<compile_context>
chip_gen: v6e
topology: v6e:2x2x1
jax: 0.10.0
libtpu: 0.0.40
codegen_flags: <defaults>
</compile_context>

<pallas_src>
import numpy as np
import jax
import jax.numpy as jnp
from jax import lax
from jax.experimental import pallas as pl
from jax.experimental.pallas import tpu as pltpu

_EPS = 1e-5
_NUM_CLASSES = 7
_LANE = 128

# Static per-layer conv configuration: (cout, cin, kernel, stride, pad).
_CONV_CONFS = (
    (16, 3, 2, 2, 2),
    (32, 16, 4, 3, 2),
    (64, 32, 4, 3, 2),
)


def _round_up(x, m):
    return ((x + m - 1) // m) * m


# --------------------------------------------------------------------------
# Compile-time 0/1 gather matrices: turn a (C, in_h*in_w) activation into the
# conv-patch contributions, with zero padding and the 2x2 max-pool tap
# grouping encoded directly in the matrix.
# --------------------------------------------------------------------------
def _pool_grouped_gather(in_h, in_w, s_dim, k, stride, pad):
    """Returns g (k*k, s_dim, 4*ph_n*pw_n) float32 and (ph_n, pw_n).

    g[i*k+j, r*in_w+c, (q*ph_n+ph)*pw_n+pw] = 1 whenever conv-output position
    (2*ph+di, 2*pw+dj) (q = di*2+dj is the pool tap) reads unpadded input
    pixel (r, c) through kernel tap (i, j).  Out-of-range taps (zero padding)
    and rows dropped by the floor-mode pool simply have no ones.
    """
    oh = (in_h + 2 * pad - k) // stride + 1
    ow = (in_w + 2 * pad - k) // stride + 1
    ph_n, pw_n = oh // 2, ow // 2
    g = np.zeros((k * k, s_dim, 4 * ph_n * pw_n), np.float32)
    for di in range(2):
        for dj in range(2):
            q = di * 2 + dj
            for ph in range(ph_n):
                for pw in range(pw_n):
                    m = (q * ph_n + ph) * pw_n + pw
                    orow, ocol = 2 * ph + di, 2 * pw + dj
                    for i in range(k):
                        for j in range(k):
                            r = stride * orow + i - pad
                            c = stride * ocol + j - pad
                            if 0 <= r < in_h and 0 <= c < in_w:
                                g[i * k + j, r * in_w + c, m] = 1.0
    return g, (ph_n, pw_n)


# --------------------------------------------------------------------------
# The fused whole-network kernel (one sample per grid step, all in VMEM).
# --------------------------------------------------------------------------
def _cnn_fused_kernel(x1_ref, w1_ref, s1_ref, w2_ref, s2_ref, g2_ref,
                      w3_ref, s3_ref, g3_ref, fcw_ref, fcb_ref, o_ref):
    f32 = jnp.float32

    # ---- layer 1: conv(k=2,s=2,p=2) + BN + ReLU + maxpool(2), transposed
    # layout.  x1: (K1, 4*S1) lanes grouped by the 4 pool taps; w1: (C1, K1).
    x1 = x1_ref[0]
    s1p = x1.shape[1] // 4
    z1 = jnp.dot(w1_ref[...], x1, preferred_element_type=f32)        # (C1, 4*S1)
    z1 = jnp.maximum(jnp.maximum(z1[:, 0:s1p], z1[:, s1p:2 * s1p]),
                     jnp.maximum(z1[:, 2 * s1p:3 * s1p], z1[:, 3 * s1p:]))
    y1 = jnp.maximum(z1 + s1_ref[...], 0.0)                          # (C1, S1)

    # ---- layer 2: conv(k=4,s=3,p=2) via per-tap gather matmuls + pool.
    nt2, _, np2 = g2_ref.shape
    c2 = s2_ref.shape[0]
    b2 = jnp.dot(w2_ref[...], y1, preferred_element_type=f32)        # (nt2*C2, S1)
    z2 = jnp.zeros((c2, np2), f32)
    for t in range(nt2):                                             # static unroll
        z2 = z2 + jnp.dot(b2[t * c2:(t + 1) * c2, :], g2_ref[t],
                          preferred_element_type=f32)
    pp2 = np2 // 4
    z2 = jnp.maximum(jnp.maximum(z2[:, 0:pp2], z2[:, pp2:2 * pp2]),
                     jnp.maximum(z2[:, 2 * pp2:3 * pp2], z2[:, 3 * pp2:]))
    y2 = jnp.maximum(z2 + s2_ref[...], 0.0)                          # (C2, PP2)

    # ---- layer 3 (pooled spatial is 1x1) + fused Linear(64, 7).
    nt3, _, np3 = g3_ref.shape
    c3 = s3_ref.shape[0]
    b3 = jnp.dot(w3_ref[...], y2, preferred_element_type=f32)        # (nt3*C3, PP2)
    z3 = jnp.zeros((c3, np3), f32)
    for t in range(nt3):
        z3 = z3 + jnp.dot(b3[t * c3:(t + 1) * c3, :], g3_ref[t],
                          preferred_element_type=f32)
    y3 = jnp.maximum(jnp.max(z3, axis=1, keepdims=True) + s3_ref[...], 0.0)  # (C3, 1)

    logits = jnp.sum(fcw_ref[...] * y3, axis=0, keepdims=True) + fcb_ref[...]  # (1, 7)
    o_ref[0] = logits.astype(o_ref.dtype)


# --------------------------------------------------------------------------
# Host-side prep (tiny, traced): input permutation and BN/bias folding.
# --------------------------------------------------------------------------
def _prep_layer1_input(x_nchw, k, stride, pad):
    """Space-to-depth + 2x2-pool-tap grouping of the (padded) input.

    Valid because layer 1 has kernel == stride == 2 (non-overlapping windows):
    a pure permutation of the padded input, no k^2 im2col inflation.
    Returns (N, k*k*C, 4*S1pad) with lanes ordered (pool tap q, pooled pos p).
    """
    assert k == 2 and stride == 2 and pad == 2
    n, c, h, w = x_nchw.shape
    assert h % 4 == 0 and w % 4 == 0, "conv1 space-to-depth prep needs H, W % 4 == 0"
    p1h, p1w = (h + 2 * pad) // 4, (w + 2 * pad) // 4
    x = jnp.transpose(x_nchw, (0, 2, 3, 1)).astype(jnp.float32)       # NHWC
    xp = jnp.pad(x, ((0, 0), (pad, pad), (pad, pad), (0, 0)))
    t = xp.reshape(n, p1h, 2, 2, p1w, 2, 2, c)                        # n,ph,di,i,pw,dj,j,c
    t = jnp.transpose(t, (0, 3, 6, 7, 2, 5, 1, 4))                    # n,i,j,c,di,dj,ph,pw
    s1 = p1h * p1w
    s1p = _round_up(s1, _LANE)
    t = t.reshape(n, k * k * c, 4, s1)
    t = jnp.pad(t, ((0, 0), (0, 0), (0, 0), (0, s1p - s1)))
    return t.reshape(n, k * k * c, 4 * s1p), (p1h, p1w, s1p)


def _fold_bn(b, bn):
    """Inference BatchNorm + conv bias -> (per-channel scale, per-channel shift)."""
    scale = bn["gamma"] * lax.rsqrt(bn["rvar"] + _EPS)
    shift = bn["beta"] - bn["rmean"] * scale + b * scale
    return scale, shift


def _conv_weight_tap_major(w, scale):
    """(Cout, Cin, k, k) -> (k*k*Cout, Cin), rows ordered (kernel tap, Cout),
    with the BN scale folded into the output channels."""
    cout, cin, kh, kw = w.shape
    ws = w * scale[:, None, None, None]
    return jnp.transpose(ws, (2, 3, 0, 1)).reshape(kh * kw * cout, cin)


# --------------------------------------------------------------------------
# Public forward.
# --------------------------------------------------------------------------
def cnn_forward(params, x_nchw):
    (c1, ci1, k1, st1, pd1), (c2, _ci2, k2, st2, pd2), (c3, _ci3, k3, st3, pd3) = _CONV_CONFS
    n = x_nchw.shape[0]

    x1t, (p1h, p1w, s1p) = _prep_layer1_input(x_nchw, k1, st1, pd1)

    l1, l2, l3 = params["l1"], params["l2"], params["l3"]
    sc1, sh1 = _fold_bn(l1["b"], l1["bn"])
    sc2, sh2 = _fold_bn(l2["b"], l2["bn"])
    sc3, sh3 = _fold_bn(l3["b"], l3["bn"])
    w1t = jnp.transpose(l1["w"] * sc1[:, None, None, None],
                        (0, 2, 3, 1)).reshape(c1, k1 * k1 * ci1)       # (C1, K1)
    w2t = _conv_weight_tap_major(l2["w"], sc2)                         # (k2^2*C2, C1)
    w3t = _conv_weight_tap_major(l3["w"], sc3)                         # (k3^2*C3, C2)

    # Static 0/1 gather matrices for in-kernel patch construction.
    g2_np, (p2h, p2w) = _pool_grouped_gather(p1h, p1w, s1p, k2, st2, pd2)
    g3_np, (p3h, p3w) = _pool_grouped_gather(p2h, p2w, p2h * p2w, k3, st3, pd3)
    assert p3h == 1 and p3w == 1, (
        "Linear(64, 7) requires a 1x1 pooled spatial output", p3h, p3w)
    g2 = jnp.asarray(g2_np)
    g3 = jnp.asarray(g3_np)
    np2, np3 = g2_np.shape[2], g3_np.shape[2]

    flops_per_step = 2 * (c1 * (k1 * k1 * ci1) * 4 * s1p
                          + (k2 * k2 * c2) * c1 * s1p
                          + k2 * k2 * c2 * s1p * np2
                          + (k3 * k3 * c3) * c2 * (p2h * p2w)
                          + k3 * k3 * c3 * (p2h * p2w) * np3
                          + c3 * _NUM_CLASSES)
    const_bytes = 4 * (w1t.size + c1 + w2t.size + c2 + int(g2.size)
                       + w3t.size + c3 + int(g3.size)
                       + c3 * _NUM_CLASSES + _NUM_CLASSES)
    cost = pl.CostEstimate(
        flops=int(n * flops_per_step), transcendentals=0,
        bytes_accessed=int(4 * n * (x1t.shape[1] * x1t.shape[2] + _NUM_CLASSES)
                           + const_bytes))

    def const2d(shape):
        return pl.BlockSpec(shape, lambda i: (0, 0))

    def const3d(shape):
        return pl.BlockSpec(shape, lambda i: (0, 0, 0))

    out = pl.pallas_call(
        _cnn_fused_kernel,
        out_shape=jax.ShapeDtypeStruct((n, 1, _NUM_CLASSES), jnp.float32),
        grid=(n,),
        in_specs=[
            pl.BlockSpec((1, x1t.shape[1], x1t.shape[2]), lambda i: (i, 0, 0)),
            const2d(w1t.shape),
            const2d((c1, 1)),
            const2d(w2t.shape),
            const2d((c2, 1)),
            const3d(g2.shape),
            const2d(w3t.shape),
            const2d((c3, 1)),
            const3d(g3.shape),
            const2d((c3, _NUM_CLASSES)),
            const2d((1, _NUM_CLASSES)),
        ],
        out_specs=pl.BlockSpec((1, 1, _NUM_CLASSES), lambda i: (i, 0, 0)),
        compiler_params=pltpu.CompilerParams(
            dimension_semantics=("parallel",),
            vmem_limit_bytes=32 * 1024 * 1024),
        cost_estimate=cost,
    )(x1t, w1t, sh1[:, None], w2t, sh2[:, None], g2,
      w3t, sh3[:, None], g3, params["fc_w_t"], params["fc_b"][None, :])
    return out[:, 0, :]


# --------------------------------------------------------------------------
# Parameters + pure-XLA reference (for the built-in correctness check).
# --------------------------------------------------------------------------
def init_params(key):
    """Deterministic init mirroring the nn.Module's shapes (inference BN with
    randomized running stats so the BN fold is actually exercised)."""
    ks = jax.random.split(key, 20)
    it = iter(ks)

    def conv_init(cout, cin, k):
        fan_in = cin * k * k
        bound = 1.0 / np.sqrt(fan_in)
        w = jax.random.uniform(next(it), (cout, cin, k, k), jnp.float32, -bound, bound)
        b = jax.random.uniform(next(it), (cout,), jnp.float32, -bound, bound)
        return w, b

    def bn_init(c):
        return dict(
            gamma=jax.random.uniform(next(it), (c,), jnp.float32, 0.5, 1.5),
            beta=jax.random.uniform(next(it), (c,), jnp.float32, -0.3, 0.3),
            rmean=jax.random.uniform(next(it), (c,), jnp.float32, -0.3, 0.3),
            rvar=jax.random.uniform(next(it), (c,), jnp.float32, 0.5, 1.5))

    params = {}
    for li, (cout, cin, k, _s, _p) in enumerate(_CONV_CONFS):
        w, b = conv_init(cout, cin, k)
        params[f"l{li + 1}"] = dict(w=w, b=b, bn=bn_init(cout))
    bound = 1.0 / np.sqrt(64.0)
    fc_w = jax.random.uniform(next(it), (_NUM_CLASSES, 64), jnp.float32, -bound, bound)
    params["fc_w_t"] = fc_w.T                                          # (64, 7)
    params["fc_b"] = jax.random.uniform(next(it), (_NUM_CLASSES,), jnp.float32,
                                        -bound, bound)
    return params


def _ref_forward(params, x_nchw):
    """Pure-JAX reference: conv + inference BN + ReLU + floor-mode maxpool + FC."""
    x = x_nchw.astype(jnp.float32)
    for li, (_cout, _cin, _k, stride, pad) in enumerate(_CONV_CONFS):
        p = params[f"l{li + 1}"]
        x = lax.conv_general_dilated(
            x, p["w"], (stride, stride), [(pad, pad), (pad, pad)],
            dimension_numbers=("NCHW", "OIHW", "NCHW"),
            precision=lax.Precision.HIGHEST)
        x = x + p["b"][None, :, None, None]
        bn = p["bn"]
        scale = bn["gamma"] * lax.rsqrt(bn["rvar"] + _EPS)
        x = (x - bn["rmean"][None, :, None, None]) * scale[None, :, None, None] \
            + bn["beta"][None, :, None, None]
        x = jnp.maximum(x, 0.0)
        x = lax.reduce_window(x, -jnp.inf, lax.max,
                              (1, 1, 2, 2), (1, 1, 2, 2), "VALID")
    feat = x.reshape(x.shape[0], -1)
    return jnp.dot(feat, params["fc_w_t"],
                   precision=lax.Precision.HIGHEST) + params["fc_b"][None, :]


if __name__ == "__main__":
    key = jax.random.PRNGKey(0)
    kp, kx = jax.random.split(key)
    params = init_params(kp)
    # Smallest input for which the module's flatten yields exactly the 64
    # features Linear(64, 7) expects: (batch=2, channels=3, H=W=56).
    x = jax.random.normal(kx, (2, 3, 56, 56), jnp.float32)

    out = jax.block_until_ready(jax.jit(cnn_forward)(params, x))
    assert out.shape == (2, _NUM_CLASSES), out.shape

    ref = jax.block_until_ready(jax.jit(_ref_forward)(params, x))
    np.testing.assert_allclose(np.asarray(out), np.asarray(ref),
                               rtol=2e-2, atol=2e-2)
    print("KERNEL_OK")
</pallas_src>

<mosaic_0001>
module attributes {stable_mosaic.version = 11 : i64} {
  func.func @_cnn_fused_kernel(%arg0: i32, %arg1: memref<1x12x1024xf32, #tpu.memory_space<vmem>>, %arg2: memref<16x12xf32, #tpu.memory_space<vmem>>, %arg3: memref<16x1xf32, #tpu.memory_space<vmem>>, %arg4: memref<512x16xf32, #tpu.memory_space<vmem>>, %arg5: memref<32x1xf32, #tpu.memory_space<vmem>>, %arg6: memref<16x256x36xf32, #tpu.memory_space<vmem>>, %arg7: memref<1024x32xf32, #tpu.memory_space<vmem>>, %arg8: memref<64x1xf32, #tpu.memory_space<vmem>>, %arg9: memref<16x9x4xf32, #tpu.memory_space<vmem>>, %arg10: memref<64x7xf32, #tpu.memory_space<vmem>>, %arg11: memref<1x7xf32, #tpu.memory_space<vmem>>, %arg12: memref<1x1x7xf32, #tpu.memory_space<vmem>>) attributes {dimension_semantics = [#tpu.dimension_semantics<parallel>], iteration_bounds = array<i64: 2>, scalar_prefetch = 0 : i64, scratch_operands = 0 : i64, tpu.core_type = #tpu.core_type<tc>, window_params = [{transform_indices = @transform_0, window_bounds = array<i64: 1, 12, 1024>}, {pipeline_mode = #tpu.pipeline_mode<synchronous>, transform_indices = @transform_1, window_bounds = array<i64: 16, 12>}, {pipeline_mode = #tpu.pipeline_mode<synchronous>, transform_indices = @transform_2, window_bounds = array<i64: 16, 1>}, {pipeline_mode = #tpu.pipeline_mode<synchronous>, transform_indices = @transform_3, window_bounds = array<i64: 512, 16>}, {pipeline_mode = #tpu.pipeline_mode<synchronous>, transform_indices = @transform_4, window_bounds = array<i64: 32, 1>}, {pipeline_mode = #tpu.pipeline_mode<synchronous>, transform_indices = @transform_5, window_bounds = array<i64: 16, 256, 36>}, {pipeline_mode = #tpu.pipeline_mode<synchronous>, transform_indices = @transform_6, window_bounds = array<i64: 1024, 32>}, {pipeline_mode = #tpu.pipeline_mode<synchronous>, transform_indices = @transform_7, window_bounds = array<i64: 64, 1>}, {pipeline_mode = #tpu.pipeline_mode<synchronous>, transform_indices = @transform_8, window_bounds = array<i64: 16, 9, 4>}, {pipeline_mode = #tpu.pipeline_mode<synchronous>, transform_indices = @transform_9, window_bounds = array<i64: 64, 7>}, {pipeline_mode = #tpu.pipeline_mode<synchronous>, transform_indices = @transform_10, window_bounds = array<i64: 1, 7>}, {transform_indices = @transform_11, window_bounds = array<i64: 1, 1, 7>}]} {
    %c0 = arith.constant 0 : index
    %c0_0 = arith.constant 0 : index
    %c0_1 = arith.constant 0 : index
    %0 = vector.load %arg1[%c0, %c0_0, %c0_1] : memref<1x12x1024xf32, #tpu.memory_space<vmem>>, vector<1x12x1024xf32>
    %1 = vector.shape_cast %0 : vector<1x12x1024xf32> to vector<12x1024xf32>
    %c0_2 = arith.constant 0 : index
    %c0_3 = arith.constant 0 : index
    %2 = vector.load %arg2[%c0_2, %c0_3] : memref<16x12xf32, #tpu.memory_space<vmem>>, vector<16x12xf32>
    %cst = arith.constant dense<0.000000e+00> : vector<16x1024xf32>
    %3 = tpu.matmul %2, %1, %cst {dimension_numbers = #tpu.dot_dimension_numbers<[1], [0], [0], [1], [0, 0, 1, 1], [], []>} : vector<16x12xf32>, vector<12x1024xf32>, vector<16x1024xf32> -> vector<16x1024xf32>
    %4 = vector.extract_strided_slice %3 {offsets = [0, 0], sizes = [16, 256], strides = [1, 1]} : vector<16x1024xf32> to vector<16x256xf32>
    %5 = vector.extract_strided_slice %3 {offsets = [0, 256], sizes = [16, 256], strides = [1, 1]} : vector<16x1024xf32> to vector<16x256xf32>
    %6 = arith.maximumf %4, %5 : vector<16x256xf32>
    %7 = vector.extract_strided_slice %3 {offsets = [0, 512], sizes = [16, 256], strides = [1, 1]} : vector<16x1024xf32> to vector<16x256xf32>
    %8 = vector.extract_strided_slice %3 {offsets = [0, 768], sizes = [16, 256], strides = [1, 1]} : vector<16x1024xf32> to vector<16x256xf32>
    %9 = arith.maximumf %7, %8 : vector<16x256xf32>
    %10 = arith.maximumf %6, %9 : vector<16x256xf32>
    %c0_4 = arith.constant 0 : index
    %c0_5 = arith.constant 0 : index
    %11 = vector.load %arg3[%c0_4, %c0_5] : memref<16x1xf32, #tpu.memory_space<vmem>>, vector<16x1xf32>
    %12 = vector.broadcast %11 : vector<16x1xf32> to vector<16x256xf32>
    %13 = arith.addf %10, %12 : vector<16x256xf32>
    %cst_6 = arith.constant 0.000000e+00 : f32
    %14 = vector.broadcast %cst_6 : f32 to vector<16x256xf32>
    %15 = arith.maximumf %13, %14 : vector<16x256xf32>
    %c0_7 = arith.constant 0 : index
    %c0_8 = arith.constant 0 : index
    %16 = vector.load %arg4[%c0_7, %c0_8] : memref<512x16xf32, #tpu.memory_space<vmem>>, vector<512x16xf32>
    %cst_9 = arith.constant dense<0.000000e+00> : vector<512x256xf32>
    %17 = tpu.matmul %16, %15, %cst_9 {dimension_numbers = #tpu.dot_dimension_numbers<[1], [0], [0], [1], [0, 0, 1, 1], [], []>} : vector<512x16xf32>, vector<16x256xf32>, vector<512x256xf32> -> vector<512x256xf32>
    %cst_10 = arith.constant 0.000000e+00 : f32
    %18 = vector.broadcast %cst_10 : f32 to vector<32x36xf32>
    %19 = vector.extract_strided_slice %17 {offsets = [0, 0], sizes = [32, 256], strides = [1, 1]} : vector<512x256xf32> to vector<32x256xf32>
    %c0_11 = arith.constant 0 : index
    %c0_12 = arith.constant 0 : index
    %c0_13 = arith.constant 0 : index
    %20 = vector.load %arg6[%c0_11, %c0_12, %c0_13] : memref<16x256x36xf32, #tpu.memory_space<vmem>>, vector<1x256x36xf32>
    %21 = vector.shape_cast %20 : vector<1x256x36xf32> to vector<256x36xf32>
    %cst_14 = arith.constant dense<0.000000e+00> : vector<32x36xf32>
    %22 = tpu.matmul %19, %21, %cst_14 {dimension_numbers = #tpu.dot_dimension_numbers<[1], [0], [0], [1], [0, 0, 1, 1], [], []>} : vector<32x256xf32>, vector<256x36xf32>, vector<32x36xf32> -> vector<32x36xf32>
    %23 = arith.addf %18, %22 : vector<32x36xf32>
    %24 = vector.extract_strided_slice %17 {offsets = [32, 0], sizes = [32, 256], strides = [1, 1]} : vector<512x256xf32> to vector<32x256xf32>
    %c1 = arith.constant 1 : index
    %c0_15 = arith.constant 0 : index
    %c0_16 = arith.constant 0 : index
    %25 = vector.load %arg6[%c1, %c0_15, %c0_16] : memref<16x256x36xf32, #tpu.memory_space<vmem>>, vector<1x256x36xf32>
    %26 = vector.shape_cast %25 : vector<1x256x36xf32> to vector<256x36xf32>
    %cst_17 = arith.constant dense<0.000000e+00> : vector<32x36xf32>
    %27 = tpu.matmul %24, %26, %cst_17 {dimension_numbers = #tpu.dot_dimension_numbers<[1], [0], [0], [1], [0, 0, 1, 1], [], []>} : vector<32x256xf32>, vector<256x36xf32>, vector<32x36xf32> -> vector<32x36xf32>
    %28 = arith.addf %23, %27 : vector<32x36xf32>
    %29 = vector.extract_strided_slice %17 {offsets = [64, 0], sizes = [32, 256], strides = [1, 1]} : vector<512x256xf32> to vector<32x256xf32>
    %c2 = arith.constant 2 : index
    %c0_18 = arith.constant 0 : index
    %c0_19 = arith.constant 0 : index
    %30 = vector.load %arg6[%c2, %c0_18, %c0_19] : memref<16x256x36xf32, #tpu.memory_space<vmem>>, vector<1x256x36xf32>
    %31 = vector.shape_cast %30 : vector<1x256x36xf32> to vector<256x36xf32>
    %cst_20 = arith.constant dense<0.000000e+00> : vector<32x36xf32>
    %32 = tpu.matmul %29, %31, %cst_20 {dimension_numbers = #tpu.dot_dimension_numbers<[1], [0], [0], [1], [0, 0, 1, 1], [], []>} : vector<32x256xf32>, vector<256x36xf32>, vector<32x36xf32> -> vector<32x36xf32>
    %33 = arith.addf %28, %32 : vector<32x36xf32>
    %34 = vector.extract_strided_slice %17 {offsets = [96, 0], sizes = [32, 256], strides = [1, 1]} : vector<512x256xf32> to vector<32x256xf32>
    %c3 = arith.constant 3 : index
    %c0_21 = arith.constant 0 : index
    %c0_22 = arith.constant 0 : index
    %35 = vector.load %arg6[%c3, %c0_21, %c0_22] : memref<16x256x36xf32, #tpu.memory_space<vmem>>, vector<1x256x36xf32>
    %36 = vector.shape_cast %35 : vector<1x256x36xf32> to vector<256x36xf32>
    %cst_23 = arith.constant dense<0.000000e+00> : vector<32x36xf32>
    %37 = tpu.matmul %34, %36, %cst_23 {dimension_numbers = #tpu.dot_dimension_numbers<[1], [0], [0], [1], [0, 0, 1, 1], [], []>} : vector<32x256xf32>, vector<256x36xf32>, vector<32x36xf32> -> vector<32x36xf32>
    %38 = arith.addf %33, %37 : vector<32x36xf32>
    %39 = vector.extract_strided_slice %17 {offsets = [128, 0], sizes = [32, 256], strides = [1, 1]} : vector<512x256xf32> to vector<32x256xf32>
    %c4 = arith.constant 4 : index
    %c0_24 = arith.constant 0 : index
    %c0_25 = arith.constant 0 : index
    %40 = vector.load %arg6[%c4, %c0_24, %c0_25] : memref<16x256x36xf32, #tpu.memory_space<vmem>>, vector<1x256x36xf32>
    %41 = vector.shape_cast %40 : vector<1x256x36xf32> to vector<256x36xf32>
    %cst_26 = arith.constant dense<0.000000e+00> : vector<32x36xf32>
    %42 = tpu.matmul %39, %41, %cst_26 {dimension_numbers = #tpu.dot_dimension_numbers<[1], [0], [0], [1], [0, 0, 1, 1], [], []>} : vector<32x256xf32>, vector<256x36xf32>, vector<32x36xf32> -> vector<32x36xf32>
    %43 = arith.addf %38, %42 : vector<32x36xf32>
    %44 = vector.extract_strided_slice %17 {offsets = [160, 0], sizes = [32, 256], strides = [1, 1]} : vector<512x256xf32> to vector<32x256xf32>
    %c5 = arith.constant 5 : index
    %c0_27 = arith.constant 0 : index
    %c0_28 = arith.constant 0 : index
    %45 = vector.load %arg6[%c5, %c0_27, %c0_28] : memref<16x256x36xf32, #tpu.memory_space<vmem>>, vector<1x256x36xf32>
    %46 = vector.shape_cast %45 : vector<1x256x36xf32> to vector<256x36xf32>
    %cst_29 = arith.constant dense<0.000000e+00> : vector<32x36xf32>
    %47 = tpu.matmul %44, %46, %cst_29 {dimension_numbers = #tpu.dot_dimension_numbers<[1], [0], [0], [1], [0, 0, 1, 1], [], []>} : vector<32x256xf32>, vector<256x36xf32>, vector<32x36xf32> -> vector<32x36xf32>
    %48 = arith.addf %43, %47 : vector<32x36xf32>
    %49 = vector.extract_strided_slice %17 {offsets = [192, 0], sizes = [32, 256], strides = [1, 1]} : vector<512x256xf32> to vector<32x256xf32>
    %c6 = arith.constant 6 : index
    %c0_30 = arith.constant 0 : index
    %c0_31 = arith.constant 0 : index
    %50 = vector.load %arg6[%c6, %c0_30, %c0_31] : memref<16x256x36xf32, #tpu.memory_space<vmem>>, vector<1x256x36xf32>
    %51 = vector.shape_cast %50 : vector<1x256x36xf32> to vector<256x36xf32>
    %cst_32 = arith.constant dense<0.000000e+00> : vector<32x36xf32>
    %52 = tpu.matmul %49, %51, %cst_32 {dimension_numbers = #tpu.dot_dimension_numbers<[1], [0], [0], [1], [0, 0, 1, 1], [], []>} : vector<32x256xf32>, vector<256x36xf32>, vector<32x36xf32> -> vector<32x36xf32>
    %53 = arith.addf %48, %52 : vector<32x36xf32>
    %54 = vector.extract_strided_slice %17 {offsets = [224, 0], sizes = [32, 256], strides = [1, 1]} : vector<512x256xf32> to vector<32x256xf32>
    %c7 = arith.constant 7 : index
    %c0_33 = arith.constant 0 : index
    %c0_34 = arith.constant 0 : index
    %55 = vector.load %arg6[%c7, %c0_33, %c0_34] : memref<16x256x36xf32, #tpu.memory_space<vmem>>, vector<1x256x36xf32>
    %56 = vector.shape_cast %55 : vector<1x256x36xf32> to vector<256x36xf32>
    %cst_35 = arith.constant dense<0.000000e+00> : vector<32x36xf32>
    %57 = tpu.matmul %54, %56, %cst_35 {dimension_numbers = #tpu.dot_dimension_numbers<[1], [0], [0], [1], [0, 0, 1, 1], [], []>} : vector<32x256xf32>, vector<256x36xf32>, vector<32x36xf32> -> vector<32x36xf32>
    %58 = arith.addf %53, %57 : vector<32x36xf32>
    %59 = vector.extract_strided_slice %17 {offsets = [256, 0], sizes = [32, 256], strides = [1, 1]} : vector<512x256xf32> to vector<32x256xf32>
    %c8 = arith.constant 8 : index
    %c0_36 = arith.constant 0 : index
    %c0_37 = arith.constant 0 : index
    %60 = vector.load %arg6[%c8, %c0_36, %c0_37] : memref<16x256x36xf32, #tpu.memory_space<vmem>>, vector<1x256x36xf32>
    %61 = vector.shape_cast %60 : vector<1x256x36xf32> to vector<256x36xf32>
    %cst_38 = arith.constant dense<0.000000e+00> : vector<32x36xf32>
    %62 = tpu.matmul %59, %61, %cst_38 {dimension_numbers = #tpu.dot_dimension_numbers<[1], [0], [0], [1], [0, 0, 1, 1], [], []>} : vector<32x256xf32>, vector<256x36xf32>, vector<32x36xf32> -> vector<32x36xf32>
    %63 = arith.addf %58, %62 : vector<32x36xf32>
    %64 = vector.extract_strided_slice %17 {offsets = [288, 0], sizes = [32, 256], strides = [1, 1]} : vector<512x256xf32> to vector<32x256xf32>
    %c9 = arith.constant 9 : index
    %c0_39 = arith.constant 0 : index
    %c0_40 = arith.constant 0 : index
    %65 = vector.load %arg6[%c9, %c0_39, %c0_40] : memref<16x256x36xf32, #tpu.memory_space<vmem>>, vector<1x256x36xf32>
    %66 = vector.shape_cast %65 : vector<1x256x36xf32> to vector<256x36xf32>
    %cst_41 = arith.constant dense<0.000000e+00> : vector<32x36xf32>
    %67 = tpu.matmul %64, %66, %cst_41 {dimension_numbers = #tpu.dot_dimension_numbers<[1], [0], [0], [1], [0, 0, 1, 1], [], []>} : vector<32x256xf32>, vector<256x36xf32>, vector<32x36xf32> -> vector<32x36xf32>
    %68 = arith.addf %63, %67 : vector<32x36xf32>
    %69 = vector.extract_strided_slice %17 {offsets = [320, 0], sizes = [32, 256], strides = [1, 1]} : vector<512x256xf32> to vector<32x256xf32>
    %c10 = arith.constant 10 : index
    %c0_42 = arith.constant 0 : index
    %c0_43 = arith.constant 0 : index
    %70 = vector.load %arg6[%c10, %c0_42, %c0_43] : memref<16x256x36xf32, #tpu.memory_space<vmem>>, vector<1x256x36xf32>
    %71 = vector.shape_cast %70 : vector<1x256x36xf32> to vector<256x36xf32>
    %cst_44 = arith.constant dense<0.000000e+00> : vector<32x36xf32>
    %72 = tpu.matmul %69, %71, %cst_44 {dimension_numbers = #tpu.dot_dimension_numbers<[1], [0], [0], [1], [0, 0, 1, 1], [], []>} : vector<32x256xf32>, vector<256x36xf32>, vector<32x36xf32> -> vector<32x36xf32>
    %73 = arith.addf %68, %72 : vector<32x36xf32>
    %74 = vector.extract_strided_slice %17 {offsets = [352, 0], sizes = [32, 256], strides = [1, 1]} : vector<512x256xf32> to vector<32x256xf32>
    %c11 = arith.constant 11 : index
    %c0_45 = arith.constant 0 : index
    %c0_46 = arith.constant 0 : index
    %75 = vector.load %arg6[%c11, %c0_45, %c0_46] : memref<16x256x36xf32, #tpu.memory_space<vmem>>, vector<1x256x36xf32>
    %76 = vector.shape_cast %75 : vector<1x256x36xf32> to vector<256x36xf32>
    %cst_47 = arith.constant dense<0.000000e+00> : vector<32x36xf32>
    %77 = tpu.matmul %74, %76, %cst_47 {dimension_numbers = #tpu.dot_dimension_numbers<[1], [0], [0], [1], [0, 0, 1, 1], [], []>} : vector<32x256xf32>, vector<256x36xf32>, vector<32x36xf32> -> vector<32x36xf32>
    %78 = arith.addf %73, %77 : vector<32x36xf32>
    %79 = vector.extract_strided_slice %17 {offsets = [384, 0], sizes = [32, 256], strides = [1, 1]} : vector<512x256xf32> to vector<32x256xf32>
    %c12 = arith.constant 12 : index
    %c0_48 = arith.constant 0 : index
    %c0_49 = arith.constant 0 : index
    %80 = vector.load %arg6[%c12, %c0_48, %c0_49] : memref<16x256x36xf32, #tpu.memory_space<vmem>>, vector<1x256x36xf32>
    %81 = vector.shape_cast %80 : vector<1x256x36xf32> to vector<256x36xf32>
    %cst_50 = arith.constant dense<0.000000e+00> : vector<32x36xf32>
    %82 = tpu.matmul %79, %81, %cst_50 {dimension_numbers = #tpu.dot_dimension_numbers<[1], [0], [0], [1], [0, 0, 1, 1], [], []>} : vector<32x256xf32>, vector<256x36xf32>, vector<32x36xf32> -> vector<32x36xf32>
    %83 = arith.addf %78, %82 : vector<32x36xf32>
    %84 = vector.extract_strided_slice %17 {offsets = [416, 0], sizes = [32, 256], strides = [1, 1]} : vector<512x256xf32> to vector<32x256xf32>
    %c13 = arith.constant 13 : index
    %c0_51 = arith.constant 0 : index
    %c0_52 = arith.constant 0 : index
    %85 = vector.load %arg6[%c13, %c0_51, %c0_52] : memref<16x256x36xf32, #tpu.memory_space<vmem>>, vector<1x256x36xf32>
    %86 = vector.shape_cast %85 : vector<1x256x36xf32> to vector<256x36xf32>
    %cst_53 = arith.constant dense<0.000000e+00> : vector<32x36xf32>
    %87 = tpu.matmul %84, %86, %cst_53 {dimension_numbers = #tpu.dot_dimension_numbers<[1], [0], [0], [1], [0, 0, 1, 1], [], []>} : vector<32x256xf32>, vector<256x36xf32>, vector<32x36xf32> -> vector<32x36xf32>
    %88 = arith.addf %83, %87 : vector<32x36xf32>
    %89 = vector.extract_strided_slice %17 {offsets = [448, 0], sizes = [32, 256], strides = [1, 1]} : vector<512x256xf32> to vector<32x256xf32>
    %c14 = arith.constant 14 : index
    %c0_54 = arith.constant 0 : index
    %c0_55 = arith.constant 0 : index
    %90 = vector.load %arg6[%c14, %c0_54, %c0_55] : memref<16x256x36xf32, #tpu.memory_space<vmem>>, vector<1x256x36xf32>
    %91 = vector.shape_cast %90 : vector<1x256x36xf32> to vector<256x36xf32>
    %cst_56 = arith.constant dense<0.000000e+00> : vector<32x36xf32>
    %92 = tpu.matmul %89, %91, %cst_56 {dimension_numbers = #tpu.dot_dimension_numbers<[1], [0], [0], [1], [0, 0, 1, 1], [], []>} : vector<32x256xf32>, vector<256x36xf32>, vector<32x36xf32> -> vector<32x36xf32>
    %93 = arith.addf %88, %92 : vector<32x36xf32>
    %94 = vector.extract_strided_slice %17 {offsets = [480, 0], sizes = [32, 256], strides = [1, 1]} : vector<512x256xf32> to vector<32x256xf32>
    %c15 = arith.constant 15 : index
    %c0_57 = arith.constant 0 : index
    %c0_58 = arith.constant 0 : index
    %95 = vector.load %arg6[%c15, %c0_57, %c0_58] : memref<16x256x36xf32, #tpu.memory_space<vmem>>, vector<1x256x36xf32>
    %96 = vector.shape_cast %95 : vector<1x256x36xf32> to vector<256x36xf32>
    %cst_59 = arith.constant dense<0.000000e+00> : vector<32x36xf32>
    %97 = tpu.matmul %94, %96, %cst_59 {dimension_numbers = #tpu.dot_dimension_numbers<[1], [0], [0], [1], [0, 0, 1, 1], [], []>} : vector<32x256xf32>, vector<256x36xf32>, vector<32x36xf32> -> vector<32x36xf32>
    %98 = arith.addf %93, %97 : vector<32x36xf32>
    %99 = vector.extract_strided_slice %98 {offsets = [0, 0], sizes = [32, 9], strides = [1, 1]} : vector<32x36xf32> to vector<32x9xf32>
    %100 = vector.extract_strided_slice %98 {offsets = [0, 9], sizes = [32, 9], strides = [1, 1]} : vector<32x36xf32> to vector<32x9xf32>
    %101 = arith.maximumf %99, %100 : vector<32x9xf32>
    %102 = vector.extract_strided_slice %98 {offsets = [0, 18], sizes = [32, 9], strides = [1, 1]} : vector<32x36xf32> to vector<32x9xf32>
    %103 = vector.extract_strided_slice %98 {offsets = [0, 27], sizes = [32, 9], strides = [1, 1]} : vector<32x36xf32> to vector<32x9xf32>
    %104 = arith.maximumf %102, %103 : vector<32x9xf32>
    %105 = arith.maximumf %101, %104 : vector<32x9xf32>
    %c0_60 = arith.constant 0 : index
    %c0_61 = arith.constant 0 : index
    %106 = vector.load %arg5[%c0_60, %c0_61] : memref<32x1xf32, #tpu.memory_space<vmem>>, vector<32x1xf32>
    %107 = vector.broadcast %106 : vector<32x1xf32> to vector<32x9xf32>
    %108 = arith.addf %105, %107 : vector<32x9xf32>
    %cst_62 = arith.constant 0.000000e+00 : f32
    %109 = vector.broadcast %cst_62 : f32 to vector<32x9xf32>
    %110 = arith.maximumf %108, %109 : vector<32x9xf32>
    %c0_63 = arith.constant 0 : index
    %c0_64 = arith.constant 0 : index
    %111 = vector.load %arg7[%c0_63, %c0_64] : memref<1024x32xf32, #tpu.memory_space<vmem>>, vector<1024x32xf32>
    %cst_65 = arith.constant dense<0.000000e+00> : vector<1024x9xf32>
    %112 = tpu.matmul %111, %110, %cst_65 {dimension_numbers = #tpu.dot_dimension_numbers<[1], [0], [0], [1], [0, 0, 1, 1], [], []>} : vector<1024x32xf32>, vector<32x9xf32>, vector<1024x9xf32> -> vector<1024x9xf32>
    %cst_66 = arith.constant 0.000000e+00 : f32
    %113 = vector.broadcast %cst_66 : f32 to vector<64x4xf32>
    %114 = vector.extract_strided_slice %112 {offsets = [0, 0], sizes = [64, 9], strides = [1, 1]} : vector<1024x9xf32> to vector<64x9xf32>
    %c0_67 = arith.constant 0 : index
    %c0_68 = arith.constant 0 : index
    %c0_69 = arith.constant 0 : index
    %115 = vector.load %arg9[%c0_67, %c0_68, %c0_69] : memref<16x9x4xf32, #tpu.memory_space<vmem>>, vector<1x9x4xf32>
    %116 = vector.shape_cast %115 : vector<1x9x4xf32> to vector<9x4xf32>
    %cst_70 = arith.constant dense<0.000000e+00> : vector<64x4xf32>
    %117 = tpu.matmul %114, %116, %cst_70 {dimension_numbers = #tpu.dot_dimension_numbers<[1], [0], [0], [1], [0, 0, 1, 1], [], []>} : vector<64x9xf32>, vector<9x4xf32>, vector<64x4xf32> -> vector<64x4xf32>
    %118 = arith.addf %113, %117 : vector<64x4xf32>
    %119 = vector.extract_strided_slice %112 {offsets = [64, 0], sizes = [64, 9], strides = [1, 1]} : vector<1024x9xf32> to vector<64x9xf32>
    %c1_71 = arith.constant 1 : index
    %c0_72 = arith.constant 0 : index
    %c0_73 = arith.constant 0 : index
    %120 = vector.load %arg9[%c1_71, %c0_72, %c0_73] : memref<16x9x4xf32, #tpu.memory_space<vmem>>, vector<1x9x4xf32>
    %121 = vector.shape_cast %120 : vector<1x9x4xf32> to vector<9x4xf32>
    %cst_74 = arith.constant dense<0.000000e+00> : vector<64x4xf32>
    %122 = tpu.matmul %119, %121, %cst_74 {dimension_numbers = #tpu.dot_dimension_numbers<[1], [0], [0], [1], [0, 0, 1, 1], [], []>} : vector<64x9xf32>, vector<9x4xf32>, vector<64x4xf32> -> vector<64x4xf32>
    %123 = arith.addf %118, %122 : vector<64x4xf32>
    %124 = vector.extract_strided_slice %112 {offsets = [128, 0], sizes = [64, 9], strides = [1, 1]} : vector<1024x9xf32> to vector<64x9xf32>
    %c2_75 = arith.constant 2 : index
    %c0_76 = arith.constant 0 : index
    %c0_77 = arith.constant 0 : index
    %125 = vector.load %arg9[%c2_75, %c0_76, %c0_77] : memref<16x9x4xf32, #tpu.memory_space<vmem>>, vector<1x9x4xf32>
    %126 = vector.shape_cast %125 : vector<1x9x4xf32> to vector<9x4xf32>
    %cst_78 = arith.constant dense<0.000000e+00> : vector<64x4xf32>
    %127 = tpu.matmul %124, %126, %cst_78 {dimension_numbers = #tpu.dot_dimension_numbers<[1], [0], [0], [1], [0, 0, 1, 1], [], []>} : vector<64x9xf32>, vector<9x4xf32>, vector<64x4xf32> -> vector<64x4xf32>
    %128 = arith.addf %123, %127 : vector<64x4xf32>
    %129 = vector.extract_strided_slice %112 {offsets = [192, 0], sizes = [64, 9], strides = [1, 1]} : vector<1024x9xf32> to vector<64x9xf32>
    %c3_79 = arith.constant 3 : index
    %c0_80 = arith.constant 0 : index
    %c0_81 = arith.constant 0 : index
    %130 = vector.load %arg9[%c3_79, %c0_80, %c0_81] : memref<16x9x4xf32, #tpu.memory_space<vmem>>, vector<1x9x4xf32>
    %131 = vector.shape_cast %130 : vector<1x9x4xf32> to vector<9x4xf32>
    %cst_82 = arith.constant dense<0.000000e+00> : vector<64x4xf32>
    %132 = tpu.matmul %129, %131, %cst_82 {dimension_numbers = #tpu.dot_dimension_numbers<[1], [0], [0], [1], [0, 0, 1, 1], [], []>} : vector<64x9xf32>, vector<9x4xf32>, vector<64x4xf32> -> vector<64x4xf32>
    %133 = arith.addf %128, %132 : vector<64x4xf32>
    %134 = vector.extract_strided_slice %112 {offsets = [256, 0], sizes = [64, 9], strides = [1, 1]} : vector<1024x9xf32> to vector<64x9xf32>
    %c4_83 = arith.constant 4 : index
    %c0_84 = arith.constant 0 : index
    %c0_85 = arith.constant 0 : index
    %135 = vector.load %arg9[%c4_83, %c0_84, %c0_85] : memref<16x9x4xf32, #tpu.memory_space<vmem>>, vector<1x9x4xf32>
    %136 = vector.shape_cast %135 : vector<1x9x4xf32> to vector<9x4xf32>
    %cst_86 = arith.constant dense<0.000000e+00> : vector<64x4xf32>
    %137 = tpu.matmul %134, %136, %cst_86 {dimension_numbers = #tpu.dot_dimension_numbers<[1], [0], [0], [1], [0, 0, 1, 1], [], []>} : vector<64x9xf32>, vector<9x4xf32>, vector<64x4xf32> -> vector<64x4xf32>
    %138 = arith.addf %133, %137 : vector<64x4xf32>
    %139 = vector.extract_strided_slice %112 {offsets = [320, 0], sizes = [64, 9], strides = [1, 1]} : vector<1024x9xf32> to vector<64x9xf32>
    %c5_87 = arith.constant 5 : index
    %c0_88 = arith.constant 0 : index
    %c0_89 = arith.constant 0 : index
    %140 = vector.load %arg9[%c5_87, %c0_88, %c0_89] : memref<16x9x4xf32, #tpu.memory_space<vmem>>, vector<1x9x4xf32>
    %141 = vector.shape_cast %140 : vector<1x9x4xf32> to vector<9x4xf32>
    %cst_90 = arith.constant dense<0.000000e+00> : vector<64x4xf32>
    %142 = tpu.matmul %139, %141, %cst_90 {dimension_numbers = #tpu.dot_dimension_numbers<[1], [0], [0], [1], [0, 0, 1, 1], [], []>} : vector<64x9xf32>, vector<9x4xf32>, vector<64x4xf32> -> vector<64x4xf32>
    %143 = arith.addf %138, %142 : vector<64x4xf32>
    %144 = vector.extract_strided_slice %112 {offsets = [384, 0], sizes = [64, 9], strides = [1, 1]} : vector<1024x9xf32> to vector<64x9xf32>
    %c6_91 = arith.constant 6 : index
    %c0_92 = arith.constant 0 : index
    %c0_93 = arith.constant 0 : index
    %145 = vector.load %arg9[%c6_91, %c0_92, %c0_93] : memref<16x9x4xf32, #tpu.memory_space<vmem>>, vector<1x9x4xf32>
    %146 = vector.shape_cast %145 : vector<1x9x4xf32> to vector<9x4xf32>
    %cst_94 = arith.constant dense<0.000000e+00> : vector<64x4xf32>
    %147 = tpu.matmul %144, %146, %cst_94 {dimension_numbers = #tpu.dot_dimension_numbers<[1], [0], [0], [1], [0, 0, 1, 1], [], []>} : vector<64x9xf32>, vector<9x4xf32>, vector<64x4xf32> -> vector<64x4xf32>
    %148 = arith.addf %143, %147 : vector<64x4xf32>
    %149 = vector.extract_strided_slice %112 {offsets = [448, 0], sizes = [64, 9], strides = [1, 1]} : vector<1024x9xf32> to vector<64x9xf32>
    %c7_95 = arith.constant 7 : index
    %c0_96 = arith.constant 0 : index
    %c0_97 = arith.constant 0 : index
    %150 = vector.load %arg9[%c7_95, %c0_96, %c0_97] : memref<16x9x4xf32, #tpu.memory_space<vmem>>, vector<1x9x4xf32>
    %151 = vector.shape_cast %150 : vector<1x9x4xf32> to vector<9x4xf32>
    %cst_98 = arith.constant dense<0.000000e+00> : vector<64x4xf32>
    %152 = tpu.matmul %149, %151, %cst_98 {dimension_numbers = #tpu.dot_dimension_numbers<[1], [0], [0], [1], [0, 0, 1, 1], [], []>} : vector<64x9xf32>, vector<9x4xf32>, vector<64x4xf32> -> vector<64x4xf32>
    %153 = arith.addf %148, %152 : vector<64x4xf32>
    %154 = vector.extract_strided_slice %112 {offsets = [512, 0], sizes = [64, 9], strides = [1, 1]} : vector<1024x9xf32> to vector<64x9xf32>
    %c8_99 = arith.constant 8 : index
    %c0_100 = arith.constant 0 : index
    %c0_101 = arith.constant 0 : index
    %155 = vector.load %arg9[%c8_99, %c0_100, %c0_101] : memref<16x9x4xf32, #tpu.memory_space<vmem>>, vector<1x9x4xf32>
    %156 = vector.shape_cast %155 : vector<1x9x4xf32> to vector<9x4xf32>
    %cst_102 = arith.constant dense<0.000000e+00> : vector<64x4xf32>
    %157 = tpu.matmul %154, %156, %cst_102 {dimension_numbers = #tpu.dot_dimension_numbers<[1], [0], [0], [1], [0, 0, 1, 1], [], []>} : vector<64x9xf32>, vector<9x4xf32>, vector<64x4xf32> -> vector<64x4xf32>
    %158 = arith.addf %153, %157 : vector<64x4xf32>
    %159 = vector.extract_strided_slice %112 {offsets = [576, 0], sizes = [64, 9], strides = [1, 1]} : vector<1024x9xf32> to vector<64x9xf32>
    %c9_103 = arith.constant 9 : index
    %c0_104 = arith.constant 0 : index
    %c0_105 = arith.constant 0 : index
    %160 = vector.load %arg9[%c9_103, %c0_104, %c0_105] : memref<16x9x4xf32, #tpu.memory_space<vmem>>, vector<1x9x4xf32>
    %161 = vector.shape_cast %160 : vector<1x9x4xf32> to vector<9x4xf32>
    %cst_106 = arith.constant dense<0.000000e+00> : vector<64x4xf32>
    %162 = tpu.matmul %159, %161, %cst_106 {dimension_numbers = #tpu.dot_dimension_numbers<[1], [0], [0], [1], [0, 0, 1, 1], [], []>} : vector<64x9xf32>, vector<9x4xf32>, vector<64x4xf32> -> vector<64x4xf32>
    %163 = arith.addf %158, %162 : vector<64x4xf32>
    %164 = vector.extract_strided_slice %112 {offsets = [640, 0], sizes = [64, 9], strides = [1, 1]} : vector<1024x9xf32> to vector<64x9xf32>
    %c10_107 = arith.constant 10 : index
    %c0_108 = arith.constant 0 : index
    %c0_109 = arith.constant 0 : index
    %165 = vector.load %arg9[%c10_107, %c0_108, %c0_109] : memref<16x9x4xf32, #tpu.memory_space<vmem>>, vector<1x9x4xf32>
    %166 = vector.shape_cast %165 : vector<1x9x4xf32> to vector<9x4xf32>
    %cst_110 = arith.constant dense<0.000000e+00> : vector<64x4xf32>
    %167 = tpu.matmul %164, %166, %cst_110 {dimension_numbers = #tpu.dot_dimension_numbers<[1], [0], [0], [1], [0, 0, 1, 1], [], []>} : vector<64x9xf32>, vector<9x4xf32>, vector<64x4xf32> -> vector<64x4xf32>
    %168 = arith.addf %163, %167 : vector<64x4xf32>
    %169 = vector.extract_strided_slice %112 {offsets = [704, 0], sizes = [64, 9], strides = [1, 1]} : vector<1024x9xf32> to vector<64x9xf32>
    %c11_111 = arith.constant 11 : index
    %c0_112 = arith.constant 0 : index
    %c0_113 = arith.constant 0 : index
    %170 = vector.load %arg9[%c11_111, %c0_112, %c0_113] : memref<16x9x4xf32, #tpu.memory_space<vmem>>, vector<1x9x4xf32>
    %171 = vector.shape_cast %170 : vector<1x9x4xf32> to vector<9x4xf32>
    %cst_114 = arith.constant dense<0.000000e+00> : vector<64x4xf32>
    %172 = tpu.matmul %169, %171, %cst_114 {dimension_numbers = #tpu.dot_dimension_numbers<[1], [0], [0], [1], [0, 0, 1, 1], [], []>} : vector<64x9xf32>, vector<9x4xf32>, vector<64x4xf32> -> vector<64x4xf32>
    %173 = arith.addf %168, %172 : vector<64x4xf32>
    %174 = vector.extract_strided_slice %112 {offsets = [768, 0], sizes = [64, 9], strides = [1, 1]} : vector<1024x9xf32> to vector<64x9xf32>
    %c12_115 = arith.constant 12 : index
    %c0_116 = arith.constant 0 : index
    %c0_117 = arith.constant 0 : index
    %175 = vector.load %arg9[%c12_115, %c0_116, %c0_117] : memref<16x9x4xf32, #tpu.memory_space<vmem>>, vector<1x9x4xf32>
    %176 = vector.shape_cast %175 : vector<1x9x4xf32> to vector<9x4xf32>
    %cst_118 = arith.constant dense<0.000000e+00> : vector<64x4xf32>
    %177 = tpu.matmul %174, %176, %cst_118 {dimension_numbers = #tpu.dot_dimension_numbers<[1], [0], [0], [1], [0, 0, 1, 1], [], []>} : vector<64x9xf32>, vector<9x4xf32>, vector<64x4xf32> -> vector<64x4xf32>
    %178 = arith.addf %173, %177 : vector<64x4xf32>
    %179 = vector.extract_strided_slice %112 {offsets = [832, 0], sizes = [64, 9], strides = [1, 1]} : vector<1024x9xf32> to vector<64x9xf32>
    %c13_119 = arith.constant 13 : index
    %c0_120 = arith.constant 0 : index
    %c0_121 = arith.constant 0 : index
    %180 = vector.load %arg9[%c13_119, %c0_120, %c0_121] : memref<16x9x4xf32, #tpu.memory_space<vmem>>, vector<1x9x4xf32>
    %181 = vector.shape_cast %180 : vector<1x9x4xf32> to vector<9x4xf32>
    %cst_122 = arith.constant dense<0.000000e+00> : vector<64x4xf32>
    %182 = tpu.matmul %179, %181, %cst_122 {dimension_numbers = #tpu.dot_dimension_numbers<[1], [0], [0], [1], [0, 0, 1, 1], [], []>} : vector<64x9xf32>, vector<9x4xf32>, vector<64x4xf32> -> vector<64x4xf32>
    %183 = arith.addf %178, %182 : vector<64x4xf32>
    %184 = vector.extract_strided_slice %112 {offsets = [896, 0], sizes = [64, 9], strides = [1, 1]} : vector<1024x9xf32> to vector<64x9xf32>
    %c14_123 = arith.constant 14 : index
    %c0_124 = arith.constant 0 : index
    %c0_125 = arith.constant 0 : index
    %185 = vector.load %arg9[%c14_123, %c0_124, %c0_125] : memref<16x9x4xf32, #tpu.memory_space<vmem>>, vector<1x9x4xf32>
    %186 = vector.shape_cast %185 : vector<1x9x4xf32> to vector<9x4xf32>
    %cst_126 = arith.constant dense<0.000000e+00> : vector<64x4xf32>
    %187 = tpu.matmul %184, %186, %cst_126 {dimension_numbers = #tpu.dot_dimension_numbers<[1], [0], [0], [1], [0, 0, 1, 1], [], []>} : vector<64x9xf32>, vector<9x4xf32>, vector<64x4xf32> -> vector<64x4xf32>
    %188 = arith.addf %183, %187 : vector<64x4xf32>
    %189 = vector.extract_strided_slice %112 {offsets = [960, 0], sizes = [64, 9], strides = [1, 1]} : vector<1024x9xf32> to vector<64x9xf32>
    %c15_127 = arith.constant 15 : index
    %c0_128 = arith.constant 0 : index
    %c0_129 = arith.constant 0 : index
    %190 = vector.load %arg9[%c15_127, %c0_128, %c0_129] : memref<16x9x4xf32, #tpu.memory_space<vmem>>, vector<1x9x4xf32>
    %191 = vector.shape_cast %190 : vector<1x9x4xf32> to vector<9x4xf32>
    %cst_130 = arith.constant dense<0.000000e+00> : vector<64x4xf32>
    %192 = tpu.matmul %189, %191, %cst_130 {dimension_numbers = #tpu.dot_dimension_numbers<[1], [0], [0], [1], [0, 0, 1, 1], [], []>} : vector<64x9xf32>, vector<9x4xf32>, vector<64x4xf32> -> vector<64x4xf32>
    %193 = arith.addf %188, %192 : vector<64x4xf32>
    %cst_131 = arith.constant dense<0xFF800000> : vector<64xf32>
    %194 = vector.multi_reduction <maximumf>, %193, %cst_131 [1] : vector<64x4xf32> to vector<64xf32>
    %195 = vector.shape_cast %194 : vector<64xf32> to vector<64x1xf32>
    %c0_132 = arith.constant 0 : index
    %c0_133 = arith.constant 0 : index
    %196 = vector.load %arg8[%c0_132, %c0_133] : memref<64x1xf32, #tpu.memory_space<vmem>>, vector<64x1xf32>
    %197 = arith.addf %195, %196 : vector<64x1xf32>
    %cst_134 = arith.constant 0.000000e+00 : f32
    %198 = vector.broadcast %cst_134 : f32 to vector<64x1xf32>
    %199 = arith.maximumf %197, %198 : vector<64x1xf32>
    %c0_135 = arith.constant 0 : index
    %c0_136 = arith.constant 0 : index
    %200 = vector.load %arg10[%c0_135, %c0_136] : memref<64x7xf32, #tpu.memory_space<vmem>>, vector<64x7xf32>
    %201 = vector.broadcast %199 : vector<64x1xf32> to vector<64x7xf32>
    %202 = arith.mulf %200, %201 : vector<64x7xf32>
    %cst_137 = arith.constant dense<0.000000e+00> : vector<7xf32>
    %203 = vector.multi_reduction <add>, %202, %cst_137 [0] : vector<64x7xf32> to vector<7xf32>
    %204 = vector.shape_cast %203 : vector<7xf32> to vector<1x7xf32>
    %c0_138 = arith.constant 0 : index
    %c0_139 = arith.constant 0 : index
    %205 = vector.load %arg11[%c0_138, %c0_139] : memref<1x7xf32, #tpu.memory_space<vmem>>, vector<1x7xf32>
    %206 = arith.addf %204, %205 : vector<1x7xf32>
    %c0_140 = arith.constant 0 : index
    %c0_141 = arith.constant 0 : index
    %c0_142 = arith.constant 0 : index
    %207 = vector.load %arg12[%c0_140, %c0_141, %c0_142] : memref<1x1x7xf32, #tpu.memory_space<vmem>>, vector<1x1x7xf32>
    %208 = vector.shape_cast %207 : vector<1x1x7xf32> to vector<1x7xf32>
    %209 = vector.shape_cast %206 : vector<1x7xf32> to vector<1x1x7xf32>
    tpu.vector_store %arg12[%c0_140, %c0_141, %c0_142], %209 {strides = array<i32>} : memref<1x1x7xf32, #tpu.memory_space<vmem>>, vector<1x1x7xf32>,
    return
  }
  func.func @transform_0(%arg0: i32) -> (i32, i32, i32) {
    %c0_i32 = arith.constant 0 : i32
    %c0_i32_0 = arith.constant 0 : i32
    %c0_i32_1 = arith.constant 0 : i32
    return %arg0, %c0_i32, %c0_i32_0 : i32, i32, i32
  }
  func.func @transform_1(%arg0: i32) -> (i32, i32) {
    %c0_i32 = arith.constant 0 : i32
    %c0_i32_0 = arith.constant 0 : i32
    %c0_i32_1 = arith.constant 0 : i32
    return %c0_i32, %c0_i32_0 : i32, i32
  }
  func.func @transform_2(%arg0: i32) -> (i32, i32) {
    %c0_i32 = arith.constant 0 : i32
    %c0_i32_0 = arith.constant 0 : i32
    %c0_i32_1 = arith.constant 0 : i32
    return %c0_i32, %c0_i32_0 : i32, i32
  }
  func.func @transform_3(%arg0: i32) -> (i32, i32) {
    %c0_i32 = arith.constant 0 : i32
    %c0_i32_0 = arith.constant 0 : i32
    %c0_i32_1 = arith.constant 0 : i32
    return %c0_i32, %c0_i32_0 : i32, i32
  }
  func.func @transform_4(%arg0: i32) -> (i32, i32) {
    %c0_i32 = arith.constant 0 : i32
    %c0_i32_0 = arith.constant 0 : i32
    %c0_i32_1 = arith.constant 0 : i32
    return %c0_i32, %c0_i32_0 : i32, i32
  }
  func.func @transform_5(%arg0: i32) -> (i32, i32, i32) {
    %c0_i32 = arith.constant 0 : i32
    %c0_i32_0 = arith.constant 0 : i32
    %c0_i32_1 = arith.constant 0 : i32
    %c0_i32_2 = arith.constant 0 : i32
    return %c0_i32, %c0_i32_0, %c0_i32_1 : i32, i32, i32
  }
  func.func @transform_6(%arg0: i32) -> (i32, i32) {
    %c0_i32 = arith.constant 0 : i32
    %c0_i32_0 = arith.constant 0 : i32
    %c0_i32_1 = arith.constant 0 : i32
    return %c0_i32, %c0_i32_0 : i32, i32
  }
  func.func @transform_7(%arg0: i32) -> (i32, i32) {
    %c0_i32 = arith.constant 0 : i32
    %c0_i32_0 = arith.constant 0 : i32
    %c0_i32_1 = arith.constant 0 : i32
    return %c0_i32, %c0_i32_0 : i32, i32
  }
  func.func @transform_8(%arg0: i32) -> (i32, i32, i32) {
    %c0_i32 = arith.constant 0 : i32
    %c0_i32_0 = arith.constant 0 : i32
    %c0_i32_1 = arith.constant 0 : i32
    %c0_i32_2 = arith.constant 0 : i32
    return %c0_i32, %c0_i32_0, %c0_i32_1 : i32, i32, i32
  }
  func.func @transform_9(%arg0: i32) -> (i32, i32) {
    %c0_i32 = arith.constant 0 : i32
    %c0_i32_0 = arith.constant 0 : i32
    %c0_i32_1 = arith.constant 0 : i32
    return %c0_i32, %c0_i32_0 : i32, i32
  }
  func.func @transform_10(%arg0: i32) -> (i32, i32) {
    %c0_i32 = arith.constant 0 : i32
    %c0_i32_0 = arith.constant 0 : i32
    %c0_i32_1 = arith.constant 0 : i32
    return %c0_i32, %c0_i32_0 : i32, i32
  }
  func.func @transform_11(%arg0: i32) -> (i32, i32, i32) {
    %c0_i32 = arith.constant 0 : i32
    %c0_i32_0 = arith.constant 0 : i32
    %c0_i32_1 = arith.constant 0 : i32
    return %arg0, %c0_i32, %c0_i32_0 : i32, i32, i32
  }
}

</mosaic_0001>

<llo_original>
// kernel: cnn_forward.1
$region0: #{cnn_forward.1}
  #allocation0 [shape = 'u32[]', space=smem, size = 0x4, offset = 0x4, fixed_abs, tag = 'smem constant byte address 0x4 - core index']
  #allocation1 [shape = 'u32[144,128]{1,0:T(1,128)}', space=vmem, size = 0x12000, scoped, tag = 'internal scratch']
  %s0 = inlined_call_operand.vmem [shape: f32[2,12,1024], index: 0, kind: input, shape index: {}]
  %s1 = inlined_call_operand.vmem [shape: f32[16,12], index: 1, kind: input, shape index: {}]
  %s2 = inlined_call_operand.vmem [shape: f32[16,1], index: 2, kind: input, shape index: {}]
  %s3 = inlined_call_operand.vmem [shape: f32[512,16], index: 3, kind: input, shape index: {}]
  %s4 = inlined_call_operand.vmem [shape: f32[32,1], index: 4, kind: input, shape index: {}]
  %s5 = inlined_call_operand.vmem [shape: f32[16,256,36], index: 5, kind: input, shape index: {}]
  %s6 = inlined_call_operand.vmem [shape: f32[1024,32], index: 6, kind: input, shape index: {}]
  %s7 = inlined_call_operand.vmem [shape: f32[64,1], index: 7, kind: input, shape index: {}]
  %s8 = inlined_call_operand.vmem [shape: f32[16,9,4], index: 8, kind: input, shape index: {}]
  %s9 = inlined_call_operand.vmem [shape: f32[64,7], index: 9, kind: input, shape index: {}]
  %s10 = inlined_call_operand.vmem [shape: f32[1,7], index: 10, kind: input, shape index: {}]
  %s11 = inlined_call_operand.hbm [shape: f32[2,1,7], index: 11, kind: output, shape index: {}]
  %s12 = sld [smem:[#allocation0]]
  $region77: #{cnn_forward.1} parent=0
    _
  %s14 = ssub.s32 1, %s12
  %s15 = scalar_select 0, %s14, %s12
  $region1: #{cnn_forward.1} parent=0
    #allocation2 [shape = 'u8[1024]{0}', space=vmem, size = 0x400, scoped, tag = 'output window, operand 0']
    #allocation3 [shape = 's32[2]{0}', space=sflag, size = 0x8, scoped, tag = 'scoped memory for cnn_forward.1']
    %16 = vsyncpa [#allocation3], 0
    %s17 = scalar_lea.sflag [#allocation3], 1
    %18 = vsyncpa %s17, 0
    loop: start=0, step=1, limit=4
    $region2: #{cnn_forward.1} parent=1 // loop_pre_header
      _
    $region3: #{cnn_forward.1} parent=1 // loop_header
      %s20 = sphi 0, %s24
      %p21 = scmp.ge.s32.totalorder %s20, 4
      %s30 = sphi 0, %s32
      %s33 = sphi 0, %s30
      %s34 = sphi 0, %s33
      %s50 = sphi 0, %s34
      %s54 = sphi 0, %s54
      %s56 = sphi 0, %s54
      %s57 = sphi 0, %s56
      %s71 = sphi 0, %s57
      %s75 = sphi 0, %s75
      %s77 = sphi 0, %s75
      %s78 = sphi 0, %s77
      %s92 = sphi 0, %s78
      %s96 = sphi 0, %s96
      %s98 = sphi 0, %s96
      %s99 = sphi 0, %s98
      %s113 = sphi 0, %s99
      %s117 = sphi 0, %s117
      %s119 = sphi 0, %s117
      %s120 = sphi 0, %s119
      %s134 = sphi 0, %s120
      %s138 = sphi 0, %s138
      %s140 = sphi 0, %s138
      %s141 = sphi 0, %s140
      %s155 = sphi 0, %s141
      %s159 = sphi 0, %s159
      %s161 = sphi 0, %s159
      %s162 = sphi 0, %s161
      %s176 = sphi 0, %s162
      %s180 = sphi 0, %s180
      %s182 = sphi 0, %s180
      %s183 = sphi 0, %s182
      %s197 = sphi 0, %s183
      %s201 = sphi 0, %s201
      %s203 = sphi 0, %s201
      %s204 = sphi 0, %s203
      %s218 = sphi 0, %s204
      %s222 = sphi 0, %s222
      %s224 = sphi 0, %s222
      %s225 = sphi 0, %s224
      %s239 = sphi 0, %s225
      %s243 = sphi 0, %s243
      %s245 = sphi 0, %s243
      %s246 = sphi 0, %s245
      %s260 = sphi 0, %s246
      %s266 = sphi 0, %s268
      %s269 = sphi 0, %s266
      %s270 = sphi 0, %s269
      %s286 = sphi 0, %s270
    $region4: #{cnn_forward.1} parent=1 // loop_header_branch
      %23 = sbr.rel (%p21) target = $region8
    $region5: #{cnn_forward.1} parent=1 // loop_body
      %s25 = ssub.s32 %s20, 1
      %s26 = ssub.s32 %s20, 2
      %s27 = sadd.s32 %s20, 1
      %s28 = ssub.s32 %s20, %s27
      %p29 = scmp.eq.s32.totalorder %s28, 0
      %s31 = sadd.s32 %s30, 1
      %s32 = scalar_select %p29, %s30, %s31
      %p35 = pneg %p29
      %p36 = scmp.eq.s32.totalorder %s20, 1
      %p37 = por %p35, %p36
      %p38 = scmp.ne.s32.totalorder %s30, %s33
      %p39 = scmp.eq.s32.totalorder %s20, 0
      %p40 = por %p38, %p39
      %p41 = scmp.ne.s32.totalorder %s30, %s33
      %p42 = scmp.eq.s32.totalorder %s25, 1
      %p43 = por %p41, %p42
      %p44 = scmp.ne.s32.totalorder %s33, %s34
      %p45 = scmp.eq.s32.totalorder %s25, 0
      %p46 = por %p44, %p45
      %p47 = scmp.ne.s32.totalorder %s33, %s34
      %p48 = scmp.eq.s32.totalorder %s26, 1
      %p49 = por %p47, %p48
      %p51 = scmp.ne.s32.totalorder %s34, %s50
      %p52 = scmp.eq.s32.totalorder %s26, 0
      %p53 = por %p51, %p52
      %s55 = sadd.s32 %s54, 1
      %p58 = scmp.eq.s32.totalorder %s20, 1
      %p59 = scmp.ne.s32.totalorder %s54, %s56
      %p60 = scmp.eq.s32.totalorder %s20, 0
      %p61 = por %p59, %p60
      %p62 = scmp.ne.s32.totalorder %s54, %s56
      %p63 = scmp.eq.s32.totalorder %s25, 1
      %p64 = por %p62, %p63
      %p65 = scmp.ne.s32.totalorder %s56, %s57
      %p66 = scmp.eq.s32.totalorder %s25, 0
      %p67 = por %p65, %p66
      %p68 = scmp.ne.s32.totalorder %s56, %s57
      %p69 = scmp.eq.s32.totalorder %s26, 1
      %p70 = por %p68, %p69
      %p72 = scmp.ne.s32.totalorder %s57, %s71
      %p73 = scmp.eq.s32.totalorder %s26, 0
      %p74 = por %p72, %p73
      %s76 = sadd.s32 %s75, 1
      %p79 = scmp.eq.s32.totalorder %s20, 1
      %p80 = scmp.ne.s32.totalorder %s75, %s77
      %p81 = scmp.eq.s32.totalorder %s20, 0
      %p82 = por %p80, %p81
      %p83 = scmp.ne.s32.totalorder %s75, %s77
      %p84 = scmp.eq.s32.totalorder %s25, 1
      %p85 = por %p83, %p84
      %p86 = scmp.ne.s32.totalorder %s77, %s78
      %p87 = scmp.eq.s32.totalorder %s25, 0
      %p88 = por %p86, %p87
      %p89 = scmp.ne.s32.totalorder %s77, %s78
      %p90 = scmp.eq.s32.totalorder %s26, 1
      %p91 = por %p89, %p90
      %p93 = scmp.ne.s32.totalorder %s78, %s92
      %p94 = scmp.eq.s32.totalorder %s26, 0
      %p95 = por %p93, %p94
      %s97 = sadd.s32 %s96, 1
      %p100 = scmp.eq.s32.totalorder %s20, 1
      %p101 = scmp.ne.s32.totalorder %s96, %s98
      %p102 = scmp.eq.s32.totalorder %s20, 0
      %p103 = por %p101, %p102
      %p104 = scmp.ne.s32.totalorder %s96, %s98
      %p105 = scmp.eq.s32.totalorder %s25, 1
      %p106 = por %p104, %p105
      %p107 = scmp.ne.s32.totalorder %s98, %s99
      %p108 = scmp.eq.s32.totalorder %s25, 0
      %p109 = por %p107, %p108
      %p110 = scmp.ne.s32.totalorder %s98, %s99
      %p111 = scmp.eq.s32.totalorder %s26, 1
      %p112 = por %p110, %p111
      %p114 = scmp.ne.s32.totalorder %s99, %s113
      %p115 = scmp.eq.s32.totalorder %s26, 0
      %p116 = por %p114, %p115
      %s118 = sadd.s32 %s117, 1
      %p121 = scmp.eq.s32.totalorder %s20, 1
      %p122 = scmp.ne.s32.totalorder %s117, %s119
      %p123 = scmp.eq.s32.totalorder %s20, 0
      %p124 = por %p122, %p123
      %p125 = scmp.ne.s32.totalorder %s117, %s119
      %p126 = scmp.eq.s32.totalorder %s25, 1
      %p127 = por %p125, %p126
      %p128 = scmp.ne.s32.totalorder %s119, %s120
      %p129 = scmp.eq.s32.totalorder %s25, 0
      %p130 = por %p128, %p129
      %p131 = scmp.ne.s32.totalorder %s119, %s120
      %p132 = scmp.eq.s32.totalorder %s26, 1
      %p133 = por %p131, %p132
      %p135 = scmp.ne.s32.totalorder %s120, %s134
      %p136 = scmp.eq.s32.totalorder %s26, 0
      %p137 = por %p135, %p136
      %s139 = sadd.s32 %s138, 1
      %p142 = scmp.eq.s32.totalorder %s20, 1
      %p143 = scmp.ne.s32.totalorder %s138, %s140
      %p144 = scmp.eq.s32.totalorder %s20, 0
      %p145 = por %p143, %p144
      %p146 = scmp.ne.s32.totalorder %s138, %s140
      %p147 = scmp.eq.s32.totalorder %s25, 1
      %p148 = por %p146, %p147
      %p149 = scmp.ne.s32.totalorder %s140, %s141
      %p150 = scmp.eq.s32.totalorder %s25, 0
      %p151 = por %p149, %p150
      %p152 = scmp.ne.s32.totalorder %s140, %s141
      %p153 = scmp.eq.s32.totalorder %s26, 1
      %p154 = por %p152, %p153
      %p156 = scmp.ne.s32.totalorder %s141, %s155
      %p157 = scmp.eq.s32.totalorder %s26, 0
      %p158 = por %p156, %p157
      %s160 = sadd.s32 %s159, 1
      %p163 = scmp.eq.s32.totalorder %s20, 1
      %p164 = scmp.ne.s32.totalorder %s159, %s161
      %p165 = scmp.eq.s32.totalorder %s20, 0
      %p166 = por %p164, %p165
      %p167 = scmp.ne.s32.totalorder %s159, %s161
      %p168 = scmp.eq.s32.totalorder %s25, 1
      %p169 = por %p167, %p168
      %p170 = scmp.ne.s32.totalorder %s161, %s162
      %p171 = scmp.eq.s32.totalorder %s25, 0
      %p172 = por %p170, %p171
      %p173 = scmp.ne.s32.totalorder %s161, %s162
      %p174 = scmp.eq.s32.totalorder %s26, 1
      %p175 = por %p173, %p174
      %p177 = scmp.ne.s32.totalorder %s162, %s176
      %p178 = scmp.eq.s32.totalorder %s26, 0
      %p179 = por %p177, %p178
      %s181 = sadd.s32 %s180, 1
      %p184 = scmp.eq.s32.totalorder %s20, 1
      %p185 = scmp.ne.s32.totalorder %s180, %s182
      %p186 = scmp.eq.s32.totalorder %s20, 0
      %p187 = por %p185, %p186
      %p188 = scmp.ne.s32.totalorder %s180, %s182
      %p189 = scmp.eq.s32.totalorder %s25, 1
      %p190 = por %p188, %p189
      %p191 = scmp.ne.s32.totalorder %s182, %s183
      %p192 = scmp.eq.s32.totalorder %s25, 0
      %p193 = por %p191, %p192
      %p194 = scmp.ne.s32.totalorder %s182, %s183
      %p195 = scmp.eq.s32.totalorder %s26, 1
      %p196 = por %p194, %p195
      %p198 = scmp.ne.s32.totalorder %s183, %s197
      %p199 = scmp.eq.s32.totalorder %s26, 0
      %p200 = por %p198, %p199
      %s202 = sadd.s32 %s201, 1
      %p205 = scmp.eq.s32.totalorder %s20, 1
      %p206 = scmp.ne.s32.totalorder %s201, %s203
      %p207 = scmp.eq.s32.totalorder %s20, 0
      %p208 = por %p206, %p207
      %p209 = scmp.ne.s32.totalorder %s201, %s203
      %p210 = scmp.eq.s32.totalorder %s25, 1
      %p211 = por %p209, %p210
      %p212 = scmp.ne.s32.totalorder %s203, %s204
      %p213 = scmp.eq.s32.totalorder %s25, 0
      %p214 = por %p212, %p213
      %p215 = scmp.ne.s32.totalorder %s203, %s204
      %p216 = scmp.eq.s32.totalorder %s26, 1
      %p217 = por %p215, %p216
      %p219 = scmp.ne.s32.totalorder %s204, %s218
      %p220 = scmp.eq.s32.totalorder %s26, 0
      %p221 = por %p219, %p220
      %s223 = sadd.s32 %s222, 1
      %p226 = scmp.eq.s32.totalorder %s20, 1
      %p227 = scmp.ne.s32.totalorder %s222, %s224
      %p228 = scmp.eq.s32.totalorder %s20, 0
      %p229 = por %p227, %p228
      %p230 = scmp.ne.s32.totalorder %s222, %s224
      %p231 = scmp.eq.s32.totalorder %s25, 1
      %p232 = por %p230, %p231
      %p233 = scmp.ne.s32.totalorder %s224, %s225
      %p234 = scmp.eq.s32.totalorder %s25, 0
      %p235 = por %p233, %p234
      %p236 = scmp.ne.s32.totalorder %s224, %s225
      %p237 = scmp.eq.s32.totalorder %s26, 1
      %p238 = por %p236, %p237
      %p240 = scmp.ne.s32.totalorder %s225, %s239
      %p241 = scmp.eq.s32.totalorder %s26, 0
      %p242 = por %p240, %p241
      %s244 = sadd.s32 %s243, 1
      %p247 = scmp.eq.s32.totalorder %s20, 1
      %p248 = scmp.ne.s32.totalorder %s243, %s245
      %p249 = scmp.eq.s32.totalorder %s20, 0
      %p250 = por %p248, %p249
      %p251 = scmp.ne.s32.totalorder %s243, %s245
      %p252 = scmp.eq.s32.totalorder %s25, 1
      %p253 = por %p251, %p252
      %p254 = scmp.ne.s32.totalorder %s245, %s246
      %p255 = scmp.eq.s32.totalorder %s25, 0
      %p256 = por %p254, %p255
      %p257 = scmp.ne.s32.totalorder %s245, %s246
      %p258 = scmp.eq.s32.totalorder %s26, 1
      %p259 = por %p257, %p258
      %p261 = scmp.ne.s32.totalorder %s246, %s260
      %p262 = scmp.eq.s32.totalorder %s26, 0
      %p263 = por %p261, %p262
      %s264 = ssub.s32 %s20, %s27
      %p265 = scmp.eq.s32.totalorder %s264, 0
      %s267 = sadd.s32 %s266, 1
      %s268 = scalar_select %p265, %s266, %s267
      %p271 = pneg %p265
      %p272 = scmp.eq.s32.totalorder %s20, 1
      %p273 = por %p271, %p272
      %p274 = scmp.ne.s32.totalorder %s266, %s269
      %p275 = scmp.eq.s32.totalorder %s20, 0
      %p276 = por %p274, %p275
      %p277 = scmp.ne.s32.totalorder %s266, %s269
      %p278 = scmp.eq.s32.totalorder %s25, 1
      %p279 = por %p277, %p278
      %p280 = scmp.ne.s32.totalorder %s269, %s270
      %p281 = scmp.eq.s32.totalorder %s25, 0
      %p282 = por %p280, %p281
      %p283 = scmp.ne.s32.totalorder %s269, %s270
      %p284 = scmp.eq.s32.totalorder %s26, 1
      %p285 = por %p283, %p284
      %p287 = scmp.ne.s32.totalorder %s270, %s286
      %p288 = scmp.eq.s32.totalorder %s26, 0
      %p289 = por %p287, %p288
      %p290 = scmp.le.s32.totalorder 1, %s20
      %p291 = scmp.lt.s32.totalorder %s20, 3
      %p292 = pnand %p290, %p291
      %p293 = pneg %p292
      // Predicated region
      $region9: #{cnn_forward.1} parent=5 // pred_check
        _
      $region10: #{cnn_forward.1} parent=5 // pred_check_branch
        %295 = sbr.rel (%p292) target = $region12
      $region11: #{cnn_forward.1} parent=5 // pred_region
        %s296 = ssub.s32 %s20, 1
        // Predicated region
        $region13: #{cnn_forward.1} parent=11 // pred_check
          %p297 = pneg %p67
        $region14: #{cnn_forward.1} parent=11 // pred_check_branch
          %299 = sbr.rel (%p297) target = $region16
        $region15: #{cnn_forward.1} parent=11 // pred_region
          _
        $region16: #{cnn_forward.1} parent=11 // pred_fallthru
          _
        // Predicated region
        $region17: #{cnn_forward.1} parent=11 // pred_check
          %p300 = pneg %p88
        $region18: #{cnn_forward.1} parent=11 // pred_check_branch
          %302 = sbr.rel (%p300) target = $region20
        $region19: #{cnn_forward.1} parent=11 // pred_region
          _
        $region20: #{cnn_forward.1} parent=11 // pred_fallthru
          _
        // Predicated region
        $region21: #{cnn_forward.1} parent=11 // pred_check
          %p303 = pneg %p109
        $region22: #{cnn_forward.1} parent=11 // pred_check_branch
          %305 = sbr.rel (%p303) target = $region24
        $region23: #{cnn_forward.1} parent=11 // pred_region
          _
        $region24: #{cnn_forward.1} parent=11 // pred_fallthru
          _
        // Predicated region
        $region25: #{cnn_forward.1} parent=11 // pred_check
          %p306 = pneg %p130
        $region26: #{cnn_forward.1} parent=11 // pred_check_branch
          %308 = sbr.rel (%p306) target = $region28
        $region27: #{cnn_forward.1} parent=11 // pred_region
          _
        $region28: #{cnn_forward.1} parent=11 // pred_fallthru
          _
        // Predicated region
        $region29: #{cnn_forward.1} parent=11 // pred_check
          %p309 = pneg %p151
        $region30: #{cnn_forward.1} parent=11 // pred_check_branch
          %311 = sbr.rel (%p309) target = $region32
        $region31: #{cnn_forward.1} parent=11 // pred_region
          _
        $region32: #{cnn_forward.1} parent=11 // pred_fallthru
          _
        // Predicated region
        $region33: #{cnn_forward.1} parent=11 // pred_check
          %p312 = pneg %p172
        $region34: #{cnn_forward.1} parent=11 // pred_check_branch
          %314 = sbr.rel (%p312) target = $region36
        $region35: #{cnn_forward.1} parent=11 // pred_region
          _
        $region36: #{cnn_forward.1} parent=11 // pred_fallthru
          _
        // Predicated region
        $region37: #{cnn_forward.1} parent=11 // pred_check
          %p315 = pneg %p193
        $region38: #{cnn_forward.1} parent=11 // pred_check_branch
          %317 = sbr.rel (%p315) target = $region40
        $region39: #{cnn_forward.1} parent=11 // pred_region
          _
        $region40: #{cnn_forward.1} parent=11 // pred_fallthru
          _
        // Predicated region
        $region41: #{cnn_forward.1} parent=11 // pred_check
          %p318 = pneg %p214
        $region42: #{cnn_forward.1} parent=11 // pred_check_branch
          %320 = sbr.rel (%p318) target = $region44
        $region43: #{cnn_forward.1} parent=11 // pred_region
          _
        $region44: #{cnn_forward.1} parent=11 // pred_fallthru
          _
        // Predicated region
        $region45: #{cnn_forward.1} parent=11 // pred_check
          %p321 = pneg %p235
        $region46: #{cnn_forward.1} parent=11 // pred_check_branch
          %323 = sbr.rel (%p321) target = $region48
        $region47: #{cnn_forward.1} parent=11 // pred_region
          _
        $region48: #{cnn_forward.1} parent=11 // pred_fallthru
          _
        // Predicated region
        $region49: #{cnn_forward.1} parent=11 // pred_check
          %p324 = pneg %p256
        $region50: #{cnn_forward.1} parent=11 // pred_check_branch
          %326 = sbr.rel (%p324) target = $region52
        $region51: #{cnn_forward.1} parent=11 // pred_region
          _
        $region52: #{cnn_forward.1} parent=11 // pred_fallthru
          _
      $region12: #{cnn_forward.1} parent=5 // pred_fallthru
        _
      %p327 = scmp.lt.s32.totalorder %s20, 2
      // Predicated region
      $region53: #{cnn_forward.1} parent=5 // pred_check
        %p328 = pneg %p327
      $region54: #{cnn_forward.1} parent=5 // pred_check_branch
        %330 = sbr.rel (%p328) target = $region56
      $region55: #{cnn_forward.1} parent=5 // pred_region
        // Predicated region
        $region57: #{cnn_forward.1} parent=55 // pred_check
          %p331 = pneg %p40
        $region58: #{cnn_forward.1} parent=55 // pred_check_branch
          %333 = sbr.rel (%p331) target = $region60
        $region59: #{cnn_forward.1} parent=55 // pred_region
          %p334 = scmp.lt.s32.totalorder %s20, 1
          %s335 = scalar_select %p334, %s20, 1
          %s336 = smul.addr %s335, 16
          %s337 = smul.addr %s336, 8
          %s338 = scalar_lea.vmem %s0, %s337
        $region60: #{cnn_forward.1} parent=55 // pred_fallthru
          _
      $region56: #{cnn_forward.1} parent=5 // pred_fallthru
        _
      %p339 = scmp.le.s32.totalorder 1, %s20
      %p340 = scmp.lt.s32.totalorder %s20, 3
      %p341 = pnand %p339, %p340
      %p342 = pneg %p341
      // Predicated region
      $region61: #{cnn_forward.1} parent=5 // pred_check
        _
      $region62: #{cnn_forward.1} parent=5 // pred_check_branch
        %344 = sbr.rel (%p341) target = $region64
      $region63: #{cnn_forward.1} parent=5 // pred_region
        %s345 = ssub.s32 %s20, 1
        %p346 = scmp.lt.s32.totalorder %s25, 1
        %s347 = scalar_select %p346, %s25, 1
        %s348 = smul.addr %s347, 16
        %s349 = smul.addr %s348, 8
        %s350 = scalar_lea.vmem %s0, %s349
        %p351 = pneg %p46
        %p352 = pneg %p43
        %p353 = pneg %p67
        %p354 = pneg %p64
        %p355 = pneg %p88
        %p356 = pneg %p85
        %p357 = pneg %p109
        %p358 = pneg %p106
        %p359 = pneg %p130
        %p360 = pneg %p127
        %p361 = pneg %p151
        %p362 = pneg %p148
        %p363 = pneg %p172
        %p364 = pneg %p169
        %p365 = pneg %p193
        %p366 = pneg %p190
        %p367 = pneg %p214
        %p368 = pneg %p211
        %p369 = pneg %p235
        %p370 = pneg %p232
        %p371 = pneg %p256
        %p372 = pneg %p253
        %p373 = pneg %p282
        %p374 = pneg %p279
        %s375 = sand.u32 %s269, 1
        %s376 = scalar_lea.sflag [#allocation3], %s375
        %s377 = sand.u32 %s269, 1
        %s378 = scalar_lea.vmem [#allocation2], %s377
        %p379 = scmp.lt.s32.totalorder %s25, 1
        %s380 = scalar_select %p379, %s25, 1
        %s381 = smul.addr %s380, 16
        %s382 = smul.addr %s381, 8
        %s383 = scalar_lea.vmem %s0, %s382
        %v384 = vld [vmem:[%s383] sm:$0xff]
        %v385 = vld [vmem:[%s383 + $0x8] sm:$0xff]
        %v386 = vld [vmem:[%s383 + $0x10] sm:$0xff]
        %v387 = vld [vmem:[%s383 + $0x18] sm:$0xff]
        %v388 = vld [vmem:[%s383 + $0x20] sm:$0xff]
        %v389 = vld [vmem:[%s383 + $0x28] sm:$0xff]
        %v390 = vld [vmem:[%s383 + $0x30] sm:$0xff]
        %v391 = vld [vmem:[%s383 + $0x38] sm:$0xff]
        %v392 = vld [vmem:[%s383 + $0x40] sm:$0xf]
        %v393 = vld [vmem:[%s383 + $0x48] sm:$0xf]
        %v394 = vld [vmem:[%s383 + $0x50] sm:$0xf]
        %v395 = vld [vmem:[%s383 + $0x58] sm:$0xf]
        %v396 = vld [vmem:[%s383 + $0x60] sm:$0xf]
        %v397 = vld [vmem:[%s383 + $0x68] sm:$0xf]
        %v398 = vld [vmem:[%s383 + $0x70] sm:$0xf]
        %v399 = vld [vmem:[%s383 + $0x78] sm:$0xf]
        %v400 = vld [vmem:[%s1] sm:$0xff]
        %v401 = vld [vmem:[%s1 + $0x8] sm:$0xff]
        %vm402 = vcmask 97280
        %v404 = vsel %vm402, %v400, 0
        %v407 = vsel %vm402, %v401, 0
        %vm409 = vcmask 1043456
        %v411 = vsel %vm409, %v392, 0
        %v414 = vsel %vm409, %v393, 0
        %v417 = vsel %vm409, %v394, 0
        %v420 = vsel %vm409, %v395, 0
        %v423 = vsel %vm409, %v396, 0
        %v426 = vsel %vm409, %v397, 0
        %v429 = vsel %vm409, %v398, 0
        %v432 = vsel %vm409, %v399, 0
        %434 = vmatprep.subr.mxu0 0.0
        %435 = vmatpush1.msra.mxu0 0.0
        %436 = vmatprep.subr.mxu0 0.0
        %437 = vmatpush1.msra.mxu0 0.0
        %438 = vmatprep.subr.mxu0 0.0
        %439 = vmatpush1.msra.mxu0 0.0
        %440 = vmatprep.subr.mxu0 0.0
        %441 = vmatpush1.msra.mxu0 0.0
        %442 = vmatprep.subr.mxu0 0.0
        %443 = vmatpush1.msra.mxu0 0.0
        %444 = vmatprep.subr.mxu0 0.0
        %445 = vmatpush1.msra.mxu0 0.0
        %446 = vmatprep.subr.mxu0 0.0
        %447 = vmatpush1.msra.mxu0 0.0
        %448 = vmatprep.subr.mxu0 0.0
        %449 = vmatpush1.msra.mxu0 0.0
        %450 = vmatprep.subr.mxu0 0.0
        %451 = vmatpush1.msra.mxu0 0.0
        %452 = vmatprep.subr.mxu0 0.0
        %453 = vmatpush1.msra.mxu0 0.0
        %454 = vmatprep.subr.mxu0 0.0
        %455 = vmatpush1.msra.mxu0 0.0
        %456 = vmatprep.subr.mxu0 0.0
        %457 = vmatpush1.msra.mxu0 0.0
        %458 = vmatprep.subr.mxu0 0.0
        %459 = vmatpush1.msra.mxu0 0.0
        %460 = vmatprep.subr.mxu0 0.0
        %461 = vmatpush1.msra.mxu0 0.0
        %462 = vmatprep.subr.mxu0 %v414
        %463 = vmatpush1.msra.mxu0 %v411
        %464 = vmatprep.subr.mxu0 %v385
        %465 = vmatpush1.msra.mxu0 %v384
        %466 = vmatprep.subr.mxu0 0.0
        %467 = vmatpush2.msra.mxu0 0.0
        %468 = vmatprep.subr.mxu0 0.0
        %469 = vmatpush2.msra.mxu0 0.0
        %470 = vmatprep.subr.mxu0 0.0
        %471 = vmatpush2.msra.mxu0 0.0
        %472 = vmatprep.subr.mxu0 0.0
        %473 = vmatpush2.msra.mxu0 0.0
        %474 = vmatprep.subr.mxu0 0.0
        %475 = vmatpush2.msra.mxu0 0.0
        %476 = vmatprep.subr.mxu0 0.0
        %477 = vmatpush2.msra.mxu0 0.0
        %478 = vmatprep.subr.mxu0 0.0
        %479 = vmatpush2.msra.mxu0 0.0
        %480 = vmatprep.subr.mxu0 0.0
        %481 = vmatpush2.msra.mxu0 0.0
        %482 = vmatprep.subr.mxu0 0.0
        %483 = vmatpush2.msra.mxu0 0.0
        %484 = vmatprep.subr.mxu0 0.0
        %485 = vmatpush2.msra.mxu0 0.0
        %486 = vmatprep.subr.mxu0 0.0
        %487 = vmatpush2.msra.mxu0 0.0
        %488 = vmatprep.subr.mxu0 0.0
        %489 = vmatpush2.msra.mxu0 0.0
        %490 = vmatprep.subr.mxu0 0.0
        %491 = vmatpush2.msra.mxu0 0.0
        %492 = vmatprep.subr.mxu0 0.0
        %493 = vmatpush2.msra.mxu0 0.0
        %494 = vmatprep.subr.mxu0 0.0
        %495 = vmatpush2.msra.mxu0 0.0
        %496 = vmatprep.subr.mxu0 0.0
        %497 = vmatpush2.msra.mxu0 0.0
        %498 = vmatprep.mubr.f32.mxu0 0.0
        %499 = vmatmul.mubr.f32.gmra.mxu0 %v404
        %v500 = vpop.f32.mrf.mxu0
        %v501 = vadd.f32 0.0, %v500
        %v502 = vpop.f32.mrf.mxu0
        %v503 = vadd.f32 0.0, %v502
        %504 = vmatprep.mubr.f32.mxu0 0.0
        %505 = vmatmul.mubr.f32.gmra.mxu0 %v407
        %v506 = vpop.f32.mrf.mxu0
        %v507 = vadd.f32 0.0, %v506
        %v508 = vpop.f32.mrf.mxu0
        %v509 = vadd.f32 0.0, %v508
        %510 = vdwg.mxu0
        %511 = vmatprep.subr.mxu0 0.0
        %512 = vmatpush1.msra.mxu0 0.0
        %513 = vmatprep.subr.mxu0 0.0
        %514 = vmatpush1.msra.mxu0 0.0
        %515 = vmatprep.subr.mxu0 0.0
        %516 = vmatpush1.msra.mxu0 0.0
        %517 = vmatprep.subr.mxu0 0.0
        %518 = vmatpush1.msra.mxu0 0.0
        %519 = vmatprep.subr.mxu0 0.0
        %520 = vmatpush1.msra.mxu0 0.0
        %521 = vmatprep.subr.mxu0 0.0
        %522 = vmatpush1.msra.mxu0 0.0
        %523 = vmatprep.subr.mxu0 0.0
        %524 = vmatpush1.msra.mxu0 0.0
        %525 = vmatprep.subr.mxu0 0.0
        %526 = vmatpush1.msra.mxu0 0.0
        %527 = vmatprep.subr.mxu0 0.0
        %528 = vmatpush1.msra.mxu0 0.0
        %529 = vmatprep.subr.mxu0 0.0
        %530 = vmatpush1.msra.mxu0 0.0
        %531 = vmatprep.subr.mxu0 0.0
        %532 = vmatpush1.msra.mxu0 0.0
        %533 = vmatprep.subr.mxu0 0.0
        %534 = vmatpush1.msra.mxu0 0.0
        %535 = vmatprep.subr.mxu0 0.0
        %536 = vmatpush1.msra.mxu0 0.0
        %537 = vmatprep.subr.mxu0 0.0
        %538 = vmatpush1.msra.mxu0 0.0
        %539 = vmatprep.subr.mxu0 %v420
        %540 = vmatpush1.msra.mxu0 %v417
        %541 = vmatprep.subr.mxu0 %v387
        %542 = vmatpush1.msra.mxu0 %v386
        %543 = vmatprep.subr.mxu0 0.0
        %544 = vmatpush2.msra.mxu0 0.0
        %545 = vmatprep.subr.mxu0 0.0
        %546 = vmatpush2.msra.mxu0 0.0
        %547 = vmatprep.subr.mxu0 0.0
        %548 = vmatpush2.msra.mxu0 0.0
        %549 = vmatprep.subr.mxu0 0.0
        %550 = vmatpush2.msra.mxu0 0.0
        %551 = vmatprep.subr.mxu0 0.0
        %552 = vmatpush2.msra.mxu0 0.0
        %553 = vmatprep.subr.mxu0 0.0
        %554 = vmatpush2.msra.mxu0 0.0
        %555 = vmatprep.subr.mxu0 0.0
        %556 = vmatpush2.msra.mxu0 0.0
        %557 = vmatprep.subr.mxu0 0.0
        %558 = vmatpush2.msra.mxu0 0.0
        %559 = vmatprep.subr.mxu0 0.0
        %560 = vmatpush2.msra.mxu0 0.0
        %561 = vmatprep.subr.mxu0 0.0
        %562 = vmatpush2.msra.mxu0 0.0
        %563 = vmatprep.subr.mxu0 0.0
        %564 = vmatpush2.msra.mxu0 0.0
        %565 = vmatprep.subr.mxu0 0.0
        %566 = vmatpush2.msra.mxu0 0.0
        %567 = vmatprep.subr.mxu0 0.0
        %568 = vmatpush2.msra.mxu0 0.0
        %569 = vmatprep.subr.mxu0 0.0
        %570 = vmatpush2.msra.mxu0 0.0
        %571 = vmatprep.subr.mxu0 0.0
        %572 = vmatpush2.msra.mxu0 0.0
        %573 = vmatprep.subr.mxu0 0.0
        %574 = vmatpush2.msra.mxu0 0.0
        %575 = vmatprep.mubr.f32.mxu0 0.0
        %576 = vmatmul.mubr.f32.gmra.mxu0 %v404
        %v577 = vpop.f32.mrf.mxu0
        %v578 = vadd.f32 0.0, %v577
        %v579 = vpop.f32.mrf.mxu0
        %v580 = vadd.f32 0.0, %v579
        %581 = vmatprep.mubr.f32.mxu0 0.0
        %582 = vmatmul.mubr.f32.gmra.mxu0 %v407
        %v583 = vpop.f32.mrf.mxu0
        %v584 = vadd.f32 0.0, %v583
        %v585 = vpop.f32.mrf.mxu0
        %v586 = vadd.f32 0.0, %v585
        %587 = vdwg.mxu0
        %588 = vmatprep.subr.mxu0 0.0
        %589 = vmatpush1.msra.mxu0 0.0
        %590 = vmatprep.subr.mxu0 0.0
        %591 = vmatpush1.msra.mxu0 0.0
        %592 = vmatprep.subr.mxu0 0.0
        %593 = vmatpush1.msra.mxu0 0.0
        %594 = vmatprep.subr.mxu0 0.0
        %595 = vmatpush1.msra.mxu0 0.0
        %596 = vmatprep.subr.mxu0 0.0
        %597 = vmatpush1.msra.mxu0 0.0
        %598 = vmatprep.subr.mxu0 0.0
        %599 = vmatpush1.msra.mxu0 0.0
        %600 = vmatprep.subr.mxu0 0.0
        %601 = vmatpush1.msra.mxu0 0.0
        %602 = vmatprep.subr.mxu0 0.0
        %603 = vmatpush1.msra.mxu0 0.0
        %604 = vmatprep.subr.mxu0 0.0
        %605 = vmatpush1.msra.mxu0 0.0
        %606 = vmatprep.subr.mxu0 0.0
        %607 = vmatpush1.msra.mxu0 0.0
        %608 = vmatprep.subr.mxu0 0.0
        %609 = vmatpush1.msra.mxu0 0.0
        %610 = vmatprep.subr.mxu0 0.0
        %611 = vmatpush1.msra.mxu0 0.0
        %612 = vmatprep.subr.mxu0 0.0
        %613 = vmatpush1.msra.mxu0 0.0
        %614 = vmatprep.subr.mxu0 0.0
        %615 = vmatpush1.msra.mxu0 0.0
        %616 = vmatprep.subr.mxu0 %v426
        %617 = vmatpush1.msra.mxu0 %v423
        %618 = vmatprep.subr.mxu0 %v389
        %619 = vmatpush1.msra.mxu0 %v388
        %620 = vmatprep.subr.mxu0 0.0
        %621 = vmatpush2.msra.mxu0 0.0
        %622 = vmatprep.subr.mxu0 0.0
        %623 = vmatpush2.msra.mxu0 0.0
        %624 = vmatprep.subr.mxu0 0.0
        %625 = vmatpush2.msra.mxu0 0.0
        %626 = vmatprep.subr.mxu0 0.0
        %627 = vmatpush2.msra.mxu0 0.0
        %628 = vmatprep.subr.mxu0 0.0
        %629 = vmatpush2.msra.mxu0 0.0
        %630 = vmatprep.subr.mxu0 0.0
        %631 = vmatpush2.msra.mxu0 0.0
        %632 = vmatprep.subr.mxu0 0.0
        %633 = vmatpush2.msra.mxu0 0.0
        %634 = vmatprep.subr.mxu0 0.0
        %635 = vmatpush2.msra.mxu0 0.0
        %636 = vmatprep.subr.mxu0 0.0
        %637 = vmatpush2.msra.mxu0 0.0
        %638 = vmatprep.subr.mxu0 0.0
        %639 = vmatpush2.msra.mxu0 0.0
        %640 = vmatprep.subr.mxu0 0.0
        %641 = vmatpush2.msra.mxu0 0.0
        %642 = vmatprep.subr.mxu0 0.0
        %643 = vmatpush2.msra.mxu0 0.0
        %644 = vmatprep.subr.mxu0 0.0
        %645 = vmatpush2.msra.mxu0 0.0
        %646 = vmatprep.subr.mxu0 0.0
        %647 = vmatpush2.msra.mxu0 0.0
        %648 = vmatprep.subr.mxu0 0.0
        %649 = vmatpush2.msra.mxu0 0.0
        %650 = vmatprep.subr.mxu0 0.0
        %651 = vmatpush2.msra.mxu0 0.0
        %652 = vmatprep.mubr.f32.mxu0 0.0
        %653 = vmatmul.mubr.f32.gmra.mxu0 %v404
        %v654 = vpop.f32.mrf.mxu0
        %v655 = vadd.f32 0.0, %v654
        %v656 = vpop.f32.mrf.mxu0
        %v657 = vadd.f32 0.0, %v656
        %658 = vmatprep.mubr.f32.mxu0 0.0
        %659 = vmatmul.mubr.f32.gmra.mxu0 %v407
        %v660 = vpop.f32.mrf.mxu0
        %v661 = vadd.f32 0.0, %v660
        %v662 = vpop.f32.mrf.mxu0
        %v663 = vadd.f32 0.0, %v662
        %664 = vdwg.mxu0
        %665 = vmatprep.subr.mxu0 0.0
        %666 = vmatpush1.msra.mxu0 0.0
        %667 = vmatprep.subr.mxu0 0.0
        %668 = vmatpush1.msra.mxu0 0.0
        %669 = vmatprep.subr.mxu0 0.0
        %670 = vmatpush1.msra.mxu0 0.0
        %671 = vmatprep.subr.mxu0 0.0
        %672 = vmatpush1.msra.mxu0 0.0
        %673 = vmatprep.subr.mxu0 0.0
        %674 = vmatpush1.msra.mxu0 0.0
        %675 = vmatprep.subr.mxu0 0.0
        %676 = vmatpush1.msra.mxu0 0.0
        %677 = vmatprep.subr.mxu0 0.0
        %678 = vmatpush1.msra.mxu0 0.0
        %679 = vmatprep.subr.mxu0 0.0
        %680 = vmatpush1.msra.mxu0 0.0
        %681 = vmatprep.subr.mxu0 0.0
        %682 = vmatpush1.msra.mxu0 0.0
        %683 = vmatprep.subr.mxu0 0.0
        %684 = vmatpush1.msra.mxu0 0.0
        %685 = vmatprep.subr.mxu0 0.0
        %686 = vmatpush1.msra.mxu0 0.0
        %687 = vmatprep.subr.mxu0 0.0
        %688 = vmatpush1.msra.mxu0 0.0
        %689 = vmatprep.subr.mxu0 0.0
        %690 = vmatpush1.msra.mxu0 0.0
        %691 = vmatprep.subr.mxu0 0.0
        %692 = vmatpush1.msra.mxu0 0.0
        %693 = vmatprep.subr.mxu0 %v432
        %694 = vmatpush1.msra.mxu0 %v429
        %695 = vmatprep.subr.mxu0 %v391
        %696 = vmatpush1.msra.mxu0 %v390
        %697 = vmatprep.subr.mxu0 0.0
        %698 = vmatpush2.msra.mxu0 0.0
        %699 = vmatprep.subr.mxu0 0.0
        %700 = vmatpush2.msra.mxu0 0.0
        %701 = vmatprep.subr.mxu0 0.0
        %702 = vmatpush2.msra.mxu0 0.0
        %703 = vmatprep.subr.mxu0 0.0
        %704 = vmatpush2.msra.mxu0 0.0
        %705 = vmatprep.subr.mxu0 0.0
        %706 = vmatpush2.msra.mxu0 0.0
        %707 = vmatprep.subr.mxu0 0.0
        %708 = vmatpush2.msra.mxu0 0.0
        %709 = vmatprep.subr.mxu0 0.0
        %710 = vmatpush2.msra.mxu0 0.0
        %711 = vmatprep.subr.mxu0 0.0
        %712 = vmatpush2.msra.mxu0 0.0
        %713 = vmatprep.subr.mxu0 0.0
        %714 = vmatpush2.msra.mxu0 0.0
        %715 = vmatprep.subr.mxu0 0.0
        %716 = vmatpush2.msra.mxu0 0.0
        %717 = vmatprep.subr.mxu0 0.0
        %718 = vmatpush2.msra.mxu0 0.0
        %719 = vmatprep.subr.mxu0 0.0
        %720 = vmatpush2.msra.mxu0 0.0
        %721 = vmatprep.subr.mxu0 0.0
        %722 = vmatpush2.msra.mxu0 0.0
        %723 = vmatprep.subr.mxu0 0.0
        %724 = vmatpush2.msra.mxu0 0.0
        %725 = vmatprep.subr.mxu0 0.0
        %726 = vmatpush2.msra.mxu0 0.0
        %727 = vmatprep.subr.mxu0 0.0
        %728 = vmatpush2.msra.mxu0 0.0
        %729 = vmatprep.mubr.f32.mxu0 0.0
        %730 = vmatmul.mubr.f32.gmra.mxu0 %v404
        %v731 = vpop.f32.mrf.mxu0
        %v732 = vadd.f32 0.0, %v731
        %v733 = vpop.f32.mrf.mxu0
        %v734 = vadd.f32 0.0, %v733
        %735 = vmatprep.mubr.f32.mxu0 0.0
        %736 = vmatmul.mubr.f32.gmra.mxu0 %v407
        %v737 = vpop.f32.mrf.mxu0
        %v738 = vadd.f32 0.0, %v737
        %v739 = vpop.f32.mrf.mxu0
        %v740 = vadd.f32 0.0, %v739
        %741 = vdwg.mxu0
        %v742 = vmax.f32 %v501, %v578
        %v743 = vmax.f32 %v503, %v580
        %v744 = vmax.f32 %v507, %v584
        %v745 = vmax.f32 %v509, %v586
        %v746 = vmax.f32 %v655, %v732
        %v747 = vmax.f32 %v657, %v734
        %v748 = vmax.f32 %v661, %v738
        %v749 = vmax.f32 %v663, %v740
        %v750 = vmax.f32 %v742, %v746
        %v751 = vmax.f32 %v743, %v747
        %v752 = vmax.f32 %v744, %v748
        %v753 = vmax.f32 %v745, %v749
        %v754 = vld [vmem:[%s2] sm:$0xff]
        %v755 = vld [vmem:[%s2 + $0x8] sm:$0xff]
        %757 = vset.pattern.permute.xlu0 0
        %758 = vperm.xlu0 %757, %v754
        %v759 = vpop.permute.xlu0 %758
        %762 = vset.pattern.permute.xlu0 0
        %763 = vperm.xlu0 %762, %v755
        %v764 = vpop.permute.xlu0 %763
        %v766 = vadd.f32 %v750, %v759
        %v767 = vadd.f32 %v751, %v759
        %v768 = vadd.f32 %v752, %v764
        %v769 = vadd.f32 %v753, %v764
        %v770 = vmax.f32 %v766, 0.0
        %v771 = vmax.f32 %v767, 0.0
        %v772 = vmax.f32 %v768, 0.0
        %v773 = vmax.f32 %v769, 0.0
        %v774 = vld [vmem:[%s3] sm:$0xff]
        %v775 = vld [vmem:[%s3 + $0x8] sm:$0xff]
        %v776 = vld [vmem:[%s3 + $0x10] sm:$0xff]
        %v777 = vld [vmem:[%s3 + $0x18] sm:$0xff]
        %v778 = vld [vmem:[%s3 + $0x20] sm:$0xff]
        %v779 = vld [vmem:[%s3 + $0x28] sm:$0xff]
        %v780 = vld [vmem:[%s3 + $0x30] sm:$0xff]
        %v781 = vld [vmem:[%s3 + $0x38] sm:$0xff]
        %v782 = vld [vmem:[%s3 + $0x40] sm:$0xff]
        %v783 = vld [vmem:[%s3 + $0x48] sm:$0xff]
        %v784 = vld [vmem:[%s3 + $0x50] sm:$0xff]
        %v785 = vld [vmem:[%s3 + $0x58] sm:$0xff]
        %v786 = vld [vmem:[%s3 + $0x60] sm:$0xff]
        %v787 = vld [vmem:[%s3 + $0x68] sm:$0xff]
        %v788 = vld [vmem:[%s3 + $0x70] sm:$0xff]
        %v789 = vld [vmem:[%s3 + $0x78] sm:$0xff]
        %v790 = vld [vmem:[%s3 + $0x80] sm:$0xff]
        %v791 = vld [vmem:[%s3 + $0x88] sm:$0xff]
        %v792 = vld [vmem:[%s3 + $0x90] sm:$0xff]
        %v793 = vld [vmem:[%s3 + $0x98] sm:$0xff]
        %v794 = vld [vmem:[%s3 + $0xa0] sm:$0xff]
        %v795 = vld [vmem:[%s3 + $0xa8] sm:$0xff]
        %v796 = vld [vmem:[%s3 + $0xb0] sm:$0xff]
        %v797 = vld [vmem:[%s3 + $0xb8] sm:$0xff]
        %v798 = vld [vmem:[%s3 + $0xc0] sm:$0xff]
        %v799 = vld [vmem:[%s3 + $0xc8] sm:$0xff]
        %v800 = vld [vmem:[%s3 + $0xd0] sm:$0xff]
        %v801 = vld [vmem:[%s3 + $0xd8] sm:$0xff]
        %v802 = vld [vmem:[%s3 + $0xe0] sm:$0xff]
        %v803 = vld [vmem:[%s3 + $0xe8] sm:$0xff]
        %v804 = vld [vmem:[%s3 + $0xf0] sm:$0xff]
        %v805 = vld [vmem:[%s3 + $0xf8] sm:$0xff]
        %v806 = vld [vmem:[%s3 + $0x100] sm:$0xff]
        %v807 = vld [vmem:[%s3 + $0x108] sm:$0xff]
        %v808 = vld [vmem:[%s3 + $0x110] sm:$0xff]
        %v809 = vld [vmem:[%s3 + $0x118] sm:$0xff]
        %v810 = vld [vmem:[%s3 + $0x120] sm:$0xff]
        %v811 = vld [vmem:[%s3 + $0x128] sm:$0xff]
        %v812 = vld [vmem:[%s3 + $0x130] sm:$0xff]
        %v813 = vld [vmem:[%s3 + $0x138] sm:$0xff]
        %v814 = vld [vmem:[%s3 + $0x140] sm:$0xff]
        %v815 = vld [vmem:[%s3 + $0x148] sm:$0xff]
        %v816 = vld [vmem:[%s3 + $0x150] sm:$0xff]
        %v817 = vld [vmem:[%s3 + $0x158] sm:$0xff]
        %v818 = vld [vmem:[%s3 + $0x160] sm:$0xff]
        %v819 = vld [vmem:[%s3 + $0x168] sm:$0xff]
        %v820 = vld [vmem:[%s3 + $0x170] sm:$0xff]
        %v821 = vld [vmem:[%s3 + $0x178] sm:$0xff]
        %v822 = vld [vmem:[%s3 + $0x180] sm:$0xff]
        %v823 = vld [vmem:[%s3 + $0x188] sm:$0xff]
        %v824 = vld [vmem:[%s3 + $0x190] sm:$0xff]
        %v825 = vld [vmem:[%s3 + $0x198] sm:$0xff]
        %v826 = vld [vmem:[%s3 + $0x1a0] sm:$0xff]
        %v827 = vld [vmem:[%s3 + $0x1a8] sm:$0xff]
        %v828 = vld [vmem:[%s3 + $0x1b0] sm:$0xff]
        %v829 = vld [vmem:[%s3 + $0x1b8] sm:$0xff]
        %v830 = vld [vmem:[%s3 + $0x1c0] sm:$0xff]
        %v831 = vld [vmem:[%s3 + $0x1c8] sm:$0xff]
        %v832 = vld [vmem:[%s3 + $0x1d0] sm:$0xff]
        %v833 = vld [vmem:[%s3 + $0x1d8] sm:$0xff]
        %v834 = vld [vmem:[%s3 + $0x1e0] sm:$0xff]
        %v835 = vld [vmem:[%s3 + $0x1e8] sm:$0xff]
        %v836 = vld [vmem:[%s3 + $0x1f0] sm:$0xff]
        %v837 = vld [vmem:[%s3 + $0x1f8] sm:$0xff]
        %vm838 = vcmask 130048
        %v840 = vsel %vm838, %v774, 0
        %v843 = vsel %vm838, %v775, 0
        %v846 = vsel %vm838, %v776, 0
        %v849 = vsel %vm838, %v777, 0
        %v852 = vsel %vm838, %v778, 0
        %v855 = vsel %vm838, %v779, 0
        %v858 = vsel %vm838, %v780, 0
        %v861 = vsel %vm838, %v781, 0
        %v864 = vsel %vm838, %v782, 0
        %v867 = vsel %vm838, %v783, 0
        %v870 = vsel %vm838, %v784, 0
        %v873 = vsel %vm838, %v785, 0
        %v876 = vsel %vm838, %v786, 0
        %v879 = vsel %vm838, %v787, 0
        %v882 = vsel %vm838, %v788, 0
        %v885 = vsel %vm838, %v789, 0
        %v888 = vsel %vm838, %v790, 0
        %v891 = vsel %vm838, %v791, 0
        %v894 = vsel %vm838, %v792, 0
        %v897 = vsel %vm838, %v793, 0
        %v900 = vsel %vm838, %v794, 0
        %v903 = vsel %vm838, %v795, 0
        %v906 = vsel %vm838, %v796, 0
        %v909 = vsel %vm838, %v797, 0
        %v912 = vsel %vm838, %v798, 0
        %v915 = vsel %vm838, %v799, 0
        %v918 = vsel %vm838, %v800, 0
        %v921 = vsel %vm838, %v801, 0
        %v924 = vsel %vm838, %v802, 0
        %v927 = vsel %vm838, %v803, 0
        %v930 = vsel %vm838, %v804, 0
        %v933 = vsel %vm838, %v805, 0
        %v936 = vsel %vm838, %v806, 0
        %v939 = vsel %vm838, %v807, 0
        %v942 = vsel %vm838, %v808, 0
        %v945 = vsel %vm838, %v809, 0
        %v948 = vsel %vm838, %v810, 0
        %v951 = vsel %vm838, %v811, 0
        %v954 = vsel %vm838, %v812, 0
        %v957 = vsel %vm838, %v813, 0
        %v960 = vsel %vm838, %v814, 0
        %v963 = vsel %vm838, %v815, 0
        %v966 = vsel %vm838, %v816, 0
        %v969 = vsel %vm838, %v817, 0
        %v972 = vsel %vm838, %v818, 0
        %v975 = vsel %vm838, %v819, 0
        %v978 = vsel %vm838, %v820, 0
        %v981 = vsel %vm838, %v821, 0
        %v984 = vsel %vm838, %v822, 0
        %v987 = vsel %vm838, %v823, 0
        %v990 = vsel %vm838, %v824, 0
        %v993 = vsel %vm838, %v825, 0
        %v996 = vsel %vm838, %v826, 0
        %v999 = vsel %vm838, %v827, 0
        %v1002 = vsel %vm838, %v828, 0
        %v1005 = vsel %vm838, %v829, 0
        %v1008 = vsel %vm838, %v830, 0
        %v1011 = vsel %vm838, %v831, 0
        %v1014 = vsel %vm838, %v832, 0
        %v1017 = vsel %vm838, %v833, 0
        %v1020 = vsel %vm838, %v834, 0
        %v1023 = vsel %vm838, %v835, 0
        %v1026 = vsel %vm838, %v836, 0
        %v1029 = vsel %vm838, %v837, 0
        %1031 = vmatprep.subr.mxu0 0.0
        %1032 = vmatpush1.msra.mxu0 0.0
        %1033 = vmatprep.subr.mxu0 0.0
        %1034 = vmatpush1.msra.mxu0 0.0
        %1035 = vmatprep.subr.mxu0 0.0
        %1036 = vmatpush1.msra.mxu0 0.0
        %1037 = vmatprep.subr.mxu0 0.0
        %1038 = vmatpush1.msra.mxu0 0.0
        %1039 = vmatprep.subr.mxu0 0.0
        %1040 = vmatpush1.msra.mxu0 0.0
        %1041 = vmatprep.subr.mxu0 0.0
        %1042 = vmatpush1.msra.mxu0 0.0
        %1043 = vmatprep.subr.mxu0 0.0
        %1044 = vmatpush1.msra.mxu0 0.0
        %1045 = vmatprep.subr.mxu0 0.0
        %1046 = vmatpush1.msra.mxu0 0.0
        %1047 = vmatprep.subr.mxu0 0.0
        %1048 = vmatpush1.msra.mxu0 0.0
        %1049 = vmatprep.subr.mxu0 0.0
        %1050 = vmatpush1.msra.mxu0 0.0
        %1051 = vmatprep.subr.mxu0 0.0
        %1052 = vmatpush1.msra.mxu0 0.0
        %1053 = vmatprep.subr.mxu0 0.0
        %1054 = vmatpush1.msra.mxu0 0.0
        %1055 = vmatprep.subr.mxu0 0.0
        %1056 = vmatpush1.msra.mxu0 0.0
        %1057 = vmatprep.subr.mxu0 0.0
        %1058 = vmatpush1.msra.mxu0 0.0
        %1059 = vmatprep.subr.mxu0 %v773
        %1060 = vmatpush1.msra.mxu0 %v772
        %1061 = vmatprep.subr.mxu0 %v771
        %1062 = vmatpush1.msra.mxu0 %v770
        %1063 = vmatprep.subr.mxu0 0.0
        %1064 = vmatpush2.msra.mxu0 0.0
        %1065 = vmatprep.subr.mxu0 0.0
        %1066 = vmatpush2.msra.mxu0 0.0
        %1067 = vmatprep.subr.mxu0 0.0
        %1068 = vmatpush2.msra.mxu0 0.0
        %1069 = vmatprep.subr.mxu0 0.0
        %1070 = vmatpush2.msra.mxu0 0.0
        %1071 = vmatprep.subr.mxu0 0.0
        %1072 = vmatpush2.msra.mxu0 0.0
        %1073 = vmatprep.subr.mxu0 0.0
        %1074 = vmatpush2.msra.mxu0 0.0
        %1075 = vmatprep.subr.mxu0 0.0
        %1076 = vmatpush2.msra.mxu0 0.0
        %1077 = vmatprep.subr.mxu0 0.0
        %1078 = vmatpush2.msra.mxu0 0.0
        %1079 = vmatprep.subr.mxu0 0.0
        %1080 = vmatpush2.msra.mxu0 0.0
        %1081 = vmatprep.subr.mxu0 0.0
        %1082 = vmatpush2.msra.mxu0 0.0
        %1083 = vmatprep.subr.mxu0 0.0
        %1084 = vmatpush2.msra.mxu0 0.0
        %1085 = vmatprep.subr.mxu0 0.0
        %1086 = vmatpush2.msra.mxu0 0.0
        %1087 = vmatprep.subr.mxu0 0.0
        %1088 = vmatpush2.msra.mxu0 0.0
        %1089 = vmatprep.subr.mxu0 0.0
        %1090 = vmatpush2.msra.mxu0 0.0
        %1091 = vmatprep.subr.mxu0 0.0
        %1092 = vmatpush2.msra.mxu0 0.0
        %1093 = vmatprep.subr.mxu0 0.0
        %1094 = vmatpush2.msra.mxu0 0.0
        %1095 = vmatprep.mubr.f32.mxu0 0.0
        %1096 = vmatmul.mubr.f32.gmra.mxu0 %v840
        %v1097 = vpop.f32.mrf.mxu0
        %v1098 = vadd.f32 0.0, %v1097
        %v1099 = vpop.f32.mrf.mxu0
        %v1100 = vadd.f32 0.0, %v1099
        %1101 = vmatprep.mubr.f32.mxu0 0.0
        %1102 = vmatmul.mubr.f32.gmra.mxu0 %v843
        %v1103 = vpop.f32.mrf.mxu0
        %v1104 = vadd.f32 0.0, %v1103
        %v1105 = vpop.f32.mrf.mxu0
        %v1106 = vadd.f32 0.0, %v1105
        %1107 = vmatprep.mubr.f32.mxu0 0.0
        %1108 = vmatmul.mubr.f32.gmra.mxu0 %v846
        %v1109 = vpop.f32.mrf.mxu0
        %v1110 = vadd.f32 0.0, %v1109
        %v1111 = vpop.f32.mrf.mxu0
        %v1112 = vadd.f32 0.0, %v1111
        %1113 = vmatprep.mubr.f32.mxu0 0.0
        %1114 = vmatmul.mubr.f32.gmra.mxu0 %v849
        %v1115 = vpop.f32.mrf.mxu0
        %v1116 = vadd.f32 0.0, %v1115
        %v1117 = vpop.f32.mrf.mxu0
        %v1118 = vadd.f32 0.0, %v1117
        %1119 = vmatprep.mubr.f32.mxu0 0.0
        %1120 = vmatmul.mubr.f32.gmra.mxu0 %v852
        %v1121 = vpop.f32.mrf.mxu0
        %v1122 = vadd.f32 0.0, %v1121
        %v1123 = vpop.f32.mrf.mxu0
        %v1124 = vadd.f32 0.0, %v1123
        %1125 = vmatprep.mubr.f32.mxu0 0.0
        %1126 = vmatmul.mubr.f32.gmra.mxu0 %v855
        %v1127 = vpop.f32.mrf.mxu0
        %v1128 = vadd.f32 0.0, %v1127
        %v1129 = vpop.f32.mrf.mxu0
        %v1130 = vadd.f32 0.0, %v1129
        %1131 = vmatprep.mubr.f32.mxu0 0.0
        %1132 = vmatmul.mubr.f32.gmra.mxu0 %v858
        %v1133 = vpop.f32.mrf.mxu0
        %v1134 = vadd.f32 0.0, %v1133
        %v1135 = vpop.f32.mrf.mxu0
        %v1136 = vadd.f32 0.0, %v1135
        %1137 = vmatprep.mubr.f32.mxu0 0.0
        %1138 = vmatmul.mubr.f32.gmra.mxu0 %v861
        %v1139 = vpop.f32.mrf.mxu0
        %v1140 = vadd.f32 0.0, %v1139
        %v1141 = vpop.f32.mrf.mxu0
        %v1142 = vadd.f32 0.0, %v1141
        %1143 = vmatprep.mubr.f32.mxu0 0.0
        %1144 = vmatmul.mubr.f32.gmra.mxu0 %v864
        %v1145 = vpop.f32.mrf.mxu0
        %v1146 = vadd.f32 0.0, %v1145
        %v1147 = vpop.f32.mrf.mxu0
        %v1148 = vadd.f32 0.0, %v1147
        %1149 = vmatprep.mubr.f32.mxu0 0.0
        %1150 = vmatmul.mubr.f32.gmra.mxu0 %v867
        %v1151 = vpop.f32.mrf.mxu0
        %v1152 = vadd.f32 0.0, %v1151
        %v1153 = vpop.f32.mrf.mxu0
        %v1154 = vadd.f32 0.0, %v1153
        %1155 = vmatprep.mubr.f32.mxu0 0.0
        %1156 = vmatmul.mubr.f32.gmra.mxu0 %v870
        %v1157 = vpop.f32.mrf.mxu0
        %v1158 = vadd.f32 0.0, %v1157
        %v1159 = vpop.f32.mrf.mxu0
        %v1160 = vadd.f32 0.0, %v1159
        %1161 = vmatprep.mubr.f32.mxu0 0.0
        %1162 = vmatmul.mubr.f32.gmra.mxu0 %v873
        %v1163 = vpop.f32.mrf.mxu0
        %v1164 = vadd.f32 0.0, %v1163
        %v1165 = vpop.f32.mrf.mxu0
        %v1166 = vadd.f32 0.0, %v1165
        %1167 = vmatprep.mubr.f32.mxu0 0.0
        %1168 = vmatmul.mubr.f32.gmra.mxu0 %v876
        %v1169 = vpop.f32.mrf.mxu0
        %v1170 = vadd.f32 0.0, %v1169
        %v1171 = vpop.f32.mrf.mxu0
        %v1172 = vadd.f32 0.0, %v1171
        %1173 = vmatprep.mubr.f32.mxu0 0.0
        %1174 = vmatmul.mubr.f32.gmra.mxu0 %v879
        %v1175 = vpop.f32.mrf.mxu0
        %v1176 = vadd.f32 0.0, %v1175
        %v1177 = vpop.f32.mrf.mxu0
        %v1178 = vadd.f32 0.0, %v1177
        %1179 = vmatprep.mubr.f32.mxu0 0.0
        %1180 = vmatmul.mubr.f32.gmra.mxu0 %v882
        %v1181 = vpop.f32.mrf.mxu0
        %v1182 = vadd.f32 0.0, %v1181
        %v1183 = vpop.f32.mrf.mxu0
        %v1184 = vadd.f32 0.0, %v1183
        %1185 = vmatprep.mubr.f32.mxu0 0.0
        %1186 = vmatmul.mubr.f32.gmra.mxu0 %v885
        %v1187 = vpop.f32.mrf.mxu0
        %v1188 = vadd.f32 0.0, %v1187
        %v1189 = vpop.f32.mrf.mxu0
        %v1190 = vadd.f32 0.0, %v1189
        %1191 = vmatprep.mubr.f32.mxu0 0.0
        %1192 = vmatmul.mubr.f32.gmra.mxu0 %v888
        %v1193 = vpop.f32.mrf.mxu0
        %v1194 = vadd.f32 0.0, %v1193
        %v1195 = vpop.f32.mrf.mxu0
        %v1196 = vadd.f32 0.0, %v1195
        %1197 = vmatprep.mubr.f32.mxu0 0.0
        %1198 = vmatmul.mubr.f32.gmra.mxu0 %v891
        %v1199 = vpop.f32.mrf.mxu0
        %v1200 = vadd.f32 0.0, %v1199
        %v1201 = vpop.f32.mrf.mxu0
        %v1202 = vadd.f32 0.0, %v1201
        %1203 = vmatprep.mubr.f32.mxu0 0.0
        %1204 = vmatmul.mubr.f32.gmra.mxu0 %v894
        %v1205 = vpop.f32.mrf.mxu0
        %v1206 = vadd.f32 0.0, %v1205
        %v1207 = vpop.f32.mrf.mxu0
        %v1208 = vadd.f32 0.0, %v1207
        %1209 = vmatprep.mubr.f32.mxu0 0.0
        %1210 = vmatmul.mubr.f32.gmra.mxu0 %v897
        %v1211 = vpop.f32.mrf.mxu0
        %v1212 = vadd.f32 0.0, %v1211
        %v1213 = vpop.f32.mrf.mxu0
        %v1214 = vadd.f32 0.0, %v1213
        %1215 = vmatprep.mubr.f32.mxu0 0.0
        %1216 = vmatmul.mubr.f32.gmra.mxu0 %v900
        %v1217 = vpop.f32.mrf.mxu0
        %v1218 = vadd.f32 0.0, %v1217
        %v1219 = vpop.f32.mrf.mxu0
        %v1220 = vadd.f32 0.0, %v1219
        %1221 = vmatprep.mubr.f32.mxu0 0.0
        %1222 = vmatmul.mubr.f32.gmra.mxu0 %v903
        %v1223 = vpop.f32.mrf.mxu0
        %v1224 = vadd.f32 0.0, %v1223
        %v1225 = vpop.f32.mrf.mxu0
        %v1226 = vadd.f32 0.0, %v1225
        %1227 = vmatprep.mubr.f32.mxu0 0.0
        %1228 = vmatmul.mubr.f32.gmra.mxu0 %v906
        %v1229 = vpop.f32.mrf.mxu0
        %v1230 = vadd.f32 0.0, %v1229
        %v1231 = vpop.f32.mrf.mxu0
        %v1232 = vadd.f32 0.0, %v1231
        %1233 = vmatprep.mubr.f32.mxu0 0.0
        %1234 = vmatmul.mubr.f32.gmra.mxu0 %v909
        %v1235 = vpop.f32.mrf.mxu0
        %v1236 = vadd.f32 0.0, %v1235
        %v1237 = vpop.f32.mrf.mxu0
        %v1238 = vadd.f32 0.0, %v1237
        %1239 = vmatprep.mubr.f32.mxu0 0.0
        %1240 = vmatmul.mubr.f32.gmra.mxu0 %v912
        %v1241 = vpop.f32.mrf.mxu0
        %v1242 = vadd.f32 0.0, %v1241
        %v1243 = vpop.f32.mrf.mxu0
        %v1244 = vadd.f32 0.0, %v1243
        %1245 = vmatprep.mubr.f32.mxu0 0.0
        %1246 = vmatmul.mubr.f32.gmra.mxu0 %v915
        %v1247 = vpop.f32.mrf.mxu0
        %v1248 = vadd.f32 0.0, %v1247
        %v1249 = vpop.f32.mrf.mxu0
        %v1250 = vadd.f32 0.0, %v1249
        %1251 = vmatprep.mubr.f32.mxu0 0.0
        %1252 = vmatmul.mubr.f32.gmra.mxu0 %v918
        %v1253 = vpop.f32.mrf.mxu0
        %v1254 = vadd.f32 0.0, %v1253
        %v1255 = vpop.f32.mrf.mxu0
        %v1256 = vadd.f32 0.0, %v1255
        %1257 = vmatprep.mubr.f32.mxu0 0.0
        %1258 = vmatmul.mubr.f32.gmra.mxu0 %v921
        %v1259 = vpop.f32.mrf.mxu0
        %v1260 = vadd.f32 0.0, %v1259
        %v1261 = vpop.f32.mrf.mxu0
        %v1262 = vadd.f32 0.0, %v1261
        %1263 = vmatprep.mubr.f32.mxu0 0.0
        %1264 = vmatmul.mubr.f32.gmra.mxu0 %v924
        %v1265 = vpop.f32.mrf.mxu0
        %v1266 = vadd.f32 0.0, %v1265
        %v1267 = vpop.f32.mrf.mxu0
        %v1268 = vadd.f32 0.0, %v1267
        %1269 = vmatprep.mubr.f32.mxu0 0.0
        %1270 = vmatmul.mubr.f32.gmra.mxu0 %v927
        %v1271 = vpop.f32.mrf.mxu0
        %v1272 = vadd.f32 0.0, %v1271
        %v1273 = vpop.f32.mrf.mxu0
        %v1274 = vadd.f32 0.0, %v1273
        %1275 = vmatprep.mubr.f32.mxu0 0.0
        %1276 = vmatmul.mubr.f32.gmra.mxu0 %v930
        %v1277 = vpop.f32.mrf.mxu0
        %v1278 = vadd.f32 0.0, %v1277
        %v1279 = vpop.f32.mrf.mxu0
        %v1280 = vadd.f32 0.0, %v1279
        %1281 = vmatprep.mubr.f32.mxu0 0.0
        %1282 = vmatmul.mubr.f32.gmra.mxu0 %v933
        %v1283 = vpop.f32.mrf.mxu0
        %v1284 = vadd.f32 0.0, %v1283
        %v1285 = vpop.f32.mrf.mxu0
        %v1286 = vadd.f32 0.0, %v1285
        %1287 = vmatprep.mubr.f32.mxu0 0.0
        %1288 = vmatmul.mubr.f32.gmra.mxu0 %v936
        %v1289 = vpop.f32.mrf.mxu0
        %v1290 = vadd.f32 0.0, %v1289
        %v1291 = vpop.f32.mrf.mxu0
        %v1292 = vadd.f32 0.0, %v1291
        %1293 = vmatprep.mubr.f32.mxu0 0.0
        %1294 = vmatmul.mubr.f32.gmra.mxu0 %v939
        %v1295 = vpop.f32.mrf.mxu0
        %v1296 = vadd.f32 0.0, %v1295
        %v1297 = vpop.f32.mrf.mxu0
        %v1298 = vadd.f32 0.0, %v1297
        %1299 = vmatprep.mubr.f32.mxu0 0.0
        %1300 = vmatmul.mubr.f32.gmra.mxu0 %v942
        %v1301 = vpop.f32.mrf.mxu0
        %v1302 = vadd.f32 0.0, %v1301
        %v1303 = vpop.f32.mrf.mxu0
        %v1304 = vadd.f32 0.0, %v1303
        %1305 = vmatprep.mubr.f32.mxu0 0.0
        %1306 = vmatmul.mubr.f32.gmra.mxu0 %v945
        %v1307 = vpop.f32.mrf.mxu0
        %v1308 = vadd.f32 0.0, %v1307
        %v1309 = vpop.f32.mrf.mxu0
        %v1310 = vadd.f32 0.0, %v1309
        %1311 = vmatprep.mubr.f32.mxu0 0.0
        %1312 = vmatmul.mubr.f32.gmra.mxu0 %v948
        %v1313 = vpop.f32.mrf.mxu0
        %v1314 = vadd.f32 0.0, %v1313
        %v1315 = vpop.f32.mrf.mxu0
        %v1316 = vadd.f32 0.0, %v1315
        %1317 = vmatprep.mubr.f32.mxu0 0.0
        %1318 = vmatmul.mubr.f32.gmra.mxu0 %v951
        %v1319 = vpop.f32.mrf.mxu0
        %v1320 = vadd.f32 0.0, %v1319
        %v1321 = vpop.f32.mrf.mxu0
        %v1322 = vadd.f32 0.0, %v1321
        %1323 = vmatprep.mubr.f32.mxu0 0.0
        %1324 = vmatmul.mubr.f32.gmra.mxu0 %v954
        %v1325 = vpop.f32.mrf.mxu0
        %v1326 = vadd.f32 0.0, %v1325
        %v1327 = vpop.f32.mrf.mxu0
        %v1328 = vadd.f32 0.0, %v1327
        %1329 = vmatprep.mubr.f32.mxu0 0.0
        %1330 = vmatmul.mubr.f32.gmra.mxu0 %v957
        %v1331 = vpop.f32.mrf.mxu0
        %v1332 = vadd.f32 0.0, %v1331
        %v1333 = vpop.f32.mrf.mxu0
        %v1334 = vadd.f32 0.0, %v1333
        %1335 = vmatprep.mubr.f32.mxu0 0.0
        %1336 = vmatmul.mubr.f32.gmra.mxu0 %v960
        %v1337 = vpop.f32.mrf.mxu0
        %v1338 = vadd.f32 0.0, %v1337
        %v1339 = vpop.f32.mrf.mxu0
        %v1340 = vadd.f32 0.0, %v1339
        %1341 = vmatprep.mubr.f32.mxu0 0.0
        %1342 = vmatmul.mubr.f32.gmra.mxu0 %v963
        %v1343 = vpop.f32.mrf.mxu0
        %v1344 = vadd.f32 0.0, %v1343
        %v1345 = vpop.f32.mrf.mxu0
        %v1346 = vadd.f32 0.0, %v1345
        %1347 = vmatprep.mubr.f32.mxu0 0.0
        %1348 = vmatmul.mubr.f32.gmra.mxu0 %v966
        %v1349 = vpop.f32.mrf.mxu0
        %v1350 = vadd.f32 0.0, %v1349
        %v1351 = vpop.f32.mrf.mxu0
        %v1352 = vadd.f32 0.0, %v1351
        %1353 = vmatprep.mubr.f32.mxu0 0.0
        %1354 = vmatmul.mubr.f32.gmra.mxu0 %v969
        %v1355 = vpop.f32.mrf.mxu0
        %v1356 = vadd.f32 0.0, %v1355
        %v1357 = vpop.f32.mrf.mxu0
        %v1358 = vadd.f32 0.0, %v1357
        %1359 = vmatprep.mubr.f32.mxu0 0.0
        %1360 = vmatmul.mubr.f32.gmra.mxu0 %v972
        %v1361 = vpop.f32.mrf.mxu0
        %v1362 = vadd.f32 0.0, %v1361
        %v1363 = vpop.f32.mrf.mxu0
        %v1364 = vadd.f32 0.0, %v1363
        %1365 = vmatprep.mubr.f32.mxu0 0.0
        %1366 = vmatmul.mubr.f32.gmra.mxu0 %v975
        %v1367 = vpop.f32.mrf.mxu0
        %v1368 = vadd.f32 0.0, %v1367
        %v1369 = vpop.f32.mrf.mxu0
        %v1370 = vadd.f32 0.0, %v1369
        %1371 = vmatprep.mubr.f32.mxu0 0.0
        %1372 = vmatmul.mubr.f32.gmra.mxu0 %v978
        %v1373 = vpop.f32.mrf.mxu0
        %v1374 = vadd.f32 0.0, %v1373
        %v1375 = vpop.f32.mrf.mxu0
        %v1376 = vadd.f32 0.0, %v1375
        %1377 = vmatprep.mubr.f32.mxu0 0.0
        %1378 = vmatmul.mubr.f32.gmra.mxu0 %v981
        %v1379 = vpop.f32.mrf.mxu0
        %v1380 = vadd.f32 0.0, %v1379
        %v1381 = vpop.f32.mrf.mxu0
        %v1382 = vadd.f32 0.0, %v1381
        %1383 = vmatprep.mubr.f32.mxu0 0.0
        %1384 = vmatmul.mubr.f32.gmra.mxu0 %v984
        %v1385 = vpop.f32.mrf.mxu0
        %v1386 = vadd.f32 0.0, %v1385
        %v1387 = vpop.f32.mrf.mxu0
        %v1388 = vadd.f32 0.0, %v1387
        %1389 = vmatprep.mubr.f32.mxu0 0.0
        %1390 = vmatmul.mubr.f32.gmra.mxu0 %v987
        %v1391 = vpop.f32.mrf.mxu0
        %v1392 = vadd.f32 0.0, %v1391
        %v1393 = vpop.f32.mrf.mxu0
        %v1394 = vadd.f32 0.0, %v1393
        %1395 = vmatprep.mubr.f32.mxu0 0.0
        %1396 = vmatmul.mubr.f32.gmra.mxu0 %v990
        %v1397 = vpop.f32.mrf.mxu0
        %v1398 = vadd.f32 0.0, %v1397
        %v1399 = vpop.f32.mrf.mxu0
        %v1400 = vadd.f32 0.0, %v1399
        %1401 = vmatprep.mubr.f32.mxu0 0.0
        %1402 = vmatmul.mubr.f32.gmra.mxu0 %v993
        %v1403 = vpop.f32.mrf.mxu0
        %v1404 = vadd.f32 0.0, %v1403
        %v1405 = vpop.f32.mrf.mxu0
        %v1406 = vadd.f32 0.0, %v1405
        %1407 = vmatprep.mubr.f32.mxu0 0.0
        %1408 = vmatmul.mubr.f32.gmra.mxu0 %v996
        %v1409 = vpop.f32.mrf.mxu0
        %v1410 = vadd.f32 0.0, %v1409
        %v1411 = vpop.f32.mrf.mxu0
        %v1412 = vadd.f32 0.0, %v1411
        %1413 = vmatprep.mubr.f32.mxu0 0.0
        %1414 = vmatmul.mubr.f32.gmra.mxu0 %v999
        %v1415 = vpop.f32.mrf.mxu0
        %v1416 = vadd.f32 0.0, %v1415
        %v1417 = vpop.f32.mrf.mxu0
        %v1418 = vadd.f32 0.0, %v1417
        %1419 = vmatprep.mubr.f32.mxu0 0.0
        %1420 = vmatmul.mubr.f32.gmra.mxu0 %v1002
        %v1421 = vpop.f32.mrf.mxu0
        %v1422 = vadd.f32 0.0, %v1421
        %v1423 = vpop.f32.mrf.mxu0
        %v1424 = vadd.f32 0.0, %v1423
        %1425 = vmatprep.mubr.f32.mxu0 0.0
        %1426 = vmatmul.mubr.f32.gmra.mxu0 %v1005
        %v1427 = vpop.f32.mrf.mxu0
        %v1428 = vadd.f32 0.0, %v1427
        %v1429 = vpop.f32.mrf.mxu0
        %v1430 = vadd.f32 0.0, %v1429
        %1431 = vmatprep.mubr.f32.mxu0 0.0
        %1432 = vmatmul.mubr.f32.gmra.mxu0 %v1008
        %v1433 = vpop.f32.mrf.mxu0
        %v1434 = vadd.f32 0.0, %v1433
        %v1435 = vpop.f32.mrf.mxu0
        %v1436 = vadd.f32 0.0, %v1435
        %1437 = vmatprep.mubr.f32.mxu0 0.0
        %1438 = vmatmul.mubr.f32.gmra.mxu0 %v1011
        %v1439 = vpop.f32.mrf.mxu0
        %v1440 = vadd.f32 0.0, %v1439
        %v1441 = vpop.f32.mrf.mxu0
        %v1442 = vadd.f32 0.0, %v1441
        %1443 = vmatprep.mubr.f32.mxu0 0.0
        %1444 = vmatmul.mubr.f32.gmra.mxu0 %v1014
        %v1445 = vpop.f32.mrf.mxu0
        %v1446 = vadd.f32 0.0, %v1445
        %v1447 = vpop.f32.mrf.mxu0
        %v1448 = vadd.f32 0.0, %v1447
        %1449 = vmatprep.mubr.f32.mxu0 0.0
        %1450 = vmatmul.mubr.f32.gmra.mxu0 %v1017
        %v1451 = vpop.f32.mrf.mxu0
        %v1452 = vadd.f32 0.0, %v1451
        %v1453 = vpop.f32.mrf.mxu0
        %v1454 = vadd.f32 0.0, %v1453
        %1455 = vmatprep.mubr.f32.mxu0 0.0
        %1456 = vmatmul.mubr.f32.gmra.mxu0 %v1020
        %v1457 = vpop.f32.mrf.mxu0
        %v1458 = vadd.f32 0.0, %v1457
        %v1459 = vpop.f32.mrf.mxu0
        %v1460 = vadd.f32 0.0, %v1459
        %1461 = vmatprep.mubr.f32.mxu0 0.0
        %1462 = vmatmul.mubr.f32.gmra.mxu0 %v1023
        %v1463 = vpop.f32.mrf.mxu0
        %v1464 = vadd.f32 0.0, %v1463
        %v1465 = vpop.f32.mrf.mxu0
        %v1466 = vadd.f32 0.0, %v1465
        %1467 = vmatprep.mubr.f32.mxu0 0.0
        %1468 = vmatmul.mubr.f32.gmra.mxu0 %v1026
        %v1469 = vpop.f32.mrf.mxu0
        %v1470 = vadd.f32 0.0, %v1469
        %v1471 = vpop.f32.mrf.mxu0
        %v1472 = vadd.f32 0.0, %v1471
        %1473 = vmatprep.mubr.f32.mxu0 0.0
        %1474 = vmatmul.mubr.f32.gmra.mxu0 %v1029
        %v1475 = vpop.f32.mrf.mxu0
        %v1476 = vadd.f32 0.0, %v1475
        %v1477 = vpop.f32.mrf.mxu0
        %v1478 = vadd.f32 0.0, %v1477
        %1479 = vdwg.mxu0
        %v1480 = vld [vmem:[%s5] sm:$0xff]
        %v1481 = vld [vmem:[%s5 + $0x8] sm:$0xff]
        %v1482 = vld [vmem:[%s5 + $0x10] sm:$0xff]
        %v1483 = vld [vmem:[%s5 + $0x18] sm:$0xff]
        %v1484 = vld [vmem:[%s5 + $0x20] sm:$0xff]
        %v1485 = vld [vmem:[%s5 + $0x28] sm:$0xff]
        %v1486 = vld [vmem:[%s5 + $0x30] sm:$0xff]
        %v1487 = vld [vmem:[%s5 + $0x38] sm:$0xff]
        %v1488 = vld [vmem:[%s5 + $0x40] sm:$0xff]
        %v1489 = vld [vmem:[%s5 + $0x48] sm:$0xff]
        %v1490 = vld [vmem:[%s5 + $0x50] sm:$0xff]
        %v1491 = vld [vmem:[%s5 + $0x58] sm:$0xff]
        %v1492 = vld [vmem:[%s5 + $0x60] sm:$0xff]
        %v1493 = vld [vmem:[%s5 + $0x68] sm:$0xff]
        %v1494 = vld [vmem:[%s5 + $0x70] sm:$0xff]
        %v1495 = vld [vmem:[%s5 + $0x78] sm:$0xff]
        %v1496 = vld [vmem:[%s5 + $0x80] sm:$0xff]
        %v1497 = vld [vmem:[%s5 + $0x88] sm:$0xff]
        %v1498 = vld [vmem:[%s5 + $0x90] sm:$0xff]
        %v1499 = vld [vmem:[%s5 + $0x98] sm:$0xff]
        %v1500 = vld [vmem:[%s5 + $0xa0] sm:$0xff]
        %v1501 = vld [vmem:[%s5 + $0xa8] sm:$0xff]
        %v1502 = vld [vmem:[%s5 + $0xb0] sm:$0xff]
        %v1503 = vld [vmem:[%s5 + $0xb8] sm:$0xff]
        %v1504 = vld [vmem:[%s5 + $0xc0] sm:$0xff]
        %v1505 = vld [vmem:[%s5 + $0xc8] sm:$0xff]
        %v1506 = vld [vmem:[%s5 + $0xd0] sm:$0xff]
        %v1507 = vld [vmem:[%s5 + $0xd8] sm:$0xff]
        %v1508 = vld [vmem:[%s5 + $0xe0] sm:$0xff]
        %v1509 = vld [vmem:[%s5 + $0xe8] sm:$0xff]
        %v1510 = vld [vmem:[%s5 + $0xf0] sm:$0xff]
        %v1511 = vld [vmem:[%s5 + $0xf8] sm:$0xff]
        %s1512 = scalar_lea.vmem %s5, 256
        %v1513 = vld [vmem:[%s1512] sm:$0xff]
        %v1514 = vld [vmem:[%s1512 + $0x8] sm:$0xff]
        %v1515 = vld [vmem:[%s1512 + $0x10] sm:$0xff]
        %v1516 = vld [vmem:[%s1512 + $0x18] sm:$0xff]
        %v1517 = vld [vmem:[%s1512 + $0x20] sm:$0xff]
        %v1518 = vld [vmem:[%s1512 + $0x28] sm:$0xff]
        %v1519 = vld [vmem:[%s1512 + $0x30] sm:$0xff]
        %v1520 = vld [vmem:[%s1512 + $0x38] sm:$0xff]
        %v1521 = vld [vmem:[%s1512 + $0x40] sm:$0xff]
        %v1522 = vld [vmem:[%s1512 + $0x48] sm:$0xff]
        %v1523 = vld [vmem:[%s1512 + $0x50] sm:$0xff]
        %v1524 = vld [vmem:[%s1512 + $0x58] sm:$0xff]
        %v1525 = vld [vmem:[%s1512 + $0x60] sm:$0xff]
        %v1526 = vld [vmem:[%s1512 + $0x68] sm:$0xff]
        %v1527 = vld [vmem:[%s1512 + $0x70] sm:$0xff]
        %v1528 = vld [vmem:[%s1512 + $0x78] sm:$0xff]
        %v1529 = vld [vmem:[%s1512 + $0x80] sm:$0xff]
        %v1530 = vld [vmem:[%s1512 + $0x88] sm:$0xff]
        %v1531 = vld [vmem:[%s1512 + $0x90] sm:$0xff]
        %v1532 = vld [vmem:[%s1512 + $0x98] sm:$0xff]
        %v1533 = vld [vmem:[%s1512 + $0xa0] sm:$0xff]
        %v1534 = vld [vmem:[%s1512 + $0xa8] sm:$0xff]
        %v1535 = vld [vmem:[%s1512 + $0xb0] sm:$0xff]
        %v1536 = vld [vmem:[%s1512 + $0xb8] sm:$0xff]
        %v1537 = vld [vmem:[%s1512 + $0xc0] sm:$0xff]
        %v1538 = vld [vmem:[%s1512 + $0xc8] sm:$0xff]
        %v1539 = vld [vmem:[%s1512 + $0xd0] sm:$0xff]
        %v1540 = vld [vmem:[%s1512 + $0xd8] sm:$0xff]
        %v1541 = vld [vmem:[%s1512 + $0xe0] sm:$0xff]
        %v1542 = vld [vmem:[%s1512 + $0xe8] sm:$0xff]
        %v1543 = vld [vmem:[%s1512 + $0xf0] sm:$0xff]
        %v1544 = vld [vmem:[%s1512 + $0xf8] sm:$0xff]
        %1545 = vmatprep.subr.mxu0 0.0
        %1546 = vmatpush1.msra.mxu0 %v1528
        %1547 = vmatprep.subr.mxu0 0.0
        %1548 = vmatpush1.msra.mxu0 %v1527
        %1549 = vmatprep.subr.mxu0 0.0
        %1550 = vmatpush1.msra.mxu0 %v1526
        %1551 = vmatprep.subr.mxu0 0.0
        %1552 = vmatpush1.msra.mxu0 %v1525
        %1553 = vmatprep.subr.mxu0 0.0
        %1554 = vmatpush1.msra.mxu0 %v1524
        %1555 = vmatprep.subr.mxu0 0.0
        %1556 = vmatpush1.msra.mxu0 %v1523
        %1557 = vmatprep.subr.mxu0 0.0
        %1558 = vmatpush1.msra.mxu0 %v1522
        %1559 = vmatprep.subr.mxu0 0.0
        %1560 = vmatpush1.msra.mxu0 %v1521
        %1561 = vmatprep.subr.mxu0 0.0
        %1562 = vmatpush1.msra.mxu0 %v1520
        %1563 = vmatprep.subr.mxu0 0.0
        %1564 = vmatpush1.msra.mxu0 %v1519
        %1565 = vmatprep.subr.mxu0 0.0
        %1566 = vmatpush1.msra.mxu0 %v1518
        %1567 = vmatprep.subr.mxu0 0.0
        %1568 = vmatpush1.msra.mxu0 %v1517
        %1569 = vmatprep.subr.mxu0 0.0
        %1570 = vmatpush1.msra.mxu0 %v1516
        %1571 = vmatprep.subr.mxu0 0.0
        %1572 = vmatpush1.msra.mxu0 %v1515
        %1573 = vmatprep.subr.mxu0 0.0
        %1574 = vmatpush1.msra.mxu0 %v1514
        %1575 = vmatprep.subr.mxu0 0.0
        %1576 = vmatpush1.msra.mxu0 %v1513
        %1577 = vmatprep.subr.mxu0 0.0
        %1578 = vmatpush2.msra.mxu0 %v1544
        %1579 = vmatprep.subr.mxu0 0.0
        %1580 = vmatpush2.msra.mxu0 %v1543
        %1581 = vmatprep.subr.mxu0 0.0
        %1582 = vmatpush2.msra.mxu0 %v1542
        %1583 = vmatprep.subr.mxu0 0.0
        %1584 = vmatpush2.msra.mxu0 %v1541
        %1585 = vmatprep.subr.mxu0 0.0
        %1586 = vmatpush2.msra.mxu0 %v1540
        %1587 = vmatprep.subr.mxu0 0.0
        %1588 = vmatpush2.msra.mxu0 %v1539
        %1589 = vmatprep.subr.mxu0 0.0
        %1590 = vmatpush2.msra.mxu0 %v1538
        %1591 = vmatprep.subr.mxu0 0.0
        %1592 = vmatpush2.msra.mxu0 %v1537
        %1593 = vmatprep.subr.mxu0 0.0
        %1594 = vmatpush2.msra.mxu0 %v1536
        %1595 = vmatprep.subr.mxu0 0.0
        %1596 = vmatpush2.msra.mxu0 %v1535
        %1597 = vmatprep.subr.mxu0 0.0
        %1598 = vmatpush2.msra.mxu0 %v1534
        %1599 = vmatprep.subr.mxu0 0.0
        %1600 = vmatpush2.msra.mxu0 %v1533
        %1601 = vmatprep.subr.mxu0 0.0
        %1602 = vmatpush2.msra.mxu0 %v1532
        %1603 = vmatprep.subr.mxu0 0.0
        %1604 = vmatpush2.msra.mxu0 %v1531
        %1605 = vmatprep.subr.mxu0 0.0
        %1606 = vmatpush2.msra.mxu0 %v1530
        %1607 = vmatprep.subr.mxu0 0.0
        %1608 = vmatpush2.msra.mxu0 %v1529
        %1609 = vmatprep.mubr.f32.mxu0 %v1124
        %1610 = vmatmul.mubr.f32.gmra.mxu0 %v1122
        %v1611 = vpop.f32.mrf.mxu0
        %v1612 = vadd.f32 0.0, %v1611
        %v1613 = vpop.f32.mrf.mxu0
        %1614 = vmatprep.mubr.f32.mxu0 %v1130
        %1615 = vmatmul.mubr.f32.gmra.mxu0 %v1128
        %v1616 = vpop.f32.mrf.mxu0
        %v1617 = vadd.f32 0.0, %v1616
        %v1618 = vpop.f32.mrf.mxu0
        %1619 = vmatprep.mubr.f32.mxu0 %v1136
        %1620 = vmatmul.mubr.f32.gmra.mxu0 %v1134
        %v1621 = vpop.f32.mrf.mxu0
        %v1622 = vadd.f32 0.0, %v1621
        %v1623 = vpop.f32.mrf.mxu0
        %1624 = vmatprep.mubr.f32.mxu0 %v1142
        %1625 = vmatmul.mubr.f32.gmra.mxu0 %v1140
        %v1626 = vpop.f32.mrf.mxu0
        %v1627 = vadd.f32 0.0, %v1626
        %v1628 = vpop.f32.mrf.mxu0
        %1629 = vdwg.mxu0
        %1630 = vmatprep.subr.mxu0 0.0
        %1631 = vmatpush1.msra.mxu0 %v1495
        %1632 = vmatprep.subr.mxu0 0.0
        %1633 = vmatpush1.msra.mxu0 %v1494
        %1634 = vmatprep.subr.mxu0 0.0
        %1635 = vmatpush1.msra.mxu0 %v1493
        %1636 = vmatprep.subr.mxu0 0.0
        %1637 = vmatpush1.msra.mxu0 %v1492
        %1638 = vmatprep.subr.mxu0 0.0
        %1639 = vmatpush1.msra.mxu0 %v1491
        %1640 = vmatprep.subr.mxu0 0.0
        %1641 = vmatpush1.msra.mxu0 %v1490
        %1642 = vmatprep.subr.mxu0 0.0
        %1643 = vmatpush1.msra.mxu0 %v1489
        %1644 = vmatprep.subr.mxu0 0.0
        %1645 = vmatpush1.msra.mxu0 %v1488
        %1646 = vmatprep.subr.mxu0 0.0
        %1647 = vmatpush1.msra.mxu0 %v1487
        %1648 = vmatprep.subr.mxu0 0.0
        %1649 = vmatpush1.msra.mxu0 %v1486
        %1650 = vmatprep.subr.mxu0 0.0
        %1651 = vmatpush1.msra.mxu0 %v1485
        %1652 = vmatprep.subr.mxu0 0.0
        %1653 = vmatpush1.msra.mxu0 %v1484
        %1654 = vmatprep.subr.mxu0 0.0
        %1655 = vmatpush1.msra.mxu0 %v1483
        %1656 = vmatprep.subr.mxu0 0.0
        %1657 = vmatpush1.msra.mxu0 %v1482
        %1658 = vmatprep.subr.mxu0 0.0
        %1659 = vmatpush1.msra.mxu0 %v1481
        %1660 = vmatprep.subr.mxu0 0.0
        %1661 = vmatpush1.msra.mxu0 %v1480
        %1662 = vmatprep.subr.mxu0 0.0
        %1663 = vmatpush2.msra.mxu0 %v1511
        %1664 = vmatprep.subr.mxu0 0.0
        %1665 = vmatpush2.msra.mxu0 %v1510
        %1666 = vmatprep.subr.mxu0 0.0
        %1667 = vmatpush2.msra.mxu0 %v1509
        %1668 = vmatprep.subr.mxu0 0.0
        %1669 = vmatpush2.msra.mxu0 %v1508
        %1670 = vmatprep.subr.mxu0 0.0
        %1671 = vmatpush2.msra.mxu0 %v1507
        %1672 = vmatprep.subr.mxu0 0.0
        %1673 = vmatpush2.msra.mxu0 %v1506
        %1674 = vmatprep.subr.mxu0 0.0
        %1675 = vmatpush2.msra.mxu0 %v1505
        %1676 = vmatprep.subr.mxu0 0.0
        %1677 = vmatpush2.msra.mxu0 %v1504
        %1678 = vmatprep.subr.mxu0 0.0
        %1679 = vmatpush2.msra.mxu0 %v1503
        %1680 = vmatprep.subr.mxu0 0.0
        %1681 = vmatpush2.msra.mxu0 %v1502
        %1682 = vmatprep.subr.mxu0 0.0
        %1683 = vmatpush2.msra.mxu0 %v1501
        %1684 = vmatprep.subr.mxu0 0.0
        %1685 = vmatpush2.msra.mxu0 %v1500
        %1686 = vmatprep.subr.mxu0 0.0
        %1687 = vmatpush2.msra.mxu0 %v1499
        %1688 = vmatprep.subr.mxu0 0.0
        %1689 = vmatpush2.msra.mxu0 %v1498
        %1690 = vmatprep.subr.mxu0 0.0
        %1691 = vmatpush2.msra.mxu0 %v1497
        %1692 = vmatprep.subr.mxu0 0.0
        %1693 = vmatpush2.msra.mxu0 %v1496
        %1694 = vmatprep.mubr.f32.mxu0 %v1100
        %1695 = vmatmul.mubr.f32.gmra.mxu0 %v1098
        %v1696 = vpop.f32.mrf.mxu0
        %v1697 = vadd.f32 %v1612, %v1696
        %v1698 = vpop.f32.mrf.mxu0
        %1699 = vmatprep.mubr.f32.mxu0 %v1106
        %1700 = vmatmul.mubr.f32.gmra.mxu0 %v1104
        %v1701 = vpop.f32.mrf.mxu0
        %v1702 = vadd.f32 %v1617, %v1701
        %v1703 = vpop.f32.mrf.mxu0
        %1704 = vmatprep.mubr.f32.mxu0 %v1112
        %1705 = vmatmul.mubr.f32.gmra.mxu0 %v1110
        %v1706 = vpop.f32.mrf.mxu0
        %v1707 = vadd.f32 %v1622, %v1706
        %v1708 = vpop.f32.mrf.mxu0
        %1709 = vmatprep.mubr.f32.mxu0 %v1118
        %1710 = vmatmul.mubr.f32.gmra.mxu0 %v1116
        %v1711 = vpop.f32.mrf.mxu0
        %v1712 = vadd.f32 %v1627, %v1711
        %v1713 = vpop.f32.mrf.mxu0
        %1714 = vdwg.mxu0
        %s1715 = scalar_lea.vmem %s5, 512
        %v1716 = vld [vmem:[%s1715] sm:$0xff]
        %v1717 = vld [vmem:[%s1715 + $0x8] sm:$0xff]
        %v1718 = vld [vmem:[%s1715 + $0x10] sm:$0xff]
        %v1719 = vld [vmem:[%s1715 + $0x18] sm:$0xff]
        %v1720 = vld [vmem:[%s1715 + $0x20] sm:$0xff]
        %v1721 = vld [vmem:[%s1715 + $0x28] sm:$0xff]
        %v1722 = vld [vmem:[%s1715 + $0x30] sm:$0xff]
        %v1723 = vld [vmem:[%s1715 + $0x38] sm:$0xff]
        %v1724 = vld [vmem:[%s1715 + $0x40] sm:$0xff]
        %v1725 = vld [vmem:[%s1715 + $0x48] sm:$0xff]
        %v1726 = vld [vmem:[%s1715 + $0x50] sm:$0xff]
        %v1727 = vld [vmem:[%s1715 + $0x58] sm:$0xff]
        %v1728 = vld [vmem:[%s1715 + $0x60] sm:$0xff]
        %v1729 = vld [vmem:[%s1715 + $0x68] sm:$0xff]
        %v1730 = vld [vmem:[%s1715 + $0x70] sm:$0xff]
        %v1731 = vld [vmem:[%s1715 + $0x78] sm:$0xff]
        %v1732 = vld [vmem:[%s1715 + $0x80] sm:$0xff]
        %v1733 = vld [vmem:[%s1715 + $0x88] sm:$0xff]
        %v1734 = vld [vmem:[%s1715 + $0x90] sm:$0xff]
        %v1735 = vld [vmem:[%s1715 + $0x98] sm:$0xff]
        %v1736 = vld [vmem:[%s1715 + $0xa0] sm:$0xff]
        %v1737 = vld [vmem:[%s1715 + $0xa8] sm:$0xff]
        %v1738 = vld [vmem:[%s1715 + $0xb0] sm:$0xff]
        %v1739 = vld [vmem:[%s1715 + $0xb8] sm:$0xff]
        %v1740 = vld [vmem:[%s1715 + $0xc0] sm:$0xff]
        %v1741 = vld [vmem:[%s1715 + $0xc8] sm:$0xff]
        %v1742 = vld [vmem:[%s1715 + $0xd0] sm:$0xff]
        %v1743 = vld [vmem:[%s1715 + $0xd8] sm:$0xff]
        %v1744 = vld [vmem:[%s1715 + $0xe0] sm:$0xff]
        %v1745 = vld [vmem:[%s1715 + $0xe8] sm:$0xff]
        %v1746 = vld [vmem:[%s1715 + $0xf0] sm:$0xff]
        %v1747 = vld [vmem:[%s1715 + $0xf8] sm:$0xff]
        %1748 = vmatprep.subr.mxu0 0.0
        %1749 = vmatpush1.msra.mxu0 %v1731
        %1750 = vmatprep.subr.mxu0 0.0
        %1751 = vmatpush1.msra.mxu0 %v1730
        %1752 = vmatprep.subr.mxu0 0.0
        %1753 = vmatpush1.msra.mxu0 %v1729
        %1754 = vmatprep.subr.mxu0 0.0
        %1755 = vmatpush1.msra.mxu0 %v1728
        %1756 = vmatprep.subr.mxu0 0.0
        %1757 = vmatpush1.msra.mxu0 %v1727
        %1758 = vmatprep.subr.mxu0 0.0
        %1759 = vmatpush1.msra.mxu0 %v1726
        %1760 = vmatprep.subr.mxu0 0.0
        %1761 = vmatpush1.msra.mxu0 %v1725
        %1762 = vmatprep.subr.mxu0 0.0
        %1763 = vmatpush1.msra.mxu0 %v1724
        %1764 = vmatprep.subr.mxu0 0.0
        %1765 = vmatpush1.msra.mxu0 %v1723
        %1766 = vmatprep.subr.mxu0 0.0
        %1767 = vmatpush1.msra.mxu0 %v1722
        %1768 = vmatprep.subr.mxu0 0.0
        %1769 = vmatpush1.msra.mxu0 %v1721
        %1770 = vmatprep.subr.mxu0 0.0
        %1771 = vmatpush1.msra.mxu0 %v1720
        %1772 = vmatprep.subr.mxu0 0.0
        %1773 = vmatpush1.msra.mxu0 %v1719
        %1774 = vmatprep.subr.mxu0 0.0
        %1775 = vmatpush1.msra.mxu0 %v1718
        %1776 = vmatprep.subr.mxu0 0.0
        %1777 = vmatpush1.msra.mxu0 %v1717
        %1778 = vmatprep.subr.mxu0 0.0
        %1779 = vmatpush1.msra.mxu0 %v1716
        %1780 = vmatprep.subr.mxu0 0.0
        %1781 = vmatpush2.msra.mxu0 %v1747
        %1782 = vmatprep.subr.mxu0 0.0
        %1783 = vmatpush2.msra.mxu0 %v1746
        %1784 = vmatprep.subr.mxu0 0.0
        %1785 = vmatpush2.msra.mxu0 %v1745
        %1786 = vmatprep.subr.mxu0 0.0
        %1787 = vmatpush2.msra.mxu0 %v1744
        %1788 = vmatprep.subr.mxu0 0.0
        %1789 = vmatpush2.msra.mxu0 %v1743
        %1790 = vmatprep.subr.mxu0 0.0
        %1791 = vmatpush2.msra.mxu0 %v1742
        %1792 = vmatprep.subr.mxu0 0.0
        %1793 = vmatpush2.msra.mxu0 %v1741
        %1794 = vmatprep.subr.mxu0 0.0
        %1795 = vmatpush2.msra.mxu0 %v1740
        %1796 = vmatprep.subr.mxu0 0.0
        %1797 = vmatpush2.msra.mxu0 %v1739
        %1798 = vmatprep.subr.mxu0 0.0
        %1799 = vmatpush2.msra.mxu0 %v1738
        %1800 = vmatprep.subr.mxu0 0.0
        %1801 = vmatpush2.msra.mxu0 %v1737
        %1802 = vmatprep.subr.mxu0 0.0
        %1803 = vmatpush2.msra.mxu0 %v1736
        %1804 = vmatprep.subr.mxu0 0.0
        %1805 = vmatpush2.msra.mxu0 %v1735
        %1806 = vmatprep.subr.mxu0 0.0
        %1807 = vmatpush2.msra.mxu0 %v1734
        %1808 = vmatprep.subr.mxu0 0.0
        %1809 = vmatpush2.msra.mxu0 %v1733
        %1810 = vmatprep.subr.mxu0 0.0
        %1811 = vmatpush2.msra.mxu0 %v1732
        %1812 = vmatprep.mubr.f32.mxu0 %v1148
        %1813 = vmatmul.mubr.f32.gmra.mxu0 %v1146
        %v1814 = vpop.f32.mrf.mxu0
        %v1815 = vadd.f32 0.0, %v1814
        %v1816 = vpop.f32.mrf.mxu0
        %1817 = vmatprep.mubr.f32.mxu0 %v1154
        %1818 = vmatmul.mubr.f32.gmra.mxu0 %v1152
        %v1819 = vpop.f32.mrf.mxu0
        %v1820 = vadd.f32 0.0, %v1819
        %v1821 = vpop.f32.mrf.mxu0
        %1822 = vmatprep.mubr.f32.mxu0 %v1160
        %1823 = vmatmul.mubr.f32.gmra.mxu0 %v1158
        %v1824 = vpop.f32.mrf.mxu0
        %v1825 = vadd.f32 0.0, %v1824
        %v1826 = vpop.f32.mrf.mxu0
        %1827 = vmatprep.mubr.f32.mxu0 %v1166
        %1828 = vmatmul.mubr.f32.gmra.mxu0 %v1164
        %v1829 = vpop.f32.mrf.mxu0
        %v1830 = vadd.f32 0.0, %v1829
        %v1831 = vpop.f32.mrf.mxu0
        %1832 = vdwg.mxu0
        %v1833 = vadd.f32 %v1697, %v1815
        %v1834 = vadd.f32 %v1702, %v1820
        %v1835 = vadd.f32 %v1707, %v1825
        %v1836 = vadd.f32 %v1712, %v1830
        %s1837 = scalar_lea.vmem %s5, 768
        %v1838 = vld [vmem:[%s1837] sm:$0xff]
        %v1839 = vld [vmem:[%s1837 + $0x8] sm:$0xff]
        %v1840 = vld [vmem:[%s1837 + $0x10] sm:$0xff]
        %v1841 = vld [vmem:[%s1837 + $0x18] sm:$0xff]
        %v1842 = vld [vmem:[%s1837 + $0x20] sm:$0xff]
        %v1843 = vld [vmem:[%s1837 + $0x28] sm:$0xff]
        %v1844 = vld [vmem:[%s1837 + $0x30] sm:$0xff]
        %v1845 = vld [vmem:[%s1837 + $0x38] sm:$0xff]
        %v1846 = vld [vmem:[%s1837 + $0x40] sm:$0xff]
        %v1847 = vld [vmem:[%s1837 + $0x48] sm:$0xff]
        %v1848 = vld [vmem:[%s1837 + $0x50] sm:$0xff]
        %v1849 = vld [vmem:[%s1837 + $0x58] sm:$0xff]
        %v1850 = vld [vmem:[%s1837 + $0x60] sm:$0xff]
        %v1851 = vld [vmem:[%s1837 + $0x68] sm:$0xff]
        %v1852 = vld [vmem:[%s1837 + $0x70] sm:$0xff]
        %v1853 = vld [vmem:[%s1837 + $0x78] sm:$0xff]
        %v1854 = vld [vmem:[%s1837 + $0x80] sm:$0xff]
        %v1855 = vld [vmem:[%s1837 + $0x88] sm:$0xff]
        %v1856 = vld [vmem:[%s1837 + $0x90] sm:$0xff]
        %v1857 = vld [vmem:[%s1837 + $0x98] sm:$0xff]
        %v1858 = vld [vmem:[%s1837 + $0xa0] sm:$0xff]
        %v1859 = vld [vmem:[%s1837 + $0xa8] sm:$0xff]
        %v1860 = vld [vmem:[%s1837 + $0xb0] sm:$0xff]
        %v1861 = vld [vmem:[%s1837 + $0xb8] sm:$0xff]
        %v1862 = vld [vmem:[%s1837 + $0xc0] sm:$0xff]
        %v1863 = vld [vmem:[%s1837 + $0xc8] sm:$0xff]
        %v1864 = vld [vmem:[%s1837 + $0xd0] sm:$0xff]
        %v1865 = vld [vmem:[%s1837 + $0xd8] sm:$0xff]
        %v1866 = vld [vmem:[%s1837 + $0xe0] sm:$0xff]
        %v1867 = vld [vmem:[%s1837 + $0xe8] sm:$0xff]
        %v1868 = vld [vmem:[%s1837 + $0xf0] sm:$0xff]
        %v1869 = vld [vmem:[%s1837 + $0xf8] sm:$0xff]
        %1870 = vmatprep.subr.mxu0 0.0
        %1871 = vmatpush1.msra.mxu0 %v1853
        %1872 = vmatprep.subr.mxu0 0.0
        %1873 = vmatpush1.msra.mxu0 %v1852
        %1874 = vmatprep.subr.mxu0 0.0
        %1875 = vmatpush1.msra.mxu0 %v1851
        %1876 = vmatprep.subr.mxu0 0.0
        %1877 = vmatpush1.msra.mxu0 %v1850
        %1878 = vmatprep.subr.mxu0 0.0
        %1879 = vmatpush1.msra.mxu0 %v1849
        %1880 = vmatprep.subr.mxu0 0.0
        %1881 = vmatpush1.msra.mxu0 %v1848
        %1882 = vmatprep.subr.mxu0 0.0
        %1883 = vmatpush1.msra.mxu0 %v1847
        %1884 = vmatprep.subr.mxu0 0.0
        %1885 = vmatpush1.msra.mxu0 %v1846
        %1886 = vmatprep.subr.mxu0 0.0
        %1887 = vmatpush1.msra.mxu0 %v1845
        %1888 = vmatprep.subr.mxu0 0.0
        %1889 = vmatpush1.msra.mxu0 %v1844
        %1890 = vmatprep.subr.mxu0 0.0
        %1891 = vmatpush1.msra.mxu0 %v1843
        %1892 = vmatprep.subr.mxu0 0.0
        %1893 = vmatpush1.msra.mxu0 %v1842
        %1894 = vmatprep.subr.mxu0 0.0
        %1895 = vmatpush1.msra.mxu0 %v1841
        %1896 = vmatprep.subr.mxu0 0.0
        %1897 = vmatpush1.msra.mxu0 %v1840
        %1898 = vmatprep.subr.mxu0 0.0
        %1899 = vmatpush1.msra.mxu0 %v1839
        %1900 = vmatprep.subr.mxu0 0.0
        %1901 = vmatpush1.msra.mxu0 %v1838
        %1902 = vmatprep.subr.mxu0 0.0
        %1903 = vmatpush2.msra.mxu0 %v1869
        %1904 = vmatprep.subr.mxu0 0.0
        %1905 = vmatpush2.msra.mxu0 %v1868
        %1906 = vmatprep.subr.mxu0 0.0
        %1907 = vmatpush2.msra.mxu0 %v1867
        %1908 = vmatprep.subr.mxu0 0.0
        %1909 = vmatpush2.msra.mxu0 %v1866
        %1910 = vmatprep.subr.mxu0 0.0
        %1911 = vmatpush2.msra.mxu0 %v1865
        %1912 = vmatprep.subr.mxu0 0.0
        %1913 = vmatpush2.msra.mxu0 %v1864
        %1914 = vmatprep.subr.mxu0 0.0
        %1915 = vmatpush2.msra.mxu0 %v1863
        %1916 = vmatprep.subr.mxu0 0.0
        %1917 = vmatpush2.msra.mxu0 %v1862
        %1918 = vmatprep.subr.mxu0 0.0
        %1919 = vmatpush2.msra.mxu0 %v1861
        %1920 = vmatprep.subr.mxu0 0.0
        %1921 = vmatpush2.msra.mxu0 %v1860
        %1922 = vmatprep.subr.mxu0 0.0
        %1923 = vmatpush2.msra.mxu0 %v1859
        %1924 = vmatprep.subr.mxu0 0.0
        %1925 = vmatpush2.msra.mxu0 %v1858
        %1926 = vmatprep.subr.mxu0 0.0
        %1927 = vmatpush2.msra.mxu0 %v1857
        %1928 = vmatprep.subr.mxu0 0.0
        %1929 = vmatpush2.msra.mxu0 %v1856
        %1930 = vmatprep.subr.mxu0 0.0
        %1931 = vmatpush2.msra.mxu0 %v1855
        %1932 = vmatprep.subr.mxu0 0.0
        %1933 = vmatpush2.msra.mxu0 %v1854
        %1934 = vmatprep.mubr.f32.mxu0 %v1172
        %1935 = vmatmul.mubr.f32.gmra.mxu0 %v1170
        %v1936 = vpop.f32.mrf.mxu0
        %v1937 = vadd.f32 0.0, %v1936
        %v1938 = vpop.f32.mrf.mxu0
        %1939 = vmatprep.mubr.f32.mxu0 %v1178
        %1940 = vmatmul.mubr.f32.gmra.mxu0 %v1176
        %v1941 = vpop.f32.mrf.mxu0
        %v1942 = vadd.f32 0.0, %v1941
        %v1943 = vpop.f32.mrf.mxu0
        %1944 = vmatprep.mubr.f32.mxu0 %v1184
        %1945 = vmatmul.mubr.f32.gmra.mxu0 %v1182
        %v1946 = vpop.f32.mrf.mxu0
        %v1947 = vadd.f32 0.0, %v1946
        %v1948 = vpop.f32.mrf.mxu0
        %1949 = vmatprep.mubr.f32.mxu0 %v1190
        %1950 = vmatmul.mubr.f32.gmra.mxu0 %v1188
        %v1951 = vpop.f32.mrf.mxu0
        %v1952 = vadd.f32 0.0, %v1951
        %v1953 = vpop.f32.mrf.mxu0
        %1954 = vdwg.mxu0
        %v1955 = vadd.f32 %v1833, %v1937
        %v1956 = vadd.f32 %v1834, %v1942
        %v1957 = vadd.f32 %v1835, %v1947
        %v1958 = vadd.f32 %v1836, %v1952
        %s1959 = scalar_lea.vmem %s5, 1024
        %v1960 = vld [vmem:[%s1959] sm:$0xff]
        %v1961 = vld [vmem:[%s1959 + $0x8] sm:$0xff]
        %v1962 = vld [vmem:[%s1959 + $0x10] sm:$0xff]
        %v1963 = vld [vmem:[%s1959 + $0x18] sm:$0xff]
        %v1964 = vld [vmem:[%s1959 + $0x20] sm:$0xff]
        %v1965 = vld [vmem:[%s1959 + $0x28] sm:$0xff]
        %v1966 = vld [vmem:[%s1959 + $0x30] sm:$0xff]
        %v1967 = vld [vmem:[%s1959 + $0x38] sm:$0xff]
        %v1968 = vld [vmem:[%s1959 + $0x40] sm:$0xff]
        %v1969 = vld [vmem:[%s1959 + $0x48] sm:$0xff]
        %v1970 = vld [vmem:[%s1959 + $0x50] sm:$0xff]
        %v1971 = vld [vmem:[%s1959 + $0x58] sm:$0xff]
        %v1972 = vld [vmem:[%s1959 + $0x60] sm:$0xff]
        %v1973 = vld [vmem:[%s1959 + $0x68] sm:$0xff]
        %v1974 = vld [vmem:[%s1959 + $0x70] sm:$0xff]
        %v1975 = vld [vmem:[%s1959 + $0x78] sm:$0xff]
        %v1976 = vld [vmem:[%s1959 + $0x80] sm:$0xff]
        %v1977 = vld [vmem:[%s1959 + $0x88] sm:$0xff]
        %v1978 = vld [vmem:[%s1959 + $0x90] sm:$0xff]
        %v1979 = vld [vmem:[%s1959 + $0x98] sm:$0xff]
        %v1980 = vld [vmem:[%s1959 + $0xa0] sm:$0xff]
        %v1981 = vld [vmem:[%s1959 + $0xa8] sm:$0xff]
        %v1982 = vld [vmem:[%s1959 + $0xb0] sm:$0xff]
        %v1983 = vld [vmem:[%s1959 + $0xb8] sm:$0xff]
        %v1984 = vld [vmem:[%s1959 + $0xc0] sm:$0xff]
        %v1985 = vld [vmem:[%s1959 + $0xc8] sm:$0xff]
        %v1986 = vld [vmem:[%s1959 + $0xd0] sm:$0xff]
        %v1987 = vld [vmem:[%s1959 + $0xd8] sm:$0xff]
        %v1988 = vld [vmem:[%s1959 + $0xe0] sm:$0xff]
        %v1989 = vld [vmem:[%s1959 + $0xe8] sm:$0xff]
        %v1990 = vld [vmem:[%s1959 + $0xf0] sm:$0xff]
        %v1991 = vld [vmem:[%s1959 + $0xf8] sm:$0xff]
        %1992 = vmatprep.subr.mxu0 0.0
        %1993 = vmatpush1.msra.mxu0 %v1975
        %1994 = vmatprep.subr.mxu0 0.0
        %1995 = vmatpush1.msra.mxu0 %v1974
        %1996 = vmatprep.subr.mxu0 0.0
        %1997 = vmatpush1.msra.mxu0 %v1973
        %1998 = vmatprep.subr.mxu0 0.0
        %1999 = vmatpush1.msra.mxu0 %v1972
        %2000 = vmatprep.subr.mxu0 0.0
        %2001 = vmatpush1.msra.mxu0 %v1971
        %2002 = vmatprep.subr.mxu0 0.0
        %2003 = vmatpush1.msra.mxu0 %v1970
        %2004 = vmatprep.subr.mxu0 0.0
        %2005 = vmatpush1.msra.mxu0 %v1969
        %2006 = vmatprep.subr.mxu0 0.0
        %2007 = vmatpush1.msra.mxu0 %v1968
        %2008 = vmatprep.subr.mxu0 0.0
        %2009 = vmatpush1.msra.mxu0 %v1967
        %2010 = vmatprep.subr.mxu0 0.0
        %2011 = vmatpush1.msra.mxu0 %v1966
        %2012 = vmatprep.subr.mxu0 0.0
        %2013 = vmatpush1.msra.mxu0 %v1965
        %2014 = vmatprep.subr.mxu0 0.0
        %2015 = vmatpush1.msra.mxu0 %v1964
        %2016 = vmatprep.subr.mxu0 0.0
        %2017 = vmatpush1.msra.mxu0 %v1963
        %2018 = vmatprep.subr.mxu0 0.0
        %2019 = vmatpush1.msra.mxu0 %v1962
        %2020 = vmatprep.subr.mxu0 0.0
        %2021 = vmatpush1.msra.mxu0 %v1961
        %2022 = vmatprep.subr.mxu0 0.0
        %2023 = vmatpush1.msra.mxu0 %v1960
        %2024 = vmatprep.subr.mxu0 0.0
        %2025 = vmatpush2.msra.mxu0 %v1991
        %2026 = vmatprep.subr.mxu0 0.0
        %2027 = vmatpush2.msra.mxu0 %v1990
        %2028 = vmatprep.subr.mxu0 0.0
        %2029 = vmatpush2.msra.mxu0 %v1989
        %2030 = vmatprep.subr.mxu0 0.0
        %2031 = vmatpush2.msra.mxu0 %v1988
        %2032 = vmatprep.subr.mxu0 0.0
        %2033 = vmatpush2.msra.mxu0 %v1987
        %2034 = vmatprep.subr.mxu0 0.0
        %2035 = vmatpush2.msra.mxu0 %v1986
        %2036 = vmatprep.subr.mxu0 0.0
        %2037 = vmatpush2.msra.mxu0 %v1985
        %2038 = vmatprep.subr.mxu0 0.0
        %2039 = vmatpush2.msra.mxu0 %v1984
        %2040 = vmatprep.subr.mxu0 0.0
        %2041 = vmatpush2.msra.mxu0 %v1983
        %2042 = vmatprep.subr.mxu0 0.0
        %2043 = vmatpush2.msra.mxu0 %v1982
        %2044 = vmatprep.subr.mxu0 0.0
        %2045 = vmatpush2.msra.mxu0 %v1981
        %2046 = vmatprep.subr.mxu0 0.0
        %2047 = vmatpush2.msra.mxu0 %v1980
        %2048 = vmatprep.subr.mxu0 0.0
        %2049 = vmatpush2.msra.mxu0 %v1979
        %2050 = vmatprep.subr.mxu0 0.0
        %2051 = vmatpush2.msra.mxu0 %v1978
        %2052 = vmatprep.subr.mxu0 0.0
        %2053 = vmatpush2.msra.mxu0 %v1977
        %2054 = vmatprep.subr.mxu0 0.0
        %2055 = vmatpush2.msra.mxu0 %v1976
        %2056 = vmatprep.mubr.f32.mxu0 %v1196
        %2057 = vmatmul.mubr.f32.gmra.mxu0 %v1194
        %v2058 = vpop.f32.mrf.mxu0
        %v2059 = vadd.f32 0.0, %v2058
        %v2060 = vpop.f32.mrf.mxu0
        %2061 = vmatprep.mubr.f32.mxu0 %v1202
        %2062 = vmatmul.mubr.f32.gmra.mxu0 %v1200
        %v2063 = vpop.f32.mrf.mxu0
        %v2064 = vadd.f32 0.0, %v2063
        %v2065 = vpop.f32.mrf.mxu0
        %2066 = vmatprep.mubr.f32.mxu0 %v1208
        %2067 = vmatmul.mubr.f32.gmra.mxu0 %v1206
        %v2068 = vpop.f32.mrf.mxu0
        %v2069 = vadd.f32 0.0, %v2068
        %v2070 = vpop.f32.mrf.mxu0
        %2071 = vmatprep.mubr.f32.mxu0 %v1214
        %2072 = vmatmul.mubr.f32.gmra.mxu0 %v1212
        %v2073 = vpop.f32.mrf.mxu0
        %v2074 = vadd.f32 0.0, %v2073
        %v2075 = vpop.f32.mrf.mxu0
        %2076 = vdwg.mxu0
        %v2077 = vadd.f32 %v1955, %v2059
        %v2078 = vadd.f32 %v1956, %v2064
        %v2079 = vadd.f32 %v1957, %v2069
        %v2080 = vadd.f32 %v1958, %v2074
        %s2081 = scalar_lea.vmem %s5, 1280
        %v2082 = vld [vmem:[%s2081] sm:$0xff]
        %v2083 = vld [vmem:[%s2081 + $0x8] sm:$0xff]
        %v2084 = vld [vmem:[%s2081 + $0x10] sm:$0xff]
        %v2085 = vld [vmem:[%s2081 + $0x18] sm:$0xff]
        %v2086 = vld [vmem:[%s2081 + $0x20] sm:$0xff]
        %v2087 = vld [vmem:[%s2081 + $0x28] sm:$0xff]
        %v2088 = vld [vmem:[%s2081 + $0x30] sm:$0xff]
        %v2089 = vld [vmem:[%s2081 + $0x38] sm:$0xff]
        %v2090 = vld [vmem:[%s2081 + $0x40] sm:$0xff]
        %v2091 = vld [vmem:[%s2081 + $0x48] sm:$0xff]
        %v2092 = vld [vmem:[%s2081 + $0x50] sm:$0xff]
        %v2093 = vld [vmem:[%s2081 + $0x58] sm:$0xff]
        %v2094 = vld [vmem:[%s2081 + $0x60] sm:$0xff]
        %v2095 = vld [vmem:[%s2081 + $0x68] sm:$0xff]
        %v2096 = vld [vmem:[%s2081 + $0x70] sm:$0xff]
        %v2097 = vld [vmem:[%s2081 + $0x78] sm:$0xff]
        %v2098 = vld [vmem:[%s2081 + $0x80] sm:$0xff]
        %v2099 = vld [vmem:[%s2081 + $0x88] sm:$0xff]
        %v2100 = vld [vmem:[%s2081 + $0x90] sm:$0xff]
        %v2101 = vld [vmem:[%s2081 + $0x98] sm:$0xff]
        %v2102 = vld [vmem:[%s2081 + $0xa0] sm:$0xff]
        %v2103 = vld [vmem:[%s2081 + $0xa8] sm:$0xff]
        %v2104 = vld [vmem:[%s2081 + $0xb0] sm:$0xff]
        %v2105 = vld [vmem:[%s2081 + $0xb8] sm:$0xff]
        %v2106 = vld [vmem:[%s2081 + $0xc0] sm:$0xff]
        %v2107 = vld [vmem:[%s2081 + $0xc8] sm:$0xff]
        %v2108 = vld [vmem:[%s2081 + $0xd0] sm:$0xff]
        %v2109 = vld [vmem:[%s2081 + $0xd8] sm:$0xff]
        %v2110 = vld [vmem:[%s2081 + $0xe0] sm:$0xff]
        %v2111 = vld [vmem:[%s2081 + $0xe8] sm:$0xff]
        %v2112 = vld [vmem:[%s2081 + $0xf0] sm:$0xff]
        %v2113 = vld [vmem:[%s2081 + $0xf8] sm:$0xff]
        %2114 = vmatprep.subr.mxu0 0.0
        %2115 = vmatpush1.msra.mxu0 %v2097
        %2116 = vmatprep.subr.mxu0 0.0
        %2117 = vmatpush1.msra.mxu0 %v2096
        %2118 = vmatprep.subr.mxu0 0.0
        %2119 = vmatpush1.msra.mxu0 %v2095
        %2120 = vmatprep.subr.mxu0 0.0
        %2121 = vmatpush1.msra.mxu0 %v2094
        %2122 = vmatprep.subr.mxu0 0.0
        %2123 = vmatpush1.msra.mxu0 %v2093
        %2124 = vmatprep.subr.mxu0 0.0
        %2125 = vmatpush1.msra.mxu0 %v2092
        %2126 = vmatprep.subr.mxu0 0.0
        %2127 = vmatpush1.msra.mxu0 %v2091
        %2128 = vmatprep.subr.mxu0 0.0
        %2129 = vmatpush1.msra.mxu0 %v2090
        %2130 = vmatprep.subr.mxu0 0.0
        %2131 = vmatpush1.msra.mxu0 %v2089
        %2132 = vmatprep.subr.mxu0 0.0
        %2133 = vmatpush1.msra.mxu0 %v2088
        %2134 = vmatprep.subr.mxu0 0.0
        %2135 = vmatpush1.msra.mxu0 %v2087
        %2136 = vmatprep.subr.mxu0 0.0
        %2137 = vmatpush1.msra.mxu0 %v2086
        %2138 = vmatprep.subr.mxu0 0.0
        %2139 = vmatpush1.msra.mxu0 %v2085
        %2140 = vmatprep.subr.mxu0 0.0
        %2141 = vmatpush1.msra.mxu0 %v2084
        %2142 = vmatprep.subr.mxu0 0.0
        %2143 = vmatpush1.msra.mxu0 %v2083
        %2144 = vmatprep.subr.mxu0 0.0
        %2145 = vmatpush1.msra.mxu0 %v2082
        %2146 = vmatprep.subr.mxu0 0.0
        %2147 = vmatpush2.msra.mxu0 %v2113
        %2148 = vmatprep.subr.mxu0 0.0
        %2149 = vmatpush2.msra.mxu0 %v2112
        %2150 = vmatprep.subr.mxu0 0.0
        %2151 = vmatpush2.msra.mxu0 %v2111
        %2152 = vmatprep.subr.mxu0 0.0
        %2153 = vmatpush2.msra.mxu0 %v2110
        %2154 = vmatprep.subr.mxu0 0.0
        %2155 = vmatpush2.msra.mxu0 %v2109
        %2156 = vmatprep.subr.mxu0 0.0
        %2157 = vmatpush2.msra.mxu0 %v2108
        %2158 = vmatprep.subr.mxu0 0.0
        %2159 = vmatpush2.msra.mxu0 %v2107
        %2160 = vmatprep.subr.mxu0 0.0
        %2161 = vmatpush2.msra.mxu0 %v2106
        %2162 = vmatprep.subr.mxu0 0.0
        %2163 = vmatpush2.msra.mxu0 %v2105
        %2164 = vmatprep.subr.mxu0 0.0
        %2165 = vmatpush2.msra.mxu0 %v2104
        %2166 = vmatprep.subr.mxu0 0.0
        %2167 = vmatpush2.msra.mxu0 %v2103
        %2168 = vmatprep.subr.mxu0 0.0
        %2169 = vmatpush2.msra.mxu0 %v2102
        %2170 = vmatprep.subr.mxu0 0.0
        %2171 = vmatpush2.msra.mxu0 %v2101
        %2172 = vmatprep.subr.mxu0 0.0
        %2173 = vmatpush2.msra.mxu0 %v2100
        %2174 = vmatprep.subr.mxu0 0.0
        %2175 = vmatpush2.msra.mxu0 %v2099
        %2176 = vmatprep.subr.mxu0 0.0
        %2177 = vmatpush2.msra.mxu0 %v2098
        %2178 = vmatprep.mubr.f32.mxu0 %v1220
        %2179 = vmatmul.mubr.f32.gmra.mxu0 %v1218
        %v2180 = vpop.f32.mrf.mxu0
        %v2181 = vadd.f32 0.0, %v2180
        %v2182 = vpop.f32.mrf.mxu0
        %2183 = vmatprep.mubr.f32.mxu0 %v1226
        %2184 = vmatmul.mubr.f32.gmra.mxu0 %v1224
        %v2185 = vpop.f32.mrf.mxu0
        %v2186 = vadd.f32 0.0, %v2185
        %v2187 = vpop.f32.mrf.mxu0
        %2188 = vmatprep.mubr.f32.mxu0 %v1232
        %2189 = vmatmul.mubr.f32.gmra.mxu0 %v1230
        %v2190 = vpop.f32.mrf.mxu0
        %v2191 = vadd.f32 0.0, %v2190
        %v2192 = vpop.f32.mrf.mxu0
        %2193 = vmatprep.mubr.f32.mxu0 %v1238
        %2194 = vmatmul.mubr.f32.gmra.mxu0 %v1236
        %v2195 = vpop.f32.mrf.mxu0
        %v2196 = vadd.f32 0.0, %v2195
        %v2197 = vpop.f32.mrf.mxu0
        %2198 = vdwg.mxu0
        %v2199 = vadd.f32 %v2077, %v2181
        %v2200 = vadd.f32 %v2078, %v2186
        %v2201 = vadd.f32 %v2079, %v2191
        %v2202 = vadd.f32 %v2080, %v2196
        %s2203 = scalar_lea.vmem %s5, 1536
        %v2204 = vld [vmem:[%s2203] sm:$0xff]
        %v2205 = vld [vmem:[%s2203 + $0x8] sm:$0xff]
        %v2206 = vld [vmem:[%s2203 + $0x10] sm:$0xff]
        %v2207 = vld [vmem:[%s2203 + $0x18] sm:$0xff]
        %v2208 = vld [vmem:[%s2203 + $0x20] sm:$0xff]
        %v2209 = vld [vmem:[%s2203 + $0x28] sm:$0xff]
        %v2210 = vld [vmem:[%s2203 + $0x30] sm:$0xff]
        %v2211 = vld [vmem:[%s2203 + $0x38] sm:$0xff]
        %v2212 = vld [vmem:[%s2203 + $0x40] sm:$0xff]
        %v2213 = vld [vmem:[%s2203 + $0x48] sm:$0xff]
        %v2214 = vld [vmem:[%s2203 + $0x50] sm:$0xff]
        %v2215 = vld [vmem:[%s2203 + $0x58] sm:$0xff]
        %v2216 = vld [vmem:[%s2203 + $0x60] sm:$0xff]
        %v2217 = vld [vmem:[%s2203 + $0x68] sm:$0xff]
        %v2218 = vld [vmem:[%s2203 + $0x70] sm:$0xff]
        %v2219 = vld [vmem:[%s2203 + $0x78] sm:$0xff]
        %v2220 = vld [vmem:[%s2203 + $0x80] sm:$0xff]
        %v2221 = vld [vmem:[%s2203 + $0x88] sm:$0xff]
        %v2222 = vld [vmem:[%s2203 + $0x90] sm:$0xff]
        %v2223 = vld [vmem:[%s2203 + $0x98] sm:$0xff]
        %v2224 = vld [vmem:[%s2203 + $0xa0] sm:$0xff]
        %v2225 = vld [vmem:[%s2203 + $0xa8] sm:$0xff]
        %v2226 = vld [vmem:[%s2203 + $0xb0] sm:$0xff]
        %v2227 = vld [vmem:[%s2203 + $0xb8] sm:$0xff]
        %v2228 = vld [vmem:[%s2203 + $0xc0] sm:$0xff]
        %v2229 = vld [vmem:[%s2203 + $0xc8] sm:$0xff]
        %v2230 = vld [vmem:[%s2203 + $0xd0] sm:$0xff]
        %v2231 = vld [vmem:[%s2203 + $0xd8] sm:$0xff]
        %v2232 = vld [vmem:[%s2203 + $0xe0] sm:$0xff]
        %v2233 = vld [vmem:[%s2203 + $0xe8] sm:$0xff]
        %v2234 = vld [vmem:[%s2203 + $0xf0] sm:$0xff]
        %v2235 = vld [vmem:[%s2203 + $0xf8] sm:$0xff]
        %2236 = vmatprep.subr.mxu0 0.0
        %2237 = vmatpush1.msra.mxu0 %v2219
        %2238 = vmatprep.subr.mxu0 0.0
        %2239 = vmatpush1.msra.mxu0 %v2218
        %2240 = vmatprep.subr.mxu0 0.0
        %2241 = vmatpush1.msra.mxu0 %v2217
        %2242 = vmatprep.subr.mxu0 0.0
        %2243 = vmatpush1.msra.mxu0 %v2216
        %2244 = vmatprep.subr.mxu0 0.0
        %2245 = vmatpush1.msra.mxu0 %v2215
        %2246 = vmatprep.subr.mxu0 0.0
        %2247 = vmatpush1.msra.mxu0 %v2214
        %2248 = vmatprep.subr.mxu0 0.0
        %2249 = vmatpush1.msra.mxu0 %v2213
        %2250 = vmatprep.subr.mxu0 0.0
        %2251 = vmatpush1.msra.mxu0 %v2212
        %2252 = vmatprep.subr.mxu0 0.0
        %2253 = vmatpush1.msra.mxu0 %v2211
        %2254 = vmatprep.subr.mxu0 0.0
        %2255 = vmatpush1.msra.mxu0 %v2210
        %2256 = vmatprep.subr.mxu0 0.0
        %2257 = vmatpush1.msra.mxu0 %v2209
        %2258 = vmatprep.subr.mxu0 0.0
        %2259 = vmatpush1.msra.mxu0 %v2208
        %2260 = vmatprep.subr.mxu0 0.0
        %2261 = vmatpush1.msra.mxu0 %v2207
        %2262 = vmatprep.subr.mxu0 0.0
        %2263 = vmatpush1.msra.mxu0 %v2206
        %2264 = vmatprep.subr.mxu0 0.0
        %2265 = vmatpush1.msra.mxu0 %v2205
        %2266 = vmatprep.subr.mxu0 0.0
        %2267 = vmatpush1.msra.mxu0 %v2204
        %2268 = vmatprep.subr.mxu0 0.0
        %2269 = vmatpush2.msra.mxu0 %v2235
        %2270 = vmatprep.subr.mxu0 0.0
        %2271 = vmatpush2.msra.mxu0 %v2234
        %2272 = vmatprep.subr.mxu0 0.0
        %2273 = vmatpush2.msra.mxu0 %v2233
        %2274 = vmatprep.subr.mxu0 0.0
        %2275 = vmatpush2.msra.mxu0 %v2232
        %2276 = vmatprep.subr.mxu0 0.0
        %2277 = vmatpush2.msra.mxu0 %v2231
        %2278 = vmatprep.subr.mxu0 0.0
        %2279 = vmatpush2.msra.mxu0 %v2230
        %2280 = vmatprep.subr.mxu0 0.0
        %2281 = vmatpush2.msra.mxu0 %v2229
        %2282 = vmatprep.subr.mxu0 0.0
        %2283 = vmatpush2.msra.mxu0 %v2228
        %2284 = vmatprep.subr.mxu0 0.0
        %2285 = vmatpush2.msra.mxu0 %v2227
        %2286 = vmatprep.subr.mxu0 0.0
        %2287 = vmatpush2.msra.mxu0 %v2226
        %2288 = vmatprep.subr.mxu0 0.0
        %2289 = vmatpush2.msra.mxu0 %v2225
        %2290 = vmatprep.subr.mxu0 0.0
        %2291 = vmatpush2.msra.mxu0 %v2224
        %2292 = vmatprep.subr.mxu0 0.0
        %2293 = vmatpush2.msra.mxu0 %v2223
        %2294 = vmatprep.subr.mxu0 0.0
        %2295 = vmatpush2.msra.mxu0 %v2222
        %2296 = vmatprep.subr.mxu0 0.0
        %2297 = vmatpush2.msra.mxu0 %v2221
        %2298 = vmatprep.subr.mxu0 0.0
        %2299 = vmatpush2.msra.mxu0 %v2220
        %2300 = vmatprep.mubr.f32.mxu0 %v1244
        %2301 = vmatmul.mubr.f32.gmra.mxu0 %v1242
        %v2302 = vpop.f32.mrf.mxu0
        %v2303 = vadd.f32 0.0, %v2302
        %v2304 = vpop.f32.mrf.mxu0
        %2305 = vmatprep.mubr.f32.mxu0 %v1250
        %2306 = vmatmul.mubr.f32.gmra.mxu0 %v1248
        %v2307 = vpop.f32.mrf.mxu0
        %v2308 = vadd.f32 0.0, %v2307
        %v2309 = vpop.f32.mrf.mxu0
        %2310 = vmatprep.mubr.f32.mxu0 %v1256
        %2311 = vmatmul.mubr.f32.gmra.mxu0 %v1254
        %v2312 = vpop.f32.mrf.mxu0
        %v2313 = vadd.f32 0.0, %v2312
        %v2314 = vpop.f32.mrf.mxu0
        %2315 = vmatprep.mubr.f32.mxu0 %v1262
        %2316 = vmatmul.mubr.f32.gmra.mxu0 %v1260
        %v2317 = vpop.f32.mrf.mxu0
        %v2318 = vadd.f32 0.0, %v2317
        %v2319 = vpop.f32.mrf.mxu0
        %2320 = vdwg.mxu0
        %v2321 = vadd.f32 %v2199, %v2303
        %v2322 = vadd.f32 %v2200, %v2308
        %v2323 = vadd.f32 %v2201, %v2313
        %v2324 = vadd.f32 %v2202, %v2318
        %s2325 = scalar_lea.vmem %s5, 1792
        %v2326 = vld [vmem:[%s2325] sm:$0xff]
        %v2327 = vld [vmem:[%s2325 + $0x8] sm:$0xff]
        %v2328 = vld [vmem:[%s2325 + $0x10] sm:$0xff]
        %v2329 = vld [vmem:[%s2325 + $0x18] sm:$0xff]
        %v2330 = vld [vmem:[%s2325 + $0x20] sm:$0xff]
        %v2331 = vld [vmem:[%s2325 + $0x28] sm:$0xff]
        %v2332 = vld [vmem:[%s2325 + $0x30] sm:$0xff]
        %v2333 = vld [vmem:[%s2325 + $0x38] sm:$0xff]
        %v2334 = vld [vmem:[%s2325 + $0x40] sm:$0xff]
        %v2335 = vld [vmem:[%s2325 + $0x48] sm:$0xff]
        %v2336 = vld [vmem:[%s2325 + $0x50] sm:$0xff]
        %v2337 = vld [vmem:[%s2325 + $0x58] sm:$0xff]
        %v2338 = vld [vmem:[%s2325 + $0x60] sm:$0xff]
        %v2339 = vld [vmem:[%s2325 + $0x68] sm:$0xff]
        %v2340 = vld [vmem:[%s2325 + $0x70] sm:$0xff]
        %v2341 = vld [vmem:[%s2325 + $0x78] sm:$0xff]
        %v2342 = vld [vmem:[%s2325 + $0x80] sm:$0xff]
        %v2343 = vld [vmem:[%s2325 + $0x88] sm:$0xff]
        %v2344 = vld [vmem:[%s2325 + $0x90] sm:$0xff]
        %v2345 = vld [vmem:[%s2325 + $0x98] sm:$0xff]
        %v2346 = vld [vmem:[%s2325 + $0xa0] sm:$0xff]
        %v2347 = vld [vmem:[%s2325 + $0xa8] sm:$0xff]
        %v2348 = vld [vmem:[%s2325 + $0xb0] sm:$0xff]
        %v2349 = vld [vmem:[%s2325 + $0xb8] sm:$0xff]
        %v2350 = vld [vmem:[%s2325 + $0xc0] sm:$0xff]
        %v2351 = vld [vmem:[%s2325 + $0xc8] sm:$0xff]
        %v2352 = vld [vmem:[%s2325 + $0xd0] sm:$0xff]
        %v2353 = vld [vmem:[%s2325 + $0xd8] sm:$0xff]
        %v2354 = vld [vmem:[%s2325 + $0xe0] sm:$0xff]
        %v2355 = vld [vmem:[%s2325 + $0xe8] sm:$0xff]
        %v2356 = vld [vmem:[%s2325 + $0xf0] sm:$0xff]
        %v2357 = vld [vmem:[%s2325 + $0xf8] sm:$0xff]
        %2358 = vmatprep.subr.mxu0 0.0
        %2359 = vmatpush1.msra.mxu0 %v2341
        %2360 = vmatprep.subr.mxu0 0.0
        %2361 = vmatpush1.msra.mxu0 %v2340
        %2362 = vmatprep.subr.mxu0 0.0
        %2363 = vmatpush1.msra.mxu0 %v2339
        %2364 = vmatprep.subr.mxu0 0.0
        %2365 = vmatpush1.msra.mxu0 %v2338
        %2366 = vmatprep.subr.mxu0 0.0
        %2367 = vmatpush1.msra.mxu0 %v2337
        %2368 = vmatprep.subr.mxu0 0.0
        %2369 = vmatpush1.msra.mxu0 %v2336
        %2370 = vmatprep.subr.mxu0 0.0
        %2371 = vmatpush1.msra.mxu0 %v2335
        %2372 = vmatprep.subr.mxu0 0.0
        %2373 = vmatpush1.msra.mxu0 %v2334
        %2374 = vmatprep.subr.mxu0 0.0
        %2375 = vmatpush1.msra.mxu0 %v2333
        %2376 = vmatprep.subr.mxu0 0.0
        %2377 = vmatpush1.msra.mxu0 %v2332
        %2378 = vmatprep.subr.mxu0 0.0
        %2379 = vmatpush1.msra.mxu0 %v2331
        %2380 = vmatprep.subr.mxu0 0.0
        %2381 = vmatpush1.msra.mxu0 %v2330
        %2382 = vmatprep.subr.mxu0 0.0
        %2383 = vmatpush1.msra.mxu0 %v2329
        %2384 = vmatprep.subr.mxu0 0.0
        %2385 = vmatpush1.msra.mxu0 %v2328
        %2386 = vmatprep.subr.mxu0 0.0
        %2387 = vmatpush1.msra.mxu0 %v2327
        %2388 = vmatprep.subr.mxu0 0.0
        %2389 = vmatpush1.msra.mxu0 %v2326
        %2390 = vmatprep.subr.mxu0 0.0
        %2391 = vmatpush2.msra.mxu0 %v2357
        %2392 = vmatprep.subr.mxu0 0.0
        %2393 = vmatpush2.msra.mxu0 %v2356
        %2394 = vmatprep.subr.mxu0 0.0
        %2395 = vmatpush2.msra.mxu0 %v2355
        %2396 = vmatprep.subr.mxu0 0.0
        %2397 = vmatpush2.msra.mxu0 %v2354
        %2398 = vmatprep.subr.mxu0 0.0
        %2399 = vmatpush2.msra.mxu0 %v2353
        %2400 = vmatprep.subr.mxu0 0.0
        %2401 = vmatpush2.msra.mxu0 %v2352
        %2402 = vmatprep.subr.mxu0 0.0
        %2403 = vmatpush2.msra.mxu0 %v2351
        %2404 = vmatprep.subr.mxu0 0.0
        %2405 = vmatpush2.msra.mxu0 %v2350
        %2406 = vmatprep.subr.mxu0 0.0
        %2407 = vmatpush2.msra.mxu0 %v2349
        %2408 = vmatprep.subr.mxu0 0.0
        %2409 = vmatpush2.msra.mxu0 %v2348
        %2410 = vmatprep.subr.mxu0 0.0
        %2411 = vmatpush2.msra.mxu0 %v2347
        %2412 = vmatprep.subr.mxu0 0.0
        %2413 = vmatpush2.msra.mxu0 %v2346
        %2414 = vmatprep.subr.mxu0 0.0
        %2415 = vmatpush2.msra.mxu0 %v2345
        %2416 = vmatprep.subr.mxu0 0.0
        %2417 = vmatpush2.msra.mxu0 %v2344
        %2418 = vmatprep.subr.mxu0 0.0
        %2419 = vmatpush2.msra.mxu0 %v2343
        %2420 = vmatprep.subr.mxu0 0.0
        %2421 = vmatpush2.msra.mxu0 %v2342
        %2422 = vmatprep.mubr.f32.mxu0 %v1268
        %2423 = vmatmul.mubr.f32.gmra.mxu0 %v1266
        %v2424 = vpop.f32.mrf.mxu0
        %v2425 = vadd.f32 0.0, %v2424
        %v2426 = vpop.f32.mrf.mxu0
        %2427 = vmatprep.mubr.f32.mxu0 %v1274
        %2428 = vmatmul.mubr.f32.gmra.mxu0 %v1272
        %v2429 = vpop.f32.mrf.mxu0
        %v2430 = vadd.f32 0.0, %v2429
        %v2431 = vpop.f32.mrf.mxu0
        %2432 = vmatprep.mubr.f32.mxu0 %v1280
        %2433 = vmatmul.mubr.f32.gmra.mxu0 %v1278
        %v2434 = vpop.f32.mrf.mxu0
        %v2435 = vadd.f32 0.0, %v2434
        %v2436 = vpop.f32.mrf.mxu0
        %2437 = vmatprep.mubr.f32.mxu0 %v1286
        %2438 = vmatmul.mubr.f32.gmra.mxu0 %v1284
        %v2439 = vpop.f32.mrf.mxu0
        %v2440 = vadd.f32 0.0, %v2439
        %v2441 = vpop.f32.mrf.mxu0
        %2442 = vdwg.mxu0
        %v2443 = vadd.f32 %v2321, %v2425
        %v2444 = vadd.f32 %v2322, %v2430
        %v2445 = vadd.f32 %v2323, %v2435
        %v2446 = vadd.f32 %v2324, %v2440
        %s2447 = scalar_lea.vmem %s5, 2048
        %v2448 = vld [vmem:[%s2447] sm:$0xff]
        %v2449 = vld [vmem:[%s2447 + $0x8] sm:$0xff]
        %v2450 = vld [vmem:[%s2447 + $0x10] sm:$0xff]
        %v2451 = vld [vmem:[%s2447 + $0x18] sm:$0xff]
        %v2452 = vld [vmem:[%s2447 + $0x20] sm:$0xff]
        %v2453 = vld [vmem:[%s2447 + $0x28] sm:$0xff]
        %v2454 = vld [vmem:[%s2447 + $0x30] sm:$0xff]
        %v2455 = vld [vmem:[%s2447 + $0x38] sm:$0xff]
        %v2456 = vld [vmem:[%s2447 + $0x40] sm:$0xff]
        %v2457 = vld [vmem:[%s2447 + $0x48] sm:$0xff]
        %v2458 = vld [vmem:[%s2447 + $0x50] sm:$0xff]
        %v2459 = vld [vmem:[%s2447 + $0x58] sm:$0xff]
        %v2460 = vld [vmem:[%s2447 + $0x60] sm:$0xff]
        %v2461 = vld [vmem:[%s2447 + $0x68] sm:$0xff]
        %v2462 = vld [vmem:[%s2447 + $0x70] sm:$0xff]
        %v2463 = vld [vmem:[%s2447 + $0x78] sm:$0xff]
        %v2464 = vld [vmem:[%s2447 + $0x80] sm:$0xff]
        %v2465 = vld [vmem:[%s2447 + $0x88] sm:$0xff]
        %v2466 = vld [vmem:[%s2447 + $0x90] sm:$0xff]
        %v2467 = vld [vmem:[%s2447 + $0x98] sm:$0xff]
        %v2468 = vld [vmem:[%s2447 + $0xa0] sm:$0xff]
        %v2469 = vld [vmem:[%s2447 + $0xa8] sm:$0xff]
        %v2470 = vld [vmem:[%s2447 + $0xb0] sm:$0xff]
        %v2471 = vld [vmem:[%s2447 + $0xb8] sm:$0xff]
        %v2472 = vld [vmem:[%s2447 + $0xc0] sm:$0xff]
        %v2473 = vld [vmem:[%s2447 + $0xc8] sm:$0xff]
        %v2474 = vld [vmem:[%s2447 + $0xd0] sm:$0xff]
        %v2475 = vld [vmem:[%s2447 + $0xd8] sm:$0xff]
        %v2476 = vld [vmem:[%s2447 + $0xe0] sm:$0xff]
        %v2477 = vld [vmem:[%s2447 + $0xe8] sm:$0xff]
        %v2478 = vld [vmem:[%s2447 + $0xf0] sm:$0xff]
        %v2479 = vld [vmem:[%s2447 + $0xf8] sm:$0xff]
        %2480 = vmatprep.subr.mxu0 0.0
        %2481 = vmatpush1.msra.mxu0 %v2463
        %2482 = vmatprep.subr.mxu0 0.0
        %2483 = vmatpush1.msra.mxu0 %v2462
        %2484 = vmatprep.subr.mxu0 0.0
        %2485 = vmatpush1.msra.mxu0 %v2461
        %2486 = vmatprep.subr.mxu0 0.0
        %2487 = vmatpush1.msra.mxu0 %v2460
        %2488 = vmatprep.subr.mxu0 0.0
        %2489 = vmatpush1.msra.mxu0 %v2459
        %2490 = vmatprep.subr.mxu0 0.0
        %2491 = vmatpush1.msra.mxu0 %v2458
        %2492 = vmatprep.subr.mxu0 0.0
        %2493 = vmatpush1.msra.mxu0 %v2457
        %2494 = vmatprep.subr.mxu0 0.0
        %2495 = vmatpush1.msra.mxu0 %v2456
        %2496 = vmatprep.subr.mxu0 0.0
        %2497 = vmatpush1.msra.mxu0 %v2455
        %2498 = vmatprep.subr.mxu0 0.0
        %2499 = vmatpush1.msra.mxu0 %v2454
        %2500 = vmatprep.subr.mxu0 0.0
        %2501 = vmatpush1.msra.mxu0 %v2453
        %2502 = vmatprep.subr.mxu0 0.0
        %2503 = vmatpush1.msra.mxu0 %v2452
        %2504 = vmatprep.subr.mxu0 0.0
        %2505 = vmatpush1.msra.mxu0 %v2451
        %2506 = vmatprep.subr.mxu0 0.0
        %2507 = vmatpush1.msra.mxu0 %v2450
        %2508 = vmatprep.subr.mxu0 0.0
        %2509 = vmatpush1.msra.mxu0 %v2449
        %2510 = vmatprep.subr.mxu0 0.0
        %2511 = vmatpush1.msra.mxu0 %v2448
        %2512 = vmatprep.subr.mxu0 0.0
        %2513 = vmatpush2.msra.mxu0 %v2479
        %2514 = vmatprep.subr.mxu0 0.0
        %2515 = vmatpush2.msra.mxu0 %v2478
        %2516 = vmatprep.subr.mxu0 0.0
        %2517 = vmatpush2.msra.mxu0 %v2477
        %2518 = vmatprep.subr.mxu0 0.0
        %2519 = vmatpush2.msra.mxu0 %v2476
        %2520 = vmatprep.subr.mxu0 0.0
        %2521 = vmatpush2.msra.mxu0 %v2475
        %2522 = vmatprep.subr.mxu0 0.0
        %2523 = vmatpush2.msra.mxu0 %v2474
        %2524 = vmatprep.subr.mxu0 0.0
        %2525 = vmatpush2.msra.mxu0 %v2473
        %2526 = vmatprep.subr.mxu0 0.0
        %2527 = vmatpush2.msra.mxu0 %v2472
        %2528 = vmatprep.subr.mxu0 0.0
        %2529 = vmatpush2.msra.mxu0 %v2471
        %2530 = vmatprep.subr.mxu0 0.0
        %2531 = vmatpush2.msra.mxu0 %v2470
        %2532 = vmatprep.subr.mxu0 0.0
        %2533 = vmatpush2.msra.mxu0 %v2469
        %2534 = vmatprep.subr.mxu0 0.0
        %2535 = vmatpush2.msra.mxu0 %v2468
        %2536 = vmatprep.subr.mxu0 0.0
        %2537 = vmatpush2.msra.mxu0 %v2467
        %2538 = vmatprep.subr.mxu0 0.0
        %2539 = vmatpush2.msra.mxu0 %v2466
        %2540 = vmatprep.subr.mxu0 0.0
        %2541 = vmatpush2.msra.mxu0 %v2465
        %2542 = vmatprep.subr.mxu0 0.0
        %2543 = vmatpush2.msra.mxu0 %v2464
        %2544 = vmatprep.mubr.f32.mxu0 %v1292
        %2545 = vmatmul.mubr.f32.gmra.mxu0 %v1290
        %v2546 = vpop.f32.mrf.mxu0
        %v2547 = vadd.f32 0.0, %v2546
        %v2548 = vpop.f32.mrf.mxu0
        %2549 = vmatprep.mubr.f32.mxu0 %v1298
        %2550 = vmatmul.mubr.f32.gmra.mxu0 %v1296
        %v2551 = vpop.f32.mrf.mxu0
        %v2552 = vadd.f32 0.0, %v2551
        %v2553 = vpop.f32.mrf.mxu0
        %2554 = vmatprep.mubr.f32.mxu0 %v1304
        %2555 = vmatmul.mubr.f32.gmra.mxu0 %v1302
        %v2556 = vpop.f32.mrf.mxu0
        %v2557 = vadd.f32 0.0, %v2556
        %v2558 = vpop.f32.mrf.mxu0
        %2559 = vmatprep.mubr.f32.mxu0 %v1310
        %2560 = vmatmul.mubr.f32.gmra.mxu0 %v1308
        %v2561 = vpop.f32.mrf.mxu0
        %v2562 = vadd.f32 0.0, %v2561
        %v2563 = vpop.f32.mrf.mxu0
        %2564 = vdwg.mxu0
        %v2565 = vadd.f32 %v2443, %v2547
        %v2566 = vadd.f32 %v2444, %v2552
        %v2567 = vadd.f32 %v2445, %v2557
        %v2568 = vadd.f32 %v2446, %v2562
        %s2569 = scalar_lea.vmem %s5, 2304
        %v2570 = vld [vmem:[%s2569] sm:$0xff]
        %v2571 = vld [vmem:[%s2569 + $0x8] sm:$0xff]
        %v2572 = vld [vmem:[%s2569 + $0x10] sm:$0xff]
        %v2573 = vld [vmem:[%s2569 + $0x18] sm:$0xff]
        %v2574 = vld [vmem:[%s2569 + $0x20] sm:$0xff]
        %v2575 = vld [vmem:[%s2569 + $0x28] sm:$0xff]
        %v2576 = vld [vmem:[%s2569 + $0x30] sm:$0xff]
        %v2577 = vld [vmem:[%s2569 + $0x38] sm:$0xff]
        %v2578 = vld [vmem:[%s2569 + $0x40] sm:$0xff]
        %v2579 = vld [vmem:[%s2569 + $0x48] sm:$0xff]
        %v2580 = vld [vmem:[%s2569 + $0x50] sm:$0xff]
        %v2581 = vld [vmem:[%s2569 + $0x58] sm:$0xff]
        %v2582 = vld [vmem:[%s2569 + $0x60] sm:$0xff]
        %v2583 = vld [vmem:[%s2569 + $0x68] sm:$0xff]
        %v2584 = vld [vmem:[%s2569 + $0x70] sm:$0xff]
        %v2585 = vld [vmem:[%s2569 + $0x78] sm:$0xff]
        %v2586 = vld [vmem:[%s2569 + $0x80] sm:$0xff]
        %v2587 = vld [vmem:[%s2569 + $0x88] sm:$0xff]
        %v2588 = vld [vmem:[%s2569 + $0x90] sm:$0xff]
        %v2589 = vld [vmem:[%s2569 + $0x98] sm:$0xff]
        %v2590 = vld [vmem:[%s2569 + $0xa0] sm:$0xff]
        %v2591 = vld [vmem:[%s2569 + $0xa8] sm:$0xff]
        %v2592 = vld [vmem:[%s2569 + $0xb0] sm:$0xff]
        %v2593 = vld [vmem:[%s2569 + $0xb8] sm:$0xff]
        %v2594 = vld [vmem:[%s2569 + $0xc0] sm:$0xff]
        %v2595 = vld [vmem:[%s2569 + $0xc8] sm:$0xff]
        %v2596 = vld [vmem:[%s2569 + $0xd0] sm:$0xff]
        %v2597 = vld [vmem:[%s2569 + $0xd8] sm:$0xff]
        %v2598 = vld [vmem:[%s2569 + $0xe0] sm:$0xff]
        %v2599 = vld [vmem:[%s2569 + $0xe8] sm:$0xff]
        %v2600 = vld [vmem:[%s2569 + $0xf0] sm:$0xff]
        %v2601 = vld [vmem:[%s2569 + $0xf8] sm:$0xff]
        %2602 = vmatprep.subr.mxu0 0.0
        %2603 = vmatpush1.msra.mxu0 %v2585
        %2604 = vmatprep.subr.mxu0 0.0
        %2605 = vmatpush1.msra.mxu0 %v2584
        %2606 = vmatprep.subr.mxu0 0.0
        %2607 = vmatpush1.msra.mxu0 %v2583
        %2608 = vmatprep.subr.mxu0 0.0
        %2609 = vmatpush1.msra.mxu0 %v2582
        %2610 = vmatprep.subr.mxu0 0.0
        %2611 = vmatpush1.msra.mxu0 %v2581
        %2612 = vmatprep.subr.mxu0 0.0
        %2613 = vmatpush1.msra.mxu0 %v2580
        %2614 = vmatprep.subr.mxu0 0.0
        %2615 = vmatpush1.msra.mxu0 %v2579
        %2616 = vmatprep.subr.mxu0 0.0
        %2617 = vmatpush1.msra.mxu0 %v2578
        %2618 = vmatprep.subr.mxu0 0.0
        %2619 = vmatpush1.msra.mxu0 %v2577
        %2620 = vmatprep.subr.mxu0 0.0
        %2621 = vmatpush1.msra.mxu0 %v2576
        %2622 = vmatprep.subr.mxu0 0.0
        %2623 = vmatpush1.msra.mxu0 %v2575
        %2624 = vmatprep.subr.mxu0 0.0
        %2625 = vmatpush1.msra.mxu0 %v2574
        %2626 = vmatprep.subr.mxu0 0.0
        %2627 = vmatpush1.msra.mxu0 %v2573
        %2628 = vmatprep.subr.mxu0 0.0
        %2629 = vmatpush1.msra.mxu0 %v2572
        %2630 = vmatprep.subr.mxu0 0.0
        %2631 = vmatpush1.msra.mxu0 %v2571
        %2632 = vmatprep.subr.mxu0 0.0
        %2633 = vmatpush1.msra.mxu0 %v2570
        %2634 = vmatprep.subr.mxu0 0.0
        %2635 = vmatpush2.msra.mxu0 %v2601
        %2636 = vmatprep.subr.mxu0 0.0
        %2637 = vmatpush2.msra.mxu0 %v2600
        %2638 = vmatprep.subr.mxu0 0.0
        %2639 = vmatpush2.msra.mxu0 %v2599
        %2640 = vmatprep.subr.mxu0 0.0
        %2641 = vmatpush2.msra.mxu0 %v2598
        %2642 = vmatprep.subr.mxu0 0.0
        %2643 = vmatpush2.msra.mxu0 %v2597
        %2644 = vmatprep.subr.mxu0 0.0
        %2645 = vmatpush2.msra.mxu0 %v2596
        %2646 = vmatprep.subr.mxu0 0.0
        %2647 = vmatpush2.msra.mxu0 %v2595
        %2648 = vmatprep.subr.mxu0 0.0
        %2649 = vmatpush2.msra.mxu0 %v2594
        %2650 = vmatprep.subr.mxu0 0.0
        %2651 = vmatpush2.msra.mxu0 %v2593
        %2652 = vmatprep.subr.mxu0 0.0
        %2653 = vmatpush2.msra.mxu0 %v2592
        %2654 = vmatprep.subr.mxu0 0.0
        %2655 = vmatpush2.msra.mxu0 %v2591
        %2656 = vmatprep.subr.mxu0 0.0
        %2657 = vmatpush2.msra.mxu0 %v2590
        %2658 = vmatprep.subr.mxu0 0.0
        %2659 = vmatpush2.msra.mxu0 %v2589
        %2660 = vmatprep.subr.mxu0 0.0
        %2661 = vmatpush2.msra.mxu0 %v2588
        %2662 = vmatprep.subr.mxu0 0.0
        %2663 = vmatpush2.msra.mxu0 %v2587
        %2664 = vmatprep.subr.mxu0 0.0
        %2665 = vmatpush2.msra.mxu0 %v2586
        %2666 = vmatprep.mubr.f32.mxu0 %v1316
        %2667 = vmatmul.mubr.f32.gmra.mxu0 %v1314
        %v2668 = vpop.f32.mrf.mxu0
        %v2669 = vadd.f32 0.0, %v2668
        %v2670 = vpop.f32.mrf.mxu0
        %2671 = vmatprep.mubr.f32.mxu0 %v1322
        %2672 = vmatmul.mubr.f32.gmra.mxu0 %v1320
        %v2673 = vpop.f32.mrf.mxu0
        %v2674 = vadd.f32 0.0, %v2673
        %v2675 = vpop.f32.mrf.mxu0
        %2676 = vmatprep.mubr.f32.mxu0 %v1328
        %2677 = vmatmul.mubr.f32.gmra.mxu0 %v1326
        %v2678 = vpop.f32.mrf.mxu0
        %v2679 = vadd.f32 0.0, %v2678
        %v2680 = vpop.f32.mrf.mxu0
        %2681 = vmatprep.mubr.f32.mxu0 %v1334
        %2682 = vmatmul.mubr.f32.gmra.mxu0 %v1332
        %v2683 = vpop.f32.mrf.mxu0
        %v2684 = vadd.f32 0.0, %v2683
        %v2685 = vpop.f32.mrf.mxu0
        %2686 = vdwg.mxu0
        %v2687 = vadd.f32 %v2565, %v2669
        %v2688 = vadd.f32 %v2566, %v2674
        %v2689 = vadd.f32 %v2567, %v2679
        %v2690 = vadd.f32 %v2568, %v2684
        %s2691 = scalar_lea.vmem %s5, 2560
        %v2692 = vld [vmem:[%s2691] sm:$0xff]
        %v2693 = vld [vmem:[%s2691 + $0x8] sm:$0xff]
        %v2694 = vld [vmem:[%s2691 + $0x10] sm:$0xff]
        %v2695 = vld [vmem:[%s2691 + $0x18] sm:$0xff]
        %v2696 = vld [vmem:[%s2691 + $0x20] sm:$0xff]
        %v2697 = vld [vmem:[%s2691 + $0x28] sm:$0xff]
        %v2698 = vld [vmem:[%s2691 + $0x30] sm:$0xff]
        %v2699 = vld [vmem:[%s2691 + $0x38] sm:$0xff]
        %v2700 = vld [vmem:[%s2691 + $0x40] sm:$0xff]
        %v2701 = vld [vmem:[%s2691 + $0x48] sm:$0xff]
        %v2702 = vld [vmem:[%s2691 + $0x50] sm:$0xff]
        %v2703 = vld [vmem:[%s2691 + $0x58] sm:$0xff]
        %v2704 = vld [vmem:[%s2691 + $0x60] sm:$0xff]
        %v2705 = vld [vmem:[%s2691 + $0x68] sm:$0xff]
        %v2706 = vld [vmem:[%s2691 + $0x70] sm:$0xff]
        %v2707 = vld [vmem:[%s2691 + $0x78] sm:$0xff]
        %v2708 = vld [vmem:[%s2691 + $0x80] sm:$0xff]
        %v2709 = vld [vmem:[%s2691 + $0x88] sm:$0xff]
        %v2710 = vld [vmem:[%s2691 + $0x90] sm:$0xff]
        %v2711 = vld [vmem:[%s2691 + $0x98] sm:$0xff]
        %v2712 = vld [vmem:[%s2691 + $0xa0] sm:$0xff]
        %v2713 = vld [vmem:[%s2691 + $0xa8] sm:$0xff]
        %v2714 = vld [vmem:[%s2691 + $0xb0] sm:$0xff]
        %v2715 = vld [vmem:[%s2691 + $0xb8] sm:$0xff]
        %v2716 = vld [vmem:[%s2691 + $0xc0] sm:$0xff]
        %v2717 = vld [vmem:[%s2691 + $0xc8] sm:$0xff]
        %v2718 = vld [vmem:[%s2691 + $0xd0] sm:$0xff]
        %v2719 = vld [vmem:[%s2691 + $0xd8] sm:$0xff]
        %v2720 = vld [vmem:[%s2691 + $0xe0] sm:$0xff]
        %v2721 = vld [vmem:[%s2691 + $0xe8] sm:$0xff]
        %v2722 = vld [vmem:[%s2691 + $0xf0] sm:$0xff]
        %v2723 = vld [vmem:[%s2691 + $0xf8] sm:$0xff]
        %2724 = vmatprep.subr.mxu0 0.0
        %2725 = vmatpush1.msra.mxu0 %v2707
        %2726 = vmatprep.subr.mxu0 0.0
        %2727 = vmatpush1.msra.mxu0 %v2706
        %2728 = vmatprep.subr.mxu0 0.0
        %2729 = vmatpush1.msra.mxu0 %v2705
        %2730 = vmatprep.subr.mxu0 0.0
        %2731 = vmatpush1.msra.mxu0 %v2704
        %2732 = vmatprep.subr.mxu0 0.0
        %2733 = vmatpush1.msra.mxu0 %v2703
        %2734 = vmatprep.subr.mxu0 0.0
        %2735 = vmatpush1.msra.mxu0 %v2702
        %2736 = vmatprep.subr.mxu0 0.0
        %2737 = vmatpush1.msra.mxu0 %v2701
        %2738 = vmatprep.subr.mxu0 0.0
        %2739 = vmatpush1.msra.mxu0 %v2700
        %2740 = vmatprep.subr.mxu0 0.0
        %2741 = vmatpush1.msra.mxu0 %v2699
        %2742 = vmatprep.subr.mxu0 0.0
        %2743 = vmatpush1.msra.mxu0 %v2698
        %2744 = vmatprep.subr.mxu0 0.0
        %2745 = vmatpush1.msra.mxu0 %v2697
        %2746 = vmatprep.subr.mxu0 0.0
        %2747 = vmatpush1.msra.mxu0 %v2696
        %2748 = vmatprep.subr.mxu0 0.0
        %2749 = vmatpush1.msra.mxu0 %v2695
        %2750 = vmatprep.subr.mxu0 0.0
        %2751 = vmatpush1.msra.mxu0 %v2694
        %2752 = vmatprep.subr.mxu0 0.0
        %2753 = vmatpush1.msra.mxu0 %v2693
        %2754 = vmatprep.subr.mxu0 0.0
        %2755 = vmatpush1.msra.mxu0 %v2692
        %2756 = vmatprep.subr.mxu0 0.0
        %2757 = vmatpush2.msra.mxu0 %v2723
        %2758 = vmatprep.subr.mxu0 0.0
        %2759 = vmatpush2.msra.mxu0 %v2722
        %2760 = vmatprep.subr.mxu0 0.0
        %2761 = vmatpush2.msra.mxu0 %v2721
        %2762 = vmatprep.subr.mxu0 0.0
        %2763 = vmatpush2.msra.mxu0 %v2720
        %2764 = vmatprep.subr.mxu0 0.0
        %2765 = vmatpush2.msra.mxu0 %v2719
        %2766 = vmatprep.subr.mxu0 0.0
        %2767 = vmatpush2.msra.mxu0 %v2718
        %2768 = vmatprep.subr.mxu0 0.0
        %2769 = vmatpush2.msra.mxu0 %v2717
        %2770 = vmatprep.subr.mxu0 0.0
        %2771 = vmatpush2.msra.mxu0 %v2716
        %2772 = vmatprep.subr.mxu0 0.0
        %2773 = vmatpush2.msra.mxu0 %v2715
        %2774 = vmatprep.subr.mxu0 0.0
        %2775 = vmatpush2.msra.mxu0 %v2714
        %2776 = vmatprep.subr.mxu0 0.0
        %2777 = vmatpush2.msra.mxu0 %v2713
        %2778 = vmatprep.subr.mxu0 0.0
        %2779 = vmatpush2.msra.mxu0 %v2712
        %2780 = vmatprep.subr.mxu0 0.0
        %2781 = vmatpush2.msra.mxu0 %v2711
        %2782 = vmatprep.subr.mxu0 0.0
        %2783 = vmatpush2.msra.mxu0 %v2710
        %2784 = vmatprep.subr.mxu0 0.0
        %2785 = vmatpush2.msra.mxu0 %v2709
        %2786 = vmatprep.subr.mxu0 0.0
        %2787 = vmatpush2.msra.mxu0 %v2708
        %2788 = vmatprep.mubr.f32.mxu0 %v1340
        %2789 = vmatmul.mubr.f32.gmra.mxu0 %v1338
        %v2790 = vpop.f32.mrf.mxu0
        %v2791 = vadd.f32 0.0, %v2790
        %v2792 = vpop.f32.mrf.mxu0
        %2793 = vmatprep.mubr.f32.mxu0 %v1346
        %2794 = vmatmul.mubr.f32.gmra.mxu0 %v1344
        %v2795 = vpop.f32.mrf.mxu0
        %v2796 = vadd.f32 0.0, %v2795
        %v2797 = vpop.f32.mrf.mxu0
        %2798 = vmatprep.mubr.f32.mxu0 %v1352
        %2799 = vmatmul.mubr.f32.gmra.mxu0 %v1350
        %v2800 = vpop.f32.mrf.mxu0
        %v2801 = vadd.f32 0.0, %v2800
        %v2802 = vpop.f32.mrf.mxu0
        %2803 = vmatprep.mubr.f32.mxu0 %v1358
        %2804 = vmatmul.mubr.f32.gmra.mxu0 %v1356
        %v2805 = vpop.f32.mrf.mxu0
        %v2806 = vadd.f32 0.0, %v2805
        %v2807 = vpop.f32.mrf.mxu0
        %2808 = vdwg.mxu0
        %v2809 = vadd.f32 %v2687, %v2791
        %v2810 = vadd.f32 %v2688, %v2796
        %v2811 = vadd.f32 %v2689, %v2801
        %v2812 = vadd.f32 %v2690, %v2806
        %s2813 = scalar_lea.vmem %s5, 2816
        %v2814 = vld [vmem:[%s2813] sm:$0xff]
        %v2815 = vld [vmem:[%s2813 + $0x8] sm:$0xff]
        %v2816 = vld [vmem:[%s2813 + $0x10] sm:$0xff]
        %v2817 = vld [vmem:[%s2813 + $0x18] sm:$0xff]
        %v2818 = vld [vmem:[%s2813 + $0x20] sm:$0xff]
        %v2819 = vld [vmem:[%s2813 + $0x28] sm:$0xff]
        %v2820 = vld [vmem:[%s2813 + $0x30] sm:$0xff]
        %v2821 = vld [vmem:[%s2813 + $0x38] sm:$0xff]
        %v2822 = vld [vmem:[%s2813 + $0x40] sm:$0xff]
        %v2823 = vld [vmem:[%s2813 + $0x48] sm:$0xff]
        %v2824 = vld [vmem:[%s2813 + $0x50] sm:$0xff]
        %v2825 = vld [vmem:[%s2813 + $0x58] sm:$0xff]
        %v2826 = vld [vmem:[%s2813 + $0x60] sm:$0xff]
        %v2827 = vld [vmem:[%s2813 + $0x68] sm:$0xff]
        %v2828 = vld [vmem:[%s2813 + $0x70] sm:$0xff]
        %v2829 = vld [vmem:[%s2813 + $0x78] sm:$0xff]
        %v2830 = vld [vmem:[%s2813 + $0x80] sm:$0xff]
        %v2831 = vld [vmem:[%s2813 + $0x88] sm:$0xff]
        %v2832 = vld [vmem:[%s2813 + $0x90] sm:$0xff]
        %v2833 = vld [vmem:[%s2813 + $0x98] sm:$0xff]
        %v2834 = vld [vmem:[%s2813 + $0xa0] sm:$0xff]
        %v2835 = vld [vmem:[%s2813 + $0xa8] sm:$0xff]
        %v2836 = vld [vmem:[%s2813 + $0xb0] sm:$0xff]
        %v2837 = vld [vmem:[%s2813 + $0xb8] sm:$0xff]
        %v2838 = vld [vmem:[%s2813 + $0xc0] sm:$0xff]
        %v2839 = vld [vmem:[%s2813 + $0xc8] sm:$0xff]
        %v2840 = vld [vmem:[%s2813 + $0xd0] sm:$0xff]
        %v2841 = vld [vmem:[%s2813 + $0xd8] sm:$0xff]
        %v2842 = vld [vmem:[%s2813 + $0xe0] sm:$0xff]
        %v2843 = vld [vmem:[%s2813 + $0xe8] sm:$0xff]
        %v2844 = vld [vmem:[%s2813 + $0xf0] sm:$0xff]
        %v2845 = vld [vmem:[%s2813 + $0xf8] sm:$0xff]
        %2846 = vmatprep.subr.mxu0 0.0
        %2847 = vmatpush1.msra.mxu0 %v2829
        %2848 = vmatprep.subr.mxu0 0.0
        %2849 = vmatpush1.msra.mxu0 %v2828
        %2850 = vmatprep.subr.mxu0 0.0
        %2851 = vmatpush1.msra.mxu0 %v2827
        %2852 = vmatprep.subr.mxu0 0.0
        %2853 = vmatpush1.msra.mxu0 %v2826
        %2854 = vmatprep.subr.mxu0 0.0
        %2855 = vmatpush1.msra.mxu0 %v2825
        %2856 = vmatprep.subr.mxu0 0.0
        %2857 = vmatpush1.msra.mxu0 %v2824
        %2858 = vmatprep.subr.mxu0 0.0
        %2859 = vmatpush1.msra.mxu0 %v2823
        %2860 = vmatprep.subr.mxu0 0.0
        %2861 = vmatpush1.msra.mxu0 %v2822
        %2862 = vmatprep.subr.mxu0 0.0
        %2863 = vmatpush1.msra.mxu0 %v2821
        %2864 = vmatprep.subr.mxu0 0.0
        %2865 = vmatpush1.msra.mxu0 %v2820
        %2866 = vmatprep.subr.mxu0 0.0
        %2867 = vmatpush1.msra.mxu0 %v2819
        %2868 = vmatprep.subr.mxu0 0.0
        %2869 = vmatpush1.msra.mxu0 %v2818
        %2870 = vmatprep.subr.mxu0 0.0
        %2871 = vmatpush1.msra.mxu0 %v2817
        %2872 = vmatprep.subr.mxu0 0.0
        %2873 = vmatpush1.msra.mxu0 %v2816
        %2874 = vmatprep.subr.mxu0 0.0
        %2875 = vmatpush1.msra.mxu0 %v2815
        %2876 = vmatprep.subr.mxu0 0.0
        %2877 = vmatpush1.msra.mxu0 %v2814
        %2878 = vmatprep.subr.mxu0 0.0
        %2879 = vmatpush2.msra.mxu0 %v2845
        %2880 = vmatprep.subr.mxu0 0.0
        %2881 = vmatpush2.msra.mxu0 %v2844
        %2882 = vmatprep.subr.mxu0 0.0
        %2883 = vmatpush2.msra.mxu0 %v2843
        %2884 = vmatprep.subr.mxu0 0.0
        %2885 = vmatpush2.msra.mxu0 %v2842
        %2886 = vmatprep.subr.mxu0 0.0
        %2887 = vmatpush2.msra.mxu0 %v2841
        %2888 = vmatprep.subr.mxu0 0.0
        %2889 = vmatpush2.msra.mxu0 %v2840
        %2890 = vmatprep.subr.mxu0 0.0
        %2891 = vmatpush2.msra.mxu0 %v2839
        %2892 = vmatprep.subr.mxu0 0.0
        %2893 = vmatpush2.msra.mxu0 %v2838
        %2894 = vmatprep.subr.mxu0 0.0
        %2895 = vmatpush2.msra.mxu0 %v2837
        %2896 = vmatprep.subr.mxu0 0.0
        %2897 = vmatpush2.msra.mxu0 %v2836
        %2898 = vmatprep.subr.mxu0 0.0
        %2899 = vmatpush2.msra.mxu0 %v2835
        %2900 = vmatprep.subr.mxu0 0.0
        %2901 = vmatpush2.msra.mxu0 %v2834
        %2902 = vmatprep.subr.mxu0 0.0
        %2903 = vmatpush2.msra.mxu0 %v2833
        %2904 = vmatprep.subr.mxu0 0.0
        %2905 = vmatpush2.msra.mxu0 %v2832
        %2906 = vmatprep.subr.mxu0 0.0
        %2907 = vmatpush2.msra.mxu0 %v2831
        %2908 = vmatprep.subr.mxu0 0.0
        %2909 = vmatpush2.msra.mxu0 %v2830
        %2910 = vmatprep.mubr.f32.mxu0 %v1364
        %2911 = vmatmul.mubr.f32.gmra.mxu0 %v1362
        %v2912 = vpop.f32.mrf.mxu0
        %v2913 = vadd.f32 0.0, %v2912
        %v2914 = vpop.f32.mrf.mxu0
        %2915 = vmatprep.mubr.f32.mxu0 %v1370
        %2916 = vmatmul.mubr.f32.gmra.mxu0 %v1368
        %v2917 = vpop.f32.mrf.mxu0
        %v2918 = vadd.f32 0.0, %v2917
        %v2919 = vpop.f32.mrf.mxu0
        %2920 = vmatprep.mubr.f32.mxu0 %v1376
        %2921 = vmatmul.mubr.f32.gmra.mxu0 %v1374
        %v2922 = vpop.f32.mrf.mxu0
        %v2923 = vadd.f32 0.0, %v2922
        %v2924 = vpop.f32.mrf.mxu0
        %2925 = vmatprep.mubr.f32.mxu0 %v1382
        %2926 = vmatmul.mubr.f32.gmra.mxu0 %v1380
        %v2927 = vpop.f32.mrf.mxu0
        %v2928 = vadd.f32 0.0, %v2927
        %v2929 = vpop.f32.mrf.mxu0
        %2930 = vdwg.mxu0
        %v2931 = vadd.f32 %v2809, %v2913
        %v2932 = vadd.f32 %v2810, %v2918
        %v2933 = vadd.f32 %v2811, %v2923
        %v2934 = vadd.f32 %v2812, %v2928
        %s2935 = scalar_lea.vmem %s5, 3072
        %v2936 = vld [vmem:[%s2935] sm:$0xff]
        %v2937 = vld [vmem:[%s2935 + $0x8] sm:$0xff]
        %v2938 = vld [vmem:[%s2935 + $0x10] sm:$0xff]
        %v2939 = vld [vmem:[%s2935 + $0x18] sm:$0xff]
        %v2940 = vld [vmem:[%s2935 + $0x20] sm:$0xff]
        %v2941 = vld [vmem:[%s2935 + $0x28] sm:$0xff]
        %v2942 = vld [vmem:[%s2935 + $0x30] sm:$0xff]
        %v2943 = vld [vmem:[%s2935 + $0x38] sm:$0xff]
        %v2944 = vld [vmem:[%s2935 + $0x40] sm:$0xff]
        %v2945 = vld [vmem:[%s2935 + $0x48] sm:$0xff]
        %v2946 = vld [vmem:[%s2935 + $0x50] sm:$0xff]
        %v2947 = vld [vmem:[%s2935 + $0x58] sm:$0xff]
        %v2948 = vld [vmem:[%s2935 + $0x60] sm:$0xff]
        %v2949 = vld [vmem:[%s2935 + $0x68] sm:$0xff]
        %v2950 = vld [vmem:[%s2935 + $0x70] sm:$0xff]
        %v2951 = vld [vmem:[%s2935 + $0x78] sm:$0xff]
        %v2952 = vld [vmem:[%s2935 + $0x80] sm:$0xff]
        %v2953 = vld [vmem:[%s2935 + $0x88] sm:$0xff]
        %v2954 = vld [vmem:[%s2935 + $0x90] sm:$0xff]
        %v2955 = vld [vmem:[%s2935 + $0x98] sm:$0xff]
        %v2956 = vld [vmem:[%s2935 + $0xa0] sm:$0xff]
        %v2957 = vld [vmem:[%s2935 + $0xa8] sm:$0xff]
        %v2958 = vld [vmem:[%s2935 + $0xb0] sm:$0xff]
        %v2959 = vld [vmem:[%s2935 + $0xb8] sm:$0xff]
        %v2960 = vld [vmem:[%s2935 + $0xc0] sm:$0xff]
        %v2961 = vld [vmem:[%s2935 + $0xc8] sm:$0xff]
        %v2962 = vld [vmem:[%s2935 + $0xd0] sm:$0xff]
        %v2963 = vld [vmem:[%s2935 + $0xd8] sm:$0xff]
        %v2964 = vld [vmem:[%s2935 + $0xe0] sm:$0xff]
        %v2965 = vld [vmem:[%s2935 + $0xe8] sm:$0xff]
        %v2966 = vld [vmem:[%s2935 + $0xf0] sm:$0xff]
        %v2967 = vld [vmem:[%s2935 + $0xf8] sm:$0xff]
        %2968 = vmatprep.subr.mxu0 0.0
        %2969 = vmatpush1.msra.mxu0 %v2951
        %2970 = vmatprep.subr.mxu0 0.0
        %2971 = vmatpush1.msra.mxu0 %v2950
        %2972 = vmatprep.subr.mxu0 0.0
        %2973 = vmatpush1.msra.mxu0 %v2949
        %2974 = vmatprep.subr.mxu0 0.0
        %2975 = vmatpush1.msra.mxu0 %v2948
        %2976 = vmatprep.subr.mxu0 0.0
        %2977 = vmatpush1.msra.mxu0 %v2947
        %2978 = vmatprep.subr.mxu0 0.0
        %2979 = vmatpush1.msra.mxu0 %v2946
        %2980 = vmatprep.subr.mxu0 0.0
        %2981 = vmatpush1.msra.mxu0 %v2945
        %2982 = vmatprep.subr.mxu0 0.0
        %2983 = vmatpush1.msra.mxu0 %v2944
        %2984 = vmatprep.subr.mxu0 0.0
        %2985 = vmatpush1.msra.mxu0 %v2943
        %2986 = vmatprep.subr.mxu0 0.0
        %2987 = vmatpush1.msra.mxu0 %v2942
        %2988 = vmatprep.subr.mxu0 0.0
        %2989 = vmatpush1.msra.mxu0 %v2941
        %2990 = vmatprep.subr.mxu0 0.0
        %2991 = vmatpush1.msra.mxu0 %v2940
        %2992 = vmatprep.subr.mxu0 0.0
        %2993 = vmatpush1.msra.mxu0 %v2939
        %2994 = vmatprep.subr.mxu0 0.0
        %2995 = vmatpush1.msra.mxu0 %v2938
        %2996 = vmatprep.subr.mxu0 0.0
        %2997 = vmatpush1.msra.mxu0 %v2937
        %2998 = vmatprep.subr.mxu0 0.0
        %2999 = vmatpush1.msra.mxu0 %v2936
        %3000 = vmatprep.subr.mxu0 0.0
        %3001 = vmatpush2.msra.mxu0 %v2967
        %3002 = vmatprep.subr.mxu0 0.0
        %3003 = vmatpush2.msra.mxu0 %v2966
        %3004 = vmatprep.subr.mxu0 0.0
        %3005 = vmatpush2.msra.mxu0 %v2965
        %3006 = vmatprep.subr.mxu0 0.0
        %3007 = vmatpush2.msra.mxu0 %v2964
        %3008 = vmatprep.subr.mxu0 0.0
        %3009 = vmatpush2.msra.mxu0 %v2963
        %3010 = vmatprep.subr.mxu0 0.0
        %3011 = vmatpush2.msra.mxu0 %v2962
        %3012 = vmatprep.subr.mxu0 0.0
        %3013 = vmatpush2.msra.mxu0 %v2961
        %3014 = vmatprep.subr.mxu0 0.0
        %3015 = vmatpush2.msra.mxu0 %v2960
        %3016 = vmatprep.subr.mxu0 0.0
        %3017 = vmatpush2.msra.mxu0 %v2959
        %3018 = vmatprep.subr.mxu0 0.0
        %3019 = vmatpush2.msra.mxu0 %v2958
        %3020 = vmatprep.subr.mxu0 0.0
        %3021 = vmatpush2.msra.mxu0 %v2957
        %3022 = vmatprep.subr.mxu0 0.0
        %3023 = vmatpush2.msra.mxu0 %v2956
        %3024 = vmatprep.subr.mxu0 0.0
        %3025 = vmatpush2.msra.mxu0 %v2955
        %3026 = vmatprep.subr.mxu0 0.0
        %3027 = vmatpush2.msra.mxu0 %v2954
        %3028 = vmatprep.subr.mxu0 0.0
        %3029 = vmatpush2.msra.mxu0 %v2953
        %3030 = vmatprep.subr.mxu0 0.0
        %3031 = vmatpush2.msra.mxu0 %v2952
        %3032 = vmatprep.mubr.f32.mxu0 %v1388
        %3033 = vmatmul.mubr.f32.gmra.mxu0 %v1386
        %v3034 = vpop.f32.mrf.mxu0
        %v3035 = vadd.f32 0.0, %v3034
        %v3036 = vpop.f32.mrf.mxu0
        %3037 = vmatprep.mubr.f32.mxu0 %v1394
        %3038 = vmatmul.mubr.f32.gmra.mxu0 %v1392
        %v3039 = vpop.f32.mrf.mxu0
        %v3040 = vadd.f32 0.0, %v3039
        %v3041 = vpop.f32.mrf.mxu0
        %3042 = vmatprep.mubr.f32.mxu0 %v1400
        %3043 = vmatmul.mubr.f32.gmra.mxu0 %v1398
        %v3044 = vpop.f32.mrf.mxu0
        %v3045 = vadd.f32 0.0, %v3044
        %v3046 = vpop.f32.mrf.mxu0
        %3047 = vmatprep.mubr.f32.mxu0 %v1406
        %3048 = vmatmul.mubr.f32.gmra.mxu0 %v1404
        %v3049 = vpop.f32.mrf.mxu0
        %v3050 = vadd.f32 0.0, %v3049
        %v3051 = vpop.f32.mrf.mxu0
        %3052 = vdwg.mxu0
        %v3053 = vadd.f32 %v2931, %v3035
        %v3054 = vadd.f32 %v2932, %v3040
        %v3055 = vadd.f32 %v2933, %v3045
        %v3056 = vadd.f32 %v2934, %v3050
        %s3057 = scalar_lea.vmem %s5, 3328
        %v3058 = vld [vmem:[%s3057] sm:$0xff]
        %v3059 = vld [vmem:[%s3057 + $0x8] sm:$0xff]
        %v3060 = vld [vmem:[%s3057 + $0x10] sm:$0xff]
        %v3061 = vld [vmem:[%s3057 + $0x18] sm:$0xff]
        %v3062 = vld [vmem:[%s3057 + $0x20] sm:$0xff]
        %v3063 = vld [vmem:[%s3057 + $0x28] sm:$0xff]
        %v3064 = vld [vmem:[%s3057 + $0x30] sm:$0xff]
        %v3065 = vld [vmem:[%s3057 + $0x38] sm:$0xff]
        %v3066 = vld [vmem:[%s3057 + $0x40] sm:$0xff]
        %v3067 = vld [vmem:[%s3057 + $0x48] sm:$0xff]
        %v3068 = vld [vmem:[%s3057 + $0x50] sm:$0xff]
        %v3069 = vld [vmem:[%s3057 + $0x58] sm:$0xff]
        %v3070 = vld [vmem:[%s3057 + $0x60] sm:$0xff]
        %v3071 = vld [vmem:[%s3057 + $0x68] sm:$0xff]
        %v3072 = vld [vmem:[%s3057 + $0x70] sm:$0xff]
        %v3073 = vld [vmem:[%s3057 + $0x78] sm:$0xff]
        %v3074 = vld [vmem:[%s3057 + $0x80] sm:$0xff]
        %v3075 = vld [vmem:[%s3057 + $0x88] sm:$0xff]
        %v3076 = vld [vmem:[%s3057 + $0x90] sm:$0xff]
        %v3077 = vld [vmem:[%s3057 + $0x98] sm:$0xff]
        %v3078 = vld [vmem:[%s3057 + $0xa0] sm:$0xff]
        %v3079 = vld [vmem:[%s3057 + $0xa8] sm:$0xff]
        %v3080 = vld [vmem:[%s3057 + $0xb0] sm:$0xff]
        %v3081 = vld [vmem:[%s3057 + $0xb8] sm:$0xff]
        %v3082 = vld [vmem:[%s3057 + $0xc0] sm:$0xff]
        %v3083 = vld [vmem:[%s3057 + $0xc8] sm:$0xff]
        %v3084 = vld [vmem:[%s3057 + $0xd0] sm:$0xff]
        %v3085 = vld [vmem:[%s3057 + $0xd8] sm:$0xff]
        %v3086 = vld [vmem:[%s3057 + $0xe0] sm:$0xff]
        %v3087 = vld [vmem:[%s3057 + $0xe8] sm:$0xff]
        %v3088 = vld [vmem:[%s3057 + $0xf0] sm:$0xff]
        %v3089 = vld [vmem:[%s3057 + $0xf8] sm:$0xff]
        %3090 = vmatprep.subr.mxu0 0.0
        %3091 = vmatpush1.msra.mxu0 %v3073
        %3092 = vmatprep.subr.mxu0 0.0
        %3093 = vmatpush1.msra.mxu0 %v3072
        %3094 = vmatprep.subr.mxu0 0.0
        %3095 = vmatpush1.msra.mxu0 %v3071
        %3096 = vmatprep.subr.mxu0 0.0
        %3097 = vmatpush1.msra.mxu0 %v3070
        %3098 = vmatprep.subr.mxu0 0.0
        %3099 = vmatpush1.msra.mxu0 %v3069
        %3100 = vmatprep.subr.mxu0 0.0
        %3101 = vmatpush1.msra.mxu0 %v3068
        %3102 = vmatprep.subr.mxu0 0.0
        %3103 = vmatpush1.msra.mxu0 %v3067
        %3104 = vmatprep.subr.mxu0 0.0
        %3105 = vmatpush1.msra.mxu0 %v3066
        %3106 = vmatprep.subr.mxu0 0.0
        %3107 = vmatpush1.msra.mxu0 %v3065
        %3108 = vmatprep.subr.mxu0 0.0
        %3109 = vmatpush1.msra.mxu0 %v3064
        %3110 = vmatprep.subr.mxu0 0.0
        %3111 = vmatpush1.msra.mxu0 %v3063
        %3112 = vmatprep.subr.mxu0 0.0
        %3113 = vmatpush1.msra.mxu0 %v3062
        %3114 = vmatprep.subr.mxu0 0.0
        %3115 = vmatpush1.msra.mxu0 %v3061
        %3116 = vmatprep.subr.mxu0 0.0
        %3117 = vmatpush1.msra.mxu0 %v3060
        %3118 = vmatprep.subr.mxu0 0.0
        %3119 = vmatpush1.msra.mxu0 %v3059
        %3120 = vmatprep.subr.mxu0 0.0
        %3121 = vmatpush1.msra.mxu0 %v3058
        %3122 = vmatprep.subr.mxu0 0.0
        %3123 = vmatpush2.msra.mxu0 %v3089
        %3124 = vmatprep.subr.mxu0 0.0
        %3125 = vmatpush2.msra.mxu0 %v3088
        %3126 = vmatprep.subr.mxu0 0.0
        %3127 = vmatpush2.msra.mxu0 %v3087
        %3128 = vmatprep.subr.mxu0 0.0
        %3129 = vmatpush2.msra.mxu0 %v3086
        %3130 = vmatprep.subr.mxu0 0.0
        %3131 = vmatpush2.msra.mxu0 %v3085
        %3132 = vmatprep.subr.mxu0 0.0
        %3133 = vmatpush2.msra.mxu0 %v3084
        %3134 = vmatprep.subr.mxu0 0.0
        %3135 = vmatpush2.msra.mxu0 %v3083
        %3136 = vmatprep.subr.mxu0 0.0
        %3137 = vmatpush2.msra.mxu0 %v3082
        %3138 = vmatprep.subr.mxu0 0.0
        %3139 = vmatpush2.msra.mxu0 %v3081
        %3140 = vmatprep.subr.mxu0 0.0
        %3141 = vmatpush2.msra.mxu0 %v3080
        %3142 = vmatprep.subr.mxu0 0.0
        %3143 = vmatpush2.msra.mxu0 %v3079
        %3144 = vmatprep.subr.mxu0 0.0
        %3145 = vmatpush2.msra.mxu0 %v3078
        %3146 = vmatprep.subr.mxu0 0.0
        %3147 = vmatpush2.msra.mxu0 %v3077
        %3148 = vmatprep.subr.mxu0 0.0
        %3149 = vmatpush2.msra.mxu0 %v3076
        %3150 = vmatprep.subr.mxu0 0.0
        %3151 = vmatpush2.msra.mxu0 %v3075
        %3152 = vmatprep.subr.mxu0 0.0
        %3153 = vmatpush2.msra.mxu0 %v3074
        %3154 = vmatprep.mubr.f32.mxu0 %v1412
        %3155 = vmatmul.mubr.f32.gmra.mxu0 %v1410
        %v3156 = vpop.f32.mrf.mxu0
        %v3157 = vadd.f32 0.0, %v3156
        %v3158 = vpop.f32.mrf.mxu0
        %3159 = vmatprep.mubr.f32.mxu0 %v1418
        %3160 = vmatmul.mubr.f32.gmra.mxu0 %v1416
        %v3161 = vpop.f32.mrf.mxu0
        %v3162 = vadd.f32 0.0, %v3161
        %v3163 = vpop.f32.mrf.mxu0
        %3164 = vmatprep.mubr.f32.mxu0 %v1424
        %3165 = vmatmul.mubr.f32.gmra.mxu0 %v1422
        %v3166 = vpop.f32.mrf.mxu0
        %v3167 = vadd.f32 0.0, %v3166
        %v3168 = vpop.f32.mrf.mxu0
        %3169 = vmatprep.mubr.f32.mxu0 %v1430
        %3170 = vmatmul.mubr.f32.gmra.mxu0 %v1428
        %v3171 = vpop.f32.mrf.mxu0
        %v3172 = vadd.f32 0.0, %v3171
        %v3173 = vpop.f32.mrf.mxu0
        %3174 = vdwg.mxu0
        %v3175 = vadd.f32 %v3053, %v3157
        %v3176 = vadd.f32 %v3054, %v3162
        %v3177 = vadd.f32 %v3055, %v3167
        %v3178 = vadd.f32 %v3056, %v3172
        %s3179 = scalar_lea.vmem %s5, 3584
        %v3180 = vld [vmem:[%s3179] sm:$0xff]
        %v3181 = vld [vmem:[%s3179 + $0x8] sm:$0xff]
        %v3182 = vld [vmem:[%s3179 + $0x10] sm:$0xff]
        %v3183 = vld [vmem:[%s3179 + $0x18] sm:$0xff]
        %v3184 = vld [vmem:[%s3179 + $0x20] sm:$0xff]
        %v3185 = vld [vmem:[%s3179 + $0x28] sm:$0xff]
        %v3186 = vld [vmem:[%s3179 + $0x30] sm:$0xff]
        %v3187 = vld [vmem:[%s3179 + $0x38] sm:$0xff]
        %v3188 = vld [vmem:[%s3179 + $0x40] sm:$0xff]
        %v3189 = vld [vmem:[%s3179 + $0x48] sm:$0xff]
        %v3190 = vld [vmem:[%s3179 + $0x50] sm:$0xff]
        %v3191 = vld [vmem:[%s3179 + $0x58] sm:$0xff]
        %v3192 = vld [vmem:[%s3179 + $0x60] sm:$0xff]
        %v3193 = vld [vmem:[%s3179 + $0x68] sm:$0xff]
        %v3194 = vld [vmem:[%s3179 + $0x70] sm:$0xff]
        %v3195 = vld [vmem:[%s3179 + $0x78] sm:$0xff]
        %v3196 = vld [vmem:[%s3179 + $0x80] sm:$0xff]
        %v3197 = vld [vmem:[%s3179 + $0x88] sm:$0xff]
        %v3198 = vld [vmem:[%s3179 + $0x90] sm:$0xff]
        %v3199 = vld [vmem:[%s3179 + $0x98] sm:$0xff]
        %v3200 = vld [vmem:[%s3179 + $0xa0] sm:$0xff]
        %v3201 = vld [vmem:[%s3179 + $0xa8] sm:$0xff]
        %v3202 = vld [vmem:[%s3179 + $0xb0] sm:$0xff]
        %v3203 = vld [vmem:[%s3179 + $0xb8] sm:$0xff]
        %v3204 = vld [vmem:[%s3179 + $0xc0] sm:$0xff]
        %v3205 = vld [vmem:[%s3179 + $0xc8] sm:$0xff]
        %v3206 = vld [vmem:[%s3179 + $0xd0] sm:$0xff]
        %v3207 = vld [vmem:[%s3179 + $0xd8] sm:$0xff]
        %v3208 = vld [vmem:[%s3179 + $0xe0] sm:$0xff]
        %v3209 = vld [vmem:[%s3179 + $0xe8] sm:$0xff]
        %v3210 = vld [vmem:[%s3179 + $0xf0] sm:$0xff]
        %v3211 = vld [vmem:[%s3179 + $0xf8] sm:$0xff]
        %3212 = vmatprep.subr.mxu0 0.0
        %3213 = vmatpush1.msra.mxu0 %v3195
        %3214 = vmatprep.subr.mxu0 0.0
        %3215 = vmatpush1.msra.mxu0 %v3194
        %3216 = vmatprep.subr.mxu0 0.0
        %3217 = vmatpush1.msra.mxu0 %v3193
        %3218 = vmatprep.subr.mxu0 0.0
        %3219 = vmatpush1.msra.mxu0 %v3192
        %3220 = vmatprep.subr.mxu0 0.0
        %3221 = vmatpush1.msra.mxu0 %v3191
        %3222 = vmatprep.subr.mxu0 0.0
        %3223 = vmatpush1.msra.mxu0 %v3190
        %3224 = vmatprep.subr.mxu0 0.0
        %3225 = vmatpush1.msra.mxu0 %v3189
        %3226 = vmatprep.subr.mxu0 0.0
        %3227 = vmatpush1.msra.mxu0 %v3188
        %3228 = vmatprep.subr.mxu0 0.0
        %3229 = vmatpush1.msra.mxu0 %v3187
        %3230 = vmatprep.subr.mxu0 0.0
        %3231 = vmatpush1.msra.mxu0 %v3186
        %3232 = vmatprep.subr.mxu0 0.0
        %3233 = vmatpush1.msra.mxu0 %v3185
        %3234 = vmatprep.subr.mxu0 0.0
        %3235 = vmatpush1.msra.mxu0 %v3184
        %3236 = vmatprep.subr.mxu0 0.0
        %3237 = vmatpush1.msra.mxu0 %v3183
        %3238 = vmatprep.subr.mxu0 0.0
        %3239 = vmatpush1.msra.mxu0 %v3182
        %3240 = vmatprep.subr.mxu0 0.0
        %3241 = vmatpush1.msra.mxu0 %v3181
        %3242 = vmatprep.subr.mxu0 0.0
        %3243 = vmatpush1.msra.mxu0 %v3180
        %3244 = vmatprep.subr.mxu0 0.0
        %3245 = vmatpush2.msra.mxu0 %v3211
        %3246 = vmatprep.subr.mxu0 0.0
        %3247 = vmatpush2.msra.mxu0 %v3210
        %3248 = vmatprep.subr.mxu0 0.0
        %3249 = vmatpush2.msra.mxu0 %v3209
        %3250 = vmatprep.subr.mxu0 0.0
        %3251 = vmatpush2.msra.mxu0 %v3208
        %3252 = vmatprep.subr.mxu0 0.0
        %3253 = vmatpush2.msra.mxu0 %v3207
        %3254 = vmatprep.subr.mxu0 0.0
        %3255 = vmatpush2.msra.mxu0 %v3206
        %3256 = vmatprep.subr.mxu0 0.0
        %3257 = vmatpush2.msra.mxu0 %v3205
        %3258 = vmatprep.subr.mxu0 0.0
        %3259 = vmatpush2.msra.mxu0 %v3204
        %3260 = vmatprep.subr.mxu0 0.0
        %3261 = vmatpush2.msra.mxu0 %v3203
        %3262 = vmatprep.subr.mxu0 0.0
        %3263 = vmatpush2.msra.mxu0 %v3202
        %3264 = vmatprep.subr.mxu0 0.0
        %3265 = vmatpush2.msra.mxu0 %v3201
        %3266 = vmatprep.subr.mxu0 0.0
        %3267 = vmatpush2.msra.mxu0 %v3200
        %3268 = vmatprep.subr.mxu0 0.0
        %3269 = vmatpush2.msra.mxu0 %v3199
        %3270 = vmatprep.subr.mxu0 0.0
        %3271 = vmatpush2.msra.mxu0 %v3198
        %3272 = vmatprep.subr.mxu0 0.0
        %3273 = vmatpush2.msra.mxu0 %v3197
        %3274 = vmatprep.subr.mxu0 0.0
        %3275 = vmatpush2.msra.mxu0 %v3196
        %3276 = vmatprep.mubr.f32.mxu0 %v1436
        %3277 = vmatmul.mubr.f32.gmra.mxu0 %v1434
        %v3278 = vpop.f32.mrf.mxu0
        %v3279 = vadd.f32 0.0, %v3278
        %v3280 = vpop.f32.mrf.mxu0
        %3281 = vmatprep.mubr.f32.mxu0 %v1442
        %3282 = vmatmul.mubr.f32.gmra.mxu0 %v1440
        %v3283 = vpop.f32.mrf.mxu0
        %v3284 = vadd.f32 0.0, %v3283
        %v3285 = vpop.f32.mrf.mxu0
        %3286 = vmatprep.mubr.f32.mxu0 %v1448
        %3287 = vmatmul.mubr.f32.gmra.mxu0 %v1446
        %v3288 = vpop.f32.mrf.mxu0
        %v3289 = vadd.f32 0.0, %v3288
        %v3290 = vpop.f32.mrf.mxu0
        %3291 = vmatprep.mubr.f32.mxu0 %v1454
        %3292 = vmatmul.mubr.f32.gmra.mxu0 %v1452
        %v3293 = vpop.f32.mrf.mxu0
        %v3294 = vadd.f32 0.0, %v3293
        %v3295 = vpop.f32.mrf.mxu0
        %3296 = vdwg.mxu0
        %v3297 = vadd.f32 %v3175, %v3279
        %v3298 = vadd.f32 %v3176, %v3284
        %v3299 = vadd.f32 %v3177, %v3289
        %v3300 = vadd.f32 %v3178, %v3294
        %s3301 = scalar_lea.vmem %s5, 3840
        %v3302 = vld [vmem:[%s3301] sm:$0xff]
        %v3303 = vld [vmem:[%s3301 + $0x8] sm:$0xff]
        %v3304 = vld [vmem:[%s3301 + $0x10] sm:$0xff]
        %v3305 = vld [vmem:[%s3301 + $0x18] sm:$0xff]
        %v3306 = vld [vmem:[%s3301 + $0x20] sm:$0xff]
        %v3307 = vld [vmem:[%s3301 + $0x28] sm:$0xff]
        %v3308 = vld [vmem:[%s3301 + $0x30] sm:$0xff]
        %v3309 = vld [vmem:[%s3301 + $0x38] sm:$0xff]
        %v3310 = vld [vmem:[%s3301 + $0x40] sm:$0xff]
        %v3311 = vld [vmem:[%s3301 + $0x48] sm:$0xff]
        %v3312 = vld [vmem:[%s3301 + $0x50] sm:$0xff]
        %v3313 = vld [vmem:[%s3301 + $0x58] sm:$0xff]
        %v3314 = vld [vmem:[%s3301 + $0x60] sm:$0xff]
        %v3315 = vld [vmem:[%s3301 + $0x68] sm:$0xff]
        %v3316 = vld [vmem:[%s3301 + $0x70] sm:$0xff]
        %v3317 = vld [vmem:[%s3301 + $0x78] sm:$0xff]
        %v3318 = vld [vmem:[%s3301 + $0x80] sm:$0xff]
        %v3319 = vld [vmem:[%s3301 + $0x88] sm:$0xff]
        %v3320 = vld [vmem:[%s3301 + $0x90] sm:$0xff]
        %v3321 = vld [vmem:[%s3301 + $0x98] sm:$0xff]
        %v3322 = vld [vmem:[%s3301 + $0xa0] sm:$0xff]
        %v3323 = vld [vmem:[%s3301 + $0xa8] sm:$0xff]
        %v3324 = vld [vmem:[%s3301 + $0xb0] sm:$0xff]
        %v3325 = vld [vmem:[%s3301 + $0xb8] sm:$0xff]
        %v3326 = vld [vmem:[%s3301 + $0xc0] sm:$0xff]
        %v3327 = vld [vmem:[%s3301 + $0xc8] sm:$0xff]
        %v3328 = vld [vmem:[%s3301 + $0xd0] sm:$0xff]
        %v3329 = vld [vmem:[%s3301 + $0xd8] sm:$0xff]
        %v3330 = vld [vmem:[%s3301 + $0xe0] sm:$0xff]
        %v3331 = vld [vmem:[%s3301 + $0xe8] sm:$0xff]
        %v3332 = vld [vmem:[%s3301 + $0xf0] sm:$0xff]
        %v3333 = vld [vmem:[%s3301 + $0xf8] sm:$0xff]
        %3334 = vmatprep.subr.mxu0 0.0
        %3335 = vmatpush1.msra.mxu0 %v3317
        %3336 = vmatprep.subr.mxu0 0.0
        %3337 = vmatpush1.msra.mxu0 %v3316
        %3338 = vmatprep.subr.mxu0 0.0
        %3339 = vmatpush1.msra.mxu0 %v3315
        %3340 = vmatprep.subr.mxu0 0.0
        %3341 = vmatpush1.msra.mxu0 %v3314
        %3342 = vmatprep.subr.mxu0 0.0
        %3343 = vmatpush1.msra.mxu0 %v3313
        %3344 = vmatprep.subr.mxu0 0.0
        %3345 = vmatpush1.msra.mxu0 %v3312
        %3346 = vmatprep.subr.mxu0 0.0
        %3347 = vmatpush1.msra.mxu0 %v3311
        %3348 = vmatprep.subr.mxu0 0.0
        %3349 = vmatpush1.msra.mxu0 %v3310
        %3350 = vmatprep.subr.mxu0 0.0
        %3351 = vmatpush1.msra.mxu0 %v3309
        %3352 = vmatprep.subr.mxu0 0.0
        %3353 = vmatpush1.msra.mxu0 %v3308
        %3354 = vmatprep.subr.mxu0 0.0
        %3355 = vmatpush1.msra.mxu0 %v3307
        %3356 = vmatprep.subr.mxu0 0.0
        %3357 = vmatpush1.msra.mxu0 %v3306
        %3358 = vmatprep.subr.mxu0 0.0
        %3359 = vmatpush1.msra.mxu0 %v3305
        %3360 = vmatprep.subr.mxu0 0.0
        %3361 = vmatpush1.msra.mxu0 %v3304
        %3362 = vmatprep.subr.mxu0 0.0
        %3363 = vmatpush1.msra.mxu0 %v3303
        %3364 = vmatprep.subr.mxu0 0.0
        %3365 = vmatpush1.msra.mxu0 %v3302
        %3366 = vmatprep.subr.mxu0 0.0
        %3367 = vmatpush2.msra.mxu0 %v3333
        %3368 = vmatprep.subr.mxu0 0.0
        %3369 = vmatpush2.msra.mxu0 %v3332
        %3370 = vmatprep.subr.mxu0 0.0
        %3371 = vmatpush2.msra.mxu0 %v3331
        %3372 = vmatprep.subr.mxu0 0.0
        %3373 = vmatpush2.msra.mxu0 %v3330
        %3374 = vmatprep.subr.mxu0 0.0
        %3375 = vmatpush2.msra.mxu0 %v3329
        %3376 = vmatprep.subr.mxu0 0.0
        %3377 = vmatpush2.msra.mxu0 %v3328
        %3378 = vmatprep.subr.mxu0 0.0
        %3379 = vmatpush2.msra.mxu0 %v3327
        %3380 = vmatprep.subr.mxu0 0.0
        %3381 = vmatpush2.msra.mxu0 %v3326
        %3382 = vmatprep.subr.mxu0 0.0
        %3383 = vmatpush2.msra.mxu0 %v3325
        %3384 = vmatprep.subr.mxu0 0.0
        %3385 = vmatpush2.msra.mxu0 %v3324
        %3386 = vmatprep.subr.mxu0 0.0
        %3387 = vmatpush2.msra.mxu0 %v3323
        %3388 = vmatprep.subr.mxu0 0.0
        %3389 = vmatpush2.msra.mxu0 %v3322
        %3390 = vmatprep.subr.mxu0 0.0
        %3391 = vmatpush2.msra.mxu0 %v3321
        %3392 = vmatprep.subr.mxu0 0.0
        %3393 = vmatpush2.msra.mxu0 %v3320
        %3394 = vmatprep.subr.mxu0 0.0
        %3395 = vmatpush2.msra.mxu0 %v3319
        %3396 = vmatprep.subr.mxu0 0.0
        %3397 = vmatpush2.msra.mxu0 %v3318
        %3398 = vmatprep.mubr.f32.mxu0 %v1460
        %3399 = vmatmul.mubr.f32.gmra.mxu0 %v1458
        %v3400 = vpop.f32.mrf.mxu0
        %v3401 = vadd.f32 0.0, %v3400
        %v3402 = vpop.f32.mrf.mxu0
        %3403 = vmatprep.mubr.f32.mxu0 %v1466
        %3404 = vmatmul.mubr.f32.gmra.mxu0 %v1464
        %v3405 = vpop.f32.mrf.mxu0
        %v3406 = vadd.f32 0.0, %v3405
        %v3407 = vpop.f32.mrf.mxu0
        %3408 = vmatprep.mubr.f32.mxu0 %v1472
        %3409 = vmatmul.mubr.f32.gmra.mxu0 %v1470
        %v3410 = vpop.f32.mrf.mxu0
        %v3411 = vadd.f32 0.0, %v3410
        %v3412 = vpop.f32.mrf.mxu0
        %3413 = vmatprep.mubr.f32.mxu0 %v1478
        %3414 = vmatmul.mubr.f32.gmra.mxu0 %v1476
        %v3415 = vpop.f32.mrf.mxu0
        %v3416 = vadd.f32 0.0, %v3415
        %v3417 = vpop.f32.mrf.mxu0
        %3418 = vdwg.mxu0
        %v3419 = vadd.f32 %v3297, %v3401
        %v3420 = vadd.f32 %v3298, %v3406
        %v3421 = vadd.f32 %v3299, %v3411
        %v3422 = vadd.f32 %v3300, %v3416
        %3427 = vrot.lane.b32.xlu0 %v3419, 119
        %v3428 = vpop.permute.xlu0 %3427
        %3429 = vrot.lane.b32.xlu0 %v3420, 119
        %v3430 = vpop.permute.xlu0 %3429
        %3431 = vrot.lane.b32.xlu0 %v3421, 119
        %v3432 = vpop.permute.xlu0 %3431
        %3433 = vrot.lane.b32.xlu0 %v3422, 119
        %v3434 = vpop.permute.xlu0 %3433
        %v3439 = vmax.f32 %v3419, %v3428
        %v3440 = vmax.f32 %v3420, %v3430
        %v3441 = vmax.f32 %v3421, %v3432
        %v3442 = vmax.f32 %v3422, %v3434
        %3447 = vrot.lane.b32.xlu0 %v3439, 110
        %v3448 = vpop.permute.xlu0 %3447
        %3449 = vrot.lane.b32.xlu0 %v3440, 110
        %v3450 = vpop.permute.xlu0 %3449
        %3451 = vrot.lane.b32.xlu0 %v3441, 110
        %v3452 = vpop.permute.xlu0 %3451
        %3453 = vrot.lane.b32.xlu0 %v3442, 110
        %v3454 = vpop.permute.xlu0 %3453
        %v3459 = vmax.f32 %v3439, %v3448
        %v3460 = vmax.f32 %v3440, %v3450
        %v3461 = vmax.f32 %v3441, %v3452
        %v3462 = vmax.f32 %v3442, %v3454
        %v3463 = vld [vmem:[%s4] sm:$0xff]
        %v3464 = vld [vmem:[%s4 + $0x8] sm:$0xff]
        %v3465 = vld [vmem:[%s4 + $0x10] sm:$0xff]
        %v3466 = vld [vmem:[%s4 + $0x18] sm:$0xff]
        %3468 = vset.pattern.permute.xlu0 0
        %3469 = vperm.xlu0 %3468, %v3463
        %v3470 = vpop.permute.xlu0 %3469
        %3473 = vset.pattern.permute.xlu0 0
        %3474 = vperm.xlu0 %3473, %v3464
        %v3475 = vpop.permute.xlu0 %3474
        %3478 = vset.pattern.permute.xlu0 0
        %3479 = vperm.xlu0 %3478, %v3465
        %v3480 = vpop.permute.xlu0 %3479
        %3483 = vset.pattern.permute.xlu0 0
        %3484 = vperm.xlu0 %3483, %v3466
        %v3485 = vpop.permute.xlu0 %3484
        %v3487 = vadd.f32 %v3459, %v3470
        %v3488 = vadd.f32 %v3460, %v3475
        %v3489 = vadd.f32 %v3461, %v3480
        %v3490 = vadd.f32 %v3462, %v3485
        %v3491 = vmax.f32 %v3487, 0.0
        %v3492 = vmax.f32 %v3488, 0.0
        %v3493 = vmax.f32 %v3489, 0.0
        %v3494 = vmax.f32 %v3490, 0.0
        %v3495 = vld [vmem:[%s6] sm:$0xff]
        %v3496 = vld [vmem:[%s6 + $0x8] sm:$0xff]
        %v3497 = vld [vmem:[%s6 + $0x10] sm:$0xff]
        %v3498 = vld [vmem:[%s6 + $0x18] sm:$0xff]
        %v3499 = vld [vmem:[%s6 + $0x20] sm:$0xff]
        %v3500 = vld [vmem:[%s6 + $0x28] sm:$0xff]
        %v3501 = vld [vmem:[%s6 + $0x30] sm:$0xff]
        %v3502 = vld [vmem:[%s6 + $0x38] sm:$0xff]
        %v3503 = vld [vmem:[%s6 + $0x40] sm:$0xff]
        %v3504 = vld [vmem:[%s6 + $0x48] sm:$0xff]
        %v3505 = vld [vmem:[%s6 + $0x50] sm:$0xff]
        %v3506 = vld [vmem:[%s6 + $0x58] sm:$0xff]
        %v3507 = vld [vmem:[%s6 + $0x60] sm:$0xff]
        %v3508 = vld [vmem:[%s6 + $0x68] sm:$0xff]
        %v3509 = vld [vmem:[%s6 + $0x70] sm:$0xff]
        %v3510 = vld [vmem:[%s6 + $0x78] sm:$0xff]
        %v3511 = vld [vmem:[%s6 + $0x80] sm:$0xff]
        %v3512 = vld [vmem:[%s6 + $0x88] sm:$0xff]
        %v3513 = vld [vmem:[%s6 + $0x90] sm:$0xff]
        %v3514 = vld [vmem:[%s6 + $0x98] sm:$0xff]
        %v3515 = vld [vmem:[%s6 + $0xa0] sm:$0xff]
        %v3516 = vld [vmem:[%s6 + $0xa8] sm:$0xff]
        %v3517 = vld [vmem:[%s6 + $0xb0] sm:$0xff]
        %v3518 = vld [vmem:[%s6 + $0xb8] sm:$0xff]
        %v3519 = vld [vmem:[%s6 + $0xc0] sm:$0xff]
        %v3520 = vld [vmem:[%s6 + $0xc8] sm:$0xff]
        %v3521 = vld [vmem:[%s6 + $0xd0] sm:$0xff]
        %v3522 = vld [vmem:[%s6 + $0xd8] sm:$0xff]
        %v3523 = vld [vmem:[%s6 + $0xe0] sm:$0xff]
        %v3524 = vld [vmem:[%s6 + $0xe8] sm:$0xff]
        %v3525 = vld [vmem:[%s6 + $0xf0] sm:$0xff]
        %v3526 = vld [vmem:[%s6 + $0xf8] sm:$0xff]
        %v3527 = vld [vmem:[%s6 + $0x100] sm:$0xff]
        %v3528 = vld [vmem:[%s6 + $0x108] sm:$0xff]
        %v3529 = vld [vmem:[%s6 + $0x110] sm:$0xff]
        %v3530 = vld [vmem:[%s6 + $0x118] sm:$0xff]
        %v3531 = vld [vmem:[%s6 + $0x120] sm:$0xff]
        %v3532 = vld [vmem:[%s6 + $0x128] sm:$0xff]
        %v3533 = vld [vmem:[%s6 + $0x130] sm:$0xff]
        %v3534 = vld [vmem:[%s6 + $0x138] sm:$0xff]
        %v3535 = vld [vmem:[%s6 + $0x140] sm:$0xff]
        %v3536 = vld [vmem:[%s6 + $0x148] sm:$0xff]
        %v3537 = vld [vmem:[%s6 + $0x150] sm:$0xff]
        %v3538 = vld [vmem:[%s6 + $0x158] sm:$0xff]
        %v3539 = vld [vmem:[%s6 + $0x160] sm:$0xff]
        %v3540 = vld [vmem:[%s6 + $0x168] sm:$0xff]
        %v3541 = vld [vmem:[%s6 + $0x170] sm:$0xff]
        %v3542 = vld [vmem:[%s6 + $0x178] sm:$0xff]
        %v3543 = vld [vmem:[%s6 + $0x180] sm:$0xff]
        %v3544 = vld [vmem:[%s6 + $0x188] sm:$0xff]
        %v3545 = vld [vmem:[%s6 + $0x190] sm:$0xff]
        %v3546 = vld [vmem:[%s6 + $0x198] sm:$0xff]
        %v3547 = vld [vmem:[%s6 + $0x1a0] sm:$0xff]
        %v3548 = vld [vmem:[%s6 + $0x1a8] sm:$0xff]
        %v3549 = vld [vmem:[%s6 + $0x1b0] sm:$0xff]
        %v3550 = vld [vmem:[%s6 + $0x1b8] sm:$0xff]
        %v3551 = vld [vmem:[%s6 + $0x1c0] sm:$0xff]
        %v3552 = vld [vmem:[%s6 + $0x1c8] sm:$0xff]
        %v3553 = vld [vmem:[%s6 + $0x1d0] sm:$0xff]
        %v3554 = vld [vmem:[%s6 + $0x1d8] sm:$0xff]
        %v3555 = vld [vmem:[%s6 + $0x1e0] sm:$0xff]
        %v3556 = vld [vmem:[%s6 + $0x1e8] sm:$0xff]
        %v3557 = vld [vmem:[%s6 + $0x1f0] sm:$0xff]
        %v3558 = vld [vmem:[%s6 + $0x1f8] sm:$0xff]
        %v3559 = vld [vmem:[%s6 + $0x200] sm:$0xff]
        %v3560 = vld [vmem:[%s6 + $0x208] sm:$0xff]
        %v3561 = vld [vmem:[%s6 + $0x210] sm:$0xff]
        %v3562 = vld [vmem:[%s6 + $0x218] sm:$0xff]
        %v3563 = vld [vmem:[%s6 + $0x220] sm:$0xff]
        %v3564 = vld [vmem:[%s6 + $0x228] sm:$0xff]
        %v3565 = vld [vmem:[%s6 + $0x230] sm:$0xff]
        %v3566 = vld [vmem:[%s6 + $0x238] sm:$0xff]
        %v3567 = vld [vmem:[%s6 + $0x240] sm:$0xff]
        %v3568 = vld [vmem:[%s6 + $0x248] sm:$0xff]
        %v3569 = vld [vmem:[%s6 + $0x250] sm:$0xff]
        %v3570 = vld [vmem:[%s6 + $0x258] sm:$0xff]
        %v3571 = vld [vmem:[%s6 + $0x260] sm:$0xff]
        %v3572 = vld [vmem:[%s6 + $0x268] sm:$0xff]
        %v3573 = vld [vmem:[%s6 + $0x270] sm:$0xff]
        %v3574 = vld [vmem:[%s6 + $0x278] sm:$0xff]
        %v3575 = vld [vmem:[%s6 + $0x280] sm:$0xff]
        %v3576 = vld [vmem:[%s6 + $0x288] sm:$0xff]
        %v3577 = vld [vmem:[%s6 + $0x290] sm:$0xff]
        %v3578 = vld [vmem:[%s6 + $0x298] sm:$0xff]
        %v3579 = vld [vmem:[%s6 + $0x2a0] sm:$0xff]
        %v3580 = vld [vmem:[%s6 + $0x2a8] sm:$0xff]
        %v3581 = vld [vmem:[%s6 + $0x2b0] sm:$0xff]
        %v3582 = vld [vmem:[%s6 + $0x2b8] sm:$0xff]
        %v3583 = vld [vmem:[%s6 + $0x2c0] sm:$0xff]
        %v3584 = vld [vmem:[%s6 + $0x2c8] sm:$0xff]
        %v3585 = vld [vmem:[%s6 + $0x2d0] sm:$0xff]
        %v3586 = vld [vmem:[%s6 + $0x2d8] sm:$0xff]
        %v3587 = vld [vmem:[%s6 + $0x2e0] sm:$0xff]
        %v3588 = vld [vmem:[%s6 + $0x2e8] sm:$0xff]
        %v3589 = vld [vmem:[%s6 + $0x2f0] sm:$0xff]
        %v3590 = vld [vmem:[%s6 + $0x2f8] sm:$0xff]
        %v3591 = vld [vmem:[%s6 + $0x300] sm:$0xff]
        %v3592 = vld [vmem:[%s6 + $0x308] sm:$0xff]
        %v3593 = vld [vmem:[%s6 + $0x310] sm:$0xff]
        %v3594 = vld [vmem:[%s6 + $0x318] sm:$0xff]
        %v3595 = vld [vmem:[%s6 + $0x320] sm:$0xff]
        %v3596 = vld [vmem:[%s6 + $0x328] sm:$0xff]
        %v3597 = vld [vmem:[%s6 + $0x330] sm:$0xff]
        %v3598 = vld [vmem:[%s6 + $0x338] sm:$0xff]
        %v3599 = vld [vmem:[%s6 + $0x340] sm:$0xff]
        %v3600 = vld [vmem:[%s6 + $0x348] sm:$0xff]
        %v3601 = vld [vmem:[%s6 + $0x350] sm:$0xff]
        %v3602 = vld [vmem:[%s6 + $0x358] sm:$0xff]
        %v3603 = vld [vmem:[%s6 + $0x360] sm:$0xff]
        %v3604 = vld [vmem:[%s6 + $0x368] sm:$0xff]
        %v3605 = vld [vmem:[%s6 + $0x370] sm:$0xff]
        %v3606 = vld [vmem:[%s6 + $0x378] sm:$0xff]
        %v3607 = vld [vmem:[%s6 + $0x380] sm:$0xff]
        %v3608 = vld [vmem:[%s6 + $0x388] sm:$0xff]
        %v3609 = vld [vmem:[%s6 + $0x390] sm:$0xff]
        %v3610 = vld [vmem:[%s6 + $0x398] sm:$0xff]
        %v3611 = vld [vmem:[%s6 + $0x3a0] sm:$0xff]
        %v3612 = vld [vmem:[%s6 + $0x3a8] sm:$0xff]
        %v3613 = vld [vmem:[%s6 + $0x3b0] sm:$0xff]
        %v3614 = vld [vmem:[%s6 + $0x3b8] sm:$0xff]
        %v3615 = vld [vmem:[%s6 + $0x3c0] sm:$0xff]
        %v3616 = vld [vmem:[%s6 + $0x3c8] sm:$0xff]
        %v3617 = vld [vmem:[%s6 + $0x3d0] sm:$0xff]
        %v3618 = vld [vmem:[%s6 + $0x3d8] sm:$0xff]
        %v3619 = vld [vmem:[%s6 + $0x3e0] sm:$0xff]
        %v3620 = vld [vmem:[%s6 + $0x3e8] sm:$0xff]
        %v3621 = vld [vmem:[%s6 + $0x3f0] sm:$0xff]
        %v3622 = vld [vmem:[%s6 + $0x3f8] sm:$0xff]
        %vm3623 = vcmask 261120
        %v3625 = vsel %vm3623, %v3495, 0
        %v3628 = vsel %vm3623, %v3496, 0
        %v3631 = vsel %vm3623, %v3497, 0
        %v3634 = vsel %vm3623, %v3498, 0
        %v3637 = vsel %vm3623, %v3499, 0
        %v3640 = vsel %vm3623, %v3500, 0
        %v3643 = vsel %vm3623, %v3501, 0
        %v3646 = vsel %vm3623, %v3502, 0
        %v3649 = vsel %vm3623, %v3503, 0
        %v3652 = vsel %vm3623, %v3504, 0
        %v3655 = vsel %vm3623, %v3505, 0
        %v3658 = vsel %vm3623, %v3506, 0
        %v3661 = vsel %vm3623, %v3507, 0
        %v3664 = vsel %vm3623, %v3508, 0
        %v3667 = vsel %vm3623, %v3509, 0
        %v3670 = vsel %vm3623, %v3510, 0
        %v3673 = vsel %vm3623, %v3511, 0
        %v3676 = vsel %vm3623, %v3512, 0
        %v3679 = vsel %vm3623, %v3513, 0
        %v3682 = vsel %vm3623, %v3514, 0
        %v3685 = vsel %vm3623, %v3515, 0
        %v3688 = vsel %vm3623, %v3516, 0
        %v3691 = vsel %vm3623, %v3517, 0
        %v3694 = vsel %vm3623, %v3518, 0
        %v3697 = vsel %vm3623, %v3519, 0
        %v3700 = vsel %vm3623, %v3520, 0
        %v3703 = vsel %vm3623, %v3521, 0
        %v3706 = vsel %vm3623, %v3522, 0
        %v3709 = vsel %vm3623, %v3523, 0
        %v3712 = vsel %vm3623, %v3524, 0
        %v3715 = vsel %vm3623, %v3525, 0
        %v3718 = vsel %vm3623, %v3526, 0
        %v3721 = vsel %vm3623, %v3527, 0
        %v3724 = vsel %vm3623, %v3528, 0
        %v3727 = vsel %vm3623, %v3529, 0
        %v3730 = vsel %vm3623, %v3530, 0
        %v3733 = vsel %vm3623, %v3531, 0
        %v3736 = vsel %vm3623, %v3532, 0
        %v3739 = vsel %vm3623, %v3533, 0
        %v3742 = vsel %vm3623, %v3534, 0
        %v3745 = vsel %vm3623, %v3535, 0
        %v3748 = vsel %vm3623, %v3536, 0
        %v3751 = vsel %vm3623, %v3537, 0
        %v3754 = vsel %vm3623, %v3538, 0
        %v3757 = vsel %vm3623, %v3539, 0
        %v3760 = vsel %vm3623, %v3540, 0
        %v3763 = vsel %vm3623, %v3541, 0
        %v3766 = vsel %vm3623, %v3542, 0
        %v3769 = vsel %vm3623, %v3543, 0
        %v3772 = vsel %vm3623, %v3544, 0
        %v3775 = vsel %vm3623, %v3545, 0
        %v3778 = vsel %vm3623, %v3546, 0
        %v3781 = vsel %vm3623, %v3547, 0
        %v3784 = vsel %vm3623, %v3548, 0
        %v3787 = vsel %vm3623, %v3549, 0
        %v3790 = vsel %vm3623, %v3550, 0
        %v3793 = vsel %vm3623, %v3551, 0
        %v3796 = vsel %vm3623, %v3552, 0
        %v3799 = vsel %vm3623, %v3553, 0
        %v3802 = vsel %vm3623, %v3554, 0
        %v3805 = vsel %vm3623, %v3555, 0
        %v3808 = vsel %vm3623, %v3556, 0
        %v3811 = vsel %vm3623, %v3557, 0
        %v3814 = vsel %vm3623, %v3558, 0
        %v3817 = vsel %vm3623, %v3559, 0
        %v3820 = vsel %vm3623, %v3560, 0
        %v3823 = vsel %vm3623, %v3561, 0
        %v3826 = vsel %vm3623, %v3562, 0
        %v3829 = vsel %vm3623, %v3563, 0
        %v3832 = vsel %vm3623, %v3564, 0
        %v3835 = vsel %vm3623, %v3565, 0
        %v3838 = vsel %vm3623, %v3566, 0
        %v3841 = vsel %vm3623, %v3567, 0
        %v3844 = vsel %vm3623, %v3568, 0
        %v3847 = vsel %vm3623, %v3569, 0
        %v3850 = vsel %vm3623, %v3570, 0
        %v3853 = vsel %vm3623, %v3571, 0
        %v3856 = vsel %vm3623, %v3572, 0
        %v3859 = vsel %vm3623, %v3573, 0
        %v3862 = vsel %vm3623, %v3574, 0
        %v3865 = vsel %vm3623, %v3575, 0
        %v3868 = vsel %vm3623, %v3576, 0
        %v3871 = vsel %vm3623, %v3577, 0
        %v3874 = vsel %vm3623, %v3578, 0
        %v3877 = vsel %vm3623, %v3579, 0
        %v3880 = vsel %vm3623, %v3580, 0
        %v3883 = vsel %vm3623, %v3581, 0
        %v3886 = vsel %vm3623, %v3582, 0
        %v3889 = vsel %vm3623, %v3583, 0
        %v3892 = vsel %vm3623, %v3584, 0
        %v3895 = vsel %vm3623, %v3585, 0
        %v3898 = vsel %vm3623, %v3586, 0
        %v3901 = vsel %vm3623, %v3587, 0
        %v3904 = vsel %vm3623, %v3588, 0
        %v3907 = vsel %vm3623, %v3589, 0
        %v3910 = vsel %vm3623, %v3590, 0
        %v3913 = vsel %vm3623, %v3591, 0
        %v3916 = vsel %vm3623, %v3592, 0
        %v3919 = vsel %vm3623, %v3593, 0
        %v3922 = vsel %vm3623, %v3594, 0
        %v3925 = vsel %vm3623, %v3595, 0
        %v3928 = vsel %vm3623, %v3596, 0
        %v3931 = vsel %vm3623, %v3597, 0
        %v3934 = vsel %vm3623, %v3598, 0
        %v3937 = vsel %vm3623, %v3599, 0
        %v3940 = vsel %vm3623, %v3600, 0
        %v3943 = vsel %vm3623, %v3601, 0
        %v3946 = vsel %vm3623, %v3602, 0
        %v3949 = vsel %vm3623, %v3603, 0
        %v3952 = vsel %vm3623, %v3604, 0
        %v3955 = vsel %vm3623, %v3605, 0
        %v3958 = vsel %vm3623, %v3606, 0
        %v3961 = vsel %vm3623, %v3607, 0
        %v3964 = vsel %vm3623, %v3608, 0
        %v3967 = vsel %vm3623, %v3609, 0
        %v3970 = vsel %vm3623, %v3610, 0
        %v3973 = vsel %vm3623, %v3611, 0
        %v3976 = vsel %vm3623, %v3612, 0
        %v3979 = vsel %vm3623, %v3613, 0
        %v3982 = vsel %vm3623, %v3614, 0
        %v3985 = vsel %vm3623, %v3615, 0
        %v3988 = vsel %vm3623, %v3616, 0
        %v3991 = vsel %vm3623, %v3617, 0
        %v3994 = vsel %vm3623, %v3618, 0
        %v3997 = vsel %vm3623, %v3619, 0
        %v4000 = vsel %vm3623, %v3620, 0
        %v4003 = vsel %vm3623, %v3621, 0
        %v4006 = vsel %vm3623, %v3622, 0
        %4008 = vmatprep.subr.mxu0 0.0
        %4009 = vmatpush1.msra.mxu0 0.0
        %4010 = vmatprep.subr.mxu0 0.0
        %4011 = vmatpush1.msra.mxu0 0.0
        %4012 = vmatprep.subr.mxu0 0.0
        %4013 = vmatpush1.msra.mxu0 0.0
        %4014 = vmatprep.subr.mxu0 0.0
        %4015 = vmatpush1.msra.mxu0 0.0
        %4016 = vmatprep.subr.mxu0 0.0
        %4017 = vmatpush1.msra.mxu0 0.0
        %4018 = vmatprep.subr.mxu0 0.0
        %4019 = vmatpush1.msra.mxu0 0.0
        %4020 = vmatprep.subr.mxu0 0.0
        %4021 = vmatpush1.msra.mxu0 0.0
        %4022 = vmatprep.subr.mxu0 0.0
        %4023 = vmatpush1.msra.mxu0 0.0
        %4024 = vmatprep.subr.mxu0 0.0
        %4025 = vmatpush1.msra.mxu0 0.0
        %4026 = vmatprep.subr.mxu0 0.0
        %4027 = vmatpush1.msra.mxu0 0.0
        %4028 = vmatprep.subr.mxu0 0.0
        %4029 = vmatpush1.msra.mxu0 0.0
        %4030 = vmatprep.subr.mxu0 0.0
        %4031 = vmatpush1.msra.mxu0 0.0
        %4032 = vmatprep.subr.mxu0 0.0
        %4033 = vmatpush1.msra.mxu0 %v3494
        %4034 = vmatprep.subr.mxu0 0.0
        %4035 = vmatpush1.msra.mxu0 %v3493
        %4036 = vmatprep.subr.mxu0 0.0
        %4037 = vmatpush1.msra.mxu0 %v3492
        %4038 = vmatprep.subr.mxu0 0.0
        %4039 = vmatpush1.msra.mxu0 %v3491
        %4040 = vmatprep.subr.mxu0 0.0
        %4041 = vmatpush2.msra.mxu0 0.0
        %4042 = vmatprep.subr.mxu0 0.0
        %4043 = vmatpush2.msra.mxu0 0.0
        %4044 = vmatprep.subr.mxu0 0.0
        %4045 = vmatpush2.msra.mxu0 0.0
        %4046 = vmatprep.subr.mxu0 0.0
        %4047 = vmatpush2.msra.mxu0 0.0
        %4048 = vmatprep.subr.mxu0 0.0
        %4049 = vmatpush2.msra.mxu0 0.0
        %4050 = vmatprep.subr.mxu0 0.0
        %4051 = vmatpush2.msra.mxu0 0.0
        %4052 = vmatprep.subr.mxu0 0.0
        %4053 = vmatpush2.msra.mxu0 0.0
        %4054 = vmatprep.subr.mxu0 0.0
        %4055 = vmatpush2.msra.mxu0 0.0
        %4056 = vmatprep.subr.mxu0 0.0
        %4057 = vmatpush2.msra.mxu0 0.0
        %4058 = vmatprep.subr.mxu0 0.0
        %4059 = vmatpush2.msra.mxu0 0.0
        %4060 = vmatprep.subr.mxu0 0.0
        %4061 = vmatpush2.msra.mxu0 0.0
        %4062 = vmatprep.subr.mxu0 0.0
        %4063 = vmatpush2.msra.mxu0 0.0
        %4064 = vmatprep.subr.mxu0 0.0
        %4065 = vmatpush2.msra.mxu0 0.0
        %4066 = vmatprep.subr.mxu0 0.0
        %4067 = vmatpush2.msra.mxu0 0.0
        %4068 = vmatprep.subr.mxu0 0.0
        %4069 = vmatpush2.msra.mxu0 0.0
        %4070 = vmatprep.subr.mxu0 0.0
        %4071 = vmatpush2.msra.mxu0 0.0
        %4072 = vmatprep.mubr.f32.mxu0 0.0
        %4073 = vmatmul.mubr.f32.gmra.mxu0 %v3625
        %v4074 = vpop.f32.mrf.mxu0
        %v4075 = vadd.f32 0.0, %v4074
        %v4076 = vpop.f32.mrf.mxu0
        %4077 = vmatprep.mubr.f32.mxu0 0.0
        %4078 = vmatmul.mubr.f32.gmra.mxu0 %v3628
        %v4079 = vpop.f32.mrf.mxu0
        %v4080 = vadd.f32 0.0, %v4079
        %v4081 = vpop.f32.mrf.mxu0
        %4082 = vmatprep.mubr.f32.mxu0 0.0
        %4083 = vmatmul.mubr.f32.gmra.mxu0 %v3631
        %v4084 = vpop.f32.mrf.mxu0
        %v4085 = vadd.f32 0.0, %v4084
        %v4086 = vpop.f32.mrf.mxu0
        %4087 = vmatprep.mubr.f32.mxu0 0.0
        %4088 = vmatmul.mubr.f32.gmra.mxu0 %v3634
        %v4089 = vpop.f32.mrf.mxu0
        %v4090 = vadd.f32 0.0, %v4089
        %v4091 = vpop.f32.mrf.mxu0
        %4092 = vmatprep.mubr.f32.mxu0 0.0
        %4093 = vmatmul.mubr.f32.gmra.mxu0 %v3637
        %v4094 = vpop.f32.mrf.mxu0
        %v4095 = vadd.f32 0.0, %v4094
        %v4096 = vpop.f32.mrf.mxu0
        %4097 = vmatprep.mubr.f32.mxu0 0.0
        %4098 = vmatmul.mubr.f32.gmra.mxu0 %v3640
        %v4099 = vpop.f32.mrf.mxu0
        %v4100 = vadd.f32 0.0, %v4099
        %v4101 = vpop.f32.mrf.mxu0
        %4102 = vmatprep.mubr.f32.mxu0 0.0
        %4103 = vmatmul.mubr.f32.gmra.mxu0 %v3643
        %v4104 = vpop.f32.mrf.mxu0
        %v4105 = vadd.f32 0.0, %v4104
        %v4106 = vpop.f32.mrf.mxu0
        %4107 = vmatprep.mubr.f32.mxu0 0.0
        %4108 = vmatmul.mubr.f32.gmra.mxu0 %v3646
        %v4109 = vpop.f32.mrf.mxu0
        %v4110 = vadd.f32 0.0, %v4109
        %v4111 = vpop.f32.mrf.mxu0
        %4112 = vmatprep.mubr.f32.mxu0 0.0
        %4113 = vmatmul.mubr.f32.gmra.mxu0 %v3649
        %v4114 = vpop.f32.mrf.mxu0
        %v4115 = vadd.f32 0.0, %v4114
        %v4116 = vpop.f32.mrf.mxu0
        %4117 = vmatprep.mubr.f32.mxu0 0.0
        %4118 = vmatmul.mubr.f32.gmra.mxu0 %v3652
        %v4119 = vpop.f32.mrf.mxu0
        %v4120 = vadd.f32 0.0, %v4119
        %v4121 = vpop.f32.mrf.mxu0
        %4122 = vmatprep.mubr.f32.mxu0 0.0
        %4123 = vmatmul.mubr.f32.gmra.mxu0 %v3655
        %v4124 = vpop.f32.mrf.mxu0
        %v4125 = vadd.f32 0.0, %v4124
        %v4126 = vpop.f32.mrf.mxu0
        %4127 = vmatprep.mubr.f32.mxu0 0.0
        %4128 = vmatmul.mubr.f32.gmra.mxu0 %v3658
        %v4129 = vpop.f32.mrf.mxu0
        %v4130 = vadd.f32 0.0, %v4129
        %v4131 = vpop.f32.mrf.mxu0
        %4132 = vmatprep.mubr.f32.mxu0 0.0
        %4133 = vmatmul.mubr.f32.gmra.mxu0 %v3661
        %v4134 = vpop.f32.mrf.mxu0
        %v4135 = vadd.f32 0.0, %v4134
        %v4136 = vpop.f32.mrf.mxu0
        %4137 = vmatprep.mubr.f32.mxu0 0.0
        %4138 = vmatmul.mubr.f32.gmra.mxu0 %v3664
        %v4139 = vpop.f32.mrf.mxu0
        %v4140 = vadd.f32 0.0, %v4139
        %v4141 = vpop.f32.mrf.mxu0
        %4142 = vmatprep.mubr.f32.mxu0 0.0
        %4143 = vmatmul.mubr.f32.gmra.mxu0 %v3667
        %v4144 = vpop.f32.mrf.mxu0
        %v4145 = vadd.f32 0.0, %v4144
        %v4146 = vpop.f32.mrf.mxu0
        %4147 = vmatprep.mubr.f32.mxu0 0.0
        %4148 = vmatmul.mubr.f32.gmra.mxu0 %v3670
        %v4149 = vpop.f32.mrf.mxu0
        %v4150 = vadd.f32 0.0, %v4149
        %v4151 = vpop.f32.mrf.mxu0
        %4152 = vmatprep.mubr.f32.mxu0 0.0
        %4153 = vmatmul.mubr.f32.gmra.mxu0 %v3673
        %v4154 = vpop.f32.mrf.mxu0
        %v4155 = vadd.f32 0.0, %v4154
        %v4156 = vpop.f32.mrf.mxu0
        %4157 = vmatprep.mubr.f32.mxu0 0.0
        %4158 = vmatmul.mubr.f32.gmra.mxu0 %v3676
        %v4159 = vpop.f32.mrf.mxu0
        %v4160 = vadd.f32 0.0, %v4159
        %v4161 = vpop.f32.mrf.mxu0
        %4162 = vmatprep.mubr.f32.mxu0 0.0
        %4163 = vmatmul.mubr.f32.gmra.mxu0 %v3679
        %v4164 = vpop.f32.mrf.mxu0
        %v4165 = vadd.f32 0.0, %v4164
        %v4166 = vpop.f32.mrf.mxu0
        %4167 = vmatprep.mubr.f32.mxu0 0.0
        %4168 = vmatmul.mubr.f32.gmra.mxu0 %v3682
        %v4169 = vpop.f32.mrf.mxu0
        %v4170 = vadd.f32 0.0, %v4169
        %v4171 = vpop.f32.mrf.mxu0
        %4172 = vmatprep.mubr.f32.mxu0 0.0
        %4173 = vmatmul.mubr.f32.gmra.mxu0 %v3685
        %v4174 = vpop.f32.mrf.mxu0
        %v4175 = vadd.f32 0.0, %v4174
        %v4176 = vpop.f32.mrf.mxu0
        %4177 = vmatprep.mubr.f32.mxu0 0.0
        %4178 = vmatmul.mubr.f32.gmra.mxu0 %v3688
        %v4179 = vpop.f32.mrf.mxu0
        %v4180 = vadd.f32 0.0, %v4179
        %v4181 = vpop.f32.mrf.mxu0
        %4182 = vmatprep.mubr.f32.mxu0 0.0
        %4183 = vmatmul.mubr.f32.gmra.mxu0 %v3691
        %v4184 = vpop.f32.mrf.mxu0
        %v4185 = vadd.f32 0.0, %v4184
        %v4186 = vpop.f32.mrf.mxu0
        %4187 = vmatprep.mubr.f32.mxu0 0.0
        %4188 = vmatmul.mubr.f32.gmra.mxu0 %v3694
        %v4189 = vpop.f32.mrf.mxu0
        %v4190 = vadd.f32 0.0, %v4189
        %v4191 = vpop.f32.mrf.mxu0
        %4192 = vmatprep.mubr.f32.mxu0 0.0
        %4193 = vmatmul.mubr.f32.gmra.mxu0 %v3697
        %v4194 = vpop.f32.mrf.mxu0
        %v4195 = vadd.f32 0.0, %v4194
        %v4196 = vpop.f32.mrf.mxu0
        %4197 = vmatprep.mubr.f32.mxu0 0.0
        %4198 = vmatmul.mubr.f32.gmra.mxu0 %v3700
        %v4199 = vpop.f32.mrf.mxu0
        %v4200 = vadd.f32 0.0, %v4199
        %v4201 = vpop.f32.mrf.mxu0
        %4202 = vmatprep.mubr.f32.mxu0 0.0
        %4203 = vmatmul.mubr.f32.gmra.mxu0 %v3703
        %v4204 = vpop.f32.mrf.mxu0
        %v4205 = vadd.f32 0.0, %v4204
        %v4206 = vpop.f32.mrf.mxu0
        %4207 = vmatprep.mubr.f32.mxu0 0.0
        %4208 = vmatmul.mubr.f32.gmra.mxu0 %v3706
        %v4209 = vpop.f32.mrf.mxu0
        %v4210 = vadd.f32 0.0, %v4209
        %v4211 = vpop.f32.mrf.mxu0
        %4212 = vmatprep.mubr.f32.mxu0 0.0
        %4213 = vmatmul.mubr.f32.gmra.mxu0 %v3709
        %v4214 = vpop.f32.mrf.mxu0
        %v4215 = vadd.f32 0.0, %v4214
        %v4216 = vpop.f32.mrf.mxu0
        %4217 = vmatprep.mubr.f32.mxu0 0.0
        %4218 = vmatmul.mubr.f32.gmra.mxu0 %v3712
        %v4219 = vpop.f32.mrf.mxu0
        %v4220 = vadd.f32 0.0, %v4219
        %v4221 = vpop.f32.mrf.mxu0
        %4222 = vmatprep.mubr.f32.mxu0 0.0
        %4223 = vmatmul.mubr.f32.gmra.mxu0 %v3715
        %v4224 = vpop.f32.mrf.mxu0
        %v4225 = vadd.f32 0.0, %v4224
        %v4226 = vpop.f32.mrf.mxu0
        %4227 = vmatprep.mubr.f32.mxu0 0.0
        %4228 = vmatmul.mubr.f32.gmra.mxu0 %v3718
        %v4229 = vpop.f32.mrf.mxu0
        %v4230 = vadd.f32 0.0, %v4229
        %v4231 = vpop.f32.mrf.mxu0
        %4232 = vmatprep.mubr.f32.mxu0 0.0
        %4233 = vmatmul.mubr.f32.gmra.mxu0 %v3721
        %v4234 = vpop.f32.mrf.mxu0
        %v4235 = vadd.f32 0.0, %v4234
        %v4236 = vpop.f32.mrf.mxu0
        %4237 = vmatprep.mubr.f32.mxu0 0.0
        %4238 = vmatmul.mubr.f32.gmra.mxu0 %v3724
        %v4239 = vpop.f32.mrf.mxu0
        %v4240 = vadd.f32 0.0, %v4239
        %v4241 = vpop.f32.mrf.mxu0
        %4242 = vmatprep.mubr.f32.mxu0 0.0
        %4243 = vmatmul.mubr.f32.gmra.mxu0 %v3727
        %v4244 = vpop.f32.mrf.mxu0
        %v4245 = vadd.f32 0.0, %v4244
        %v4246 = vpop.f32.mrf.mxu0
        %4247 = vmatprep.mubr.f32.mxu0 0.0
        %4248 = vmatmul.mubr.f32.gmra.mxu0 %v3730
        %v4249 = vpop.f32.mrf.mxu0
        %v4250 = vadd.f32 0.0, %v4249
        %v4251 = vpop.f32.mrf.mxu0
        %4252 = vmatprep.mubr.f32.mxu0 0.0
        %4253 = vmatmul.mubr.f32.gmra.mxu0 %v3733
        %v4254 = vpop.f32.mrf.mxu0
        %v4255 = vadd.f32 0.0, %v4254
        %v4256 = vpop.f32.mrf.mxu0
        %4257 = vmatprep.mubr.f32.mxu0 0.0
        %4258 = vmatmul.mubr.f32.gmra.mxu0 %v3736
        %v4259 = vpop.f32.mrf.mxu0
        %v4260 = vadd.f32 0.0, %v4259
        %v4261 = vpop.f32.mrf.mxu0
        %4262 = vmatprep.mubr.f32.mxu0 0.0
        %4263 = vmatmul.mubr.f32.gmra.mxu0 %v3739
        %v4264 = vpop.f32.mrf.mxu0
        %v4265 = vadd.f32 0.0, %v4264
        %v4266 = vpop.f32.mrf.mxu0
        %4267 = vmatprep.mubr.f32.mxu0 0.0
        %4268 = vmatmul.mubr.f32.gmra.mxu0 %v3742
        %v4269 = vpop.f32.mrf.mxu0
        %v4270 = vadd.f32 0.0, %v4269
        %v4271 = vpop.f32.mrf.mxu0
        %4272 = vmatprep.mubr.f32.mxu0 0.0
        %4273 = vmatmul.mubr.f32.gmra.mxu0 %v3745
        %v4274 = vpop.f32.mrf.mxu0
        %v4275 = vadd.f32 0.0, %v4274
        %v4276 = vpop.f32.mrf.mxu0
        %4277 = vmatprep.mubr.f32.mxu0 0.0
        %4278 = vmatmul.mubr.f32.gmra.mxu0 %v3748
        %v4279 = vpop.f32.mrf.mxu0
        %v4280 = vadd.f32 0.0, %v4279
        %v4281 = vpop.f32.mrf.mxu0
        %4282 = vmatprep.mubr.f32.mxu0 0.0
        %4283 = vmatmul.mubr.f32.gmra.mxu0 %v3751
        %v4284 = vpop.f32.mrf.mxu0
        %v4285 = vadd.f32 0.0, %v4284
        %v4286 = vpop.f32.mrf.mxu0
        %4287 = vmatprep.mubr.f32.mxu0 0.0
        %4288 = vmatmul.mubr.f32.gmra.mxu0 %v3754
        %v4289 = vpop.f32.mrf.mxu0
        %v4290 = vadd.f32 0.0, %v4289
        %v4291 = vpop.f32.mrf.mxu0
        %4292 = vmatprep.mubr.f32.mxu0 0.0
        %4293 = vmatmul.mubr.f32.gmra.mxu0 %v3757
        %v4294 = vpop.f32.mrf.mxu0
        %v4295 = vadd.f32 0.0, %v4294
        %v4296 = vpop.f32.mrf.mxu0
        %4297 = vmatprep.mubr.f32.mxu0 0.0
        %4298 = vmatmul.mubr.f32.gmra.mxu0 %v3760
        %v4299 = vpop.f32.mrf.mxu0
        %v4300 = vadd.f32 0.0, %v4299
        %v4301 = vpop.f32.mrf.mxu0
        %4302 = vmatprep.mubr.f32.mxu0 0.0
        %4303 = vmatmul.mubr.f32.gmra.mxu0 %v3763
        %v4304 = vpop.f32.mrf.mxu0
        %v4305 = vadd.f32 0.0, %v4304
        %v4306 = vpop.f32.mrf.mxu0
        %4307 = vmatprep.mubr.f32.mxu0 0.0
        %4308 = vmatmul.mubr.f32.gmra.mxu0 %v3766
        %v4309 = vpop.f32.mrf.mxu0
        %v4310 = vadd.f32 0.0, %v4309
        %v4311 = vpop.f32.mrf.mxu0
        %4312 = vmatprep.mubr.f32.mxu0 0.0
        %4313 = vmatmul.mubr.f32.gmra.mxu0 %v3769
        %v4314 = vpop.f32.mrf.mxu0
        %v4315 = vadd.f32 0.0, %v4314
        %v4316 = vpop.f32.mrf.mxu0
        %4317 = vmatprep.mubr.f32.mxu0 0.0
        %4318 = vmatmul.mubr.f32.gmra.mxu0 %v3772
        %v4319 = vpop.f32.mrf.mxu0
        %v4320 = vadd.f32 0.0, %v4319
        %v4321 = vpop.f32.mrf.mxu0
        %4322 = vmatprep.mubr.f32.mxu0 0.0
        %4323 = vmatmul.mubr.f32.gmra.mxu0 %v3775
        %v4324 = vpop.f32.mrf.mxu0
        %v4325 = vadd.f32 0.0, %v4324
        %v4326 = vpop.f32.mrf.mxu0
        %4327 = vmatprep.mubr.f32.mxu0 0.0
        %4328 = vmatmul.mubr.f32.gmra.mxu0 %v3778
        %v4329 = vpop.f32.mrf.mxu0
        %v4330 = vadd.f32 0.0, %v4329
        %v4331 = vpop.f32.mrf.mxu0
        %4332 = vmatprep.mubr.f32.mxu0 0.0
        %4333 = vmatmul.mubr.f32.gmra.mxu0 %v3781
        %v4334 = vpop.f32.mrf.mxu0
        %v4335 = vadd.f32 0.0, %v4334
        %v4336 = vpop.f32.mrf.mxu0
        %4337 = vmatprep.mubr.f32.mxu0 0.0
        %4338 = vmatmul.mubr.f32.gmra.mxu0 %v3784
        %v4339 = vpop.f32.mrf.mxu0
        %v4340 = vadd.f32 0.0, %v4339
        %v4341 = vpop.f32.mrf.mxu0
        %4342 = vmatprep.mubr.f32.mxu0 0.0
        %4343 = vmatmul.mubr.f32.gmra.mxu0 %v3787
        %v4344 = vpop.f32.mrf.mxu0
        %v4345 = vadd.f32 0.0, %v4344
        %v4346 = vpop.f32.mrf.mxu0
        %4347 = vmatprep.mubr.f32.mxu0 0.0
        %4348 = vmatmul.mubr.f32.gmra.mxu0 %v3790
        %v4349 = vpop.f32.mrf.mxu0
        %v4350 = vadd.f32 0.0, %v4349
        %v4351 = vpop.f32.mrf.mxu0
        %4352 = vmatprep.mubr.f32.mxu0 0.0
        %4353 = vmatmul.mubr.f32.gmra.mxu0 %v3793
        %v4354 = vpop.f32.mrf.mxu0
        %v4355 = vadd.f32 0.0, %v4354
        %v4356 = vpop.f32.mrf.mxu0
        %4357 = vmatprep.mubr.f32.mxu0 0.0
        %4358 = vmatmul.mubr.f32.gmra.mxu0 %v3796
        %v4359 = vpop.f32.mrf.mxu0
        %v4360 = vadd.f32 0.0, %v4359
        %v4361 = vpop.f32.mrf.mxu0
        %4362 = vmatprep.mubr.f32.mxu0 0.0
        %4363 = vmatmul.mubr.f32.gmra.mxu0 %v3799
        %v4364 = vpop.f32.mrf.mxu0
        %v4365 = vadd.f32 0.0, %v4364
        %v4366 = vpop.f32.mrf.mxu0
        %4367 = vmatprep.mubr.f32.mxu0 0.0
        %4368 = vmatmul.mubr.f32.gmra.mxu0 %v3802
        %v4369 = vpop.f32.mrf.mxu0
        %v4370 = vadd.f32 0.0, %v4369
        %v4371 = vpop.f32.mrf.mxu0
        %4372 = vmatprep.mubr.f32.mxu0 0.0
        %4373 = vmatmul.mubr.f32.gmra.mxu0 %v3805
        %v4374 = vpop.f32.mrf.mxu0
        %v4375 = vadd.f32 0.0, %v4374
        %v4376 = vpop.f32.mrf.mxu0
        %4377 = vmatprep.mubr.f32.mxu0 0.0
        %4378 = vmatmul.mubr.f32.gmra.mxu0 %v3808
        %v4379 = vpop.f32.mrf.mxu0
        %v4380 = vadd.f32 0.0, %v4379
        %v4381 = vpop.f32.mrf.mxu0
        %4382 = vmatprep.mubr.f32.mxu0 0.0
        %4383 = vmatmul.mubr.f32.gmra.mxu0 %v3811
        %v4384 = vpop.f32.mrf.mxu0
        %v4385 = vadd.f32 0.0, %v4384
        %v4386 = vpop.f32.mrf.mxu0
        %4387 = vmatprep.mubr.f32.mxu0 0.0
        %4388 = vmatmul.mubr.f32.gmra.mxu0 %v3814
        %v4389 = vpop.f32.mrf.mxu0
        %v4390 = vadd.f32 0.0, %v4389
        %v4391 = vpop.f32.mrf.mxu0
        %4392 = vmatprep.mubr.f32.mxu0 0.0
        %4393 = vmatmul.mubr.f32.gmra.mxu0 %v3817
        %v4394 = vpop.f32.mrf.mxu0
        %v4395 = vadd.f32 0.0, %v4394
        %v4396 = vpop.f32.mrf.mxu0
        %4397 = vmatprep.mubr.f32.mxu0 0.0
        %4398 = vmatmul.mubr.f32.gmra.mxu0 %v3820
        %v4399 = vpop.f32.mrf.mxu0
        %v4400 = vadd.f32 0.0, %v4399
        %v4401 = vpop.f32.mrf.mxu0
        %4402 = vmatprep.mubr.f32.mxu0 0.0
        %4403 = vmatmul.mubr.f32.gmra.mxu0 %v3823
        %v4404 = vpop.f32.mrf.mxu0
        %v4405 = vadd.f32 0.0, %v4404
        %v4406 = vpop.f32.mrf.mxu0
        %4407 = vmatprep.mubr.f32.mxu0 0.0
        %4408 = vmatmul.mubr.f32.gmra.mxu0 %v3826
        %v4409 = vpop.f32.mrf.mxu0
        %v4410 = vadd.f32 0.0, %v4409
        %v4411 = vpop.f32.mrf.mxu0
        %4412 = vmatprep.mubr.f32.mxu0 0.0
        %4413 = vmatmul.mubr.f32.gmra.mxu0 %v3829
        %v4414 = vpop.f32.mrf.mxu0
        %v4415 = vadd.f32 0.0, %v4414
        %v4416 = vpop.f32.mrf.mxu0
        %4417 = vmatprep.mubr.f32.mxu0 0.0
        %4418 = vmatmul.mubr.f32.gmra.mxu0 %v3832
        %v4419 = vpop.f32.mrf.mxu0
        %v4420 = vadd.f32 0.0, %v4419
        %v4421 = vpop.f32.mrf.mxu0
        %4422 = vmatprep.mubr.f32.mxu0 0.0
        %4423 = vmatmul.mubr.f32.gmra.mxu0 %v3835
        %v4424 = vpop.f32.mrf.mxu0
        %v4425 = vadd.f32 0.0, %v4424
        %v4426 = vpop.f32.mrf.mxu0
        %4427 = vmatprep.mubr.f32.mxu0 0.0
        %4428 = vmatmul.mubr.f32.gmra.mxu0 %v3838
        %v4429 = vpop.f32.mrf.mxu0
        %v4430 = vadd.f32 0.0, %v4429
        %v4431 = vpop.f32.mrf.mxu0
        %4432 = vmatprep.mubr.f32.mxu0 0.0
        %4433 = vmatmul.mubr.f32.gmra.mxu0 %v3841
        %v4434 = vpop.f32.mrf.mxu0
        %v4435 = vadd.f32 0.0, %v4434
        %v4436 = vpop.f32.mrf.mxu0
        %4437 = vmatprep.mubr.f32.mxu0 0.0
        %4438 = vmatmul.mubr.f32.gmra.mxu0 %v3844
        %v4439 = vpop.f32.mrf.mxu0
        %v4440 = vadd.f32 0.0, %v4439
        %v4441 = vpop.f32.mrf.mxu0
        %4442 = vmatprep.mubr.f32.mxu0 0.0
        %4443 = vmatmul.mubr.f32.gmra.mxu0 %v3847
        %v4444 = vpop.f32.mrf.mxu0
        %v4445 = vadd.f32 0.0, %v4444
        %v4446 = vpop.f32.mrf.mxu0
        %4447 = vmatprep.mubr.f32.mxu0 0.0
        %4448 = vmatmul.mubr.f32.gmra.mxu0 %v3850
        %v4449 = vpop.f32.mrf.mxu0
        %v4450 = vadd.f32 0.0, %v4449
        %v4451 = vpop.f32.mrf.mxu0
        %4452 = vmatprep.mubr.f32.mxu0 0.0
        %4453 = vmatmul.mubr.f32.gmra.mxu0 %v3853
        %v4454 = vpop.f32.mrf.mxu0
        %v4455 = vadd.f32 0.0, %v4454
        %v4456 = vpop.f32.mrf.mxu0
        %4457 = vmatprep.mubr.f32.mxu0 0.0
        %4458 = vmatmul.mubr.f32.gmra.mxu0 %v3856
        %v4459 = vpop.f32.mrf.mxu0
        %v4460 = vadd.f32 0.0, %v4459
        %v4461 = vpop.f32.mrf.mxu0
        %4462 = vmatprep.mubr.f32.mxu0 0.0
        %4463 = vmatmul.mubr.f32.gmra.mxu0 %v3859
        %v4464 = vpop.f32.mrf.mxu0
        %v4465 = vadd.f32 0.0, %v4464
        %v4466 = vpop.f32.mrf.mxu0
        %4467 = vmatprep.mubr.f32.mxu0 0.0
        %4468 = vmatmul.mubr.f32.gmra.mxu0 %v3862
        %v4469 = vpop.f32.mrf.mxu0
        %v4470 = vadd.f32 0.0, %v4469
        %v4471 = vpop.f32.mrf.mxu0
        %4472 = vmatprep.mubr.f32.mxu0 0.0
        %4473 = vmatmul.mubr.f32.gmra.mxu0 %v3865
        %v4474 = vpop.f32.mrf.mxu0
        %v4475 = vadd.f32 0.0, %v4474
        %v4476 = vpop.f32.mrf.mxu0
        %4477 = vmatprep.mubr.f32.mxu0 0.0
        %4478 = vmatmul.mubr.f32.gmra.mxu0 %v3868
        %v4479 = vpop.f32.mrf.mxu0
        %v4480 = vadd.f32 0.0, %v4479
        %v4481 = vpop.f32.mrf.mxu0
        %4482 = vmatprep.mubr.f32.mxu0 0.0
        %4483 = vmatmul.mubr.f32.gmra.mxu0 %v3871
        %v4484 = vpop.f32.mrf.mxu0
        %v4485 = vadd.f32 0.0, %v4484
        %v4486 = vpop.f32.mrf.mxu0
        %4487 = vmatprep.mubr.f32.mxu0 0.0
        %4488 = vmatmul.mubr.f32.gmra.mxu0 %v3874
        %v4489 = vpop.f32.mrf.mxu0
        %v4490 = vadd.f32 0.0, %v4489
        %v4491 = vpop.f32.mrf.mxu0
        %4492 = vmatprep.mubr.f32.mxu0 0.0
        %4493 = vmatmul.mubr.f32.gmra.mxu0 %v3877
        %v4494 = vpop.f32.mrf.mxu0
        %v4495 = vadd.f32 0.0, %v4494
        %v4496 = vpop.f32.mrf.mxu0
        %4497 = vmatprep.mubr.f32.mxu0 0.0
        %4498 = vmatmul.mubr.f32.gmra.mxu0 %v3880
        %v4499 = vpop.f32.mrf.mxu0
        %v4500 = vadd.f32 0.0, %v4499
        %v4501 = vpop.f32.mrf.mxu0
        %4502 = vmatprep.mubr.f32.mxu0 0.0
        %4503 = vmatmul.mubr.f32.gmra.mxu0 %v3883
        %v4504 = vpop.f32.mrf.mxu0
        %v4505 = vadd.f32 0.0, %v4504
        %v4506 = vpop.f32.mrf.mxu0
        %4507 = vmatprep.mubr.f32.mxu0 0.0
        %4508 = vmatmul.mubr.f32.gmra.mxu0 %v3886
        %v4509 = vpop.f32.mrf.mxu0
        %v4510 = vadd.f32 0.0, %v4509
        %v4511 = vpop.f32.mrf.mxu0
        %4512 = vmatprep.mubr.f32.mxu0 0.0
        %4513 = vmatmul.mubr.f32.gmra.mxu0 %v3889
        %v4514 = vpop.f32.mrf.mxu0
        %v4515 = vadd.f32 0.0, %v4514
        %v4516 = vpop.f32.mrf.mxu0
        %4517 = vmatprep.mubr.f32.mxu0 0.0
        %4518 = vmatmul.mubr.f32.gmra.mxu0 %v3892
        %v4519 = vpop.f32.mrf.mxu0
        %v4520 = vadd.f32 0.0, %v4519
        %v4521 = vpop.f32.mrf.mxu0
        %4522 = vmatprep.mubr.f32.mxu0 0.0
        %4523 = vmatmul.mubr.f32.gmra.mxu0 %v3895
        %v4524 = vpop.f32.mrf.mxu0
        %v4525 = vadd.f32 0.0, %v4524
        %v4526 = vpop.f32.mrf.mxu0
        %4527 = vmatprep.mubr.f32.mxu0 0.0
        %4528 = vmatmul.mubr.f32.gmra.mxu0 %v3898
        %v4529 = vpop.f32.mrf.mxu0
        %v4530 = vadd.f32 0.0, %v4529
        %v4531 = vpop.f32.mrf.mxu0
        %4532 = vmatprep.mubr.f32.mxu0 0.0
        %4533 = vmatmul.mubr.f32.gmra.mxu0 %v3901
        %v4534 = vpop.f32.mrf.mxu0
        %v4535 = vadd.f32 0.0, %v4534
        %v4536 = vpop.f32.mrf.mxu0
        %4537 = vmatprep.mubr.f32.mxu0 0.0
        %4538 = vmatmul.mubr.f32.gmra.mxu0 %v3904
        %v4539 = vpop.f32.mrf.mxu0
        %v4540 = vadd.f32 0.0, %v4539
        %v4541 = vpop.f32.mrf.mxu0
        %4542 = vmatprep.mubr.f32.mxu0 0.0
        %4543 = vmatmul.mubr.f32.gmra.mxu0 %v3907
        %v4544 = vpop.f32.mrf.mxu0
        %v4545 = vadd.f32 0.0, %v4544
        %v4546 = vpop.f32.mrf.mxu0
        %4547 = vmatprep.mubr.f32.mxu0 0.0
        %4548 = vmatmul.mubr.f32.gmra.mxu0 %v3910
        %v4549 = vpop.f32.mrf.mxu0
        %v4550 = vadd.f32 0.0, %v4549
        %v4551 = vpop.f32.mrf.mxu0
        %4552 = vmatprep.mubr.f32.mxu0 0.0
        %4553 = vmatmul.mubr.f32.gmra.mxu0 %v3913
        %v4554 = vpop.f32.mrf.mxu0
        %v4555 = vadd.f32 0.0, %v4554
        %v4556 = vpop.f32.mrf.mxu0
        %4557 = vmatprep.mubr.f32.mxu0 0.0
        %4558 = vmatmul.mubr.f32.gmra.mxu0 %v3916
        %v4559 = vpop.f32.mrf.mxu0
        %v4560 = vadd.f32 0.0, %v4559
        %v4561 = vpop.f32.mrf.mxu0
        %4562 = vmatprep.mubr.f32.mxu0 0.0
        %4563 = vmatmul.mubr.f32.gmra.mxu0 %v3919
        %v4564 = vpop.f32.mrf.mxu0
        %v4565 = vadd.f32 0.0, %v4564
        %v4566 = vpop.f32.mrf.mxu0
        %4567 = vmatprep.mubr.f32.mxu0 0.0
        %4568 = vmatmul.mubr.f32.gmra.mxu0 %v3922
        %v4569 = vpop.f32.mrf.mxu0
        %v4570 = vadd.f32 0.0, %v4569
        %v4571 = vpop.f32.mrf.mxu0
        %4572 = vmatprep.mubr.f32.mxu0 0.0
        %4573 = vmatmul.mubr.f32.gmra.mxu0 %v3925
        %v4574 = vpop.f32.mrf.mxu0
        %v4575 = vadd.f32 0.0, %v4574
        %v4576 = vpop.f32.mrf.mxu0
        %4577 = vmatprep.mubr.f32.mxu0 0.0
        %4578 = vmatmul.mubr.f32.gmra.mxu0 %v3928
        %v4579 = vpop.f32.mrf.mxu0
        %v4580 = vadd.f32 0.0, %v4579
        %v4581 = vpop.f32.mrf.mxu0
        %4582 = vmatprep.mubr.f32.mxu0 0.0
        %4583 = vmatmul.mubr.f32.gmra.mxu0 %v3931
        %v4584 = vpop.f32.mrf.mxu0
        %v4585 = vadd.f32 0.0, %v4584
        %v4586 = vpop.f32.mrf.mxu0
        %4587 = vmatprep.mubr.f32.mxu0 0.0
        %4588 = vmatmul.mubr.f32.gmra.mxu0 %v3934
        %v4589 = vpop.f32.mrf.mxu0
        %v4590 = vadd.f32 0.0, %v4589
        %v4591 = vpop.f32.mrf.mxu0
        %4592 = vmatprep.mubr.f32.mxu0 0.0
        %4593 = vmatmul.mubr.f32.gmra.mxu0 %v3937
        %v4594 = vpop.f32.mrf.mxu0
        %v4595 = vadd.f32 0.0, %v4594
        %v4596 = vpop.f32.mrf.mxu0
        %4597 = vmatprep.mubr.f32.mxu0 0.0
        %4598 = vmatmul.mubr.f32.gmra.mxu0 %v3940
        %v4599 = vpop.f32.mrf.mxu0
        %v4600 = vadd.f32 0.0, %v4599
        %v4601 = vpop.f32.mrf.mxu0
        %4602 = vmatprep.mubr.f32.mxu0 0.0
        %4603 = vmatmul.mubr.f32.gmra.mxu0 %v3943
        %v4604 = vpop.f32.mrf.mxu0
        %v4605 = vadd.f32 0.0, %v4604
        %v4606 = vpop.f32.mrf.mxu0
        %4607 = vmatprep.mubr.f32.mxu0 0.0
        %4608 = vmatmul.mubr.f32.gmra.mxu0 %v3946
        %v4609 = vpop.f32.mrf.mxu0
        %v4610 = vadd.f32 0.0, %v4609
        %v4611 = vpop.f32.mrf.mxu0
        %4612 = vmatprep.mubr.f32.mxu0 0.0
        %4613 = vmatmul.mubr.f32.gmra.mxu0 %v3949
        %v4614 = vpop.f32.mrf.mxu0
        %v4615 = vadd.f32 0.0, %v4614
        %v4616 = vpop.f32.mrf.mxu0
        %4617 = vmatprep.mubr.f32.mxu0 0.0
        %4618 = vmatmul.mubr.f32.gmra.mxu0 %v3952
        %v4619 = vpop.f32.mrf.mxu0
        %v4620 = vadd.f32 0.0, %v4619
        %v4621 = vpop.f32.mrf.mxu0
        %4622 = vmatprep.mubr.f32.mxu0 0.0
        %4623 = vmatmul.mubr.f32.gmra.mxu0 %v3955
        %v4624 = vpop.f32.mrf.mxu0
        %v4625 = vadd.f32 0.0, %v4624
        %v4626 = vpop.f32.mrf.mxu0
        %4627 = vmatprep.mubr.f32.mxu0 0.0
        %4628 = vmatmul.mubr.f32.gmra.mxu0 %v3958
        %v4629 = vpop.f32.mrf.mxu0
        %v4630 = vadd.f32 0.0, %v4629
        %v4631 = vpop.f32.mrf.mxu0
        %4632 = vmatprep.mubr.f32.mxu0 0.0
        %4633 = vmatmul.mubr.f32.gmra.mxu0 %v3961
        %v4634 = vpop.f32.mrf.mxu0
        %v4635 = vadd.f32 0.0, %v4634
        %v4636 = vpop.f32.mrf.mxu0
        %4637 = vmatprep.mubr.f32.mxu0 0.0
        %4638 = vmatmul.mubr.f32.gmra.mxu0 %v3964
        %v4639 = vpop.f32.mrf.mxu0
        %v4640 = vadd.f32 0.0, %v4639
        %v4641 = vpop.f32.mrf.mxu0
        %4642 = vmatprep.mubr.f32.mxu0 0.0
        %4643 = vmatmul.mubr.f32.gmra.mxu0 %v3967
        %v4644 = vpop.f32.mrf.mxu0
        %v4645 = vadd.f32 0.0, %v4644
        %v4646 = vpop.f32.mrf.mxu0
        %4647 = vmatprep.mubr.f32.mxu0 0.0
        %4648 = vmatmul.mubr.f32.gmra.mxu0 %v3970
        %v4649 = vpop.f32.mrf.mxu0
        %v4650 = vadd.f32 0.0, %v4649
        %v4651 = vpop.f32.mrf.mxu0
        %4652 = vmatprep.mubr.f32.mxu0 0.0
        %4653 = vmatmul.mubr.f32.gmra.mxu0 %v3973
        %v4654 = vpop.f32.mrf.mxu0
        %v4655 = vadd.f32 0.0, %v4654
        %v4656 = vpop.f32.mrf.mxu0
        %4657 = vmatprep.mubr.f32.mxu0 0.0
        %4658 = vmatmul.mubr.f32.gmra.mxu0 %v3976
        %v4659 = vpop.f32.mrf.mxu0
        %v4660 = vadd.f32 0.0, %v4659
        %v4661 = vpop.f32.mrf.mxu0
        %4662 = vmatprep.mubr.f32.mxu0 0.0
        %4663 = vmatmul.mubr.f32.gmra.mxu0 %v3979
        %v4664 = vpop.f32.mrf.mxu0
        %v4665 = vadd.f32 0.0, %v4664
        %v4666 = vpop.f32.mrf.mxu0
        %4667 = vmatprep.mubr.f32.mxu0 0.0
        %4668 = vmatmul.mubr.f32.gmra.mxu0 %v3982
        %v4669 = vpop.f32.mrf.mxu0
        %v4670 = vadd.f32 0.0, %v4669
        %v4671 = vpop.f32.mrf.mxu0
        %4672 = vmatprep.mubr.f32.mxu0 0.0
        %4673 = vmatmul.mubr.f32.gmra.mxu0 %v3985
        %v4674 = vpop.f32.mrf.mxu0
        %v4675 = vadd.f32 0.0, %v4674
        %v4676 = vpop.f32.mrf.mxu0
        %4677 = vmatprep.mubr.f32.mxu0 0.0
        %4678 = vmatmul.mubr.f32.gmra.mxu0 %v3988
        %v4679 = vpop.f32.mrf.mxu0
        %v4680 = vadd.f32 0.0, %v4679
        %v4681 = vpop.f32.mrf.mxu0
        %4682 = vmatprep.mubr.f32.mxu0 0.0
        %4683 = vmatmul.mubr.f32.gmra.mxu0 %v3991
        %v4684 = vpop.f32.mrf.mxu0
        %v4685 = vadd.f32 0.0, %v4684
        %v4686 = vpop.f32.mrf.mxu0
        %4687 = vmatprep.mubr.f32.mxu0 0.0
        %4688 = vmatmul.mubr.f32.gmra.mxu0 %v3994
        %v4689 = vpop.f32.mrf.mxu0
        %v4690 = vadd.f32 0.0, %v4689
        %v4691 = vpop.f32.mrf.mxu0
        %4692 = vmatprep.mubr.f32.mxu0 0.0
        %4693 = vmatmul.mubr.f32.gmra.mxu0 %v3997
        %v4694 = vpop.f32.mrf.mxu0
        %v4695 = vadd.f32 0.0, %v4694
        %v4696 = vpop.f32.mrf.mxu0
        %4697 = vmatprep.mubr.f32.mxu0 0.0
        %4698 = vmatmul.mubr.f32.gmra.mxu0 %v4000
        %v4699 = vpop.f32.mrf.mxu0
        %v4700 = vadd.f32 0.0, %v4699
        %v4701 = vpop.f32.mrf.mxu0
        %4702 = vmatprep.mubr.f32.mxu0 0.0
        %4703 = vmatmul.mubr.f32.gmra.mxu0 %v4003
        %v4704 = vpop.f32.mrf.mxu0
        %v4705 = vadd.f32 0.0, %v4704
        %v4706 = vpop.f32.mrf.mxu0
        %4707 = vmatprep.mubr.f32.mxu0 0.0
        %4708 = vmatmul.mubr.f32.gmra.mxu0 %v4006
        %v4709 = vpop.f32.mrf.mxu0
        %v4710 = vadd.f32 0.0, %v4709
        %v4711 = vpop.f32.mrf.mxu0
        %4712 = vdwg.mxu0
        %v4713 = vld [vmem:[%s8] sm:$0xff]
        %v4714 = vld [vmem:[%s8 + $0x8] sm:$0x1]
        %s4715 = scalar_lea.vmem %s8, 16
        %v4716 = vld [vmem:[%s4715] sm:$0xff]
        %v4717 = vld [vmem:[%s4715 + $0x8] sm:$0x1]
        %vm4718 = vcmask 72704
        %v4720 = vsel %vm4718, %v4115, 0
        %v4723 = vsel %vm4718, %v4120, 0
        %v4726 = vsel %vm4718, %v4125, 0
        %v4729 = vsel %vm4718, %v4130, 0
        %v4732 = vsel %vm4718, %v4135, 0
        %v4735 = vsel %vm4718, %v4140, 0
        %v4738 = vsel %vm4718, %v4145, 0
        %v4741 = vsel %vm4718, %v4150, 0
        %vm4743 = vcmask 1040384
        %v4745 = vsel %vm4743, %v4717, 0
        %4747 = vmatprep.subr.mxu0 0.0
        %4748 = vmatpush1.msra.mxu0 0.0
        %4749 = vmatprep.subr.mxu0 0.0
        %4750 = vmatpush1.msra.mxu0 0.0
        %4751 = vmatprep.subr.mxu0 0.0
        %4752 = vmatpush1.msra.mxu0 0.0
        %4753 = vmatprep.subr.mxu0 0.0
        %4754 = vmatpush1.msra.mxu0 0.0
        %4755 = vmatprep.subr.mxu0 0.0
        %4756 = vmatpush1.msra.mxu0 0.0
        %4757 = vmatprep.subr.mxu0 0.0
        %4758 = vmatpush1.msra.mxu0 0.0
        %4759 = vmatprep.subr.mxu0 0.0
        %4760 = vmatpush1.msra.mxu0 0.0
        %4761 = vmatprep.subr.mxu0 0.0
        %4762 = vmatpush1.msra.mxu0 0.0
        %4763 = vmatprep.subr.mxu0 0.0
        %4764 = vmatpush1.msra.mxu0 0.0
        %4765 = vmatprep.subr.mxu0 0.0
        %4766 = vmatpush1.msra.mxu0 0.0
        %4767 = vmatprep.subr.mxu0 0.0
        %4768 = vmatpush1.msra.mxu0 0.0
        %4769 = vmatprep.subr.mxu0 0.0
        %4770 = vmatpush1.msra.mxu0 0.0
        %4771 = vmatprep.subr.mxu0 0.0
        %4772 = vmatpush1.msra.mxu0 0.0
        %4773 = vmatprep.subr.mxu0 0.0
        %4774 = vmatpush1.msra.mxu0 0.0
        %4775 = vmatprep.subr.mxu0 0.0
        %4776 = vmatpush1.msra.mxu0 %v4745
        %4777 = vmatprep.subr.mxu0 0.0
        %4778 = vmatpush1.msra.mxu0 %v4716
        %4779 = vmatprep.subr.mxu0 0.0
        %4780 = vmatpush2.msra.mxu0 0.0
        %4781 = vmatprep.subr.mxu0 0.0
        %4782 = vmatpush2.msra.mxu0 0.0
        %4783 = vmatprep.subr.mxu0 0.0
        %4784 = vmatpush2.msra.mxu0 0.0
        %4785 = vmatprep.subr.mxu0 0.0
        %4786 = vmatpush2.msra.mxu0 0.0
        %4787 = vmatprep.subr.mxu0 0.0
        %4788 = vmatpush2.msra.mxu0 0.0
        %4789 = vmatprep.subr.mxu0 0.0
        %4790 = vmatpush2.msra.mxu0 0.0
        %4791 = vmatprep.subr.mxu0 0.0
        %4792 = vmatpush2.msra.mxu0 0.0
        %4793 = vmatprep.subr.mxu0 0.0
        %4794 = vmatpush2.msra.mxu0 0.0
        %4795 = vmatprep.subr.mxu0 0.0
        %4796 = vmatpush2.msra.mxu0 0.0
        %4797 = vmatprep.subr.mxu0 0.0
        %4798 = vmatpush2.msra.mxu0 0.0
        %4799 = vmatprep.subr.mxu0 0.0
        %4800 = vmatpush2.msra.mxu0 0.0
        %4801 = vmatprep.subr.mxu0 0.0
        %4802 = vmatpush2.msra.mxu0 0.0
        %4803 = vmatprep.subr.mxu0 0.0
        %4804 = vmatpush2.msra.mxu0 0.0
        %4805 = vmatprep.subr.mxu0 0.0
        %4806 = vmatpush2.msra.mxu0 0.0
        %4807 = vmatprep.subr.mxu0 0.0
        %4808 = vmatpush2.msra.mxu0 0.0
        %4809 = vmatprep.subr.mxu0 0.0
        %4810 = vmatpush2.msra.mxu0 0.0
        %4811 = vmatprep.mubr.f32.mxu0 0.0
        %4812 = vmatmul.mubr.f32.gmra.mxu0 %v4720
        %v4813 = vpop.f32.mrf.mxu0
        %v4814 = vadd.f32 0.0, %v4813
        %v4815 = vpop.f32.mrf.mxu0
        %4816 = vmatprep.mubr.f32.mxu0 0.0
        %4817 = vmatmul.mubr.f32.gmra.mxu0 %v4723
        %v4818 = vpop.f32.mrf.mxu0
        %v4819 = vadd.f32 0.0, %v4818
        %v4820 = vpop.f32.mrf.mxu0
        %4821 = vmatprep.mubr.f32.mxu0 0.0
        %4822 = vmatmul.mubr.f32.gmra.mxu0 %v4726
        %v4823 = vpop.f32.mrf.mxu0
        %v4824 = vadd.f32 0.0, %v4823
        %v4825 = vpop.f32.mrf.mxu0
        %4826 = vmatprep.mubr.f32.mxu0 0.0
        %4827 = vmatmul.mubr.f32.gmra.mxu0 %v4729
        %v4828 = vpop.f32.mrf.mxu0
        %v4829 = vadd.f32 0.0, %v4828
        %v4830 = vpop.f32.mrf.mxu0
        %4831 = vmatprep.mubr.f32.mxu0 0.0
        %4832 = vmatmul.mubr.f32.gmra.mxu0 %v4732
        %v4833 = vpop.f32.mrf.mxu0
        %v4834 = vadd.f32 0.0, %v4833
        %v4835 = vpop.f32.mrf.mxu0
        %4836 = vmatprep.mubr.f32.mxu0 0.0
        %4837 = vmatmul.mubr.f32.gmra.mxu0 %v4735
        %v4838 = vpop.f32.mrf.mxu0
        %v4839 = vadd.f32 0.0, %v4838
        %v4840 = vpop.f32.mrf.mxu0
        %4841 = vmatprep.mubr.f32.mxu0 0.0
        %4842 = vmatmul.mubr.f32.gmra.mxu0 %v4738
        %v4843 = vpop.f32.mrf.mxu0
        %v4844 = vadd.f32 0.0, %v4843
        %v4845 = vpop.f32.mrf.mxu0
        %4846 = vmatprep.mubr.f32.mxu0 0.0
        %4847 = vmatmul.mubr.f32.gmra.mxu0 %v4741
        %v4848 = vpop.f32.mrf.mxu0
        %v4849 = vadd.f32 0.0, %v4848
        %v4850 = vpop.f32.mrf.mxu0
        %4851 = vdwg.mxu0
        %v4853 = vsel %vm4718, %v4075, 0
        %v4856 = vsel %vm4718, %v4080, 0
        %v4859 = vsel %vm4718, %v4085, 0
        %v4862 = vsel %vm4718, %v4090, 0
        %v4865 = vsel %vm4718, %v4095, 0
        %v4868 = vsel %vm4718, %v4100, 0
        %v4871 = vsel %vm4718, %v4105, 0
        %v4874 = vsel %vm4718, %v4110, 0
        %v4877 = vsel %vm4743, %v4714, 0
        %4879 = vmatprep.subr.mxu0 0.0
        %4880 = vmatpush1.msra.mxu0 0.0
        %4881 = vmatprep.subr.mxu0 0.0
        %4882 = vmatpush1.msra.mxu0 0.0
        %4883 = vmatprep.subr.mxu0 0.0
        %4884 = vmatpush1.msra.mxu0 0.0
        %4885 = vmatprep.subr.mxu0 0.0
        %4886 = vmatpush1.msra.mxu0 0.0
        %4887 = vmatprep.subr.mxu0 0.0
        %4888 = vmatpush1.msra.mxu0 0.0
        %4889 = vmatprep.subr.mxu0 0.0
        %4890 = vmatpush1.msra.mxu0 0.0
        %4891 = vmatprep.subr.mxu0 0.0
        %4892 = vmatpush1.msra.mxu0 0.0
        %4893 = vmatprep.subr.mxu0 0.0
        %4894 = vmatpush1.msra.mxu0 0.0
        %4895 = vmatprep.subr.mxu0 0.0
        %4896 = vmatpush1.msra.mxu0 0.0
        %4897 = vmatprep.subr.mxu0 0.0
        %4898 = vmatpush1.msra.mxu0 0.0
        %4899 = vmatprep.subr.mxu0 0.0
        %4900 = vmatpush1.msra.mxu0 0.0
        %4901 = vmatprep.subr.mxu0 0.0
        %4902 = vmatpush1.msra.mxu0 0.0
        %4903 = vmatprep.subr.mxu0 0.0
        %4904 = vmatpush1.msra.mxu0 0.0
        %4905 = vmatprep.subr.mxu0 0.0
        %4906 = vmatpush1.msra.mxu0 0.0
        %4907 = vmatprep.subr.mxu0 0.0
        %4908 = vmatpush1.msra.mxu0 %v4877
        %4909 = vmatprep.subr.mxu0 0.0
        %4910 = vmatpush1.msra.mxu0 %v4713
        %4911 = vmatprep.subr.mxu0 0.0
        %4912 = vmatpush2.msra.mxu0 0.0
        %4913 = vmatprep.subr.mxu0 0.0
        %4914 = vmatpush2.msra.mxu0 0.0
        %4915 = vmatprep.subr.mxu0 0.0
        %4916 = vmatpush2.msra.mxu0 0.0
        %4917 = vmatprep.subr.mxu0 0.0
        %4918 = vmatpush2.msra.mxu0 0.0
        %4919 = vmatprep.subr.mxu0 0.0
        %4920 = vmatpush2.msra.mxu0 0.0
        %4921 = vmatprep.subr.mxu0 0.0
        %4922 = vmatpush2.msra.mxu0 0.0
        %4923 = vmatprep.subr.mxu0 0.0
        %4924 = vmatpush2.msra.mxu0 0.0
        %4925 = vmatprep.subr.mxu0 0.0
        %4926 = vmatpush2.msra.mxu0 0.0
        %4927 = vmatprep.subr.mxu0 0.0
        %4928 = vmatpush2.msra.mxu0 0.0
        %4929 = vmatprep.subr.mxu0 0.0
        %4930 = vmatpush2.msra.mxu0 0.0
        %4931 = vmatprep.subr.mxu0 0.0
        %4932 = vmatpush2.msra.mxu0 0.0
        %4933 = vmatprep.subr.mxu0 0.0
        %4934 = vmatpush2.msra.mxu0 0.0
        %4935 = vmatprep.subr.mxu0 0.0
        %4936 = vmatpush2.msra.mxu0 0.0
        %4937 = vmatprep.subr.mxu0 0.0
        %4938 = vmatpush2.msra.mxu0 0.0
        %4939 = vmatprep.subr.mxu0 0.0
        %4940 = vmatpush2.msra.mxu0 0.0
        %4941 = vmatprep.subr.mxu0 0.0
        %4942 = vmatpush2.msra.mxu0 0.0
        %4943 = vmatprep.mubr.f32.mxu0 0.0
        %4944 = vmatmul.mubr.f32.gmra.mxu0 %v4853
        %v4945 = vpop.f32.mrf.mxu0
        %v4946 = vadd.f32 %v4814, %v4945
        %v4947 = vpop.f32.mrf.mxu0
        %4948 = vmatprep.mubr.f32.mxu0 0.0
        %4949 = vmatmul.mubr.f32.gmra.mxu0 %v4856
        %v4950 = vpop.f32.mrf.mxu0
        %v4951 = vadd.f32 %v4819, %v4950
        %v4952 = vpop.f32.mrf.mxu0
        %4953 = vmatprep.mubr.f32.mxu0 0.0
        %4954 = vmatmul.mubr.f32.gmra.mxu0 %v4859
        %v4955 = vpop.f32.mrf.mxu0
        %v4956 = vadd.f32 %v4824, %v4955
        %v4957 = vpop.f32.mrf.mxu0
        %4958 = vmatprep.mubr.f32.mxu0 0.0
        %4959 = vmatmul.mubr.f32.gmra.mxu0 %v4862
        %v4960 = vpop.f32.mrf.mxu0
        %v4961 = vadd.f32 %v4829, %v4960
        %v4962 = vpop.f32.mrf.mxu0
        %4963 = vmatprep.mubr.f32.mxu0 0.0
        %4964 = vmatmul.mubr.f32.gmra.mxu0 %v4865
        %v4965 = vpop.f32.mrf.mxu0
        %v4966 = vadd.f32 %v4834, %v4965
        %v4967 = vpop.f32.mrf.mxu0
        %4968 = vmatprep.mubr.f32.mxu0 0.0
        %4969 = vmatmul.mubr.f32.gmra.mxu0 %v4868
        %v4970 = vpop.f32.mrf.mxu0
        %v4971 = vadd.f32 %v4839, %v4970
        %v4972 = vpop.f32.mrf.mxu0
        %4973 = vmatprep.mubr.f32.mxu0 0.0
        %4974 = vmatmul.mubr.f32.gmra.mxu0 %v4871
        %v4975 = vpop.f32.mrf.mxu0
        %v4976 = vadd.f32 %v4844, %v4975
        %v4977 = vpop.f32.mrf.mxu0
        %4978 = vmatprep.mubr.f32.mxu0 0.0
        %4979 = vmatmul.mubr.f32.gmra.mxu0 %v4874
        %v4980 = vpop.f32.mrf.mxu0
        %v4981 = vadd.f32 %v4849, %v4980
        %v4982 = vpop.f32.mrf.mxu0
        %4983 = vdwg.mxu0
        %s4984 = scalar_lea.vmem %s8, 32
        %v4985 = vld [vmem:[%s4984] sm:$0xff]
        %v4986 = vld [vmem:[%s4984 + $0x8] sm:$0x1]
        %v4988 = vsel %vm4718, %v4155, 0
        %v4991 = vsel %vm4718, %v4160, 0
        %v4994 = vsel %vm4718, %v4165, 0
        %v4997 = vsel %vm4718, %v4170, 0
        %v5000 = vsel %vm4718, %v4175, 0
        %v5003 = vsel %vm4718, %v4180, 0
        %v5006 = vsel %vm4718, %v4185, 0
        %v5009 = vsel %vm4718, %v4190, 0
        %v5012 = vsel %vm4743, %v4986, 0
        %5014 = vmatprep.subr.mxu0 0.0
        %5015 = vmatpush1.msra.mxu0 0.0
        %5016 = vmatprep.subr.mxu0 0.0
        %5017 = vmatpush1.msra.mxu0 0.0
        %5018 = vmatprep.subr.mxu0 0.0
        %5019 = vmatpush1.msra.mxu0 0.0
        %5020 = vmatprep.subr.mxu0 0.0
        %5021 = vmatpush1.msra.mxu0 0.0
        %5022 = vmatprep.subr.mxu0 0.0
        %5023 = vmatpush1.msra.mxu0 0.0
        %5024 = vmatprep.subr.mxu0 0.0
        %5025 = vmatpush1.msra.mxu0 0.0
        %5026 = vmatprep.subr.mxu0 0.0
        %5027 = vmatpush1.msra.mxu0 0.0
        %5028 = vmatprep.subr.mxu0 0.0
        %5029 = vmatpush1.msra.mxu0 0.0
        %5030 = vmatprep.subr.mxu0 0.0
        %5031 = vmatpush1.msra.mxu0 0.0
        %5032 = vmatprep.subr.mxu0 0.0
        %5033 = vmatpush1.msra.mxu0 0.0
        %5034 = vmatprep.subr.mxu0 0.0
        %5035 = vmatpush1.msra.mxu0 0.0
        %5036 = vmatprep.subr.mxu0 0.0
        %5037 = vmatpush1.msra.mxu0 0.0
        %5038 = vmatprep.subr.mxu0 0.0
        %5039 = vmatpush1.msra.mxu0 0.0
        %5040 = vmatprep.subr.mxu0 0.0
        %5041 = vmatpush1.msra.mxu0 0.0
        %5042 = vmatprep.subr.mxu0 0.0
        %5043 = vmatpush1.msra.mxu0 %v5012
        %5044 = vmatprep.subr.mxu0 0.0
        %5045 = vmatpush1.msra.mxu0 %v4985
        %5046 = vmatprep.subr.mxu0 0.0
        %5047 = vmatpush2.msra.mxu0 0.0
        %5048 = vmatprep.subr.mxu0 0.0
        %5049 = vmatpush2.msra.mxu0 0.0
        %5050 = vmatprep.subr.mxu0 0.0
        %5051 = vmatpush2.msra.mxu0 0.0
        %5052 = vmatprep.subr.mxu0 0.0
        %5053 = vmatpush2.msra.mxu0 0.0
        %5054 = vmatprep.subr.mxu0 0.0
        %5055 = vmatpush2.msra.mxu0 0.0
        %5056 = vmatprep.subr.mxu0 0.0
        %5057 = vmatpush2.msra.mxu0 0.0
        %5058 = vmatprep.subr.mxu0 0.0
        %5059 = vmatpush2.msra.mxu0 0.0
        %5060 = vmatprep.subr.mxu0 0.0
        %5061 = vmatpush2.msra.mxu0 0.0
        %5062 = vmatprep.subr.mxu0 0.0
        %5063 = vmatpush2.msra.mxu0 0.0
        %5064 = vmatprep.subr.mxu0 0.0
        %5065 = vmatpush2.msra.mxu0 0.0
        %5066 = vmatprep.subr.mxu0 0.0
        %5067 = vmatpush2.msra.mxu0 0.0
        %5068 = vmatprep.subr.mxu0 0.0
        %5069 = vmatpush2.msra.mxu0 0.0
        %5070 = vmatprep.subr.mxu0 0.0
        %5071 = vmatpush2.msra.mxu0 0.0
        %5072 = vmatprep.subr.mxu0 0.0
        %5073 = vmatpush2.msra.mxu0 0.0
        %5074 = vmatprep.subr.mxu0 0.0
        %5075 = vmatpush2.msra.mxu0 0.0
        %5076 = vmatprep.subr.mxu0 0.0
        %5077 = vmatpush2.msra.mxu0 0.0
        %5078 = vmatprep.mubr.f32.mxu0 0.0
        %5079 = vmatmul.mubr.f32.gmra.mxu0 %v4988
        %v5080 = vpop.f32.mrf.mxu0
        %v5081 = vadd.f32 0.0, %v5080
        %v5082 = vpop.f32.mrf.mxu0
        %5083 = vmatprep.mubr.f32.mxu0 0.0
        %5084 = vmatmul.mubr.f32.gmra.mxu0 %v4991
        %v5085 = vpop.f32.mrf.mxu0
        %v5086 = vadd.f32 0.0, %v5085
        %v5087 = vpop.f32.mrf.mxu0
        %5088 = vmatprep.mubr.f32.mxu0 0.0
        %5089 = vmatmul.mubr.f32.gmra.mxu0 %v4994
        %v5090 = vpop.f32.mrf.mxu0
        %v5091 = vadd.f32 0.0, %v5090
        %v5092 = vpop.f32.mrf.mxu0
        %5093 = vmatprep.mubr.f32.mxu0 0.0
        %5094 = vmatmul.mubr.f32.gmra.mxu0 %v4997
        %v5095 = vpop.f32.mrf.mxu0
        %v5096 = vadd.f32 0.0, %v5095
        %v5097 = vpop.f32.mrf.mxu0
        %5098 = vmatprep.mubr.f32.mxu0 0.0
        %5099 = vmatmul.mubr.f32.gmra.mxu0 %v5000
        %v5100 = vpop.f32.mrf.mxu0
        %v5101 = vadd.f32 0.0, %v5100
        %v5102 = vpop.f32.mrf.mxu0
        %5103 = vmatprep.mubr.f32.mxu0 0.0
        %5104 = vmatmul.mubr.f32.gmra.mxu0 %v5003
        %v5105 = vpop.f32.mrf.mxu0
        %v5106 = vadd.f32 0.0, %v5105
        %v5107 = vpop.f32.mrf.mxu0
        %5108 = vmatprep.mubr.f32.mxu0 0.0
        %5109 = vmatmul.mubr.f32.gmra.mxu0 %v5006
        %v5110 = vpop.f32.mrf.mxu0
        %v5111 = vadd.f32 0.0, %v5110
        %v5112 = vpop.f32.mrf.mxu0
        %5113 = vmatprep.mubr.f32.mxu0 0.0
        %5114 = vmatmul.mubr.f32.gmra.mxu0 %v5009
        %v5115 = vpop.f32.mrf.mxu0
        %v5116 = vadd.f32 0.0, %v5115
        %v5117 = vpop.f32.mrf.mxu0
        %5118 = vdwg.mxu0
        %v5119 = vadd.f32 %v4946, %v5081
        %v5120 = vadd.f32 %v4951, %v5086
        %v5121 = vadd.f32 %v4956, %v5091
        %v5122 = vadd.f32 %v4961, %v5096
        %v5123 = vadd.f32 %v4966, %v5101
        %v5124 = vadd.f32 %v4971, %v5106
        %v5125 = vadd.f32 %v4976, %v5111
        %v5126 = vadd.f32 %v4981, %v5116
        %s5127 = scalar_lea.vmem %s8, 48
        %v5128 = vld [vmem:[%s5127] sm:$0xff]
        %v5129 = vld [vmem:[%s5127 + $0x8] sm:$0x1]
        %v5131 = vsel %vm4718, %v4195, 0
        %v5134 = vsel %vm4718, %v4200, 0
        %v5137 = vsel %vm4718, %v4205, 0
        %v5140 = vsel %vm4718, %v4210, 0
        %v5143 = vsel %vm4718, %v4215, 0
        %v5146 = vsel %vm4718, %v4220, 0
        %v5149 = vsel %vm4718, %v4225, 0
        %v5152 = vsel %vm4718, %v4230, 0
        %v5155 = vsel %vm4743, %v5129, 0
        %5157 = vmatprep.subr.mxu0 0.0
        %5158 = vmatpush1.msra.mxu0 0.0
        %5159 = vmatprep.subr.mxu0 0.0
        %5160 = vmatpush1.msra.mxu0 0.0
        %5161 = vmatprep.subr.mxu0 0.0
        %5162 = vmatpush1.msra.mxu0 0.0
        %5163 = vmatprep.subr.mxu0 0.0
        %5164 = vmatpush1.msra.mxu0 0.0
        %5165 = vmatprep.subr.mxu0 0.0
        %5166 = vmatpush1.msra.mxu0 0.0
        %5167 = vmatprep.subr.mxu0 0.0
        %5168 = vmatpush1.msra.mxu0 0.0
        %5169 = vmatprep.subr.mxu0 0.0
        %5170 = vmatpush1.msra.mxu0 0.0
        %5171 = vmatprep.subr.mxu0 0.0
        %5172 = vmatpush1.msra.mxu0 0.0
        %5173 = vmatprep.subr.mxu0 0.0
        %5174 = vmatpush1.msra.mxu0 0.0
        %5175 = vmatprep.subr.mxu0 0.0
        %5176 = vmatpush1.msra.mxu0 0.0
        %5177 = vmatprep.subr.mxu0 0.0
        %5178 = vmatpush1.msra.mxu0 0.0
        %5179 = vmatprep.subr.mxu0 0.0
        %5180 = vmatpush1.msra.mxu0 0.0
        %5181 = vmatprep.subr.mxu0 0.0
        %5182 = vmatpush1.msra.mxu0 0.0
        %5183 = vmatprep.subr.mxu0 0.0
        %5184 = vmatpush1.msra.mxu0 0.0
        %5185 = vmatprep.subr.mxu0 0.0
        %5186 = vmatpush1.msra.mxu0 %v5155
        %5187 = vmatprep.subr.mxu0 0.0
        %5188 = vmatpush1.msra.mxu0 %v5128
        %5189 = vmatprep.subr.mxu0 0.0
        %5190 = vmatpush2.msra.mxu0 0.0
        %5191 = vmatprep.subr.mxu0 0.0
        %5192 = vmatpush2.msra.mxu0 0.0
        %5193 = vmatprep.subr.mxu0 0.0
        %5194 = vmatpush2.msra.mxu0 0.0
        %5195 = vmatprep.subr.mxu0 0.0
        %5196 = vmatpush2.msra.mxu0 0.0
        %5197 = vmatprep.subr.mxu0 0.0
        %5198 = vmatpush2.msra.mxu0 0.0
        %5199 = vmatprep.subr.mxu0 0.0
        %5200 = vmatpush2.msra.mxu0 0.0
        %5201 = vmatprep.subr.mxu0 0.0
        %5202 = vmatpush2.msra.mxu0 0.0
        %5203 = vmatprep.subr.mxu0 0.0
        %5204 = vmatpush2.msra.mxu0 0.0
        %5205 = vmatprep.subr.mxu0 0.0
        %5206 = vmatpush2.msra.mxu0 0.0
        %5207 = vmatprep.subr.mxu0 0.0
        %5208 = vmatpush2.msra.mxu0 0.0
        %5209 = vmatprep.subr.mxu0 0.0
        %5210 = vmatpush2.msra.mxu0 0.0
        %5211 = vmatprep.subr.mxu0 0.0
        %5212 = vmatpush2.msra.mxu0 0.0
        %5213 = vmatprep.subr.mxu0 0.0
        %5214 = vmatpush2.msra.mxu0 0.0
        %5215 = vmatprep.subr.mxu0 0.0
        %5216 = vmatpush2.msra.mxu0 0.0
        %5217 = vmatprep.subr.mxu0 0.0
        %5218 = vmatpush2.msra.mxu0 0.0
        %5219 = vmatprep.subr.mxu0 0.0
        %5220 = vmatpush2.msra.mxu0 0.0
        %5221 = vmatprep.mubr.f32.mxu0 0.0
        %5222 = vmatmul.mubr.f32.gmra.mxu0 %v5131
        %v5223 = vpop.f32.mrf.mxu0
        %v5224 = vadd.f32 0.0, %v5223
        %v5225 = vpop.f32.mrf.mxu0
        %5226 = vmatprep.mubr.f32.mxu0 0.0
        %5227 = vmatmul.mubr.f32.gmra.mxu0 %v5134
        %v5228 = vpop.f32.mrf.mxu0
        %v5229 = vadd.f32 0.0, %v5228
        %v5230 = vpop.f32.mrf.mxu0
        %5231 = vmatprep.mubr.f32.mxu0 0.0
        %5232 = vmatmul.mubr.f32.gmra.mxu0 %v5137
        %v5233 = vpop.f32.mrf.mxu0
        %v5234 = vadd.f32 0.0, %v5233
        %v5235 = vpop.f32.mrf.mxu0
        %5236 = vmatprep.mubr.f32.mxu0 0.0
        %5237 = vmatmul.mubr.f32.gmra.mxu0 %v5140
        %v5238 = vpop.f32.mrf.mxu0
        %v5239 = vadd.f32 0.0, %v5238
        %v5240 = vpop.f32.mrf.mxu0
        %5241 = vmatprep.mubr.f32.mxu0 0.0
        %5242 = vmatmul.mubr.f32.gmra.mxu0 %v5143
        %v5243 = vpop.f32.mrf.mxu0
        %v5244 = vadd.f32 0.0, %v5243
        %v5245 = vpop.f32.mrf.mxu0
        %5246 = vmatprep.mubr.f32.mxu0 0.0
        %5247 = vmatmul.mubr.f32.gmra.mxu0 %v5146
        %v5248 = vpop.f32.mrf.mxu0
        %v5249 = vadd.f32 0.0, %v5248
        %v5250 = vpop.f32.mrf.mxu0
        %5251 = vmatprep.mubr.f32.mxu0 0.0
        %5252 = vmatmul.mubr.f32.gmra.mxu0 %v5149
        %v5253 = vpop.f32.mrf.mxu0
        %v5254 = vadd.f32 0.0, %v5253
        %v5255 = vpop.f32.mrf.mxu0
        %5256 = vmatprep.mubr.f32.mxu0 0.0
        %5257 = vmatmul.mubr.f32.gmra.mxu0 %v5152
        %v5258 = vpop.f32.mrf.mxu0
        %v5259 = vadd.f32 0.0, %v5258
        %v5260 = vpop.f32.mrf.mxu0
        %5261 = vdwg.mxu0
        %v5262 = vadd.f32 %v5119, %v5224
        %v5263 = vadd.f32 %v5120, %v5229
        %v5264 = vadd.f32 %v5121, %v5234
        %v5265 = vadd.f32 %v5122, %v5239
        %v5266 = vadd.f32 %v5123, %v5244
        %v5267 = vadd.f32 %v5124, %v5249
        %v5268 = vadd.f32 %v5125, %v5254
        %v5269 = vadd.f32 %v5126, %v5259
        %s5270 = scalar_lea.vmem %s8, 64
        %v5271 = vld [vmem:[%s5270] sm:$0xff]
        %v5272 = vld [vmem:[%s5270 + $0x8] sm:$0x1]
        %v5274 = vsel %vm4718, %v4235, 0
        %v5277 = vsel %vm4718, %v4240, 0
        %v5280 = vsel %vm4718, %v4245, 0
        %v5283 = vsel %vm4718, %v4250, 0
        %v5286 = vsel %vm4718, %v4255, 0
        %v5289 = vsel %vm4718, %v4260, 0
        %v5292 = vsel %vm4718, %v4265, 0
        %v5295 = vsel %vm4718, %v4270, 0
        %v5298 = vsel %vm4743, %v5272, 0
        %5300 = vmatprep.subr.mxu0 0.0
        %5301 = vmatpush1.msra.mxu0 0.0
        %5302 = vmatprep.subr.mxu0 0.0
        %5303 = vmatpush1.msra.mxu0 0.0
        %5304 = vmatprep.subr.mxu0 0.0
        %5305 = vmatpush1.msra.mxu0 0.0
        %5306 = vmatprep.subr.mxu0 0.0
        %5307 = vmatpush1.msra.mxu0 0.0
        %5308 = vmatprep.subr.mxu0 0.0
        %5309 = vmatpush1.msra.mxu0 0.0
        %5310 = vmatprep.subr.mxu0 0.0
        %5311 = vmatpush1.msra.mxu0 0.0
        %5312 = vmatprep.subr.mxu0 0.0
        %5313 = vmatpush1.msra.mxu0 0.0
        %5314 = vmatprep.subr.mxu0 0.0
        %5315 = vmatpush1.msra.mxu0 0.0
        %5316 = vmatprep.subr.mxu0 0.0
        %5317 = vmatpush1.msra.mxu0 0.0
        %5318 = vmatprep.subr.mxu0 0.0
        %5319 = vmatpush1.msra.mxu0 0.0
        %5320 = vmatprep.subr.mxu0 0.0
        %5321 = vmatpush1.msra.mxu0 0.0
        %5322 = vmatprep.subr.mxu0 0.0
        %5323 = vmatpush1.msra.mxu0 0.0
        %5324 = vmatprep.subr.mxu0 0.0
        %5325 = vmatpush1.msra.mxu0 0.0
        %5326 = vmatprep.subr.mxu0 0.0
        %5327 = vmatpush1.msra.mxu0 0.0
        %5328 = vmatprep.subr.mxu0 0.0
        %5329 = vmatpush1.msra.mxu0 %v5298
        %5330 = vmatprep.subr.mxu0 0.0
        %5331 = vmatpush1.msra.mxu0 %v5271
        %5332 = vmatprep.subr.mxu0 0.0
        %5333 = vmatpush2.msra.mxu0 0.0
        %5334 = vmatprep.subr.mxu0 0.0
        %5335 = vmatpush2.msra.mxu0 0.0
        %5336 = vmatprep.subr.mxu0 0.0
        %5337 = vmatpush2.msra.mxu0 0.0
        %5338 = vmatprep.subr.mxu0 0.0
        %5339 = vmatpush2.msra.mxu0 0.0
        %5340 = vmatprep.subr.mxu0 0.0
        %5341 = vmatpush2.msra.mxu0 0.0
        %5342 = vmatprep.subr.mxu0 0.0
        %5343 = vmatpush2.msra.mxu0 0.0
        %5344 = vmatprep.subr.mxu0 0.0
        %5345 = vmatpush2.msra.mxu0 0.0
        %5346 = vmatprep.subr.mxu0 0.0
        %5347 = vmatpush2.msra.mxu0 0.0
        %5348 = vmatprep.subr.mxu0 0.0
        %5349 = vmatpush2.msra.mxu0 0.0
        %5350 = vmatprep.subr.mxu0 0.0
        %5351 = vmatpush2.msra.mxu0 0.0
        %5352 = vmatprep.subr.mxu0 0.0
        %5353 = vmatpush2.msra.mxu0 0.0
        %5354 = vmatprep.subr.mxu0 0.0
        %5355 = vmatpush2.msra.mxu0 0.0
        %5356 = vmatprep.subr.mxu0 0.0
        %5357 = vmatpush2.msra.mxu0 0.0
        %5358 = vmatprep.subr.mxu0 0.0
        %5359 = vmatpush2.msra.mxu0 0.0
        %5360 = vmatprep.subr.mxu0 0.0
        %5361 = vmatpush2.msra.mxu0 0.0
        %5362 = vmatprep.subr.mxu0 0.0
        %5363 = vmatpush2.msra.mxu0 0.0
        %5364 = vmatprep.mubr.f32.mxu0 0.0
        %5365 = vmatmul.mubr.f32.gmra.mxu0 %v5274
        %v5366 = vpop.f32.mrf.mxu0
        %v5367 = vadd.f32 0.0, %v5366
        %v5368 = vpop.f32.mrf.mxu0
        %5369 = vmatprep.mubr.f32.mxu0 0.0
        %5370 = vmatmul.mubr.f32.gmra.mxu0 %v5277
        %v5371 = vpop.f32.mrf.mxu0
        %v5372 = vadd.f32 0.0, %v5371
        %v5373 = vpop.f32.mrf.mxu0
        %5374 = vmatprep.mubr.f32.mxu0 0.0
        %5375 = vmatmul.mubr.f32.gmra.mxu0 %v5280
        %v5376 = vpop.f32.mrf.mxu0
        %v5377 = vadd.f32 0.0, %v5376
        %v5378 = vpop.f32.mrf.mxu0
        %5379 = vmatprep.mubr.f32.mxu0 0.0
        %5380 = vmatmul.mubr.f32.gmra.mxu0 %v5283
        %v5381 = vpop.f32.mrf.mxu0
        %v5382 = vadd.f32 0.0, %v5381
        %v5383 = vpop.f32.mrf.mxu0
        %5384 = vmatprep.mubr.f32.mxu0 0.0
        %5385 = vmatmul.mubr.f32.gmra.mxu0 %v5286
        %v5386 = vpop.f32.mrf.mxu0
        %v5387 = vadd.f32 0.0, %v5386
        %v5388 = vpop.f32.mrf.mxu0
        %5389 = vmatprep.mubr.f32.mxu0 0.0
        %5390 = vmatmul.mubr.f32.gmra.mxu0 %v5289
        %v5391 = vpop.f32.mrf.mxu0
        %v5392 = vadd.f32 0.0, %v5391
        %v5393 = vpop.f32.mrf.mxu0
        %5394 = vmatprep.mubr.f32.mxu0 0.0
        %5395 = vmatmul.mubr.f32.gmra.mxu0 %v5292
        %v5396 = vpop.f32.mrf.mxu0
        %v5397 = vadd.f32 0.0, %v5396
        %v5398 = vpop.f32.mrf.mxu0
        %5399 = vmatprep.mubr.f32.mxu0 0.0
        %5400 = vmatmul.mubr.f32.gmra.mxu0 %v5295
        %v5401 = vpop.f32.mrf.mxu0
        %v5402 = vadd.f32 0.0, %v5401
        %v5403 = vpop.f32.mrf.mxu0
        %5404 = vdwg.mxu0
        %v5405 = vadd.f32 %v5262, %v5367
        %v5406 = vadd.f32 %v5263, %v5372
        %v5407 = vadd.f32 %v5264, %v5377
        %v5408 = vadd.f32 %v5265, %v5382
        %v5409 = vadd.f32 %v5266, %v5387
        %v5410 = vadd.f32 %v5267, %v5392
        %v5411 = vadd.f32 %v5268, %v5397
        %v5412 = vadd.f32 %v5269, %v5402
        %s5413 = scalar_lea.vmem %s8, 80
        %v5414 = vld [vmem:[%s5413] sm:$0xff]
        %v5415 = vld [vmem:[%s5413 + $0x8] sm:$0x1]
        %v5417 = vsel %vm4718, %v4275, 0
        %v5420 = vsel %vm4718, %v4280, 0
        %v5423 = vsel %vm4718, %v4285, 0
        %v5426 = vsel %vm4718, %v4290, 0
        %v5429 = vsel %vm4718, %v4295, 0
        %v5432 = vsel %vm4718, %v4300, 0
        %v5435 = vsel %vm4718, %v4305, 0
        %v5438 = vsel %vm4718, %v4310, 0
        %v5441 = vsel %vm4743, %v5415, 0
        %5443 = vmatprep.subr.mxu0 0.0
        %5444 = vmatpush1.msra.mxu0 0.0
        %5445 = vmatprep.subr.mxu0 0.0
        %5446 = vmatpush1.msra.mxu0 0.0
        %5447 = vmatprep.subr.mxu0 0.0
        %5448 = vmatpush1.msra.mxu0 0.0
        %5449 = vmatprep.subr.mxu0 0.0
        %5450 = vmatpush1.msra.mxu0 0.0
        %5451 = vmatprep.subr.mxu0 0.0
        %5452 = vmatpush1.msra.mxu0 0.0
        %5453 = vmatprep.subr.mxu0 0.0
        %5454 = vmatpush1.msra.mxu0 0.0
        %5455 = vmatprep.subr.mxu0 0.0
        %5456 = vmatpush1.msra.mxu0 0.0
        %5457 = vmatprep.subr.mxu0 0.0
        %5458 = vmatpush1.msra.mxu0 0.0
        %5459 = vmatprep.subr.mxu0 0.0
        %5460 = vmatpush1.msra.mxu0 0.0
        %5461 = vmatprep.subr.mxu0 0.0
        %5462 = vmatpush1.msra.mxu0 0.0
        %5463 = vmatprep.subr.mxu0 0.0
        %5464 = vmatpush1.msra.mxu0 0.0
        %5465 = vmatprep.subr.mxu0 0.0
        %5466 = vmatpush1.msra.mxu0 0.0
        %5467 = vmatprep.subr.mxu0 0.0
        %5468 = vmatpush1.msra.mxu0 0.0
        %5469 = vmatprep.subr.mxu0 0.0
        %5470 = vmatpush1.msra.mxu0 0.0
        %5471 = vmatprep.subr.mxu0 0.0
        %5472 = vmatpush1.msra.mxu0 %v5441
        %5473 = vmatprep.subr.mxu0 0.0
        %5474 = vmatpush1.msra.mxu0 %v5414
        %5475 = vmatprep.subr.mxu0 0.0
        %5476 = vmatpush2.msra.mxu0 0.0
        %5477 = vmatprep.subr.mxu0 0.0
        %5478 = vmatpush2.msra.mxu0 0.0
        %5479 = vmatprep.subr.mxu0 0.0
        %5480 = vmatpush2.msra.mxu0 0.0
        %5481 = vmatprep.subr.mxu0 0.0
        %5482 = vmatpush2.msra.mxu0 0.0
        %5483 = vmatprep.subr.mxu0 0.0
        %5484 = vmatpush2.msra.mxu0 0.0
        %5485 = vmatprep.subr.mxu0 0.0
        %5486 = vmatpush2.msra.mxu0 0.0
        %5487 = vmatprep.subr.mxu0 0.0
        %5488 = vmatpush2.msra.mxu0 0.0
        %5489 = vmatprep.subr.mxu0 0.0
        %5490 = vmatpush2.msra.mxu0 0.0
        %5491 = vmatprep.subr.mxu0 0.0
        %5492 = vmatpush2.msra.mxu0 0.0
        %5493 = vmatprep.subr.mxu0 0.0
        %5494 = vmatpush2.msra.mxu0 0.0
        %5495 = vmatprep.subr.mxu0 0.0
        %5496 = vmatpush2.msra.mxu0 0.0
        %5497 = vmatprep.subr.mxu0 0.0
        %5498 = vmatpush2.msra.mxu0 0.0
        %5499 = vmatprep.subr.mxu0 0.0
        %5500 = vmatpush2.msra.mxu0 0.0
        %5501 = vmatprep.subr.mxu0 0.0
        %5502 = vmatpush2.msra.mxu0 0.0
        %5503 = vmatprep.subr.mxu0 0.0
        %5504 = vmatpush2.msra.mxu0 0.0
        %5505 = vmatprep.subr.mxu0 0.0
        %5506 = vmatpush2.msra.mxu0 0.0
        %5507 = vmatprep.mubr.f32.mxu0 0.0
        %5508 = vmatmul.mubr.f32.gmra.mxu0 %v5417
        %v5509 = vpop.f32.mrf.mxu0
        %v5510 = vadd.f32 0.0, %v5509
        %v5511 = vpop.f32.mrf.mxu0
        %5512 = vmatprep.mubr.f32.mxu0 0.0
        %5513 = vmatmul.mubr.f32.gmra.mxu0 %v5420
        %v5514 = vpop.f32.mrf.mxu0
        %v5515 = vadd.f32 0.0, %v5514
        %v5516 = vpop.f32.mrf.mxu0
        %5517 = vmatprep.mubr.f32.mxu0 0.0
        %5518 = vmatmul.mubr.f32.gmra.mxu0 %v5423
        %v5519 = vpop.f32.mrf.mxu0
        %v5520 = vadd.f32 0.0, %v5519
        %v5521 = vpop.f32.mrf.mxu0
        %5522 = vmatprep.mubr.f32.mxu0 0.0
        %5523 = vmatmul.mubr.f32.gmra.mxu0 %v5426
        %v5524 = vpop.f32.mrf.mxu0
        %v5525 = vadd.f32 0.0, %v5524
        %v5526 = vpop.f32.mrf.mxu0
        %5527 = vmatprep.mubr.f32.mxu0 0.0
        %5528 = vmatmul.mubr.f32.gmra.mxu0 %v5429
        %v5529 = vpop.f32.mrf.mxu0
        %v5530 = vadd.f32 0.0, %v5529
        %v5531 = vpop.f32.mrf.mxu0
        %5532 = vmatprep.mubr.f32.mxu0 0.0
        %5533 = vmatmul.mubr.f32.gmra.mxu0 %v5432
        %v5534 = vpop.f32.mrf.mxu0
        %v5535 = vadd.f32 0.0, %v5534
        %v5536 = vpop.f32.mrf.mxu0
        %5537 = vmatprep.mubr.f32.mxu0 0.0
        %5538 = vmatmul.mubr.f32.gmra.mxu0 %v5435
        %v5539 = vpop.f32.mrf.mxu0
        %v5540 = vadd.f32 0.0, %v5539
        %v5541 = vpop.f32.mrf.mxu0
        %5542 = vmatprep.mubr.f32.mxu0 0.0
        %5543 = vmatmul.mubr.f32.gmra.mxu0 %v5438
        %v5544 = vpop.f32.mrf.mxu0
        %v5545 = vadd.f32 0.0, %v5544
        %v5546 = vpop.f32.mrf.mxu0
        %5547 = vdwg.mxu0
        %v5548 = vadd.f32 %v5405, %v5510
        %v5549 = vadd.f32 %v5406, %v5515
        %v5550 = vadd.f32 %v5407, %v5520
        %v5551 = vadd.f32 %v5408, %v5525
        %v5552 = vadd.f32 %v5409, %v5530
        %v5553 = vadd.f32 %v5410, %v5535
        %v5554 = vadd.f32 %v5411, %v5540
        %v5555 = vadd.f32 %v5412, %v5545
        %s5556 = scalar_lea.vmem %s8, 96
        %v5557 = vld [vmem:[%s5556] sm:$0xff]
        %v5558 = vld [vmem:[%s5556 + $0x8] sm:$0x1]
        %v5560 = vsel %vm4718, %v4315, 0
        %v5563 = vsel %vm4718, %v4320, 0
        %v5566 = vsel %vm4718, %v4325, 0
        %v5569 = vsel %vm4718, %v4330, 0
        %v5572 = vsel %vm4718, %v4335, 0
        %v5575 = vsel %vm4718, %v4340, 0
        %v5578 = vsel %vm4718, %v4345, 0
        %v5581 = vsel %vm4718, %v4350, 0
        %v5584 = vsel %vm4743, %v5558, 0
        %5586 = vmatprep.subr.mxu0 0.0
        %5587 = vmatpush1.msra.mxu0 0.0
        %5588 = vmatprep.subr.mxu0 0.0
        %5589 = vmatpush1.msra.mxu0 0.0
        %5590 = vmatprep.subr.mxu0 0.0
        %5591 = vmatpush1.msra.mxu0 0.0
        %5592 = vmatprep.subr.mxu0 0.0
        %5593 = vmatpush1.msra.mxu0 0.0
        %5594 = vmatprep.subr.mxu0 0.0
        %5595 = vmatpush1.msra.mxu0 0.0
        %5596 = vmatprep.subr.mxu0 0.0
        %5597 = vmatpush1.msra.mxu0 0.0
        %5598 = vmatprep.subr.mxu0 0.0
        %5599 = vmatpush1.msra.mxu0 0.0
        %5600 = vmatprep.subr.mxu0 0.0
        %5601 = vmatpush1.msra.mxu0 0.0
        %5602 = vmatprep.subr.mxu0 0.0
        %5603 = vmatpush1.msra.mxu0 0.0
        %5604 = vmatprep.subr.mxu0 0.0
        %5605 = vmatpush1.msra.mxu0 0.0
        %5606 = vmatprep.subr.mxu0 0.0
        %5607 = vmatpush1.msra.mxu0 0.0
        %5608 = vmatprep.subr.mxu0 0.0
        %5609 = vmatpush1.msra.mxu0 0.0
        %5610 = vmatprep.subr.mxu0 0.0
        %5611 = vmatpush1.msra.mxu0 0.0
        %5612 = vmatprep.subr.mxu0 0.0
        %5613 = vmatpush1.msra.mxu0 0.0
        %5614 = vmatprep.subr.mxu0 0.0
        %5615 = vmatpush1.msra.mxu0 %v5584
        %5616 = vmatprep.subr.mxu0 0.0
        %5617 = vmatpush1.msra.mxu0 %v5557
        %5618 = vmatprep.subr.mxu0 0.0
        %5619 = vmatpush2.msra.mxu0 0.0
        %5620 = vmatprep.subr.mxu0 0.0
        %5621 = vmatpush2.msra.mxu0 0.0
        %5622 = vmatprep.subr.mxu0 0.0
        %5623 = vmatpush2.msra.mxu0 0.0
        %5624 = vmatprep.subr.mxu0 0.0
        %5625 = vmatpush2.msra.mxu0 0.0
        %5626 = vmatprep.subr.mxu0 0.0
        %5627 = vmatpush2.msra.mxu0 0.0
        %5628 = vmatprep.subr.mxu0 0.0
        %5629 = vmatpush2.msra.mxu0 0.0
        %5630 = vmatprep.subr.mxu0 0.0
        %5631 = vmatpush2.msra.mxu0 0.0
        %5632 = vmatprep.subr.mxu0 0.0
        %5633 = vmatpush2.msra.mxu0 0.0
        %5634 = vmatprep.subr.mxu0 0.0
        %5635 = vmatpush2.msra.mxu0 0.0
        %5636 = vmatprep.subr.mxu0 0.0
        %5637 = vmatpush2.msra.mxu0 0.0
        %5638 = vmatprep.subr.mxu0 0.0
        %5639 = vmatpush2.msra.mxu0 0.0
        %5640 = vmatprep.subr.mxu0 0.0
        %5641 = vmatpush2.msra.mxu0 0.0
        %5642 = vmatprep.subr.mxu0 0.0
        %5643 = vmatpush2.msra.mxu0 0.0
        %5644 = vmatprep.subr.mxu0 0.0
        %5645 = vmatpush2.msra.mxu0 0.0
        %5646 = vmatprep.subr.mxu0 0.0
        %5647 = vmatpush2.msra.mxu0 0.0
        %5648 = vmatprep.subr.mxu0 0.0
        %5649 = vmatpush2.msra.mxu0 0.0
        %5650 = vmatprep.mubr.f32.mxu0 0.0
        %5651 = vmatmul.mubr.f32.gmra.mxu0 %v5560
        %v5652 = vpop.f32.mrf.mxu0
        %v5653 = vadd.f32 0.0, %v5652
        %v5654 = vpop.f32.mrf.mxu0
        %5655 = vmatprep.mubr.f32.mxu0 0.0
        %5656 = vmatmul.mubr.f32.gmra.mxu0 %v5563
        %v5657 = vpop.f32.mrf.mxu0
        %v5658 = vadd.f32 0.0, %v5657
        %v5659 = vpop.f32.mrf.mxu0
        %5660 = vmatprep.mubr.f32.mxu0 0.0
        %5661 = vmatmul.mubr.f32.gmra.mxu0 %v5566
        %v5662 = vpop.f32.mrf.mxu0
        %v5663 = vadd.f32 0.0, %v5662
        %v5664 = vpop.f32.mrf.mxu0
        %5665 = vmatprep.mubr.f32.mxu0 0.0
        %5666 = vmatmul.mubr.f32.gmra.mxu0 %v5569
        %v5667 = vpop.f32.mrf.mxu0
        %v5668 = vadd.f32 0.0, %v5667
        %v5669 = vpop.f32.mrf.mxu0
        %5670 = vmatprep.mubr.f32.mxu0 0.0
        %5671 = vmatmul.mubr.f32.gmra.mxu0 %v5572
        %v5672 = vpop.f32.mrf.mxu0
        %v5673 = vadd.f32 0.0, %v5672
        %v5674 = vpop.f32.mrf.mxu0
        %5675 = vmatprep.mubr.f32.mxu0 0.0
        %5676 = vmatmul.mubr.f32.gmra.mxu0 %v5575
        %v5677 = vpop.f32.mrf.mxu0
        %v5678 = vadd.f32 0.0, %v5677
        %v5679 = vpop.f32.mrf.mxu0
        %5680 = vmatprep.mubr.f32.mxu0 0.0
        %5681 = vmatmul.mubr.f32.gmra.mxu0 %v5578
        %v5682 = vpop.f32.mrf.mxu0
        %v5683 = vadd.f32 0.0, %v5682
        %v5684 = vpop.f32.mrf.mxu0
        %5685 = vmatprep.mubr.f32.mxu0 0.0
        %5686 = vmatmul.mubr.f32.gmra.mxu0 %v5581
        %v5687 = vpop.f32.mrf.mxu0
        %v5688 = vadd.f32 0.0, %v5687
        %v5689 = vpop.f32.mrf.mxu0
        %5690 = vdwg.mxu0
        %v5691 = vadd.f32 %v5548, %v5653
        %v5692 = vadd.f32 %v5549, %v5658
        %v5693 = vadd.f32 %v5550, %v5663
        %v5694 = vadd.f32 %v5551, %v5668
        %v5695 = vadd.f32 %v5552, %v5673
        %v5696 = vadd.f32 %v5553, %v5678
        %v5697 = vadd.f32 %v5554, %v5683
        %v5698 = vadd.f32 %v5555, %v5688
        %s5699 = scalar_lea.vmem %s8, 112
        %v5700 = vld [vmem:[%s5699] sm:$0xff]
        %v5701 = vld [vmem:[%s5699 + $0x8] sm:$0x1]
        %v5703 = vsel %vm4718, %v4355, 0
        %v5706 = vsel %vm4718, %v4360, 0
        %v5709 = vsel %vm4718, %v4365, 0
        %v5712 = vsel %vm4718, %v4370, 0
        %v5715 = vsel %vm4718, %v4375, 0
        %v5718 = vsel %vm4718, %v4380, 0
        %v5721 = vsel %vm4718, %v4385, 0
        %v5724 = vsel %vm4718, %v4390, 0
        %v5727 = vsel %vm4743, %v5701, 0
        %5729 = vmatprep.subr.mxu0 0.0
        %5730 = vmatpush1.msra.mxu0 0.0
        %5731 = vmatprep.subr.mxu0 0.0
        %5732 = vmatpush1.msra.mxu0 0.0
        %5733 = vmatprep.subr.mxu0 0.0
        %5734 = vmatpush1.msra.mxu0 0.0
        %5735 = vmatprep.subr.mxu0 0.0
        %5736 = vmatpush1.msra.mxu0 0.0
        %5737 = vmatprep.subr.mxu0 0.0
        %5738 = vmatpush1.msra.mxu0 0.0
        %5739 = vmatprep.subr.mxu0 0.0
        %5740 = vmatpush1.msra.mxu0 0.0
        %5741 = vmatprep.subr.mxu0 0.0
        %5742 = vmatpush1.msra.mxu0 0.0
        %5743 = vmatprep.subr.mxu0 0.0
        %5744 = vmatpush1.msra.mxu0 0.0
        %5745 = vmatprep.subr.mxu0 0.0
        %5746 = vmatpush1.msra.mxu0 0.0
        %5747 = vmatprep.subr.mxu0 0.0
        %5748 = vmatpush1.msra.mxu0 0.0
        %5749 = vmatprep.subr.mxu0 0.0
        %5750 = vmatpush1.msra.mxu0 0.0
        %5751 = vmatprep.subr.mxu0 0.0
        %5752 = vmatpush1.msra.mxu0 0.0
        %5753 = vmatprep.subr.mxu0 0.0
        %5754 = vmatpush1.msra.mxu0 0.0
        %5755 = vmatprep.subr.mxu0 0.0
        %5756 = vmatpush1.msra.mxu0 0.0
        %5757 = vmatprep.subr.mxu0 0.0
        %5758 = vmatpush1.msra.mxu0 %v5727
        %5759 = vmatprep.subr.mxu0 0.0
        %5760 = vmatpush1.msra.mxu0 %v5700
        %5761 = vmatprep.subr.mxu0 0.0
        %5762 = vmatpush2.msra.mxu0 0.0
        %5763 = vmatprep.subr.mxu0 0.0
        %5764 = vmatpush2.msra.mxu0 0.0
        %5765 = vmatprep.subr.mxu0 0.0
        %5766 = vmatpush2.msra.mxu0 0.0
        %5767 = vmatprep.subr.mxu0 0.0
        %5768 = vmatpush2.msra.mxu0 0.0
        %5769 = vmatprep.subr.mxu0 0.0
        %5770 = vmatpush2.msra.mxu0 0.0
        %5771 = vmatprep.subr.mxu0 0.0
        %5772 = vmatpush2.msra.mxu0 0.0
        %5773 = vmatprep.subr.mxu0 0.0
        %5774 = vmatpush2.msra.mxu0 0.0
        %5775 = vmatprep.subr.mxu0 0.0
        %5776 = vmatpush2.msra.mxu0 0.0
        %5777 = vmatprep.subr.mxu0 0.0
        %5778 = vmatpush2.msra.mxu0 0.0
        %5779 = vmatprep.subr.mxu0 0.0
        %5780 = vmatpush2.msra.mxu0 0.0
        %5781 = vmatprep.subr.mxu0 0.0
        %5782 = vmatpush2.msra.mxu0 0.0
        %5783 = vmatprep.subr.mxu0 0.0
        %5784 = vmatpush2.msra.mxu0 0.0
        %5785 = vmatprep.subr.mxu0 0.0
        %5786 = vmatpush2.msra.mxu0 0.0
        %5787 = vmatprep.subr.mxu0 0.0
        %5788 = vmatpush2.msra.mxu0 0.0
        %5789 = vmatprep.subr.mxu0 0.0
        %5790 = vmatpush2.msra.mxu0 0.0
        %5791 = vmatprep.subr.mxu0 0.0
        %5792 = vmatpush2.msra.mxu0 0.0
        %5793 = vmatprep.mubr.f32.mxu0 0.0
        %5794 = vmatmul.mubr.f32.gmra.mxu0 %v5703
        %v5795 = vpop.f32.mrf.mxu0
        %v5796 = vadd.f32 0.0, %v5795
        %v5797 = vpop.f32.mrf.mxu0
        %5798 = vmatprep.mubr.f32.mxu0 0.0
        %5799 = vmatmul.mubr.f32.gmra.mxu0 %v5706
        %v5800 = vpop.f32.mrf.mxu0
        %v5801 = vadd.f32 0.0, %v5800
        %v5802 = vpop.f32.mrf.mxu0
        %5803 = vmatprep.mubr.f32.mxu0 0.0
        %5804 = vmatmul.mubr.f32.gmra.mxu0 %v5709
        %v5805 = vpop.f32.mrf.mxu0
        %v5806 = vadd.f32 0.0, %v5805
        %v5807 = vpop.f32.mrf.mxu0
        %5808 = vmatprep.mubr.f32.mxu0 0.0
        %5809 = vmatmul.mubr.f32.gmra.mxu0 %v5712
        %v5810 = vpop.f32.mrf.mxu0
        %v5811 = vadd.f32 0.0, %v5810
        %v5812 = vpop.f32.mrf.mxu0
        %5813 = vmatprep.mubr.f32.mxu0 0.0
        %5814 = vmatmul.mubr.f32.gmra.mxu0 %v5715
        %v5815 = vpop.f32.mrf.mxu0
        %v5816 = vadd.f32 0.0, %v5815
        %v5817 = vpop.f32.mrf.mxu0
        %5818 = vmatprep.mubr.f32.mxu0 0.0
        %5819 = vmatmul.mubr.f32.gmra.mxu0 %v5718
        %v5820 = vpop.f32.mrf.mxu0
        %v5821 = vadd.f32 0.0, %v5820
        %v5822 = vpop.f32.mrf.mxu0
        %5823 = vmatprep.mubr.f32.mxu0 0.0
        %5824 = vmatmul.mubr.f32.gmra.mxu0 %v5721
        %v5825 = vpop.f32.mrf.mxu0
        %v5826 = vadd.f32 0.0, %v5825
        %v5827 = vpop.f32.mrf.mxu0
        %5828 = vmatprep.mubr.f32.mxu0 0.0
        %5829 = vmatmul.mubr.f32.gmra.mxu0 %v5724
        %v5830 = vpop.f32.mrf.mxu0
        %v5831 = vadd.f32 0.0, %v5830
        %v5832 = vpop.f32.mrf.mxu0
        %5833 = vdwg.mxu0
        %v5834 = vadd.f32 %v5691, %v5796
        %v5835 = vadd.f32 %v5692, %v5801
        %v5836 = vadd.f32 %v5693, %v5806
        %v5837 = vadd.f32 %v5694, %v5811
        %v5838 = vadd.f32 %v5695, %v5816
        %v5839 = vadd.f32 %v5696, %v5821
        %v5840 = vadd.f32 %v5697, %v5826
        %v5841 = vadd.f32 %v5698, %v5831
        %s5842 = scalar_lea.vmem %s8, 128
        %v5843 = vld [vmem:[%s5842] sm:$0xff]
        %v5844 = vld [vmem:[%s5842 + $0x8] sm:$0x1]
        %v5846 = vsel %vm4718, %v4395, 0
        %v5849 = vsel %vm4718, %v4400, 0
        %v5852 = vsel %vm4718, %v4405, 0
        %v5855 = vsel %vm4718, %v4410, 0
        %v5858 = vsel %vm4718, %v4415, 0
        %v5861 = vsel %vm4718, %v4420, 0
        %v5864 = vsel %vm4718, %v4425, 0
        %v5867 = vsel %vm4718, %v4430, 0
        %v5870 = vsel %vm4743, %v5844, 0
        %5872 = vmatprep.subr.mxu0 0.0
        %5873 = vmatpush1.msra.mxu0 0.0
        %5874 = vmatprep.subr.mxu0 0.0
        %5875 = vmatpush1.msra.mxu0 0.0
        %5876 = vmatprep.subr.mxu0 0.0
        %5877 = vmatpush1.msra.mxu0 0.0
        %5878 = vmatprep.subr.mxu0 0.0
        %5879 = vmatpush1.msra.mxu0 0.0
        %5880 = vmatprep.subr.mxu0 0.0
        %5881 = vmatpush1.msra.mxu0 0.0
        %5882 = vmatprep.subr.mxu0 0.0
        %5883 = vmatpush1.msra.mxu0 0.0
        %5884 = vmatprep.subr.mxu0 0.0
        %5885 = vmatpush1.msra.mxu0 0.0
        %5886 = vmatprep.subr.mxu0 0.0
        %5887 = vmatpush1.msra.mxu0 0.0
        %5888 = vmatprep.subr.mxu0 0.0
        %5889 = vmatpush1.msra.mxu0 0.0
        %5890 = vmatprep.subr.mxu0 0.0
        %5891 = vmatpush1.msra.mxu0 0.0
        %5892 = vmatprep.subr.mxu0 0.0
        %5893 = vmatpush1.msra.mxu0 0.0
        %5894 = vmatprep.subr.mxu0 0.0
        %5895 = vmatpush1.msra.mxu0 0.0
        %5896 = vmatprep.subr.mxu0 0.0
        %5897 = vmatpush1.msra.mxu0 0.0
        %5898 = vmatprep.subr.mxu0 0.0
        %5899 = vmatpush1.msra.mxu0 0.0
        %5900 = vmatprep.subr.mxu0 0.0
        %5901 = vmatpush1.msra.mxu0 %v5870
        %5902 = vmatprep.subr.mxu0 0.0
        %5903 = vmatpush1.msra.mxu0 %v5843
        %5904 = vmatprep.subr.mxu0 0.0
        %5905 = vmatpush2.msra.mxu0 0.0
        %5906 = vmatprep.subr.mxu0 0.0
        %5907 = vmatpush2.msra.mxu0 0.0
        %5908 = vmatprep.subr.mxu0 0.0
        %5909 = vmatpush2.msra.mxu0 0.0
        %5910 = vmatprep.subr.mxu0 0.0
        %5911 = vmatpush2.msra.mxu0 0.0
        %5912 = vmatprep.subr.mxu0 0.0
        %5913 = vmatpush2.msra.mxu0 0.0
        %5914 = vmatprep.subr.mxu0 0.0
        %5915 = vmatpush2.msra.mxu0 0.0
        %5916 = vmatprep.subr.mxu0 0.0
        %5917 = vmatpush2.msra.mxu0 0.0
        %5918 = vmatprep.subr.mxu0 0.0
        %5919 = vmatpush2.msra.mxu0 0.0
        %5920 = vmatprep.subr.mxu0 0.0
        %5921 = vmatpush2.msra.mxu0 0.0
        %5922 = vmatprep.subr.mxu0 0.0
        %5923 = vmatpush2.msra.mxu0 0.0
        %5924 = vmatprep.subr.mxu0 0.0
        %5925 = vmatpush2.msra.mxu0 0.0
        %5926 = vmatprep.subr.mxu0 0.0
        %5927 = vmatpush2.msra.mxu0 0.0
        %5928 = vmatprep.subr.mxu0 0.0
        %5929 = vmatpush2.msra.mxu0 0.0
        %5930 = vmatprep.subr.mxu0 0.0
        %5931 = vmatpush2.msra.mxu0 0.0
        %5932 = vmatprep.subr.mxu0 0.0
        %5933 = vmatpush2.msra.mxu0 0.0
        %5934 = vmatprep.subr.mxu0 0.0
        %5935 = vmatpush2.msra.mxu0 0.0
        %5936 = vmatprep.mubr.f32.mxu0 0.0
        %5937 = vmatmul.mubr.f32.gmra.mxu0 %v5846
        %v5938 = vpop.f32.mrf.mxu0
        %v5939 = vadd.f32 0.0, %v5938
        %v5940 = vpop.f32.mrf.mxu0
        %5941 = vmatprep.mubr.f32.mxu0 0.0
        %5942 = vmatmul.mubr.f32.gmra.mxu0 %v5849
        %v5943 = vpop.f32.mrf.mxu0
        %v5944 = vadd.f32 0.0, %v5943
        %v5945 = vpop.f32.mrf.mxu0
        %5946 = vmatprep.mubr.f32.mxu0 0.0
        %5947 = vmatmul.mubr.f32.gmra.mxu0 %v5852
        %v5948 = vpop.f32.mrf.mxu0
        %v5949 = vadd.f32 0.0, %v5948
        %v5950 = vpop.f32.mrf.mxu0
        %5951 = vmatprep.mubr.f32.mxu0 0.0
        %5952 = vmatmul.mubr.f32.gmra.mxu0 %v5855
        %v5953 = vpop.f32.mrf.mxu0
        %v5954 = vadd.f32 0.0, %v5953
        %v5955 = vpop.f32.mrf.mxu0
        %5956 = vmatprep.mubr.f32.mxu0 0.0
        %5957 = vmatmul.mubr.f32.gmra.mxu0 %v5858
        %v5958 = vpop.f32.mrf.mxu0
        %v5959 = vadd.f32 0.0, %v5958
        %v5960 = vpop.f32.mrf.mxu0
        %5961 = vmatprep.mubr.f32.mxu0 0.0
        %5962 = vmatmul.mubr.f32.gmra.mxu0 %v5861
        %v5963 = vpop.f32.mrf.mxu0
        %v5964 = vadd.f32 0.0, %v5963
        %v5965 = vpop.f32.mrf.mxu0
        %5966 = vmatprep.mubr.f32.mxu0 0.0
        %5967 = vmatmul.mubr.f32.gmra.mxu0 %v5864
        %v5968 = vpop.f32.mrf.mxu0
        %v5969 = vadd.f32 0.0, %v5968
        %v5970 = vpop.f32.mrf.mxu0
        %5971 = vmatprep.mubr.f32.mxu0 0.0
        %5972 = vmatmul.mubr.f32.gmra.mxu0 %v5867
        %v5973 = vpop.f32.mrf.mxu0
        %v5974 = vadd.f32 0.0, %v5973
        %v5975 = vpop.f32.mrf.mxu0
        %5976 = vdwg.mxu0
        %v5977 = vadd.f32 %v5834, %v5939
        %v5978 = vadd.f32 %v5835, %v5944
        %v5979 = vadd.f32 %v5836, %v5949
        %v5980 = vadd.f32 %v5837, %v5954
        %v5981 = vadd.f32 %v5838, %v5959
        %v5982 = vadd.f32 %v5839, %v5964
        %v5983 = vadd.f32 %v5840, %v5969
        %v5984 = vadd.f32 %v5841, %v5974
        %s5985 = scalar_lea.vmem %s8, 144
        %v5986 = vld [vmem:[%s5985] sm:$0xff]
        %v5987 = vld [vmem:[%s5985 + $0x8] sm:$0x1]
        %v5989 = vsel %vm4718, %v4435, 0
        %v5992 = vsel %vm4718, %v4440, 0
        %v5995 = vsel %vm4718, %v4445, 0
        %v5998 = vsel %vm4718, %v4450, 0
        %v6001 = vsel %vm4718, %v4455, 0
        %v6004 = vsel %vm4718, %v4460, 0
        %v6007 = vsel %vm4718, %v4465, 0
        %v6010 = vsel %vm4718, %v4470, 0
        %v6013 = vsel %vm4743, %v5987, 0
        %6015 = vmatprep.subr.mxu0 0.0
        %6016 = vmatpush1.msra.mxu0 0.0
        %6017 = vmatprep.subr.mxu0 0.0
        %6018 = vmatpush1.msra.mxu0 0.0
        %6019 = vmatprep.subr.mxu0 0.0
        %6020 = vmatpush1.msra.mxu0 0.0
        %6021 = vmatprep.subr.mxu0 0.0
        %6022 = vmatpush1.msra.mxu0 0.0
        %6023 = vmatprep.subr.mxu0 0.0
        %6024 = vmatpush1.msra.mxu0 0.0
        %6025 = vmatprep.subr.mxu0 0.0
        %6026 = vmatpush1.msra.mxu0 0.0
        %6027 = vmatprep.subr.mxu0 0.0
        %6028 = vmatpush1.msra.mxu0 0.0
        %6029 = vmatprep.subr.mxu0 0.0
        %6030 = vmatpush1.msra.mxu0 0.0
        %6031 = vmatprep.subr.mxu0 0.0
        %6032 = vmatpush1.msra.mxu0 0.0
        %6033 = vmatprep.subr.mxu0 0.0
        %6034 = vmatpush1.msra.mxu0 0.0
        %6035 = vmatprep.subr.mxu0 0.0
        %6036 = vmatpush1.msra.mxu0 0.0
        %6037 = vmatprep.subr.mxu0 0.0
        %6038 = vmatpush1.msra.mxu0 0.0
        %6039 = vmatprep.subr.mxu0 0.0
        %6040 = vmatpush1.msra.mxu0 0.0
        %6041 = vmatprep.subr.mxu0 0.0
        %6042 = vmatpush1.msra.mxu0 0.0
        %6043 = vmatprep.subr.mxu0 0.0
        %6044 = vmatpush1.msra.mxu0 %v6013
        %6045 = vmatprep.subr.mxu0 0.0
        %6046 = vmatpush1.msra.mxu0 %v5986
        %6047 = vmatprep.subr.mxu0 0.0
        %6048 = vmatpush2.msra.mxu0 0.0
        %6049 = vmatprep.subr.mxu0 0.0
        %6050 = vmatpush2.msra.mxu0 0.0
        %6051 = vmatprep.subr.mxu0 0.0
        %6052 = vmatpush2.msra.mxu0 0.0
        %6053 = vmatprep.subr.mxu0 0.0
        %6054 = vmatpush2.msra.mxu0 0.0
        %6055 = vmatprep.subr.mxu0 0.0
        %6056 = vmatpush2.msra.mxu0 0.0
        %6057 = vmatprep.subr.mxu0 0.0
        %6058 = vmatpush2.msra.mxu0 0.0
        %6059 = vmatprep.subr.mxu0 0.0
        %6060 = vmatpush2.msra.mxu0 0.0
        %6061 = vmatprep.subr.mxu0 0.0
        %6062 = vmatpush2.msra.mxu0 0.0
        %6063 = vmatprep.subr.mxu0 0.0
        %6064 = vmatpush2.msra.mxu0 0.0
        %6065 = vmatprep.subr.mxu0 0.0
        %6066 = vmatpush2.msra.mxu0 0.0
        %6067 = vmatprep.subr.mxu0 0.0
        %6068 = vmatpush2.msra.mxu0 0.0
        %6069 = vmatprep.subr.mxu0 0.0
        %6070 = vmatpush2.msra.mxu0 0.0
        %6071 = vmatprep.subr.mxu0 0.0
        %6072 = vmatpush2.msra.mxu0 0.0
        %6073 = vmatprep.subr.mxu0 0.0
        %6074 = vmatpush2.msra.mxu0 0.0
        %6075 = vmatprep.subr.mxu0 0.0
        %6076 = vmatpush2.msra.mxu0 0.0
        %6077 = vmatprep.subr.mxu0 0.0
        %6078 = vmatpush2.msra.mxu0 0.0
        %6079 = vmatprep.mubr.f32.mxu0 0.0
        %6080 = vmatmul.mubr.f32.gmra.mxu0 %v5989
        %v6081 = vpop.f32.mrf.mxu0
        %v6082 = vadd.f32 0.0, %v6081
        %v6083 = vpop.f32.mrf.mxu0
        %6084 = vmatprep.mubr.f32.mxu0 0.0
        %6085 = vmatmul.mubr.f32.gmra.mxu0 %v5992
        %v6086 = vpop.f32.mrf.mxu0
        %v6087 = vadd.f32 0.0, %v6086
        %v6088 = vpop.f32.mrf.mxu0
        %6089 = vmatprep.mubr.f32.mxu0 0.0
        %6090 = vmatmul.mubr.f32.gmra.mxu0 %v5995
        %v6091 = vpop.f32.mrf.mxu0
        %v6092 = vadd.f32 0.0, %v6091
        %v6093 = vpop.f32.mrf.mxu0
        %6094 = vmatprep.mubr.f32.mxu0 0.0
        %6095 = vmatmul.mubr.f32.gmra.mxu0 %v5998
        %v6096 = vpop.f32.mrf.mxu0
        %v6097 = vadd.f32 0.0, %v6096
        %v6098 = vpop.f32.mrf.mxu0
        %6099 = vmatprep.mubr.f32.mxu0 0.0
        %6100 = vmatmul.mubr.f32.gmra.mxu0 %v6001
        %v6101 = vpop.f32.mrf.mxu0
        %v6102 = vadd.f32 0.0, %v6101
        %v6103 = vpop.f32.mrf.mxu0
        %6104 = vmatprep.mubr.f32.mxu0 0.0
        %6105 = vmatmul.mubr.f32.gmra.mxu0 %v6004
        %v6106 = vpop.f32.mrf.mxu0
        %v6107 = vadd.f32 0.0, %v6106
        %v6108 = vpop.f32.mrf.mxu0
        %6109 = vmatprep.mubr.f32.mxu0 0.0
        %6110 = vmatmul.mubr.f32.gmra.mxu0 %v6007
        %v6111 = vpop.f32.mrf.mxu0
        %v6112 = vadd.f32 0.0, %v6111
        %v6113 = vpop.f32.mrf.mxu0
        %6114 = vmatprep.mubr.f32.mxu0 0.0
        %6115 = vmatmul.mubr.f32.gmra.mxu0 %v6010
        %v6116 = vpop.f32.mrf.mxu0
        %v6117 = vadd.f32 0.0, %v6116
        %v6118 = vpop.f32.mrf.mxu0
        %6119 = vdwg.mxu0
        %v6120 = vadd.f32 %v5977, %v6082
        %v6121 = vadd.f32 %v5978, %v6087
        %v6122 = vadd.f32 %v5979, %v6092
        %v6123 = vadd.f32 %v5980, %v6097
        %v6124 = vadd.f32 %v5981, %v6102
        %v6125 = vadd.f32 %v5982, %v6107
        %v6126 = vadd.f32 %v5983, %v6112
        %v6127 = vadd.f32 %v5984, %v6117
        %s6128 = scalar_lea.vmem %s8, 160
        %v6129 = vld [vmem:[%s6128] sm:$0xff]
        %v6130 = vld [vmem:[%s6128 + $0x8] sm:$0x1]
        %v6132 = vsel %vm4718, %v4475, 0
        %v6135 = vsel %vm4718, %v4480, 0
        %v6138 = vsel %vm4718, %v4485, 0
        %v6141 = vsel %vm4718, %v4490, 0
        %v6144 = vsel %vm4718, %v4495, 0
        %v6147 = vsel %vm4718, %v4500, 0
        %v6150 = vsel %vm4718, %v4505, 0
        %v6153 = vsel %vm4718, %v4510, 0
        %v6156 = vsel %vm4743, %v6130, 0
        %6158 = vmatprep.subr.mxu0 0.0
        %6159 = vmatpush1.msra.mxu0 0.0
        %6160 = vmatprep.subr.mxu0 0.0
        %6161 = vmatpush1.msra.mxu0 0.0
        %6162 = vmatprep.subr.mxu0 0.0
        %6163 = vmatpush1.msra.mxu0 0.0
        %6164 = vmatprep.subr.mxu0 0.0
        %6165 = vmatpush1.msra.mxu0 0.0
        %6166 = vmatprep.subr.mxu0 0.0
        %6167 = vmatpush1.msra.mxu0 0.0
        %6168 = vmatprep.subr.mxu0 0.0
        %6169 = vmatpush1.msra.mxu0 0.0
        %6170 = vmatprep.subr.mxu0 0.0
        %6171 = vmatpush1.msra.mxu0 0.0
        %6172 = vmatprep.subr.mxu0 0.0
        %6173 = vmatpush1.msra.mxu0 0.0
        %6174 = vmatprep.subr.mxu0 0.0
        %6175 = vmatpush1.msra.mxu0 0.0
        %6176 = vmatprep.subr.mxu0 0.0
        %6177 = vmatpush1.msra.mxu0 0.0
        %6178 = vmatprep.subr.mxu0 0.0
        %6179 = vmatpush1.msra.mxu0 0.0
        %6180 = vmatprep.subr.mxu0 0.0
        %6181 = vmatpush1.msra.mxu0 0.0
        %6182 = vmatprep.subr.mxu0 0.0
        %6183 = vmatpush1.msra.mxu0 0.0
        %6184 = vmatprep.subr.mxu0 0.0
        %6185 = vmatpush1.msra.mxu0 0.0
        %6186 = vmatprep.subr.mxu0 0.0
        %6187 = vmatpush1.msra.mxu0 %v6156
        %6188 = vmatprep.subr.mxu0 0.0
        %6189 = vmatpush1.msra.mxu0 %v6129
        %6190 = vmatprep.subr.mxu0 0.0
        %6191 = vmatpush2.msra.mxu0 0.0
        %6192 = vmatprep.subr.mxu0 0.0
        %6193 = vmatpush2.msra.mxu0 0.0
        %6194 = vmatprep.subr.mxu0 0.0
        %6195 = vmatpush2.msra.mxu0 0.0
        %6196 = vmatprep.subr.mxu0 0.0
        %6197 = vmatpush2.msra.mxu0 0.0
        %6198 = vmatprep.subr.mxu0 0.0
        %6199 = vmatpush2.msra.mxu0 0.0
        %6200 = vmatprep.subr.mxu0 0.0
        %6201 = vmatpush2.msra.mxu0 0.0
        %6202 = vmatprep.subr.mxu0 0.0
        %6203 = vmatpush2.msra.mxu0 0.0
        %6204 = vmatprep.subr.mxu0 0.0
        %6205 = vmatpush2.msra.mxu0 0.0
        %6206 = vmatprep.subr.mxu0 0.0
        %6207 = vmatpush2.msra.mxu0 0.0
        %6208 = vmatprep.subr.mxu0 0.0
        %6209 = vmatpush2.msra.mxu0 0.0
        %6210 = vmatprep.subr.mxu0 0.0
        %6211 = vmatpush2.msra.mxu0 0.0
        %6212 = vmatprep.subr.mxu0 0.0
        %6213 = vmatpush2.msra.mxu0 0.0
        %6214 = vmatprep.subr.mxu0 0.0
        %6215 = vmatpush2.msra.mxu0 0.0
        %6216 = vmatprep.subr.mxu0 0.0
        %6217 = vmatpush2.msra.mxu0 0.0
        %6218 = vmatprep.subr.mxu0 0.0
        %6219 = vmatpush2.msra.mxu0 0.0
        %6220 = vmatprep.subr.mxu0 0.0
        %6221 = vmatpush2.msra.mxu0 0.0
        %6222 = vmatprep.mubr.f32.mxu0 0.0
        %6223 = vmatmul.mubr.f32.gmra.mxu0 %v6132
        %v6224 = vpop.f32.mrf.mxu0
        %v6225 = vadd.f32 0.0, %v6224
        %v6226 = vpop.f32.mrf.mxu0
        %6227 = vmatprep.mubr.f32.mxu0 0.0
        %6228 = vmatmul.mubr.f32.gmra.mxu0 %v6135
        %v6229 = vpop.f32.mrf.mxu0
        %v6230 = vadd.f32 0.0, %v6229
        %v6231 = vpop.f32.mrf.mxu0
        %6232 = vmatprep.mubr.f32.mxu0 0.0
        %6233 = vmatmul.mubr.f32.gmra.mxu0 %v6138
        %v6234 = vpop.f32.mrf.mxu0
        %v6235 = vadd.f32 0.0, %v6234
        %v6236 = vpop.f32.mrf.mxu0
        %6237 = vmatprep.mubr.f32.mxu0 0.0
        %6238 = vmatmul.mubr.f32.gmra.mxu0 %v6141
        %v6239 = vpop.f32.mrf.mxu0
        %v6240 = vadd.f32 0.0, %v6239
        %v6241 = vpop.f32.mrf.mxu0
        %6242 = vmatprep.mubr.f32.mxu0 0.0
        %6243 = vmatmul.mubr.f32.gmra.mxu0 %v6144
        %v6244 = vpop.f32.mrf.mxu0
        %v6245 = vadd.f32 0.0, %v6244
        %v6246 = vpop.f32.mrf.mxu0
        %6247 = vmatprep.mubr.f32.mxu0 0.0
        %6248 = vmatmul.mubr.f32.gmra.mxu0 %v6147
        %v6249 = vpop.f32.mrf.mxu0
        %v6250 = vadd.f32 0.0, %v6249
        %v6251 = vpop.f32.mrf.mxu0
        %6252 = vmatprep.mubr.f32.mxu0 0.0
        %6253 = vmatmul.mubr.f32.gmra.mxu0 %v6150
        %v6254 = vpop.f32.mrf.mxu0
        %v6255 = vadd.f32 0.0, %v6254
        %v6256 = vpop.f32.mrf.mxu0
        %6257 = vmatprep.mubr.f32.mxu0 0.0
        %6258 = vmatmul.mubr.f32.gmra.mxu0 %v6153
        %v6259 = vpop.f32.mrf.mxu0
        %v6260 = vadd.f32 0.0, %v6259
        %v6261 = vpop.f32.mrf.mxu0
        %6262 = vdwg.mxu0
        %v6263 = vadd.f32 %v6120, %v6225
        %v6264 = vadd.f32 %v6121, %v6230
        %v6265 = vadd.f32 %v6122, %v6235
        %v6266 = vadd.f32 %v6123, %v6240
        %v6267 = vadd.f32 %v6124, %v6245
        %v6268 = vadd.f32 %v6125, %v6250
        %v6269 = vadd.f32 %v6126, %v6255
        %v6270 = vadd.f32 %v6127, %v6260
        %s6271 = scalar_lea.vmem %s8, 176
        %v6272 = vld [vmem:[%s6271] sm:$0xff]
        %v6273 = vld [vmem:[%s6271 + $0x8] sm:$0x1]
        %v6275 = vsel %vm4718, %v4515, 0
        %v6278 = vsel %vm4718, %v4520, 0
        %v6281 = vsel %vm4718, %v4525, 0
        %v6284 = vsel %vm4718, %v4530, 0
        %v6287 = vsel %vm4718, %v4535, 0
        %v6290 = vsel %vm4718, %v4540, 0
        %v6293 = vsel %vm4718, %v4545, 0
        %v6296 = vsel %vm4718, %v4550, 0
        %v6299 = vsel %vm4743, %v6273, 0
        %6301 = vmatprep.subr.mxu0 0.0
        %6302 = vmatpush1.msra.mxu0 0.0
        %6303 = vmatprep.subr.mxu0 0.0
        %6304 = vmatpush1.msra.mxu0 0.0
        %6305 = vmatprep.subr.mxu0 0.0
        %6306 = vmatpush1.msra.mxu0 0.0
        %6307 = vmatprep.subr.mxu0 0.0
        %6308 = vmatpush1.msra.mxu0 0.0
        %6309 = vmatprep.subr.mxu0 0.0
        %6310 = vmatpush1.msra.mxu0 0.0
        %6311 = vmatprep.subr.mxu0 0.0
        %6312 = vmatpush1.msra.mxu0 0.0
        %6313 = vmatprep.subr.mxu0 0.0
        %6314 = vmatpush1.msra.mxu0 0.0
        %6315 = vmatprep.subr.mxu0 0.0
        %6316 = vmatpush1.msra.mxu0 0.0
        %6317 = vmatprep.subr.mxu0 0.0
        %6318 = vmatpush1.msra.mxu0 0.0
        %6319 = vmatprep.subr.mxu0 0.0
        %6320 = vmatpush1.msra.mxu0 0.0
        %6321 = vmatprep.subr.mxu0 0.0
        %6322 = vmatpush1.msra.mxu0 0.0
        %6323 = vmatprep.subr.mxu0 0.0
        %6324 = vmatpush1.msra.mxu0 0.0
        %6325 = vmatprep.subr.mxu0 0.0
        %6326 = vmatpush1.msra.mxu0 0.0
        %6327 = vmatprep.subr.mxu0 0.0
        %6328 = vmatpush1.msra.mxu0 0.0
        %6329 = vmatprep.subr.mxu0 0.0
        %6330 = vmatpush1.msra.mxu0 %v6299
        %6331 = vmatprep.subr.mxu0 0.0
        %6332 = vmatpush1.msra.mxu0 %v6272
        %6333 = vmatprep.subr.mxu0 0.0
        %6334 = vmatpush2.msra.mxu0 0.0
        %6335 = vmatprep.subr.mxu0 0.0
        %6336 = vmatpush2.msra.mxu0 0.0
        %6337 = vmatprep.subr.mxu0 0.0
        %6338 = vmatpush2.msra.mxu0 0.0
        %6339 = vmatprep.subr.mxu0 0.0
        %6340 = vmatpush2.msra.mxu0 0.0
        %6341 = vmatprep.subr.mxu0 0.0
        %6342 = vmatpush2.msra.mxu0 0.0
        %6343 = vmatprep.subr.mxu0 0.0
        %6344 = vmatpush2.msra.mxu0 0.0
        %6345 = vmatprep.subr.mxu0 0.0
        %6346 = vmatpush2.msra.mxu0 0.0
        %6347 = vmatprep.subr.mxu0 0.0
        %6348 = vmatpush2.msra.mxu0 0.0
        %6349 = vmatprep.subr.mxu0 0.0
        %6350 = vmatpush2.msra.mxu0 0.0
        %6351 = vmatprep.subr.mxu0 0.0
        %6352 = vmatpush2.msra.mxu0 0.0
        %6353 = vmatprep.subr.mxu0 0.0
        %6354 = vmatpush2.msra.mxu0 0.0
        %6355 = vmatprep.subr.mxu0 0.0
        %6356 = vmatpush2.msra.mxu0 0.0
        %6357 = vmatprep.subr.mxu0 0.0
        %6358 = vmatpush2.msra.mxu0 0.0
        %6359 = vmatprep.subr.mxu0 0.0
        %6360 = vmatpush2.msra.mxu0 0.0
        %6361 = vmatprep.subr.mxu0 0.0
        %6362 = vmatpush2.msra.mxu0 0.0
        %6363 = vmatprep.subr.mxu0 0.0
        %6364 = vmatpush2.msra.mxu0 0.0
        %6365 = vmatprep.mubr.f32.mxu0 0.0
        %6366 = vmatmul.mubr.f32.gmra.mxu0 %v6275
        %v6367 = vpop.f32.mrf.mxu0
        %v6368 = vadd.f32 0.0, %v6367
        %v6369 = vpop.f32.mrf.mxu0
        %6370 = vmatprep.mubr.f32.mxu0 0.0
        %6371 = vmatmul.mubr.f32.gmra.mxu0 %v6278
        %v6372 = vpop.f32.mrf.mxu0
        %v6373 = vadd.f32 0.0, %v6372
        %v6374 = vpop.f32.mrf.mxu0
        %6375 = vmatprep.mubr.f32.mxu0 0.0
        %6376 = vmatmul.mubr.f32.gmra.mxu0 %v6281
        %v6377 = vpop.f32.mrf.mxu0
        %v6378 = vadd.f32 0.0, %v6377
        %v6379 = vpop.f32.mrf.mxu0
        %6380 = vmatprep.mubr.f32.mxu0 0.0
        %6381 = vmatmul.mubr.f32.gmra.mxu0 %v6284
        %v6382 = vpop.f32.mrf.mxu0
        %v6383 = vadd.f32 0.0, %v6382
        %v6384 = vpop.f32.mrf.mxu0
        %6385 = vmatprep.mubr.f32.mxu0 0.0
        %6386 = vmatmul.mubr.f32.gmra.mxu0 %v6287
        %v6387 = vpop.f32.mrf.mxu0
        %v6388 = vadd.f32 0.0, %v6387
        %v6389 = vpop.f32.mrf.mxu0
        %6390 = vmatprep.mubr.f32.mxu0 0.0
        %6391 = vmatmul.mubr.f32.gmra.mxu0 %v6290
        %v6392 = vpop.f32.mrf.mxu0
        %v6393 = vadd.f32 0.0, %v6392
        %v6394 = vpop.f32.mrf.mxu0
        %6395 = vmatprep.mubr.f32.mxu0 0.0
        %6396 = vmatmul.mubr.f32.gmra.mxu0 %v6293
        %v6397 = vpop.f32.mrf.mxu0
        %v6398 = vadd.f32 0.0, %v6397
        %v6399 = vpop.f32.mrf.mxu0
        %6400 = vmatprep.mubr.f32.mxu0 0.0
        %6401 = vmatmul.mubr.f32.gmra.mxu0 %v6296
        %v6402 = vpop.f32.mrf.mxu0
        %v6403 = vadd.f32 0.0, %v6402
        %v6404 = vpop.f32.mrf.mxu0
        %6405 = vdwg.mxu0
        %v6406 = vadd.f32 %v6263, %v6368
        %v6407 = vadd.f32 %v6264, %v6373
        %v6408 = vadd.f32 %v6265, %v6378
        %v6409 = vadd.f32 %v6266, %v6383
        %v6410 = vadd.f32 %v6267, %v6388
        %v6411 = vadd.f32 %v6268, %v6393
        %v6412 = vadd.f32 %v6269, %v6398
        %v6413 = vadd.f32 %v6270, %v6403
        %s6414 = scalar_lea.vmem %s8, 192
        %v6415 = vld [vmem:[%s6414] sm:$0xff]
        %v6416 = vld [vmem:[%s6414 + $0x8] sm:$0x1]
        %v6418 = vsel %vm4718, %v4555, 0
        %v6421 = vsel %vm4718, %v4560, 0
        %v6424 = vsel %vm4718, %v4565, 0
        %v6427 = vsel %vm4718, %v4570, 0
        %v6430 = vsel %vm4718, %v4575, 0
        %v6433 = vsel %vm4718, %v4580, 0
        %v6436 = vsel %vm4718, %v4585, 0
        %v6439 = vsel %vm4718, %v4590, 0
        %v6442 = vsel %vm4743, %v6416, 0
        %6444 = vmatprep.subr.mxu0 0.0
        %6445 = vmatpush1.msra.mxu0 0.0
        %6446 = vmatprep.subr.mxu0 0.0
        %6447 = vmatpush1.msra.mxu0 0.0
        %6448 = vmatprep.subr.mxu0 0.0
        %6449 = vmatpush1.msra.mxu0 0.0
        %6450 = vmatprep.subr.mxu0 0.0
        %6451 = vmatpush1.msra.mxu0 0.0
        %6452 = vmatprep.subr.mxu0 0.0
        %6453 = vmatpush1.msra.mxu0 0.0
        %6454 = vmatprep.subr.mxu0 0.0
        %6455 = vmatpush1.msra.mxu0 0.0
        %6456 = vmatprep.subr.mxu0 0.0
        %6457 = vmatpush1.msra.mxu0 0.0
        %6458 = vmatprep.subr.mxu0 0.0
        %6459 = vmatpush1.msra.mxu0 0.0
        %6460 = vmatprep.subr.mxu0 0.0
        %6461 = vmatpush1.msra.mxu0 0.0
        %6462 = vmatprep.subr.mxu0 0.0
        %6463 = vmatpush1.msra.mxu0 0.0
        %6464 = vmatprep.subr.mxu0 0.0
        %6465 = vmatpush1.msra.mxu0 0.0
        %6466 = vmatprep.subr.mxu0 0.0
        %6467 = vmatpush1.msra.mxu0 0.0
        %6468 = vmatprep.subr.mxu0 0.0
        %6469 = vmatpush1.msra.mxu0 0.0
        %6470 = vmatprep.subr.mxu0 0.0
        %6471 = vmatpush1.msra.mxu0 0.0
        %6472 = vmatprep.subr.mxu0 0.0
        %6473 = vmatpush1.msra.mxu0 %v6442
        %6474 = vmatprep.subr.mxu0 0.0
        %6475 = vmatpush1.msra.mxu0 %v6415
        %6476 = vmatprep.subr.mxu0 0.0
        %6477 = vmatpush2.msra.mxu0 0.0
        %6478 = vmatprep.subr.mxu0 0.0
        %6479 = vmatpush2.msra.mxu0 0.0
        %6480 = vmatprep.subr.mxu0 0.0
        %6481 = vmatpush2.msra.mxu0 0.0
        %6482 = vmatprep.subr.mxu0 0.0
        %6483 = vmatpush2.msra.mxu0 0.0
        %6484 = vmatprep.subr.mxu0 0.0
        %6485 = vmatpush2.msra.mxu0 0.0
        %6486 = vmatprep.subr.mxu0 0.0
        %6487 = vmatpush2.msra.mxu0 0.0
        %6488 = vmatprep.subr.mxu0 0.0
        %6489 = vmatpush2.msra.mxu0 0.0
        %6490 = vmatprep.subr.mxu0 0.0
        %6491 = vmatpush2.msra.mxu0 0.0
        %6492 = vmatprep.subr.mxu0 0.0
        %6493 = vmatpush2.msra.mxu0 0.0
        %6494 = vmatprep.subr.mxu0 0.0
        %6495 = vmatpush2.msra.mxu0 0.0
        %6496 = vmatprep.subr.mxu0 0.0
        %6497 = vmatpush2.msra.mxu0 0.0
        %6498 = vmatprep.subr.mxu0 0.0
        %6499 = vmatpush2.msra.mxu0 0.0
        %6500 = vmatprep.subr.mxu0 0.0
        %6501 = vmatpush2.msra.mxu0 0.0
        %6502 = vmatprep.subr.mxu0 0.0
        %6503 = vmatpush2.msra.mxu0 0.0
        %6504 = vmatprep.subr.mxu0 0.0
        %6505 = vmatpush2.msra.mxu0 0.0
        %6506 = vmatprep.subr.mxu0 0.0
        %6507 = vmatpush2.msra.mxu0 0.0
        %6508 = vmatprep.mubr.f32.mxu0 0.0
        %6509 = vmatmul.mubr.f32.gmra.mxu0 %v6418
        %v6510 = vpop.f32.mrf.mxu0
        %v6511 = vadd.f32 0.0, %v6510
        %v6512 = vpop.f32.mrf.mxu0
        %6513 = vmatprep.mubr.f32.mxu0 0.0
        %6514 = vmatmul.mubr.f32.gmra.mxu0 %v6421
        %v6515 = vpop.f32.mrf.mxu0
        %v6516 = vadd.f32 0.0, %v6515
        %v6517 = vpop.f32.mrf.mxu0
        %6518 = vmatprep.mubr.f32.mxu0 0.0
        %6519 = vmatmul.mubr.f32.gmra.mxu0 %v6424
        %v6520 = vpop.f32.mrf.mxu0
        %v6521 = vadd.f32 0.0, %v6520
        %v6522 = vpop.f32.mrf.mxu0
        %6523 = vmatprep.mubr.f32.mxu0 0.0
        %6524 = vmatmul.mubr.f32.gmra.mxu0 %v6427
        %v6525 = vpop.f32.mrf.mxu0
        %v6526 = vadd.f32 0.0, %v6525
        %v6527 = vpop.f32.mrf.mxu0
        %6528 = vmatprep.mubr.f32.mxu0 0.0
        %6529 = vmatmul.mubr.f32.gmra.mxu0 %v6430
        %v6530 = vpop.f32.mrf.mxu0
        %v6531 = vadd.f32 0.0, %v6530
        %v6532 = vpop.f32.mrf.mxu0
        %6533 = vmatprep.mubr.f32.mxu0 0.0
        %6534 = vmatmul.mubr.f32.gmra.mxu0 %v6433
        %v6535 = vpop.f32.mrf.mxu0
        %v6536 = vadd.f32 0.0, %v6535
        %v6537 = vpop.f32.mrf.mxu0
        %6538 = vmatprep.mubr.f32.mxu0 0.0
        %6539 = vmatmul.mubr.f32.gmra.mxu0 %v6436
        %v6540 = vpop.f32.mrf.mxu0
        %v6541 = vadd.f32 0.0, %v6540
        %v6542 = vpop.f32.mrf.mxu0
        %6543 = vmatprep.mubr.f32.mxu0 0.0
        %6544 = vmatmul.mubr.f32.gmra.mxu0 %v6439
        %v6545 = vpop.f32.mrf.mxu0
        %v6546 = vadd.f32 0.0, %v6545
        %v6547 = vpop.f32.mrf.mxu0
        %6548 = vdwg.mxu0
        %v6549 = vadd.f32 %v6406, %v6511
        %v6550 = vadd.f32 %v6407, %v6516
        %v6551 = vadd.f32 %v6408, %v6521
        %v6552 = vadd.f32 %v6409, %v6526
        %v6553 = vadd.f32 %v6410, %v6531
        %v6554 = vadd.f32 %v6411, %v6536
        %v6555 = vadd.f32 %v6412, %v6541
        %v6556 = vadd.f32 %v6413, %v6546
        %s6557 = scalar_lea.vmem %s8, 208
        %v6558 = vld [vmem:[%s6557] sm:$0xff]
        %v6559 = vld [vmem:[%s6557 + $0x8] sm:$0x1]
        %v6561 = vsel %vm4718, %v4595, 0
        %v6564 = vsel %vm4718, %v4600, 0
        %v6567 = vsel %vm4718, %v4605, 0
        %v6570 = vsel %vm4718, %v4610, 0
        %v6573 = vsel %vm4718, %v4615, 0
        %v6576 = vsel %vm4718, %v4620, 0
        %v6579 = vsel %vm4718, %v4625, 0
        %v6582 = vsel %vm4718, %v4630, 0
        %v6585 = vsel %vm4743, %v6559, 0
        %6587 = vmatprep.subr.mxu0 0.0
        %6588 = vmatpush1.msra.mxu0 0.0
        %6589 = vmatprep.subr.mxu0 0.0
        %6590 = vmatpush1.msra.mxu0 0.0
        %6591 = vmatprep.subr.mxu0 0.0
        %6592 = vmatpush1.msra.mxu0 0.0
        %6593 = vmatprep.subr.mxu0 0.0
        %6594 = vmatpush1.msra.mxu0 0.0
        %6595 = vmatprep.subr.mxu0 0.0
        %6596 = vmatpush1.msra.mxu0 0.0
        %6597 = vmatprep.subr.mxu0 0.0
        %6598 = vmatpush1.msra.mxu0 0.0
        %6599 = vmatprep.subr.mxu0 0.0
        %6600 = vmatpush1.msra.mxu0 0.0
        %6601 = vmatprep.subr.mxu0 0.0
        %6602 = vmatpush1.msra.mxu0 0.0
        %6603 = vmatprep.subr.mxu0 0.0
        %6604 = vmatpush1.msra.mxu0 0.0
        %6605 = vmatprep.subr.mxu0 0.0
        %6606 = vmatpush1.msra.mxu0 0.0
        %6607 = vmatprep.subr.mxu0 0.0
        %6608 = vmatpush1.msra.mxu0 0.0
        %6609 = vmatprep.subr.mxu0 0.0
        %6610 = vmatpush1.msra.mxu0 0.0
        %6611 = vmatprep.subr.mxu0 0.0
        %6612 = vmatpush1.msra.mxu0 0.0
        %6613 = vmatprep.subr.mxu0 0.0
        %6614 = vmatpush1.msra.mxu0 0.0
        %6615 = vmatprep.subr.mxu0 0.0
        %6616 = vmatpush1.msra.mxu0 %v6585
        %6617 = vmatprep.subr.mxu0 0.0
        %6618 = vmatpush1.msra.mxu0 %v6558
        %6619 = vmatprep.subr.mxu0 0.0
        %6620 = vmatpush2.msra.mxu0 0.0
        %6621 = vmatprep.subr.mxu0 0.0
        %6622 = vmatpush2.msra.mxu0 0.0
        %6623 = vmatprep.subr.mxu0 0.0
        %6624 = vmatpush2.msra.mxu0 0.0
        %6625 = vmatprep.subr.mxu0 0.0
        %6626 = vmatpush2.msra.mxu0 0.0
        %6627 = vmatprep.subr.mxu0 0.0
        %6628 = vmatpush2.msra.mxu0 0.0
        %6629 = vmatprep.subr.mxu0 0.0
        %6630 = vmatpush2.msra.mxu0 0.0
        %6631 = vmatprep.subr.mxu0 0.0
        %6632 = vmatpush2.msra.mxu0 0.0
        %6633 = vmatprep.subr.mxu0 0.0
        %6634 = vmatpush2.msra.mxu0 0.0
        %6635 = vmatprep.subr.mxu0 0.0
        %6636 = vmatpush2.msra.mxu0 0.0
        %6637 = vmatprep.subr.mxu0 0.0
        %6638 = vmatpush2.msra.mxu0 0.0
        %6639 = vmatprep.subr.mxu0 0.0
        %6640 = vmatpush2.msra.mxu0 0.0
        %6641 = vmatprep.subr.mxu0 0.0
        %6642 = vmatpush2.msra.mxu0 0.0
        %6643 = vmatprep.subr.mxu0 0.0
        %6644 = vmatpush2.msra.mxu0 0.0
        %6645 = vmatprep.subr.mxu0 0.0
        %6646 = vmatpush2.msra.mxu0 0.0
        %6647 = vmatprep.subr.mxu0 0.0
        %6648 = vmatpush2.msra.mxu0 0.0
        %6649 = vmatprep.subr.mxu0 0.0
        %6650 = vmatpush2.msra.mxu0 0.0
        %6651 = vmatprep.mubr.f32.mxu0 0.0
        %6652 = vmatmul.mubr.f32.gmra.mxu0 %v6561
        %v6653 = vpop.f32.mrf.mxu0
        %v6654 = vadd.f32 0.0, %v6653
        %v6655 = vpop.f32.mrf.mxu0
        %6656 = vmatprep.mubr.f32.mxu0 0.0
        %6657 = vmatmul.mubr.f32.gmra.mxu0 %v6564
        %v6658 = vpop.f32.mrf.mxu0
        %v6659 = vadd.f32 0.0, %v6658
        %v6660 = vpop.f32.mrf.mxu0
        %6661 = vmatprep.mubr.f32.mxu0 0.0
        %6662 = vmatmul.mubr.f32.gmra.mxu0 %v6567
        %v6663 = vpop.f32.mrf.mxu0
        %v6664 = vadd.f32 0.0, %v6663
        %v6665 = vpop.f32.mrf.mxu0
        %6666 = vmatprep.mubr.f32.mxu0 0.0
        %6667 = vmatmul.mubr.f32.gmra.mxu0 %v6570
        %v6668 = vpop.f32.mrf.mxu0
        %v6669 = vadd.f32 0.0, %v6668
        %v6670 = vpop.f32.mrf.mxu0
        %6671 = vmatprep.mubr.f32.mxu0 0.0
        %6672 = vmatmul.mubr.f32.gmra.mxu0 %v6573
        %v6673 = vpop.f32.mrf.mxu0
        %v6674 = vadd.f32 0.0, %v6673
        %v6675 = vpop.f32.mrf.mxu0
        %6676 = vmatprep.mubr.f32.mxu0 0.0
        %6677 = vmatmul.mubr.f32.gmra.mxu0 %v6576
        %v6678 = vpop.f32.mrf.mxu0
        %v6679 = vadd.f32 0.0, %v6678
        %v6680 = vpop.f32.mrf.mxu0
        %6681 = vmatprep.mubr.f32.mxu0 0.0
        %6682 = vmatmul.mubr.f32.gmra.mxu0 %v6579
        %v6683 = vpop.f32.mrf.mxu0
        %v6684 = vadd.f32 0.0, %v6683
        %v6685 = vpop.f32.mrf.mxu0
        %6686 = vmatprep.mubr.f32.mxu0 0.0
        %6687 = vmatmul.mubr.f32.gmra.mxu0 %v6582
        %v6688 = vpop.f32.mrf.mxu0
        %v6689 = vadd.f32 0.0, %v6688
        %v6690 = vpop.f32.mrf.mxu0
        %6691 = vdwg.mxu0
        %v6692 = vadd.f32 %v6549, %v6654
        %v6693 = vadd.f32 %v6550, %v6659
        %v6694 = vadd.f32 %v6551, %v6664
        %v6695 = vadd.f32 %v6552, %v6669
        %v6696 = vadd.f32 %v6553, %v6674
        %v6697 = vadd.f32 %v6554, %v6679
        %v6698 = vadd.f32 %v6555, %v6684
        %v6699 = vadd.f32 %v6556, %v6689
        %s6700 = scalar_lea.vmem %s8, 224
        %v6701 = vld [vmem:[%s6700] sm:$0xff]
        %v6702 = vld [vmem:[%s6700 + $0x8] sm:$0x1]
        %v6704 = vsel %vm4718, %v4635, 0
        %v6707 = vsel %vm4718, %v4640, 0
        %v6710 = vsel %vm4718, %v4645, 0
        %v6713 = vsel %vm4718, %v4650, 0
        %v6716 = vsel %vm4718, %v4655, 0
        %v6719 = vsel %vm4718, %v4660, 0
        %v6722 = vsel %vm4718, %v4665, 0
        %v6725 = vsel %vm4718, %v4670, 0
        %v6728 = vsel %vm4743, %v6702, 0
        %6730 = vmatprep.subr.mxu0 0.0
        %6731 = vmatpush1.msra.mxu0 0.0
        %6732 = vmatprep.subr.mxu0 0.0
        %6733 = vmatpush1.msra.mxu0 0.0
        %6734 = vmatprep.subr.mxu0 0.0
        %6735 = vmatpush1.msra.mxu0 0.0
        %6736 = vmatprep.subr.mxu0 0.0
        %6737 = vmatpush1.msra.mxu0 0.0
        %6738 = vmatprep.subr.mxu0 0.0
        %6739 = vmatpush1.msra.mxu0 0.0
        %6740 = vmatprep.subr.mxu0 0.0
        %6741 = vmatpush1.msra.mxu0 0.0
        %6742 = vmatprep.subr.mxu0 0.0
        %6743 = vmatpush1.msra.mxu0 0.0
        %6744 = vmatprep.subr.mxu0 0.0
        %6745 = vmatpush1.msra.mxu0 0.0
        %6746 = vmatprep.subr.mxu0 0.0
        %6747 = vmatpush1.msra.mxu0 0.0
        %6748 = vmatprep.subr.mxu0 0.0
        %6749 = vmatpush1.msra.mxu0 0.0
        %6750 = vmatprep.subr.mxu0 0.0
        %6751 = vmatpush1.msra.mxu0 0.0
        %6752 = vmatprep.subr.mxu0 0.0
        %6753 = vmatpush1.msra.mxu0 0.0
        %6754 = vmatprep.subr.mxu0 0.0
        %6755 = vmatpush1.msra.mxu0 0.0
        %6756 = vmatprep.subr.mxu0 0.0
        %6757 = vmatpush1.msra.mxu0 0.0
        %6758 = vmatprep.subr.mxu0 0.0
        %6759 = vmatpush1.msra.mxu0 %v6728
        %6760 = vmatprep.subr.mxu0 0.0
        %6761 = vmatpush1.msra.mxu0 %v6701
        %6762 = vmatprep.subr.mxu0 0.0
        %6763 = vmatpush2.msra.mxu0 0.0
        %6764 = vmatprep.subr.mxu0 0.0
        %6765 = vmatpush2.msra.mxu0 0.0
        %6766 = vmatprep.subr.mxu0 0.0
        %6767 = vmatpush2.msra.mxu0 0.0
        %6768 = vmatprep.subr.mxu0 0.0
        %6769 = vmatpush2.msra.mxu0 0.0
        %6770 = vmatprep.subr.mxu0 0.0
        %6771 = vmatpush2.msra.mxu0 0.0
        %6772 = vmatprep.subr.mxu0 0.0
        %6773 = vmatpush2.msra.mxu0 0.0
        %6774 = vmatprep.subr.mxu0 0.0
        %6775 = vmatpush2.msra.mxu0 0.0
        %6776 = vmatprep.subr.mxu0 0.0
        %6777 = vmatpush2.msra.mxu0 0.0
        %6778 = vmatprep.subr.mxu0 0.0
        %6779 = vmatpush2.msra.mxu0 0.0
        %6780 = vmatprep.subr.mxu0 0.0
        %6781 = vmatpush2.msra.mxu0 0.0
        %6782 = vmatprep.subr.mxu0 0.0
        %6783 = vmatpush2.msra.mxu0 0.0
        %6784 = vmatprep.subr.mxu0 0.0
        %6785 = vmatpush2.msra.mxu0 0.0
        %6786 = vmatprep.subr.mxu0 0.0
        %6787 = vmatpush2.msra.mxu0 0.0
        %6788 = vmatprep.subr.mxu0 0.0
        %6789 = vmatpush2.msra.mxu0 0.0
        %6790 = vmatprep.subr.mxu0 0.0
        %6791 = vmatpush2.msra.mxu0 0.0
        %6792 = vmatprep.subr.mxu0 0.0
        %6793 = vmatpush2.msra.mxu0 0.0
        %6794 = vmatprep.mubr.f32.mxu0 0.0
        %6795 = vmatmul.mubr.f32.gmra.mxu0 %v6704
        %v6796 = vpop.f32.mrf.mxu0
        %v6797 = vadd.f32 0.0, %v6796
        %v6798 = vpop.f32.mrf.mxu0
        %6799 = vmatprep.mubr.f32.mxu0 0.0
        %6800 = vmatmul.mubr.f32.gmra.mxu0 %v6707
        %v6801 = vpop.f32.mrf.mxu0
        %v6802 = vadd.f32 0.0, %v6801
        %v6803 = vpop.f32.mrf.mxu0
        %6804 = vmatprep.mubr.f32.mxu0 0.0
        %6805 = vmatmul.mubr.f32.gmra.mxu0 %v6710
        %v6806 = vpop.f32.mrf.mxu0
        %v6807 = vadd.f32 0.0, %v6806
        %v6808 = vpop.f32.mrf.mxu0
        %6809 = vmatprep.mubr.f32.mxu0 0.0
        %6810 = vmatmul.mubr.f32.gmra.mxu0 %v6713
        %v6811 = vpop.f32.mrf.mxu0
        %v6812 = vadd.f32 0.0, %v6811
        %v6813 = vpop.f32.mrf.mxu0
        %6814 = vmatprep.mubr.f32.mxu0 0.0
        %6815 = vmatmul.mubr.f32.gmra.mxu0 %v6716
        %v6816 = vpop.f32.mrf.mxu0
        %v6817 = vadd.f32 0.0, %v6816
        %v6818 = vpop.f32.mrf.mxu0
        %6819 = vmatprep.mubr.f32.mxu0 0.0
        %6820 = vmatmul.mubr.f32.gmra.mxu0 %v6719
        %v6821 = vpop.f32.mrf.mxu0
        %v6822 = vadd.f32 0.0, %v6821
        %v6823 = vpop.f32.mrf.mxu0
        %6824 = vmatprep.mubr.f32.mxu0 0.0
        %6825 = vmatmul.mubr.f32.gmra.mxu0 %v6722
        %v6826 = vpop.f32.mrf.mxu0
        %v6827 = vadd.f32 0.0, %v6826
        %v6828 = vpop.f32.mrf.mxu0
        %6829 = vmatprep.mubr.f32.mxu0 0.0
        %6830 = vmatmul.mubr.f32.gmra.mxu0 %v6725
        %v6831 = vpop.f32.mrf.mxu0
        %v6832 = vadd.f32 0.0, %v6831
        %v6833 = vpop.f32.mrf.mxu0
        %6834 = vdwg.mxu0
        %v6835 = vadd.f32 %v6692, %v6797
        %v6836 = vadd.f32 %v6693, %v6802
        %v6837 = vadd.f32 %v6694, %v6807
        %v6838 = vadd.f32 %v6695, %v6812
        %v6839 = vadd.f32 %v6696, %v6817
        %v6840 = vadd.f32 %v6697, %v6822
        %v6841 = vadd.f32 %v6698, %v6827
        %v6842 = vadd.f32 %v6699, %v6832
        %s6843 = scalar_lea.vmem %s8, 240
        %v6844 = vld [vmem:[%s6843] sm:$0xff]
        %v6845 = vld [vmem:[%s6843 + $0x8] sm:$0x1]
        %v6847 = vsel %vm4718, %v4675, 0
        %v6850 = vsel %vm4718, %v4680, 0
        %v6853 = vsel %vm4718, %v4685, 0
        %v6856 = vsel %vm4718, %v4690, 0
        %v6859 = vsel %vm4718, %v4695, 0
        %v6862 = vsel %vm4718, %v4700, 0
        %v6865 = vsel %vm4718, %v4705, 0
        %v6868 = vsel %vm4718, %v4710, 0
        %v6871 = vsel %vm4743, %v6845, 0
        %6873 = vmatprep.subr.mxu0 0.0
        %6874 = vmatpush1.msra.mxu0 0.0
        %6875 = vmatprep.subr.mxu0 0.0
        %6876 = vmatpush1.msra.mxu0 0.0
        %6877 = vmatprep.subr.mxu0 0.0
        %6878 = vmatpush1.msra.mxu0 0.0
        %6879 = vmatprep.subr.mxu0 0.0
        %6880 = vmatpush1.msra.mxu0 0.0
        %6881 = vmatprep.subr.mxu0 0.0
        %6882 = vmatpush1.msra.mxu0 0.0
        %6883 = vmatprep.subr.mxu0 0.0
        %6884 = vmatpush1.msra.mxu0 0.0
        %6885 = vmatprep.subr.mxu0 0.0
        %6886 = vmatpush1.msra.mxu0 0.0
        %6887 = vmatprep.subr.mxu0 0.0
        %6888 = vmatpush1.msra.mxu0 0.0
        %6889 = vmatprep.subr.mxu0 0.0
        %6890 = vmatpush1.msra.mxu0 0.0
        %6891 = vmatprep.subr.mxu0 0.0
        %6892 = vmatpush1.msra.mxu0 0.0
        %6893 = vmatprep.subr.mxu0 0.0
        %6894 = vmatpush1.msra.mxu0 0.0
        %6895 = vmatprep.subr.mxu0 0.0
        %6896 = vmatpush1.msra.mxu0 0.0
        %6897 = vmatprep.subr.mxu0 0.0
        %6898 = vmatpush1.msra.mxu0 0.0
        %6899 = vmatprep.subr.mxu0 0.0
        %6900 = vmatpush1.msra.mxu0 0.0
        %6901 = vmatprep.subr.mxu0 0.0
        %6902 = vmatpush1.msra.mxu0 %v6871
        %6903 = vmatprep.subr.mxu0 0.0
        %6904 = vmatpush1.msra.mxu0 %v6844
        %6905 = vmatprep.subr.mxu0 0.0
        %6906 = vmatpush2.msra.mxu0 0.0
        %6907 = vmatprep.subr.mxu0 0.0
        %6908 = vmatpush2.msra.mxu0 0.0
        %6909 = vmatprep.subr.mxu0 0.0
        %6910 = vmatpush2.msra.mxu0 0.0
        %6911 = vmatprep.subr.mxu0 0.0
        %6912 = vmatpush2.msra.mxu0 0.0
        %6913 = vmatprep.subr.mxu0 0.0
        %6914 = vmatpush2.msra.mxu0 0.0
        %6915 = vmatprep.subr.mxu0 0.0
        %6916 = vmatpush2.msra.mxu0 0.0
        %6917 = vmatprep.subr.mxu0 0.0
        %6918 = vmatpush2.msra.mxu0 0.0
        %6919 = vmatprep.subr.mxu0 0.0
        %6920 = vmatpush2.msra.mxu0 0.0
        %6921 = vmatprep.subr.mxu0 0.0
        %6922 = vmatpush2.msra.mxu0 0.0
        %6923 = vmatprep.subr.mxu0 0.0
        %6924 = vmatpush2.msra.mxu0 0.0
        %6925 = vmatprep.subr.mxu0 0.0
        %6926 = vmatpush2.msra.mxu0 0.0
        %6927 = vmatprep.subr.mxu0 0.0
        %6928 = vmatpush2.msra.mxu0 0.0
        %6929 = vmatprep.subr.mxu0 0.0
        %6930 = vmatpush2.msra.mxu0 0.0
        %6931 = vmatprep.subr.mxu0 0.0
        %6932 = vmatpush2.msra.mxu0 0.0
        %6933 = vmatprep.subr.mxu0 0.0
        %6934 = vmatpush2.msra.mxu0 0.0
        %6935 = vmatprep.subr.mxu0 0.0
        %6936 = vmatpush2.msra.mxu0 0.0
        %6937 = vmatprep.mubr.f32.mxu0 0.0
        %6938 = vmatmul.mubr.f32.gmra.mxu0 %v6847
        %v6939 = vpop.f32.mrf.mxu0
        %v6940 = vadd.f32 0.0, %v6939
        %v6941 = vpop.f32.mrf.mxu0
        %6942 = vmatprep.mubr.f32.mxu0 0.0
        %6943 = vmatmul.mubr.f32.gmra.mxu0 %v6850
        %v6944 = vpop.f32.mrf.mxu0
        %v6945 = vadd.f32 0.0, %v6944
        %v6946 = vpop.f32.mrf.mxu0
        %6947 = vmatprep.mubr.f32.mxu0 0.0
        %6948 = vmatmul.mubr.f32.gmra.mxu0 %v6853
        %v6949 = vpop.f32.mrf.mxu0
        %v6950 = vadd.f32 0.0, %v6949
        %v6951 = vpop.f32.mrf.mxu0
        %6952 = vmatprep.mubr.f32.mxu0 0.0
        %6953 = vmatmul.mubr.f32.gmra.mxu0 %v6856
        %v6954 = vpop.f32.mrf.mxu0
        %v6955 = vadd.f32 0.0, %v6954
        %v6956 = vpop.f32.mrf.mxu0
        %6957 = vmatprep.mubr.f32.mxu0 0.0
        %6958 = vmatmul.mubr.f32.gmra.mxu0 %v6859
        %v6959 = vpop.f32.mrf.mxu0
        %v6960 = vadd.f32 0.0, %v6959
        %v6961 = vpop.f32.mrf.mxu0
        %6962 = vmatprep.mubr.f32.mxu0 0.0
        %6963 = vmatmul.mubr.f32.gmra.mxu0 %v6862
        %v6964 = vpop.f32.mrf.mxu0
        %v6965 = vadd.f32 0.0, %v6964
        %v6966 = vpop.f32.mrf.mxu0
        %6967 = vmatprep.mubr.f32.mxu0 0.0
        %6968 = vmatmul.mubr.f32.gmra.mxu0 %v6865
        %v6969 = vpop.f32.mrf.mxu0
        %v6970 = vadd.f32 0.0, %v6969
        %v6971 = vpop.f32.mrf.mxu0
        %6972 = vmatprep.mubr.f32.mxu0 0.0
        %6973 = vmatmul.mubr.f32.gmra.mxu0 %v6868
        %v6974 = vpop.f32.mrf.mxu0
        %v6975 = vadd.f32 0.0, %v6974
        %v6976 = vpop.f32.mrf.mxu0
        %6977 = vdwg.mxu0
        %v6978 = vadd.f32 %v6835, %v6940
        %v6979 = vadd.f32 %v6836, %v6945
        %v6980 = vadd.f32 %v6837, %v6950
        %v6981 = vadd.f32 %v6838, %v6955
        %v6982 = vadd.f32 %v6839, %v6960
        %v6983 = vadd.f32 %v6840, %v6965
        %v6984 = vadd.f32 %v6841, %v6970
        %v6985 = vadd.f32 %v6842, %v6975
        %vm6986 = vcmask 31744
        %v6987 = vsel %vm6986, %v6978, -inf
        %6988 = vmax.xlane.f32.xlu0 %v6987
        %v6989 = vpop.xlane.xlu0 %6988
        %v6990 = vsel %vm6986, %v6979, -inf
        %6991 = vmax.xlane.f32.xlu0 %v6990
        %v6992 = vpop.xlane.xlu0 %6991
        %v6993 = vsel %vm6986, %v6980, -inf
        %6994 = vmax.xlane.f32.xlu0 %v6993
        %v6995 = vpop.xlane.xlu0 %6994
        %v6996 = vsel %vm6986, %v6981, -inf
        %6997 = vmax.xlane.f32.xlu0 %v6996
        %v6998 = vpop.xlane.xlu0 %6997
        %v6999 = vsel %vm6986, %v6982, -inf
        %7000 = vmax.xlane.f32.xlu0 %v6999
        %v7001 = vpop.xlane.xlu0 %7000
        %v7002 = vsel %vm6986, %v6983, -inf
        %7003 = vmax.xlane.f32.xlu0 %v7002
        %v7004 = vpop.xlane.xlu0 %7003
        %v7005 = vsel %vm6986, %v6984, -inf
        %7006 = vmax.xlane.f32.xlu0 %v7005
        %v7007 = vpop.xlane.xlu0 %7006
        %v7008 = vsel %vm6986, %v6985, -inf
        %7009 = vmax.xlane.f32.xlu0 %v7008
        %v7010 = vpop.xlane.xlu0 %7009
        %v7011 = vld [vmem:[%s7] sm:$0xff]
        %v7012 = vld [vmem:[%s7 + $0x8] sm:$0xff]
        %v7013 = vld [vmem:[%s7 + $0x10] sm:$0xff]
        %v7014 = vld [vmem:[%s7 + $0x18] sm:$0xff]
        %v7015 = vld [vmem:[%s7 + $0x20] sm:$0xff]
        %v7016 = vld [vmem:[%s7 + $0x28] sm:$0xff]
        %v7017 = vld [vmem:[%s7 + $0x30] sm:$0xff]
        %v7018 = vld [vmem:[%s7 + $0x38] sm:$0xff]
        %v7019 = vadd.f32 %v6989, %v7011
        %v7020 = vadd.f32 %v6992, %v7012
        %v7021 = vadd.f32 %v6995, %v7013
        %v7022 = vadd.f32 %v6998, %v7014
        %v7023 = vadd.f32 %v7001, %v7015
        %v7024 = vadd.f32 %v7004, %v7016
        %v7025 = vadd.f32 %v7007, %v7017
        %v7026 = vadd.f32 %v7010, %v7018
        %v7027 = vmax.f32 %v7019, 0.0
        %v7028 = vmax.f32 %v7020, 0.0
        %v7029 = vmax.f32 %v7021, 0.0
        %v7030 = vmax.f32 %v7022, 0.0
        %v7031 = vmax.f32 %v7023, 0.0
        %v7032 = vmax.f32 %v7024, 0.0
        %v7033 = vmax.f32 %v7025, 0.0
        %v7034 = vmax.f32 %v7026, 0.0
        %v7035 = vld [vmem:[%s9] sm:$0xff]
        %v7036 = vld [vmem:[%s9 + $0x8] sm:$0xff]
        %v7037 = vld [vmem:[%s9 + $0x10] sm:$0xff]
        %v7038 = vld [vmem:[%s9 + $0x18] sm:$0xff]
        %v7039 = vld [vmem:[%s9 + $0x20] sm:$0xff]
        %v7040 = vld [vmem:[%s9 + $0x28] sm:$0xff]
        %v7041 = vld [vmem:[%s9 + $0x30] sm:$0xff]
        %v7042 = vld [vmem:[%s9 + $0x38] sm:$0xff]
        %7044 = vset.pattern.permute.xlu0 0
        %7045 = vperm.xlu0 %7044, %v7027
        %v7046 = vpop.permute.xlu0 %7045
        %7049 = vset.pattern.permute.xlu0 0
        %7050 = vperm.xlu0 %7049, %v7028
        %v7051 = vpop.permute.xlu0 %7050
        %7054 = vset.pattern.permute.xlu0 0
        %7055 = vperm.xlu0 %7054, %v7029
        %v7056 = vpop.permute.xlu0 %7055
        %7059 = vset.pattern.permute.xlu0 0
        %7060 = vperm.xlu0 %7059, %v7030
        %v7061 = vpop.permute.xlu0 %7060
        %7064 = vset.pattern.permute.xlu0 0
        %7065 = vperm.xlu0 %7064, %v7031
        %v7066 = vpop.permute.xlu0 %7065
        %7069 = vset.pattern.permute.xlu0 0
        %7070 = vperm.xlu0 %7069, %v7032
        %v7071 = vpop.permute.xlu0 %7070
        %7074 = vset.pattern.permute.xlu0 0
        %7075 = vperm.xlu0 %7074, %v7033
        %v7076 = vpop.permute.xlu0 %7075
        %7079 = vset.pattern.permute.xlu0 0
        %7080 = vperm.xlu0 %7079, %v7034
        %v7081 = vpop.permute.xlu0 %7080
        %v7083 = vmul.f32 %v7035, %v7046
        %v7084 = vmul.f32 %v7036, %v7051
        %v7085 = vmul.f32 %v7037, %v7056
        %v7086 = vmul.f32 %v7038, %v7061
        %v7087 = vmul.f32 %v7039, %v7066
        %v7088 = vmul.f32 %v7040, %v7071
        %v7089 = vmul.f32 %v7041, %v7076
        %v7090 = vmul.f32 %v7042, %v7081
        %vm7091 = vcmask 56320
        %v7092 = vsel %vm7091, %v7083, 0.0
        %v7093 = vsel %vm7091, %v7084, 0.0
        %v7094 = vadd.f32 %v7092, %v7093
        %v7095 = vsel %vm7091, %v7085, 0.0
        %v7096 = vadd.f32 %v7094, %v7095
        %v7097 = vsel %vm7091, %v7086, 0.0
        %v7098 = vadd.f32 %v7096, %v7097
        %v7099 = vsel %vm7091, %v7087, 0.0
        %v7100 = vadd.f32 %v7098, %v7099
        %v7101 = vsel %vm7091, %v7088, 0.0
        %v7102 = vadd.f32 %v7100, %v7101
        %v7103 = vsel %vm7091, %v7089, 0.0
        %v7104 = vadd.f32 %v7102, %v7103
        %v7105 = vsel %vm7091, %v7090, 0.0
        %v7106 = vadd.f32 %v7104, %v7105
        %v7107 = vrot.slane %v7106, 4
        %v7108 = vadd.f32 %v7106, %v7107
        %v7109 = vrot.slane %v7108, 2
        %v7110 = vadd.f32 %v7108, %v7109
        %v7111 = vrot.slane %v7110, 1
        %v7112 = vadd.f32 %v7110, %v7111
        %v7113 = vld [vmem:[%s10] sm:$0x1]
        %v7114 = vadd.f32 %v7112, %v7113
        %vm7115 = vcmask 49152
        %7116 = vst.msk [vmem:[%s378] sm:$0x1] %vm7115, %v7114
        %s7117 = sand.u32 %s269, 1
        %s7118 = scalar_lea.sflag [#allocation3], %s7117
        %s7119 = sand.u32 %s269, 1
        %s7120 = scalar_lea.vmem [#allocation2], %s7119
        // Predicated region
        $region65: #{cnn_forward.1} parent=63 // pred_check
          %p7121 = pneg %p279
        $region66: #{cnn_forward.1} parent=63 // pred_check_branch
          %7123 = sbr.rel (%p7121) target = $region68
        $region67: #{cnn_forward.1} parent=63 // pred_region
          %s7125 = ssub.s32 16, 16
          %7126 = vsyncadd %s7118, %s7125
          %s7127 = smul.addr %s25, 16
          %s7128 = scalar_lea.hbm %s11, %s7127
          %s7130 = sshll.u32 %s7120, 4
          %s7131 = int_to_ptr.vmem [resolvable:$true] %s7130
          %7133 = dma.vmem_to_hbm [thread:$0]  %s7131, 16, %s7128, %s7118
        $region68: #{cnn_forward.1} parent=63 // pred_fallthru
          _
      $region64: #{cnn_forward.1} parent=5 // pred_fallthru
        _
      %p7134 = scmp.le.s32.totalorder 2, %s20
      // Predicated region
      $region69: #{cnn_forward.1} parent=5 // pred_check
        %p7135 = pneg %p7134
      $region70: #{cnn_forward.1} parent=5 // pred_check_branch
        %7137 = sbr.rel (%p7135) target = $region72
      $region71: #{cnn_forward.1} parent=5 // pred_region
        %s7138 = ssub.s32 %s20, 2
        // Predicated region
        $region73: #{cnn_forward.1} parent=71 // pred_check
          %p7139 = pneg %p285
        $region74: #{cnn_forward.1} parent=71 // pred_check_branch
          %7141 = sbr.rel (%p7139) target = $region76
        $region75: #{cnn_forward.1} parent=71 // pred_region
          %s7142 = sand.u32 %s270, 1
          %s7143 = scalar_lea.sflag [#allocation3], %s7142
          %s7144 = sand.u32 %s270, 1
          %s7145 = scalar_lea.vmem [#allocation2], %s7144
          %7146 = dma.done %s7143, 16
        $region76: #{cnn_forward.1} parent=71 // pred_fallthru
          _
      $region72: #{cnn_forward.1} parent=5 // pred_fallthru
        _
    $region6: #{cnn_forward.1} parent=1 // loop_footer
      %s24 = sadd.s32 1, %s20
    $region7: #{cnn_forward.1} parent=1 // loop_footer_branch
      %19 = sbr.rel target = $region3
    $region8: #{cnn_forward.1} parent=1 // loop_exit
      _
    %7147 = vsyncpa [#allocation3], 1
    %s7148 = scalar_lea.sflag [#allocation3], 1
    %7149 = vsyncpa %s7148, 1

</llo_original>
